<compile_context>
chip_gen: v5e
topology: v5e:2x2
jax: 0.10.0
libtpu: 0.0.40
codegen_flags: <defaults>
</compile_context>

<pallas_src>
import functools

import jax
import jax.numpy as jnp
from jax import lax
from jax.experimental import pallas as pl
from jax.experimental.pallas import tpu as pltpu


# ----------------------------------------------------------------------------
# Kernel helpers
# ----------------------------------------------------------------------------
def _layernorm(x, g, b, eps):
    # f32 math (v5e-safe).
    mean = jnp.mean(x, axis=-1, keepdims=True)
    var = jnp.mean(jnp.square(x - mean), axis=-1, keepdims=True)
    return (x - mean) * lax.rsqrt(var + eps) * g + b


# ----------------------------------------------------------------------------
# Fused kernel: Linear(D_in->D) + ReLU + Dropout(id) + AttentionBlock(D)
# ----------------------------------------------------------------------------
def _fused_block_kernel(x_ref, win_ref, bin_ref,
                        ln1g_ref, ln1b_ref, wqkv_ref,
                        wo_ref, bo_ref,
                        ln2g_ref, ln2b_ref,
                        w1_ref, b1_ref, w2_ref, b2_ref,
                        o_ref, *, num_heads, eps):
    # ---- entry Linear + ReLU (Dropout == identity at inference) ----
    x = jnp.dot(x_ref[...].astype(jnp.bfloat16), win_ref[...],
                preferred_element_type=jnp.float32)
    x = jnp.maximum(x + bin_ref[...], 0.0)            # (T, D) f32

    T, D = x.shape
    Dh = D // num_heads
    scale = float(Dh) ** -0.5

    # ---- self-attention sub-block: x = x + Wo(MHA(LN1(x))) + bo ----
    h = _layernorm(x, ln1g_ref[...], ln1b_ref[...], eps)
    qkv = jnp.dot(h.astype(jnp.bfloat16), wqkv_ref[...],
                  preferred_element_type=jnp.float32)  # (T, 3D) single MXU pass

    row = lax.broadcasted_iota(jnp.int32, (T, T), 0)
    col = lax.broadcasted_iota(jnp.int32, (T, T), 1)
    causal = col <= row                                 # hoisted out of head loop

    wo = wo_ref[...]                                    # (D, D) bf16
    proj = jnp.zeros((T, D), jnp.float32)
    for hi in range(num_heads):                         # static, unrolled
        q = qkv[:, hi * Dh:(hi + 1) * Dh]
        k = qkv[:, D + hi * Dh:D + (hi + 1) * Dh]
        v = qkv[:, 2 * D + hi * Dh:2 * D + (hi + 1) * Dh]
        # q @ k^T with contraction on the last axes (no k.T relayout).
        s = lax.dot_general(q, k, (((1,), (1,)), ((), ())),
                            preferred_element_type=jnp.float32) * scale
        s = jnp.where(causal, s, -jnp.inf)
        m = jnp.max(s, axis=-1, keepdims=True)
        p = jnp.exp(s - m)
        inv = pl.reciprocal(jnp.sum(p, axis=-1, keepdims=True), approx=True)
        p = p * inv
        o_h = jnp.dot(p, v, preferred_element_type=jnp.float32)      # (T, Dh)
        # Per-head slice of the output projection == concat(heads) @ Wo.
        proj = proj + jnp.dot(o_h.astype(jnp.bfloat16),
                              wo[hi * Dh:(hi + 1) * Dh, :],
                              preferred_element_type=jnp.float32)
    x = x + proj + bo_ref[...]                           # fused residual

    # ---- MLP sub-block: x = x + W2(relu(W1(LN2(x)) + b1)) + b2 ----
    h2 = _layernorm(x, ln2g_ref[...], ln2b_ref[...], eps)
    ff = jnp.dot(h2.astype(jnp.bfloat16), w1_ref[...],
                 preferred_element_type=jnp.float32) + b1_ref[...]
    ff = jnp.maximum(ff, 0.0)
    ff = jnp.dot(ff.astype(jnp.bfloat16), w2_ref[...],
                 preferred_element_type=jnp.float32) + b2_ref[...]
    o_ref[...] = x + ff                                  # fused residual


def fused_block(x, blk, *, num_heads=4, eps=1e-5):
    """x: (B, T, D_in) f32 -> (B, T, D) f32."""
    B, T, Din = x.shape
    D = blk["win"].shape[1]

    def _full(arr):
        return pl.BlockSpec(arr.shape, lambda b: (0, 0))

    order = ["win", "bin", "ln1_g", "ln1_b", "wqkv", "wo", "bo",
             "ln2_g", "ln2_b", "w1", "b1", "w2", "b2"]
    return pl.pallas_call(
        functools.partial(_fused_block_kernel, num_heads=num_heads, eps=eps),
        out_shape=jax.ShapeDtypeStruct((B, T, D), jnp.float32),
        grid=(B,),
        in_specs=[pl.BlockSpec((None, T, Din), lambda b: (b, 0, 0))]
                 + [_full(blk[name]) for name in order],
        out_specs=pl.BlockSpec((None, T, D), lambda b: (b, 0, 0)),
        compiler_params=pltpu.CompilerParams(dimension_semantics=("parallel",)),
    )(x, *[blk[name] for name in order])


# ----------------------------------------------------------------------------
# Final (lane-dense, vocab-padded) projection kernel
# ----------------------------------------------------------------------------
def _final_linear_kernel(x_ref, w_ref, b_ref, o_ref):
    o_ref[...] = jnp.dot(x_ref[...].astype(jnp.bfloat16), w_ref[...],
                         preferred_element_type=jnp.float32) + b_ref[...]


def final_linear(x, w, b):
    """x: (B, T, K) f32, w: (K, Npad) bf16, b: (1, Npad) f32 -> (B, T, Npad)."""
    B, T, K = x.shape
    N = w.shape[1]
    return pl.pallas_call(
        _final_linear_kernel,
        out_shape=jax.ShapeDtypeStruct((B, T, N), jnp.float32),
        grid=(B,),
        in_specs=[
            pl.BlockSpec((None, T, K), lambda b: (b, 0, 0)),
            pl.BlockSpec((K, N), lambda b: (0, 0)),
            pl.BlockSpec((1, N), lambda b: (0, 0)),
        ],
        out_specs=pl.BlockSpec((None, T, N), lambda b: (b, 0, 0)),
        compiler_params=pltpu.CompilerParams(dimension_semantics=("parallel",)),
    )(x, w, b)


# ----------------------------------------------------------------------------
# Parameter init (deterministic, synthetic; matmul weights stored as bf16)
# ----------------------------------------------------------------------------
def _wmat(key, din, dout):
    return jax.random.normal(key, (din, dout), jnp.float32) * 0.02


def _block_params(key, din, d):
    ks = jax.random.split(key, 7)
    wq, wk, wv = _wmat(ks[0], d, d), _wmat(ks[1], d, d), _wmat(ks[2], d, d)
    return dict(
        win=_wmat(ks[3], din, d).astype(jnp.bfloat16),
        bin=jnp.zeros((1, d), jnp.float32),
        ln1_g=jnp.ones((1, d), jnp.float32),
        ln1_b=jnp.zeros((1, d), jnp.float32),
        wqkv=jnp.concatenate([wq, wk, wv], axis=1).astype(jnp.bfloat16),
        wo=_wmat(ks[4], d, d).astype(jnp.bfloat16),
        bo=jnp.zeros((1, d), jnp.float32),
        ln2_g=jnp.ones((1, d), jnp.float32),
        ln2_b=jnp.zeros((1, d), jnp.float32),
        w1=_wmat(ks[5], d, 4 * d).astype(jnp.bfloat16),
        b1=jnp.zeros((1, 4 * d), jnp.float32),
        w2=_wmat(ks[6], 4 * d, d).astype(jnp.bfloat16),
        b2=jnp.zeros((1, d), jnp.float32),
    )


def init_params(key, vocab_size, block_size):
    ks = jax.random.split(key, 6)
    # Pad vocab projection to a multiple of 128 lanes (dense stores).
    n_pad = ((vocab_size + 127) // 128) * 128
    w3 = jnp.zeros((64, n_pad), jnp.float32)
    w3 = w3.at[:, :vocab_size].set(_wmat(ks[4], 64, vocab_size))
    return dict(
        tok_emb=jax.random.normal(ks[0], (vocab_size, 32), jnp.float32) * 0.02,
        pos_emb=jax.random.normal(ks[1], (block_size, 32), jnp.float32) * 0.02,
        blk0=_block_params(ks[2], 32, 256),
        blk1=_block_params(ks[3], 256, 128),
        blk2=_block_params(ks[5], 128, 64),
        lin3_w=w3.astype(jnp.bfloat16),
        lin3_b=jnp.zeros((1, n_pad), jnp.float32),
    )


# ----------------------------------------------------------------------------
# Forward pass
# ----------------------------------------------------------------------------
def nanogpt_forward(params, tokens, *, vocab_size):
    B, T = tokens.shape
    tok = params["tok_emb"][tokens]              # (B, T, 32) embedding gather (glue)
    pos = params["pos_emb"][:T]                  # (T, 32)
    h = (tok + pos[None, :, :]).astype(jnp.float32)

    h = fused_block(h, params["blk0"])           # Linear(32,256)+ReLU + AttnBlock(4,256)
    h = fused_block(h, params["blk1"])           # Linear(256,128)+ReLU + AttnBlock(4,128)
    h = fused_block(h, params["blk2"])           # Linear(128,64)+ReLU + AttnBlock(4,64)
    logits = final_linear(h, params["lin3_w"], params["lin3_b"])   # (B, T, 128)
    return logits[..., :vocab_size]              # un-pad vocab (glue)


if __name__ == "__main__":
    vocab_size, block_size = 65, 16
    B, T = 2, 8

    key = jax.random.PRNGKey(0)
    params = init_params(key, vocab_size, block_size)
    tokens = jax.random.randint(jax.random.fold_in(key, 123), (B, T), 0, vocab_size)

    fwd = jax.jit(functools.partial(nanogpt_forward, vocab_size=vocab_size))
    out = jax.block_until_ready(fwd(params, tokens))

    assert out.shape == (B, T, vocab_size), out.shape
    assert jnp.all(jnp.isfinite(out)), "non-finite logits"
    print("KERNEL_OK")
</pallas_src>

<mosaic_0001>
module attributes {stable_mosaic.version = 11 : i64} {
  func.func @_fused_block_kernel(%arg0: i32, %arg1: memref<1x8x128xf32, #tpu.memory_space<vmem>>, %arg2: memref<128x64xbf16, #tpu.memory_space<vmem>>, %arg3: memref<1x64xf32, #tpu.memory_space<vmem>>, %arg4: memref<1x64xf32, #tpu.memory_space<vmem>>, %arg5: memref<1x64xf32, #tpu.memory_space<vmem>>, %arg6: memref<64x192xbf16, #tpu.memory_space<vmem>>, %arg7: memref<64x64xbf16, #tpu.memory_space<vmem>>, %arg8: memref<1x64xf32, #tpu.memory_space<vmem>>, %arg9: memref<1x64xf32, #tpu.memory_space<vmem>>, %arg10: memref<1x64xf32, #tpu.memory_space<vmem>>, %arg11: memref<64x256xbf16, #tpu.memory_space<vmem>>, %arg12: memref<1x256xf32, #tpu.memory_space<vmem>>, %arg13: memref<256x64xbf16, #tpu.memory_space<vmem>>, %arg14: memref<1x64xf32, #tpu.memory_space<vmem>>, %arg15: memref<1x8x64xf32, #tpu.memory_space<vmem>>) attributes {dimension_semantics = [#tpu.dimension_semantics<parallel>], iteration_bounds = array<i64: 2>, scalar_prefetch = 0 : i64, scratch_operands = 0 : i64, tpu.core_type = #tpu.core_type<tc>, window_params = [{transform_indices = @transform_0, window_bounds = array<i64: 1, 8, 128>}, {pipeline_mode = #tpu.pipeline_mode<synchronous>, transform_indices = @transform_1, window_bounds = array<i64: 128, 64>}, {pipeline_mode = #tpu.pipeline_mode<synchronous>, transform_indices = @transform_2, window_bounds = array<i64: 1, 64>}, {pipeline_mode = #tpu.pipeline_mode<synchronous>, transform_indices = @transform_3, window_bounds = array<i64: 1, 64>}, {pipeline_mode = #tpu.pipeline_mode<synchronous>, transform_indices = @transform_4, window_bounds = array<i64: 1, 64>}, {pipeline_mode = #tpu.pipeline_mode<synchronous>, transform_indices = @transform_5, window_bounds = array<i64: 64, 192>}, {pipeline_mode = #tpu.pipeline_mode<synchronous>, transform_indices = @transform_6, window_bounds = array<i64: 64, 64>}, {pipeline_mode = #tpu.pipeline_mode<synchronous>, transform_indices = @transform_7, window_bounds = array<i64: 1, 64>}, {pipeline_mode = #tpu.pipeline_mode<synchronous>, transform_indices = @transform_8, window_bounds = array<i64: 1, 64>}, {pipeline_mode = #tpu.pipeline_mode<synchronous>, transform_indices = @transform_9, window_bounds = array<i64: 1, 64>}, {pipeline_mode = #tpu.pipeline_mode<synchronous>, transform_indices = @transform_10, window_bounds = array<i64: 64, 256>}, {pipeline_mode = #tpu.pipeline_mode<synchronous>, transform_indices = @transform_11, window_bounds = array<i64: 1, 256>}, {pipeline_mode = #tpu.pipeline_mode<synchronous>, transform_indices = @transform_12, window_bounds = array<i64: 256, 64>}, {pipeline_mode = #tpu.pipeline_mode<synchronous>, transform_indices = @transform_13, window_bounds = array<i64: 1, 64>}, {transform_indices = @transform_14, window_bounds = array<i64: 1, 8, 64>}]} {
    %c0 = arith.constant 0 : index
    %c0_0 = arith.constant 0 : index
    %c0_1 = arith.constant 0 : index
    %0 = vector.load %arg1[%c0, %c0_0, %c0_1] : memref<1x8x128xf32, #tpu.memory_space<vmem>>, vector<1x8x128xf32>
    %1 = vector.shape_cast %0 : vector<1x8x128xf32> to vector<8x128xf32>
    %2 = arith.truncf %1 : vector<8x128xf32> to vector<8x128xbf16>
    %c0_2 = arith.constant 0 : index
    %c0_3 = arith.constant 0 : index
    %3 = vector.load %arg2[%c0_2, %c0_3] : memref<128x64xbf16, #tpu.memory_space<vmem>>, vector<128x64xbf16>
    %cst = arith.constant dense<0.000000e+00> : vector<8x64xf32>
    %4 = tpu.matmul %2, %3, %cst {dimension_numbers = #tpu.dot_dimension_numbers<[1], [0], [0], [1], [0, 0, 1, 1], [], []>} : vector<8x128xbf16>, vector<128x64xbf16>, vector<8x64xf32> -> vector<8x64xf32>
    %c0_4 = arith.constant 0 : index
    %c0_5 = arith.constant 0 : index
    %5 = vector.load %arg3[%c0_4, %c0_5] : memref<1x64xf32, #tpu.memory_space<vmem>>, vector<1x64xf32>
    %6 = vector.broadcast %5 : vector<1x64xf32> to vector<8x64xf32>
    %7 = arith.addf %4, %6 : vector<8x64xf32>
    %cst_6 = arith.constant 0.000000e+00 : f32
    %8 = vector.broadcast %cst_6 : f32 to vector<8x64xf32>
    %9 = arith.maximumf %7, %8 : vector<8x64xf32>
    %c0_7 = arith.constant 0 : index
    %c0_8 = arith.constant 0 : index
    %10 = vector.load %arg4[%c0_7, %c0_8] : memref<1x64xf32, #tpu.memory_space<vmem>>, vector<1x64xf32>
    %c0_9 = arith.constant 0 : index
    %c0_10 = arith.constant 0 : index
    %11 = vector.load %arg5[%c0_9, %c0_10] : memref<1x64xf32, #tpu.memory_space<vmem>>, vector<1x64xf32>
    %cst_11 = arith.constant dense<0.000000e+00> : vector<8xf32>
    %12 = vector.multi_reduction <add>, %9, %cst_11 [1] : vector<8x64xf32> to vector<8xf32>
    %13 = vector.shape_cast %12 : vector<8xf32> to vector<8x1xf32>
    %cst_12 = arith.constant 6.400000e+01 : f32
    %14 = vector.broadcast %cst_12 : f32 to vector<8x1xf32>
    %15 = arith.divf %13, %14 : vector<8x1xf32>
    %16 = vector.broadcast %15 : vector<8x1xf32> to vector<8x64xf32>
    %17 = arith.subf %9, %16 : vector<8x64xf32>
    %18 = arith.mulf %17, %17 : vector<8x64xf32>
    %cst_13 = arith.constant dense<0.000000e+00> : vector<8xf32>
    %19 = vector.multi_reduction <add>, %18, %cst_13 [1] : vector<8x64xf32> to vector<8xf32>
    %20 = vector.shape_cast %19 : vector<8xf32> to vector<8x1xf32>
    %cst_14 = arith.constant 6.400000e+01 : f32
    %21 = vector.broadcast %cst_14 : f32 to vector<8x1xf32>
    %22 = arith.divf %20, %21 : vector<8x1xf32>
    %23 = vector.broadcast %15 : vector<8x1xf32> to vector<8x64xf32>
    %24 = arith.subf %9, %23 : vector<8x64xf32>
    %cst_15 = arith.constant 9.99999974E-6 : f32
    %25 = vector.broadcast %cst_15 : f32 to vector<8x1xf32>
    %26 = arith.addf %22, %25 : vector<8x1xf32>
    %27 = math.rsqrt %26 : vector<8x1xf32>
    %28 = vector.broadcast %27 : vector<8x1xf32> to vector<8x64xf32>
    %29 = arith.mulf %24, %28 : vector<8x64xf32>
    %30 = vector.broadcast %10 : vector<1x64xf32> to vector<8x64xf32>
    %31 = arith.mulf %29, %30 : vector<8x64xf32>
    %32 = vector.broadcast %11 : vector<1x64xf32> to vector<8x64xf32>
    %33 = arith.addf %31, %32 : vector<8x64xf32>
    %34 = arith.truncf %33 : vector<8x64xf32> to vector<8x64xbf16>
    %c0_16 = arith.constant 0 : index
    %c0_17 = arith.constant 0 : index
    %35 = vector.load %arg6[%c0_16, %c0_17] : memref<64x192xbf16, #tpu.memory_space<vmem>>, vector<64x192xbf16>
    %cst_18 = arith.constant dense<0.000000e+00> : vector<8x192xf32>
    %36 = tpu.matmul %34, %35, %cst_18 {dimension_numbers = #tpu.dot_dimension_numbers<[1], [0], [0], [1], [0, 0, 1, 1], [], []>} : vector<8x64xbf16>, vector<64x192xbf16>, vector<8x192xf32> -> vector<8x192xf32>
    %37 = tpu.iota {dimensions = array<i32: 0>} : vector<8x8xi32>
    %38 = tpu.iota {dimensions = array<i32: 1>} : vector<8x8xi32>
    %39 = arith.cmpi sle, %38, %37 : vector<8x8xi32>
    %c0_19 = arith.constant 0 : index
    %c0_20 = arith.constant 0 : index
    %40 = vector.load %arg7[%c0_19, %c0_20] : memref<64x64xbf16, #tpu.memory_space<vmem>>, vector<64x64xbf16>
    %cst_21 = arith.constant 0.000000e+00 : f32
    %41 = vector.broadcast %cst_21 : f32 to vector<8x64xf32>
    %42 = vector.extract_strided_slice %36 {offsets = [0, 0], sizes = [8, 16], strides = [1, 1]} : vector<8x192xf32> to vector<8x16xf32>
    %43 = vector.extract_strided_slice %36 {offsets = [0, 64], sizes = [8, 16], strides = [1, 1]} : vector<8x192xf32> to vector<8x16xf32>
    %44 = vector.extract_strided_slice %36 {offsets = [0, 128], sizes = [8, 16], strides = [1, 1]} : vector<8x192xf32> to vector<8x16xf32>
    %cst_22 = arith.constant dense<0.000000e+00> : vector<8x8xf32>
    %45 = tpu.matmul %42, %43, %cst_22 {dimension_numbers = #tpu.dot_dimension_numbers<[1], [1], [0], [0], [0, 0, 1, 0], [], []>} : vector<8x16xf32>, vector<8x16xf32>, vector<8x8xf32> -> vector<8x8xf32>
    %cst_23 = arith.constant 2.500000e-01 : f32
    %46 = vector.broadcast %cst_23 : f32 to vector<8x8xf32>
    %47 = arith.mulf %45, %46 : vector<8x8xf32>
    %cst_24 = arith.constant 0xFF800000 : f32
    %48 = vector.broadcast %cst_24 : f32 to vector<8x8xf32>
    %49 = arith.select %39, %47, %48 : vector<8x8xi1>, vector<8x8xf32>
    %cst_25 = arith.constant dense<0xFF800000> : vector<8xf32>
    %50 = vector.multi_reduction <maximumf>, %49, %cst_25 [1] : vector<8x8xf32> to vector<8xf32>
    %51 = vector.shape_cast %50 : vector<8xf32> to vector<8x1xf32>
    %52 = vector.broadcast %51 : vector<8x1xf32> to vector<8x8xf32>
    %53 = arith.subf %49, %52 : vector<8x8xf32>
    %54 = math.exp %53 : vector<8x8xf32>
    %cst_26 = arith.constant dense<0.000000e+00> : vector<8xf32>
    %55 = vector.multi_reduction <add>, %54, %cst_26 [1] : vector<8x8xf32> to vector<8xf32>
    %56 = vector.shape_cast %55 : vector<8xf32> to vector<8x1xf32>
    %57 = tpu.reciprocal %56 {approx = true} : vector<8x1xf32> -> vector<8x1xf32>
    %58 = vector.broadcast %57 : vector<8x1xf32> to vector<8x8xf32>
    %59 = arith.mulf %54, %58 : vector<8x8xf32>
    %cst_27 = arith.constant dense<0.000000e+00> : vector<8x16xf32>
    %60 = tpu.matmul %59, %44, %cst_27 {dimension_numbers = #tpu.dot_dimension_numbers<[1], [0], [0], [1], [0, 0, 1, 1], [], []>} : vector<8x8xf32>, vector<8x16xf32>, vector<8x16xf32> -> vector<8x16xf32>
    %61 = arith.truncf %60 : vector<8x16xf32> to vector<8x16xbf16>
    %62 = vector.extract_strided_slice %40 {offsets = [0, 0], sizes = [16, 64], strides = [1, 1]} : vector<64x64xbf16> to vector<16x64xbf16>
    %cst_28 = arith.constant dense<0.000000e+00> : vector<8x64xf32>
    %63 = tpu.matmul %61, %62, %cst_28 {dimension_numbers = #tpu.dot_dimension_numbers<[1], [0], [0], [1], [0, 0, 1, 1], [], []>} : vector<8x16xbf16>, vector<16x64xbf16>, vector<8x64xf32> -> vector<8x64xf32>
    %64 = arith.addf %41, %63 : vector<8x64xf32>
    %65 = vector.extract_strided_slice %36 {offsets = [0, 16], sizes = [8, 16], strides = [1, 1]} : vector<8x192xf32> to vector<8x16xf32>
    %66 = vector.extract_strided_slice %36 {offsets = [0, 80], sizes = [8, 16], strides = [1, 1]} : vector<8x192xf32> to vector<8x16xf32>
    %67 = vector.extract_strided_slice %36 {offsets = [0, 144], sizes = [8, 16], strides = [1, 1]} : vector<8x192xf32> to vector<8x16xf32>
    %cst_29 = arith.constant dense<0.000000e+00> : vector<8x8xf32>
    %68 = tpu.matmul %65, %66, %cst_29 {dimension_numbers = #tpu.dot_dimension_numbers<[1], [1], [0], [0], [0, 0, 1, 0], [], []>} : vector<8x16xf32>, vector<8x16xf32>, vector<8x8xf32> -> vector<8x8xf32>
    %cst_30 = arith.constant 2.500000e-01 : f32
    %69 = vector.broadcast %cst_30 : f32 to vector<8x8xf32>
    %70 = arith.mulf %68, %69 : vector<8x8xf32>
    %cst_31 = arith.constant 0xFF800000 : f32
    %71 = vector.broadcast %cst_31 : f32 to vector<8x8xf32>
    %72 = arith.select %39, %70, %71 : vector<8x8xi1>, vector<8x8xf32>
    %cst_32 = arith.constant dense<0xFF800000> : vector<8xf32>
    %73 = vector.multi_reduction <maximumf>, %72, %cst_32 [1] : vector<8x8xf32> to vector<8xf32>
    %74 = vector.shape_cast %73 : vector<8xf32> to vector<8x1xf32>
    %75 = vector.broadcast %74 : vector<8x1xf32> to vector<8x8xf32>
    %76 = arith.subf %72, %75 : vector<8x8xf32>
    %77 = math.exp %76 : vector<8x8xf32>
    %cst_33 = arith.constant dense<0.000000e+00> : vector<8xf32>
    %78 = vector.multi_reduction <add>, %77, %cst_33 [1] : vector<8x8xf32> to vector<8xf32>
    %79 = vector.shape_cast %78 : vector<8xf32> to vector<8x1xf32>
    %80 = tpu.reciprocal %79 {approx = true} : vector<8x1xf32> -> vector<8x1xf32>
    %81 = vector.broadcast %80 : vector<8x1xf32> to vector<8x8xf32>
    %82 = arith.mulf %77, %81 : vector<8x8xf32>
    %cst_34 = arith.constant dense<0.000000e+00> : vector<8x16xf32>
    %83 = tpu.matmul %82, %67, %cst_34 {dimension_numbers = #tpu.dot_dimension_numbers<[1], [0], [0], [1], [0, 0, 1, 1], [], []>} : vector<8x8xf32>, vector<8x16xf32>, vector<8x16xf32> -> vector<8x16xf32>
    %84 = arith.truncf %83 : vector<8x16xf32> to vector<8x16xbf16>
    %85 = vector.extract_strided_slice %40 {offsets = [16, 0], sizes = [16, 64], strides = [1, 1]} : vector<64x64xbf16> to vector<16x64xbf16>
    %cst_35 = arith.constant dense<0.000000e+00> : vector<8x64xf32>
    %86 = tpu.matmul %84, %85, %cst_35 {dimension_numbers = #tpu.dot_dimension_numbers<[1], [0], [0], [1], [0, 0, 1, 1], [], []>} : vector<8x16xbf16>, vector<16x64xbf16>, vector<8x64xf32> -> vector<8x64xf32>
    %87 = arith.addf %64, %86 : vector<8x64xf32>
    %88 = vector.extract_strided_slice %36 {offsets = [0, 32], sizes = [8, 16], strides = [1, 1]} : vector<8x192xf32> to vector<8x16xf32>
    %89 = vector.extract_strided_slice %36 {offsets = [0, 96], sizes = [8, 16], strides = [1, 1]} : vector<8x192xf32> to vector<8x16xf32>
    %90 = vector.extract_strided_slice %36 {offsets = [0, 160], sizes = [8, 16], strides = [1, 1]} : vector<8x192xf32> to vector<8x16xf32>
    %cst_36 = arith.constant dense<0.000000e+00> : vector<8x8xf32>
    %91 = tpu.matmul %88, %89, %cst_36 {dimension_numbers = #tpu.dot_dimension_numbers<[1], [1], [0], [0], [0, 0, 1, 0], [], []>} : vector<8x16xf32>, vector<8x16xf32>, vector<8x8xf32> -> vector<8x8xf32>
    %cst_37 = arith.constant 2.500000e-01 : f32
    %92 = vector.broadcast %cst_37 : f32 to vector<8x8xf32>
    %93 = arith.mulf %91, %92 : vector<8x8xf32>
    %cst_38 = arith.constant 0xFF800000 : f32
    %94 = vector.broadcast %cst_38 : f32 to vector<8x8xf32>
    %95 = arith.select %39, %93, %94 : vector<8x8xi1>, vector<8x8xf32>
    %cst_39 = arith.constant dense<0xFF800000> : vector<8xf32>
    %96 = vector.multi_reduction <maximumf>, %95, %cst_39 [1] : vector<8x8xf32> to vector<8xf32>
    %97 = vector.shape_cast %96 : vector<8xf32> to vector<8x1xf32>
    %98 = vector.broadcast %97 : vector<8x1xf32> to vector<8x8xf32>
    %99 = arith.subf %95, %98 : vector<8x8xf32>
    %100 = math.exp %99 : vector<8x8xf32>
    %cst_40 = arith.constant dense<0.000000e+00> : vector<8xf32>
    %101 = vector.multi_reduction <add>, %100, %cst_40 [1] : vector<8x8xf32> to vector<8xf32>
    %102 = vector.shape_cast %101 : vector<8xf32> to vector<8x1xf32>
    %103 = tpu.reciprocal %102 {approx = true} : vector<8x1xf32> -> vector<8x1xf32>
    %104 = vector.broadcast %103 : vector<8x1xf32> to vector<8x8xf32>
    %105 = arith.mulf %100, %104 : vector<8x8xf32>
    %cst_41 = arith.constant dense<0.000000e+00> : vector<8x16xf32>
    %106 = tpu.matmul %105, %90, %cst_41 {dimension_numbers = #tpu.dot_dimension_numbers<[1], [0], [0], [1], [0, 0, 1, 1], [], []>} : vector<8x8xf32>, vector<8x16xf32>, vector<8x16xf32> -> vector<8x16xf32>
    %107 = arith.truncf %106 : vector<8x16xf32> to vector<8x16xbf16>
    %108 = vector.extract_strided_slice %40 {offsets = [32, 0], sizes = [16, 64], strides = [1, 1]} : vector<64x64xbf16> to vector<16x64xbf16>
    %cst_42 = arith.constant dense<0.000000e+00> : vector<8x64xf32>
    %109 = tpu.matmul %107, %108, %cst_42 {dimension_numbers = #tpu.dot_dimension_numbers<[1], [0], [0], [1], [0, 0, 1, 1], [], []>} : vector<8x16xbf16>, vector<16x64xbf16>, vector<8x64xf32> -> vector<8x64xf32>
    %110 = arith.addf %87, %109 : vector<8x64xf32>
    %111 = vector.extract_strided_slice %36 {offsets = [0, 48], sizes = [8, 16], strides = [1, 1]} : vector<8x192xf32> to vector<8x16xf32>
    %112 = vector.extract_strided_slice %36 {offsets = [0, 112], sizes = [8, 16], strides = [1, 1]} : vector<8x192xf32> to vector<8x16xf32>
    %113 = vector.extract_strided_slice %36 {offsets = [0, 176], sizes = [8, 16], strides = [1, 1]} : vector<8x192xf32> to vector<8x16xf32>
    %cst_43 = arith.constant dense<0.000000e+00> : vector<8x8xf32>
    %114 = tpu.matmul %111, %112, %cst_43 {dimension_numbers = #tpu.dot_dimension_numbers<[1], [1], [0], [0], [0, 0, 1, 0], [], []>} : vector<8x16xf32>, vector<8x16xf32>, vector<8x8xf32> -> vector<8x8xf32>
    %cst_44 = arith.constant 2.500000e-01 : f32
    %115 = vector.broadcast %cst_44 : f32 to vector<8x8xf32>
    %116 = arith.mulf %114, %115 : vector<8x8xf32>
    %cst_45 = arith.constant 0xFF800000 : f32
    %117 = vector.broadcast %cst_45 : f32 to vector<8x8xf32>
    %118 = arith.select %39, %116, %117 : vector<8x8xi1>, vector<8x8xf32>
    %cst_46 = arith.constant dense<0xFF800000> : vector<8xf32>
    %119 = vector.multi_reduction <maximumf>, %118, %cst_46 [1] : vector<8x8xf32> to vector<8xf32>
    %120 = vector.shape_cast %119 : vector<8xf32> to vector<8x1xf32>
    %121 = vector.broadcast %120 : vector<8x1xf32> to vector<8x8xf32>
    %122 = arith.subf %118, %121 : vector<8x8xf32>
    %123 = math.exp %122 : vector<8x8xf32>
    %cst_47 = arith.constant dense<0.000000e+00> : vector<8xf32>
    %124 = vector.multi_reduction <add>, %123, %cst_47 [1] : vector<8x8xf32> to vector<8xf32>
    %125 = vector.shape_cast %124 : vector<8xf32> to vector<8x1xf32>
    %126 = tpu.reciprocal %125 {approx = true} : vector<8x1xf32> -> vector<8x1xf32>
    %127 = vector.broadcast %126 : vector<8x1xf32> to vector<8x8xf32>
    %128 = arith.mulf %123, %127 : vector<8x8xf32>
    %cst_48 = arith.constant dense<0.000000e+00> : vector<8x16xf32>
    %129 = tpu.matmul %128, %113, %cst_48 {dimension_numbers = #tpu.dot_dimension_numbers<[1], [0], [0], [1], [0, 0, 1, 1], [], []>} : vector<8x8xf32>, vector<8x16xf32>, vector<8x16xf32> -> vector<8x16xf32>
    %130 = arith.truncf %129 : vector<8x16xf32> to vector<8x16xbf16>
    %131 = vector.extract_strided_slice %40 {offsets = [48, 0], sizes = [16, 64], strides = [1, 1]} : vector<64x64xbf16> to vector<16x64xbf16>
    %cst_49 = arith.constant dense<0.000000e+00> : vector<8x64xf32>
    %132 = tpu.matmul %130, %131, %cst_49 {dimension_numbers = #tpu.dot_dimension_numbers<[1], [0], [0], [1], [0, 0, 1, 1], [], []>} : vector<8x16xbf16>, vector<16x64xbf16>, vector<8x64xf32> -> vector<8x64xf32>
    %133 = arith.addf %110, %132 : vector<8x64xf32>
    %134 = arith.addf %9, %133 : vector<8x64xf32>
    %c0_50 = arith.constant 0 : index
    %c0_51 = arith.constant 0 : index
    %135 = vector.load %arg8[%c0_50, %c0_51] : memref<1x64xf32, #tpu.memory_space<vmem>>, vector<1x64xf32>
    %136 = vector.broadcast %135 : vector<1x64xf32> to vector<8x64xf32>
    %137 = arith.addf %134, %136 : vector<8x64xf32>
    %c0_52 = arith.constant 0 : index
    %c0_53 = arith.constant 0 : index
    %138 = vector.load %arg9[%c0_52, %c0_53] : memref<1x64xf32, #tpu.memory_space<vmem>>, vector<1x64xf32>
    %c0_54 = arith.constant 0 : index
    %c0_55 = arith.constant 0 : index
    %139 = vector.load %arg10[%c0_54, %c0_55] : memref<1x64xf32, #tpu.memory_space<vmem>>, vector<1x64xf32>
    %cst_56 = arith.constant dense<0.000000e+00> : vector<8xf32>
    %140 = vector.multi_reduction <add>, %137, %cst_56 [1] : vector<8x64xf32> to vector<8xf32>
    %141 = vector.shape_cast %140 : vector<8xf32> to vector<8x1xf32>
    %cst_57 = arith.constant 6.400000e+01 : f32
    %142 = vector.broadcast %cst_57 : f32 to vector<8x1xf32>
    %143 = arith.divf %141, %142 : vector<8x1xf32>
    %144 = vector.broadcast %143 : vector<8x1xf32> to vector<8x64xf32>
    %145 = arith.subf %137, %144 : vector<8x64xf32>
    %146 = arith.mulf %145, %145 : vector<8x64xf32>
    %cst_58 = arith.constant dense<0.000000e+00> : vector<8xf32>
    %147 = vector.multi_reduction <add>, %146, %cst_58 [1] : vector<8x64xf32> to vector<8xf32>
    %148 = vector.shape_cast %147 : vector<8xf32> to vector<8x1xf32>
    %cst_59 = arith.constant 6.400000e+01 : f32
    %149 = vector.broadcast %cst_59 : f32 to vector<8x1xf32>
    %150 = arith.divf %148, %149 : vector<8x1xf32>
    %151 = vector.broadcast %143 : vector<8x1xf32> to vector<8x64xf32>
    %152 = arith.subf %137, %151 : vector<8x64xf32>
    %cst_60 = arith.constant 9.99999974E-6 : f32
    %153 = vector.broadcast %cst_60 : f32 to vector<8x1xf32>
    %154 = arith.addf %150, %153 : vector<8x1xf32>
    %155 = math.rsqrt %154 : vector<8x1xf32>
    %156 = vector.broadcast %155 : vector<8x1xf32> to vector<8x64xf32>
    %157 = arith.mulf %152, %156 : vector<8x64xf32>
    %158 = vector.broadcast %138 : vector<1x64xf32> to vector<8x64xf32>
    %159 = arith.mulf %157, %158 : vector<8x64xf32>
    %160 = vector.broadcast %139 : vector<1x64xf32> to vector<8x64xf32>
    %161 = arith.addf %159, %160 : vector<8x64xf32>
    %162 = arith.truncf %161 : vector<8x64xf32> to vector<8x64xbf16>
    %c0_61 = arith.constant 0 : index
    %c0_62 = arith.constant 0 : index
    %163 = vector.load %arg11[%c0_61, %c0_62] : memref<64x256xbf16, #tpu.memory_space<vmem>>, vector<64x256xbf16>
    %cst_63 = arith.constant dense<0.000000e+00> : vector<8x256xf32>
    %164 = tpu.matmul %162, %163, %cst_63 {dimension_numbers = #tpu.dot_dimension_numbers<[1], [0], [0], [1], [0, 0, 1, 1], [], []>} : vector<8x64xbf16>, vector<64x256xbf16>, vector<8x256xf32> -> vector<8x256xf32>
    %c0_64 = arith.constant 0 : index
    %c0_65 = arith.constant 0 : index
    %165 = vector.load %arg12[%c0_64, %c0_65] : memref<1x256xf32, #tpu.memory_space<vmem>>, vector<1x256xf32>
    %166 = vector.broadcast %165 : vector<1x256xf32> to vector<8x256xf32>
    %167 = arith.addf %164, %166 : vector<8x256xf32>
    %cst_66 = arith.constant 0.000000e+00 : f32
    %168 = vector.broadcast %cst_66 : f32 to vector<8x256xf32>
    %169 = arith.maximumf %167, %168 : vector<8x256xf32>
    %170 = arith.truncf %169 : vector<8x256xf32> to vector<8x256xbf16>
    %c0_67 = arith.constant 0 : index
    %c0_68 = arith.constant 0 : index
    %171 = vector.load %arg13[%c0_67, %c0_68] : memref<256x64xbf16, #tpu.memory_space<vmem>>, vector<256x64xbf16>
    %cst_69 = arith.constant dense<0.000000e+00> : vector<8x64xf32>
    %172 = tpu.matmul %170, %171, %cst_69 {dimension_numbers = #tpu.dot_dimension_numbers<[1], [0], [0], [1], [0, 0, 1, 1], [], []>} : vector<8x256xbf16>, vector<256x64xbf16>, vector<8x64xf32> -> vector<8x64xf32>
    %c0_70 = arith.constant 0 : index
    %c0_71 = arith.constant 0 : index
    %173 = vector.load %arg14[%c0_70, %c0_71] : memref<1x64xf32, #tpu.memory_space<vmem>>, vector<1x64xf32>
    %174 = vector.broadcast %173 : vector<1x64xf32> to vector<8x64xf32>
    %175 = arith.addf %172, %174 : vector<8x64xf32>
    %176 = arith.addf %137, %175 : vector<8x64xf32>
    %c0_72 = arith.constant 0 : index
    %c0_73 = arith.constant 0 : index
    %c0_74 = arith.constant 0 : index
    %177 = vector.load %arg15[%c0_72, %c0_73, %c0_74] : memref<1x8x64xf32, #tpu.memory_space<vmem>>, vector<1x8x64xf32>
    %178 = vector.shape_cast %177 : vector<1x8x64xf32> to vector<8x64xf32>
    %179 = vector.shape_cast %176 : vector<8x64xf32> to vector<1x8x64xf32>
    tpu.vector_store %arg15[%c0_72, %c0_73, %c0_74], %179 {strides = array<i32>} : memref<1x8x64xf32, #tpu.memory_space<vmem>>, vector<1x8x64xf32>,
    return
  }
  func.func @transform_0(%arg0: i32) -> (i32, i32, i32) {
    %c0_i32 = arith.constant 0 : i32
    %c0_i32_0 = arith.constant 0 : i32
    %c0_i32_1 = arith.constant 0 : i32
    return %arg0, %c0_i32, %c0_i32_0 : i32, i32, i32
  }
  func.func @transform_1(%arg0: i32) -> (i32, i32) {
    %c0_i32 = arith.constant 0 : i32
    %c0_i32_0 = arith.constant 0 : i32
    %c0_i32_1 = arith.constant 0 : i32
    return %c0_i32, %c0_i32_0 : i32, i32
  }
  func.func @transform_2(%arg0: i32) -> (i32, i32) {
    %c0_i32 = arith.constant 0 : i32
    %c0_i32_0 = arith.constant 0 : i32
    %c0_i32_1 = arith.constant 0 : i32
    return %c0_i32, %c0_i32_0 : i32, i32
  }
  func.func @transform_3(%arg0: i32) -> (i32, i32) {
    %c0_i32 = arith.constant 0 : i32
    %c0_i32_0 = arith.constant 0 : i32
    %c0_i32_1 = arith.constant 0 : i32
    return %c0_i32, %c0_i32_0 : i32, i32
  }
  func.func @transform_4(%arg0: i32) -> (i32, i32) {
    %c0_i32 = arith.constant 0 : i32
    %c0_i32_0 = arith.constant 0 : i32
    %c0_i32_1 = arith.constant 0 : i32
    return %c0_i32, %c0_i32_0 : i32, i32
  }
  func.func @transform_5(%arg0: i32) -> (i32, i32) {
    %c0_i32 = arith.constant 0 : i32
    %c0_i32_0 = arith.constant 0 : i32
    %c0_i32_1 = arith.constant 0 : i32
    return %c0_i32, %c0_i32_0 : i32, i32
  }
  func.func @transform_6(%arg0: i32) -> (i32, i32) {
    %c0_i32 = arith.constant 0 : i32
    %c0_i32_0 = arith.constant 0 : i32
    %c0_i32_1 = arith.constant 0 : i32
    return %c0_i32, %c0_i32_0 : i32, i32
  }
  func.func @transform_7(%arg0: i32) -> (i32, i32) {
    %c0_i32 = arith.constant 0 : i32
    %c0_i32_0 = arith.constant 0 : i32
    %c0_i32_1 = arith.constant 0 : i32
    return %c0_i32, %c0_i32_0 : i32, i32
  }
  func.func @transform_8(%arg0: i32) -> (i32, i32) {
    %c0_i32 = arith.constant 0 : i32
    %c0_i32_0 = arith.constant 0 : i32
    %c0_i32_1 = arith.constant 0 : i32
    return %c0_i32, %c0_i32_0 : i32, i32
  }
  func.func @transform_9(%arg0: i32) -> (i32, i32) {
    %c0_i32 = arith.constant 0 : i32
    %c0_i32_0 = arith.constant 0 : i32
    %c0_i32_1 = arith.constant 0 : i32
    return %c0_i32, %c0_i32_0 : i32, i32
  }
  func.func @transform_10(%arg0: i32) -> (i32, i32) {
    %c0_i32 = arith.constant 0 : i32
    %c0_i32_0 = arith.constant 0 : i32
    %c0_i32_1 = arith.constant 0 : i32
    return %c0_i32, %c0_i32_0 : i32, i32
  }
  func.func @transform_11(%arg0: i32) -> (i32, i32) {
    %c0_i32 = arith.constant 0 : i32
    %c0_i32_0 = arith.constant 0 : i32
    %c0_i32_1 = arith.constant 0 : i32
    return %c0_i32, %c0_i32_0 : i32, i32
  }
  func.func @transform_12(%arg0: i32) -> (i32, i32) {
    %c0_i32 = arith.constant 0 : i32
    %c0_i32_0 = arith.constant 0 : i32
    %c0_i32_1 = arith.constant 0 : i32
    return %c0_i32, %c0_i32_0 : i32, i32
  }
  func.func @transform_13(%arg0: i32) -> (i32, i32) {
    %c0_i32 = arith.constant 0 : i32
    %c0_i32_0 = arith.constant 0 : i32
    %c0_i32_1 = arith.constant 0 : i32
    return %c0_i32, %c0_i32_0 : i32, i32
  }
  func.func @transform_14(%arg0: i32) -> (i32, i32, i32) {
    %c0_i32 = arith.constant 0 : i32
    %c0_i32_0 = arith.constant 0 : i32
    %c0_i32_1 = arith.constant 0 : i32
    return %arg0, %c0_i32, %c0_i32_0 : i32, i32, i32
  }
}

module attributes {stable_mosaic.version = 11 : i64} {
  func.func @_final_linear_kernel(%arg0: i32, %arg1: memref<1x8x64xf32, #tpu.memory_space<vmem>>, %arg2: memref<64x128xbf16, #tpu.memory_space<vmem>>, %arg3: memref<1x128xf32, #tpu.memory_space<vmem>>, %arg4: memref<1x8x128xf32, #tpu.memory_space<vmem>>) attributes {dimension_semantics = [#tpu.dimension_semantics<parallel>], iteration_bounds = array<i64: 2>, scalar_prefetch = 0 : i64, scratch_operands = 0 : i64, tpu.core_type = #tpu.core_type<tc>, window_params = [{transform_indices = @transform_0, window_bounds = array<i64: 1, 8, 64>}, {pipeline_mode = #tpu.pipeline_mode<synchronous>, transform_indices = @transform_1, window_bounds = array<i64: 64, 128>}, {pipeline_mode = #tpu.pipeline_mode<synchronous>, transform_indices = @transform_2, window_bounds = array<i64: 1, 128>}, {transform_indices = @transform_3, window_bounds = array<i64: 1, 8, 128>}]} {
    %c0 = arith.constant 0 : index
    %c0_0 = arith.constant 0 : index
    %c0_1 = arith.constant 0 : index
    %0 = vector.load %arg1[%c0, %c0_0, %c0_1] : memref<1x8x64xf32, #tpu.memory_space<vmem>>, vector<1x8x64xf32>
    %1 = vector.shape_cast %0 : vector<1x8x64xf32> to vector<8x64xf32>
    %2 = arith.truncf %1 : vector<8x64xf32> to vector<8x64xbf16>
    %c0_2 = arith.constant 0 : index
    %c0_3 = arith.constant 0 : index
    %3 = vector.load %arg2[%c0_2, %c0_3] : memref<64x128xbf16, #tpu.memory_space<vmem>>, vector<64x128xbf16>
    %cst = arith.constant dense<0.000000e+00> : vector<8x128xf32>
    %4 = tpu.matmul %2, %3, %cst {dimension_numbers = #tpu.dot_dimension_numbers<[1], [0], [0], [1], [0, 0, 1, 1], [], []>} : vector<8x64xbf16>, vector<64x128xbf16>, vector<8x128xf32> -> vector<8x128xf32>
    %c0_4 = arith.constant 0 : index
    %c0_5 = arith.constant 0 : index
    %5 = vector.load %arg3[%c0_4, %c0_5] : memref<1x128xf32, #tpu.memory_space<vmem>>, vector<1x128xf32>
    %6 = vector.broadcast %5 : vector<1x128xf32> to vector<8x128xf32>
    %7 = arith.addf %4, %6 : vector<8x128xf32>
    %c0_6 = arith.constant 0 : index
    %c0_7 = arith.constant 0 : index
    %c0_8 = arith.constant 0 : index
    %8 = vector.load %arg4[%c0_6, %c0_7, %c0_8] : memref<1x8x128xf32, #tpu.memory_space<vmem>>, vector<1x8x128xf32>
    %9 = vector.shape_cast %8 : vector<1x8x128xf32> to vector<8x128xf32>
    %10 = vector.shape_cast %7 : vector<8x128xf32> to vector<1x8x128xf32>
    tpu.vector_store %arg4[%c0_6, %c0_7, %c0_8], %10 {strides = array<i32>} : memref<1x8x128xf32, #tpu.memory_space<vmem>>, vector<1x8x128xf32>,
    return
  }
  func.func @transform_0(%arg0: i32) -> (i32, i32, i32) {
    %c0_i32 = arith.constant 0 : i32
    %c0_i32_0 = arith.constant 0 : i32
    %c0_i32_1 = arith.constant 0 : i32
    return %arg0, %c0_i32, %c0_i32_0 : i32, i32, i32
  }
  func.func @transform_1(%arg0: i32) -> (i32, i32) {
    %c0_i32 = arith.constant 0 : i32
    %c0_i32_0 = arith.constant 0 : i32
    %c0_i32_1 = arith.constant 0 : i32
    return %c0_i32, %c0_i32_0 : i32, i32
  }
  func.func @transform_2(%arg0: i32) -> (i32, i32) {
    %c0_i32 = arith.constant 0 : i32
    %c0_i32_0 = arith.constant 0 : i32
    %c0_i32_1 = arith.constant 0 : i32
    return %c0_i32, %c0_i32_0 : i32, i32
  }
  func.func @transform_3(%arg0: i32) -> (i32, i32, i32) {
    %c0_i32 = arith.constant 0 : i32
    %c0_i32_0 = arith.constant 0 : i32
    %c0_i32_1 = arith.constant 0 : i32
    return %arg0, %c0_i32, %c0_i32_0 : i32, i32, i32
  }
}

module attributes {stable_mosaic.version = 11 : i64} {
  func.func @_fused_block_kernel(%arg0: i32, %arg1: memref<1x8x32xf32, #tpu.memory_space<vmem>>, %arg2: memref<32x256xbf16, #tpu.memory_space<vmem>>, %arg3: memref<1x256xf32, #tpu.memory_space<vmem>>, %arg4: memref<1x256xf32, #tpu.memory_space<vmem>>, %arg5: memref<1x256xf32, #tpu.memory_space<vmem>>, %arg6: memref<256x768xbf16, #tpu.memory_space<vmem>>, %arg7: memref<256x256xbf16, #tpu.memory_space<vmem>>, %arg8: memref<1x256xf32, #tpu.memory_space<vmem>>, %arg9: memref<1x256xf32, #tpu.memory_space<vmem>>, %arg10: memref<1x256xf32, #tpu.memory_space<vmem>>, %arg11: memref<256x1024xbf16, #tpu.memory_space<vmem>>, %arg12: memref<1x1024xf32, #tpu.memory_space<vmem>>, %arg13: memref<1024x256xbf16, #tpu.memory_space<vmem>>, %arg14: memref<1x256xf32, #tpu.memory_space<vmem>>, %arg15: memref<1x8x256xf32, #tpu.memory_space<vmem>>) attributes {dimension_semantics = [#tpu.dimension_semantics<parallel>], iteration_bounds = array<i64: 2>, scalar_prefetch = 0 : i64, scratch_operands = 0 : i64, tpu.core_type = #tpu.core_type<tc>, window_params = [{transform_indices = @transform_0, window_bounds = array<i64: 1, 8, 32>}, {pipeline_mode = #tpu.pipeline_mode<synchronous>, transform_indices = @transform_1, window_bounds = array<i64: 32, 256>}, {pipeline_mode = #tpu.pipeline_mode<synchronous>, transform_indices = @transform_2, window_bounds = array<i64: 1, 256>}, {pipeline_mode = #tpu.pipeline_mode<synchronous>, transform_indices = @transform_3, window_bounds = array<i64: 1, 256>}, {pipeline_mode = #tpu.pipeline_mode<synchronous>, transform_indices = @transform_4, window_bounds = array<i64: 1, 256>}, {pipeline_mode = #tpu.pipeline_mode<synchronous>, transform_indices = @transform_5, window_bounds = array<i64: 256, 768>}, {pipeline_mode = #tpu.pipeline_mode<synchronous>, transform_indices = @transform_6, window_bounds = array<i64: 256, 256>}, {pipeline_mode = #tpu.pipeline_mode<synchronous>, transform_indices = @transform_7, window_bounds = array<i64: 1, 256>}, {pipeline_mode = #tpu.pipeline_mode<synchronous>, transform_indices = @transform_8, window_bounds = array<i64: 1, 256>}, {pipeline_mode = #tpu.pipeline_mode<synchronous>, transform_indices = @transform_9, window_bounds = array<i64: 1, 256>}, {pipeline_mode = #tpu.pipeline_mode<synchronous>, transform_indices = @transform_10, window_bounds = array<i64: 256, 1024>}, {pipeline_mode = #tpu.pipeline_mode<synchronous>, transform_indices = @transform_11, window_bounds = array<i64: 1, 1024>}, {pipeline_mode = #tpu.pipeline_mode<synchronous>, transform_indices = @transform_12, window_bounds = array<i64: 1024, 256>}, {pipeline_mode = #tpu.pipeline_mode<synchronous>, transform_indices = @transform_13, window_bounds = array<i64: 1, 256>}, {transform_indices = @transform_14, window_bounds = array<i64: 1, 8, 256>}]} {
    %c0 = arith.constant 0 : index
    %c0_0 = arith.constant 0 : index
    %c0_1 = arith.constant 0 : index
    %0 = vector.load %arg1[%c0, %c0_0, %c0_1] : memref<1x8x32xf32, #tpu.memory_space<vmem>>, vector<1x8x32xf32>
    %1 = vector.shape_cast %0 : vector<1x8x32xf32> to vector<8x32xf32>
    %2 = arith.truncf %1 : vector<8x32xf32> to vector<8x32xbf16>
    %c0_2 = arith.constant 0 : index
    %c0_3 = arith.constant 0 : index
    %3 = vector.load %arg2[%c0_2, %c0_3] : memref<32x256xbf16, #tpu.memory_space<vmem>>, vector<32x256xbf16>
    %cst = arith.constant dense<0.000000e+00> : vector<8x256xf32>
    %4 = tpu.matmul %2, %3, %cst {dimension_numbers = #tpu.dot_dimension_numbers<[1], [0], [0], [1], [0, 0, 1, 1], [], []>} : vector<8x32xbf16>, vector<32x256xbf16>, vector<8x256xf32> -> vector<8x256xf32>
    %c0_4 = arith.constant 0 : index
    %c0_5 = arith.constant 0 : index
    %5 = vector.load %arg3[%c0_4, %c0_5] : memref<1x256xf32, #tpu.memory_space<vmem>>, vector<1x256xf32>
    %6 = vector.broadcast %5 : vector<1x256xf32> to vector<8x256xf32>
    %7 = arith.addf %4, %6 : vector<8x256xf32>
    %cst_6 = arith.constant 0.000000e+00 : f32
    %8 = vector.broadcast %cst_6 : f32 to vector<8x256xf32>
    %9 = arith.maximumf %7, %8 : vector<8x256xf32>
    %c0_7 = arith.constant 0 : index
    %c0_8 = arith.constant 0 : index
    %10 = vector.load %arg4[%c0_7, %c0_8] : memref<1x256xf32, #tpu.memory_space<vmem>>, vector<1x256xf32>
    %c0_9 = arith.constant 0 : index
    %c0_10 = arith.constant 0 : index
    %11 = vector.load %arg5[%c0_9, %c0_10] : memref<1x256xf32, #tpu.memory_space<vmem>>, vector<1x256xf32>
    %cst_11 = arith.constant dense<0.000000e+00> : vector<8xf32>
    %12 = vector.multi_reduction <add>, %9, %cst_11 [1] : vector<8x256xf32> to vector<8xf32>
    %13 = vector.shape_cast %12 : vector<8xf32> to vector<8x1xf32>
    %cst_12 = arith.constant 2.560000e+02 : f32
    %14 = vector.broadcast %cst_12 : f32 to vector<8x1xf32>
    %15 = arith.divf %13, %14 : vector<8x1xf32>
    %16 = vector.broadcast %15 : vector<8x1xf32> to vector<8x256xf32>
    %17 = arith.subf %9, %16 : vector<8x256xf32>
    %18 = arith.mulf %17, %17 : vector<8x256xf32>
    %cst_13 = arith.constant dense<0.000000e+00> : vector<8xf32>
    %19 = vector.multi_reduction <add>, %18, %cst_13 [1] : vector<8x256xf32> to vector<8xf32>
    %20 = vector.shape_cast %19 : vector<8xf32> to vector<8x1xf32>
    %cst_14 = arith.constant 2.560000e+02 : f32
    %21 = vector.broadcast %cst_14 : f32 to vector<8x1xf32>
    %22 = arith.divf %20, %21 : vector<8x1xf32>
    %23 = vector.broadcast %15 : vector<8x1xf32> to vector<8x256xf32>
    %24 = arith.subf %9, %23 : vector<8x256xf32>
    %cst_15 = arith.constant 9.99999974E-6 : f32
    %25 = vector.broadcast %cst_15 : f32 to vector<8x1xf32>
    %26 = arith.addf %22, %25 : vector<8x1xf32>
    %27 = math.rsqrt %26 : vector<8x1xf32>
    %28 = vector.broadcast %27 : vector<8x1xf32> to vector<8x256xf32>
    %29 = arith.mulf %24, %28 : vector<8x256xf32>
    %30 = vector.broadcast %10 : vector<1x256xf32> to vector<8x256xf32>
    %31 = arith.mulf %29, %30 : vector<8x256xf32>
    %32 = vector.broadcast %11 : vector<1x256xf32> to vector<8x256xf32>
    %33 = arith.addf %31, %32 : vector<8x256xf32>
    %34 = arith.truncf %33 : vector<8x256xf32> to vector<8x256xbf16>
    %c0_16 = arith.constant 0 : index
    %c0_17 = arith.constant 0 : index
    %35 = vector.load %arg6[%c0_16, %c0_17] : memref<256x768xbf16, #tpu.memory_space<vmem>>, vector<256x768xbf16>
    %cst_18 = arith.constant dense<0.000000e+00> : vector<8x768xf32>
    %36 = tpu.matmul %34, %35, %cst_18 {dimension_numbers = #tpu.dot_dimension_numbers<[1], [0], [0], [1], [0, 0, 1, 1], [], []>} : vector<8x256xbf16>, vector<256x768xbf16>, vector<8x768xf32> -> vector<8x768xf32>
    %37 = tpu.iota {dimensions = array<i32: 0>} : vector<8x8xi32>
    %38 = tpu.iota {dimensions = array<i32: 1>} : vector<8x8xi32>
    %39 = arith.cmpi sle, %38, %37 : vector<8x8xi32>
    %c0_19 = arith.constant 0 : index
    %c0_20 = arith.constant 0 : index
    %40 = vector.load %arg7[%c0_19, %c0_20] : memref<256x256xbf16, #tpu.memory_space<vmem>>, vector<256x256xbf16>
    %cst_21 = arith.constant 0.000000e+00 : f32
    %41 = vector.broadcast %cst_21 : f32 to vector<8x256xf32>
    %42 = vector.extract_strided_slice %36 {offsets = [0, 0], sizes = [8, 64], strides = [1, 1]} : vector<8x768xf32> to vector<8x64xf32>
    %43 = vector.extract_strided_slice %36 {offsets = [0, 256], sizes = [8, 64], strides = [1, 1]} : vector<8x768xf32> to vector<8x64xf32>
    %44 = vector.extract_strided_slice %36 {offsets = [0, 512], sizes = [8, 64], strides = [1, 1]} : vector<8x768xf32> to vector<8x64xf32>
    %cst_22 = arith.constant dense<0.000000e+00> : vector<8x8xf32>
    %45 = tpu.matmul %42, %43, %cst_22 {dimension_numbers = #tpu.dot_dimension_numbers<[1], [1], [0], [0], [0, 0, 1, 0], [], []>} : vector<8x64xf32>, vector<8x64xf32>, vector<8x8xf32> -> vector<8x8xf32>
    %cst_23 = arith.constant 1.250000e-01 : f32
    %46 = vector.broadcast %cst_23 : f32 to vector<8x8xf32>
    %47 = arith.mulf %45, %46 : vector<8x8xf32>
    %cst_24 = arith.constant 0xFF800000 : f32
    %48 = vector.broadcast %cst_24 : f32 to vector<8x8xf32>
    %49 = arith.select %39, %47, %48 : vector<8x8xi1>, vector<8x8xf32>
    %cst_25 = arith.constant dense<0xFF800000> : vector<8xf32>
    %50 = vector.multi_reduction <maximumf>, %49, %cst_25 [1] : vector<8x8xf32> to vector<8xf32>
    %51 = vector.shape_cast %50 : vector<8xf32> to vector<8x1xf32>
    %52 = vector.broadcast %51 : vector<8x1xf32> to vector<8x8xf32>
    %53 = arith.subf %49, %52 : vector<8x8xf32>
    %54 = math.exp %53 : vector<8x8xf32>
    %cst_26 = arith.constant dense<0.000000e+00> : vector<8xf32>
    %55 = vector.multi_reduction <add>, %54, %cst_26 [1] : vector<8x8xf32> to vector<8xf32>
    %56 = vector.shape_cast %55 : vector<8xf32> to vector<8x1xf32>
    %57 = tpu.reciprocal %56 {approx = true} : vector<8x1xf32> -> vector<8x1xf32>
    %58 = vector.broadcast %57 : vector<8x1xf32> to vector<8x8xf32>
    %59 = arith.mulf %54, %58 : vector<8x8xf32>
    %cst_27 = arith.constant dense<0.000000e+00> : vector<8x64xf32>
    %60 = tpu.matmul %59, %44, %cst_27 {dimension_numbers = #tpu.dot_dimension_numbers<[1], [0], [0], [1], [0, 0, 1, 1], [], []>} : vector<8x8xf32>, vector<8x64xf32>, vector<8x64xf32> -> vector<8x64xf32>
    %61 = arith.truncf %60 : vector<8x64xf32> to vector<8x64xbf16>
    %62 = vector.extract_strided_slice %40 {offsets = [0, 0], sizes = [64, 256], strides = [1, 1]} : vector<256x256xbf16> to vector<64x256xbf16>
    %cst_28 = arith.constant dense<0.000000e+00> : vector<8x256xf32>
    %63 = tpu.matmul %61, %62, %cst_28 {dimension_numbers = #tpu.dot_dimension_numbers<[1], [0], [0], [1], [0, 0, 1, 1], [], []>} : vector<8x64xbf16>, vector<64x256xbf16>, vector<8x256xf32> -> vector<8x256xf32>
    %64 = arith.addf %41, %63 : vector<8x256xf32>
    %65 = vector.extract_strided_slice %36 {offsets = [0, 64], sizes = [8, 64], strides = [1, 1]} : vector<8x768xf32> to vector<8x64xf32>
    %66 = vector.extract_strided_slice %36 {offsets = [0, 320], sizes = [8, 64], strides = [1, 1]} : vector<8x768xf32> to vector<8x64xf32>
    %67 = vector.extract_strided_slice %36 {offsets = [0, 576], sizes = [8, 64], strides = [1, 1]} : vector<8x768xf32> to vector<8x64xf32>
    %cst_29 = arith.constant dense<0.000000e+00> : vector<8x8xf32>
    %68 = tpu.matmul %65, %66, %cst_29 {dimension_numbers = #tpu.dot_dimension_numbers<[1], [1], [0], [0], [0, 0, 1, 0], [], []>} : vector<8x64xf32>, vector<8x64xf32>, vector<8x8xf32> -> vector<8x8xf32>
    %cst_30 = arith.constant 1.250000e-01 : f32
    %69 = vector.broadcast %cst_30 : f32 to vector<8x8xf32>
    %70 = arith.mulf %68, %69 : vector<8x8xf32>
    %cst_31 = arith.constant 0xFF800000 : f32
    %71 = vector.broadcast %cst_31 : f32 to vector<8x8xf32>
    %72 = arith.select %39, %70, %71 : vector<8x8xi1>, vector<8x8xf32>
    %cst_32 = arith.constant dense<0xFF800000> : vector<8xf32>
    %73 = vector.multi_reduction <maximumf>, %72, %cst_32 [1] : vector<8x8xf32> to vector<8xf32>
    %74 = vector.shape_cast %73 : vector<8xf32> to vector<8x1xf32>
    %75 = vector.broadcast %74 : vector<8x1xf32> to vector<8x8xf32>
    %76 = arith.subf %72, %75 : vector<8x8xf32>
    %77 = math.exp %76 : vector<8x8xf32>
    %cst_33 = arith.constant dense<0.000000e+00> : vector<8xf32>
    %78 = vector.multi_reduction <add>, %77, %cst_33 [1] : vector<8x8xf32> to vector<8xf32>
    %79 = vector.shape_cast %78 : vector<8xf32> to vector<8x1xf32>
    %80 = tpu.reciprocal %79 {approx = true} : vector<8x1xf32> -> vector<8x1xf32>
    %81 = vector.broadcast %80 : vector<8x1xf32> to vector<8x8xf32>
    %82 = arith.mulf %77, %81 : vector<8x8xf32>
    %cst_34 = arith.constant dense<0.000000e+00> : vector<8x64xf32>
    %83 = tpu.matmul %82, %67, %cst_34 {dimension_numbers = #tpu.dot_dimension_numbers<[1], [0], [0], [1], [0, 0, 1, 1], [], []>} : vector<8x8xf32>, vector<8x64xf32>, vector<8x64xf32> -> vector<8x64xf32>
    %84 = arith.truncf %83 : vector<8x64xf32> to vector<8x64xbf16>
    %85 = vector.extract_strided_slice %40 {offsets = [64, 0], sizes = [64, 256], strides = [1, 1]} : vector<256x256xbf16> to vector<64x256xbf16>
    %cst_35 = arith.constant dense<0.000000e+00> : vector<8x256xf32>
    %86 = tpu.matmul %84, %85, %cst_35 {dimension_numbers = #tpu.dot_dimension_numbers<[1], [0], [0], [1], [0, 0, 1, 1], [], []>} : vector<8x64xbf16>, vector<64x256xbf16>, vector<8x256xf32> -> vector<8x256xf32>
    %87 = arith.addf %64, %86 : vector<8x256xf32>
    %88 = vector.extract_strided_slice %36 {offsets = [0, 128], sizes = [8, 64], strides = [1, 1]} : vector<8x768xf32> to vector<8x64xf32>
    %89 = vector.extract_strided_slice %36 {offsets = [0, 384], sizes = [8, 64], strides = [1, 1]} : vector<8x768xf32> to vector<8x64xf32>
    %90 = vector.extract_strided_slice %36 {offsets = [0, 640], sizes = [8, 64], strides = [1, 1]} : vector<8x768xf32> to vector<8x64xf32>
    %cst_36 = arith.constant dense<0.000000e+00> : vector<8x8xf32>
    %91 = tpu.matmul %88, %89, %cst_36 {dimension_numbers = #tpu.dot_dimension_numbers<[1], [1], [0], [0], [0, 0, 1, 0], [], []>} : vector<8x64xf32>, vector<8x64xf32>, vector<8x8xf32> -> vector<8x8xf32>
    %cst_37 = arith.constant 1.250000e-01 : f32
    %92 = vector.broadcast %cst_37 : f32 to vector<8x8xf32>
    %93 = arith.mulf %91, %92 : vector<8x8xf32>
    %cst_38 = arith.constant 0xFF800000 : f32
    %94 = vector.broadcast %cst_38 : f32 to vector<8x8xf32>
    %95 = arith.select %39, %93, %94 : vector<8x8xi1>, vector<8x8xf32>
    %cst_39 = arith.constant dense<0xFF800000> : vector<8xf32>
    %96 = vector.multi_reduction <maximumf>, %95, %cst_39 [1] : vector<8x8xf32> to vector<8xf32>
    %97 = vector.shape_cast %96 : vector<8xf32> to vector<8x1xf32>
    %98 = vector.broadcast %97 : vector<8x1xf32> to vector<8x8xf32>
    %99 = arith.subf %95, %98 : vector<8x8xf32>
    %100 = math.exp %99 : vector<8x8xf32>
    %cst_40 = arith.constant dense<0.000000e+00> : vector<8xf32>
    %101 = vector.multi_reduction <add>, %100, %cst_40 [1] : vector<8x8xf32> to vector<8xf32>
    %102 = vector.shape_cast %101 : vector<8xf32> to vector<8x1xf32>
    %103 = tpu.reciprocal %102 {approx = true} : vector<8x1xf32> -> vector<8x1xf32>
    %104 = vector.broadcast %103 : vector<8x1xf32> to vector<8x8xf32>
    %105 = arith.mulf %100, %104 : vector<8x8xf32>
    %cst_41 = arith.constant dense<0.000000e+00> : vector<8x64xf32>
    %106 = tpu.matmul %105, %90, %cst_41 {dimension_numbers = #tpu.dot_dimension_numbers<[1], [0], [0], [1], [0, 0, 1, 1], [], []>} : vector<8x8xf32>, vector<8x64xf32>, vector<8x64xf32> -> vector<8x64xf32>
    %107 = arith.truncf %106 : vector<8x64xf32> to vector<8x64xbf16>
    %108 = vector.extract_strided_slice %40 {offsets = [128, 0], sizes = [64, 256], strides = [1, 1]} : vector<256x256xbf16> to vector<64x256xbf16>
    %cst_42 = arith.constant dense<0.000000e+00> : vector<8x256xf32>
    %109 = tpu.matmul %107, %108, %cst_42 {dimension_numbers = #tpu.dot_dimension_numbers<[1], [0], [0], [1], [0, 0, 1, 1], [], []>} : vector<8x64xbf16>, vector<64x256xbf16>, vector<8x256xf32> -> vector<8x256xf32>
    %110 = arith.addf %87, %109 : vector<8x256xf32>
    %111 = vector.extract_strided_slice %36 {offsets = [0, 192], sizes = [8, 64], strides = [1, 1]} : vector<8x768xf32> to vector<8x64xf32>
    %112 = vector.extract_strided_slice %36 {offsets = [0, 448], sizes = [8, 64], strides = [1, 1]} : vector<8x768xf32> to vector<8x64xf32>
    %113 = vector.extract_strided_slice %36 {offsets = [0, 704], sizes = [8, 64], strides = [1, 1]} : vector<8x768xf32> to vector<8x64xf32>
    %cst_43 = arith.constant dense<0.000000e+00> : vector<8x8xf32>
    %114 = tpu.matmul %111, %112, %cst_43 {dimension_numbers = #tpu.dot_dimension_numbers<[1], [1], [0], [0], [0, 0, 1, 0], [], []>} : vector<8x64xf32>, vector<8x64xf32>, vector<8x8xf32> -> vector<8x8xf32>
    %cst_44 = arith.constant 1.250000e-01 : f32
    %115 = vector.broadcast %cst_44 : f32 to vector<8x8xf32>
    %116 = arith.mulf %114, %115 : vector<8x8xf32>
    %cst_45 = arith.constant 0xFF800000 : f32
    %117 = vector.broadcast %cst_45 : f32 to vector<8x8xf32>
    %118 = arith.select %39, %116, %117 : vector<8x8xi1>, vector<8x8xf32>
    %cst_46 = arith.constant dense<0xFF800000> : vector<8xf32>
    %119 = vector.multi_reduction <maximumf>, %118, %cst_46 [1] : vector<8x8xf32> to vector<8xf32>
    %120 = vector.shape_cast %119 : vector<8xf32> to vector<8x1xf32>
    %121 = vector.broadcast %120 : vector<8x1xf32> to vector<8x8xf32>
    %122 = arith.subf %118, %121 : vector<8x8xf32>
    %123 = math.exp %122 : vector<8x8xf32>
    %cst_47 = arith.constant dense<0.000000e+00> : vector<8xf32>
    %124 = vector.multi_reduction <add>, %123, %cst_47 [1] : vector<8x8xf32> to vector<8xf32>
    %125 = vector.shape_cast %124 : vector<8xf32> to vector<8x1xf32>
    %126 = tpu.reciprocal %125 {approx = true} : vector<8x1xf32> -> vector<8x1xf32>
    %127 = vector.broadcast %126 : vector<8x1xf32> to vector<8x8xf32>
    %128 = arith.mulf %123, %127 : vector<8x8xf32>
    %cst_48 = arith.constant dense<0.000000e+00> : vector<8x64xf32>
    %129 = tpu.matmul %128, %113, %cst_48 {dimension_numbers = #tpu.dot_dimension_numbers<[1], [0], [0], [1], [0, 0, 1, 1], [], []>} : vector<8x8xf32>, vector<8x64xf32>, vector<8x64xf32> -> vector<8x64xf32>
    %130 = arith.truncf %129 : vector<8x64xf32> to vector<8x64xbf16>
    %131 = vector.extract_strided_slice %40 {offsets = [192, 0], sizes = [64, 256], strides = [1, 1]} : vector<256x256xbf16> to vector<64x256xbf16>
    %cst_49 = arith.constant dense<0.000000e+00> : vector<8x256xf32>
    %132 = tpu.matmul %130, %131, %cst_49 {dimension_numbers = #tpu.dot_dimension_numbers<[1], [0], [0], [1], [0, 0, 1, 1], [], []>} : vector<8x64xbf16>, vector<64x256xbf16>, vector<8x256xf32> -> vector<8x256xf32>
    %133 = arith.addf %110, %132 : vector<8x256xf32>
    %134 = arith.addf %9, %133 : vector<8x256xf32>
    %c0_50 = arith.constant 0 : index
    %c0_51 = arith.constant 0 : index
    %135 = vector.load %arg8[%c0_50, %c0_51] : memref<1x256xf32, #tpu.memory_space<vmem>>, vector<1x256xf32>
    %136 = vector.broadcast %135 : vector<1x256xf32> to vector<8x256xf32>
    %137 = arith.addf %134, %136 : vector<8x256xf32>
    %c0_52 = arith.constant 0 : index
    %c0_53 = arith.constant 0 : index
    %138 = vector.load %arg9[%c0_52, %c0_53] : memref<1x256xf32, #tpu.memory_space<vmem>>, vector<1x256xf32>
    %c0_54 = arith.constant 0 : index
    %c0_55 = arith.constant 0 : index
    %139 = vector.load %arg10[%c0_54, %c0_55] : memref<1x256xf32, #tpu.memory_space<vmem>>, vector<1x256xf32>
    %cst_56 = arith.constant dense<0.000000e+00> : vector<8xf32>
    %140 = vector.multi_reduction <add>, %137, %cst_56 [1] : vector<8x256xf32> to vector<8xf32>
    %141 = vector.shape_cast %140 : vector<8xf32> to vector<8x1xf32>
    %cst_57 = arith.constant 2.560000e+02 : f32
    %142 = vector.broadcast %cst_57 : f32 to vector<8x1xf32>
    %143 = arith.divf %141, %142 : vector<8x1xf32>
    %144 = vector.broadcast %143 : vector<8x1xf32> to vector<8x256xf32>
    %145 = arith.subf %137, %144 : vector<8x256xf32>
    %146 = arith.mulf %145, %145 : vector<8x256xf32>
    %cst_58 = arith.constant dense<0.000000e+00> : vector<8xf32>
    %147 = vector.multi_reduction <add>, %146, %cst_58 [1] : vector<8x256xf32> to vector<8xf32>
    %148 = vector.shape_cast %147 : vector<8xf32> to vector<8x1xf32>
    %cst_59 = arith.constant 2.560000e+02 : f32
    %149 = vector.broadcast %cst_59 : f32 to vector<8x1xf32>
    %150 = arith.divf %148, %149 : vector<8x1xf32>
    %151 = vector.broadcast %143 : vector<8x1xf32> to vector<8x256xf32>
    %152 = arith.subf %137, %151 : vector<8x256xf32>
    %cst_60 = arith.constant 9.99999974E-6 : f32
    %153 = vector.broadcast %cst_60 : f32 to vector<8x1xf32>
    %154 = arith.addf %150, %153 : vector<8x1xf32>
    %155 = math.rsqrt %154 : vector<8x1xf32>
    %156 = vector.broadcast %155 : vector<8x1xf32> to vector<8x256xf32>
    %157 = arith.mulf %152, %156 : vector<8x256xf32>
    %158 = vector.broadcast %138 : vector<1x256xf32> to vector<8x256xf32>
    %159 = arith.mulf %157, %158 : vector<8x256xf32>
    %160 = vector.broadcast %139 : vector<1x256xf32> to vector<8x256xf32>
    %161 = arith.addf %159, %160 : vector<8x256xf32>
    %162 = arith.truncf %161 : vector<8x256xf32> to vector<8x256xbf16>
    %c0_61 = arith.constant 0 : index
    %c0_62 = arith.constant 0 : index
    %163 = vector.load %arg11[%c0_61, %c0_62] : memref<256x1024xbf16, #tpu.memory_space<vmem>>, vector<256x1024xbf16>
    %cst_63 = arith.constant dense<0.000000e+00> : vector<8x1024xf32>
    %164 = tpu.matmul %162, %163, %cst_63 {dimension_numbers = #tpu.dot_dimension_numbers<[1], [0], [0], [1], [0, 0, 1, 1], [], []>} : vector<8x256xbf16>, vector<256x1024xbf16>, vector<8x1024xf32> -> vector<8x1024xf32>
    %c0_64 = arith.constant 0 : index
    %c0_65 = arith.constant 0 : index
    %165 = vector.load %arg12[%c0_64, %c0_65] : memref<1x1024xf32, #tpu.memory_space<vmem>>, vector<1x1024xf32>
    %166 = vector.broadcast %165 : vector<1x1024xf32> to vector<8x1024xf32>
    %167 = arith.addf %164, %166 : vector<8x1024xf32>
    %cst_66 = arith.constant 0.000000e+00 : f32
    %168 = vector.broadcast %cst_66 : f32 to vector<8x1024xf32>
    %169 = arith.maximumf %167, %168 : vector<8x1024xf32>
    %170 = arith.truncf %169 : vector<8x1024xf32> to vector<8x1024xbf16>
    %c0_67 = arith.constant 0 : index
    %c0_68 = arith.constant 0 : index
    %171 = vector.load %arg13[%c0_67, %c0_68] : memref<1024x256xbf16, #tpu.memory_space<vmem>>, vector<1024x256xbf16>
    %cst_69 = arith.constant dense<0.000000e+00> : vector<8x256xf32>
    %172 = tpu.matmul %170, %171, %cst_69 {dimension_numbers = #tpu.dot_dimension_numbers<[1], [0], [0], [1], [0, 0, 1, 1], [], []>} : vector<8x1024xbf16>, vector<1024x256xbf16>, vector<8x256xf32> -> vector<8x256xf32>
    %c0_70 = arith.constant 0 : index
    %c0_71 = arith.constant 0 : index
    %173 = vector.load %arg14[%c0_70, %c0_71] : memref<1x256xf32, #tpu.memory_space<vmem>>, vector<1x256xf32>
    %174 = vector.broadcast %173 : vector<1x256xf32> to vector<8x256xf32>
    %175 = arith.addf %172, %174 : vector<8x256xf32>
    %176 = arith.addf %137, %175 : vector<8x256xf32>
    %c0_72 = arith.constant 0 : index
    %c0_73 = arith.constant 0 : index
    %c0_74 = arith.constant 0 : index
    %177 = vector.load %arg15[%c0_72, %c0_73, %c0_74] : memref<1x8x256xf32, #tpu.memory_space<vmem>>, vector<1x8x256xf32>
    %178 = vector.shape_cast %177 : vector<1x8x256xf32> to vector<8x256xf32>
    %179 = vector.shape_cast %176 : vector<8x256xf32> to vector<1x8x256xf32>
    tpu.vector_store %arg15[%c0_72, %c0_73, %c0_74], %179 {strides = array<i32>} : memref<1x8x256xf32, #tpu.memory_space<vmem>>, vector<1x8x256xf32>,
    return
  }
  func.func @transform_0(%arg0: i32) -> (i32, i32, i32) {
    %c0_i32 = arith.constant 0 : i32
    %c0_i32_0 = arith.constant 0 : i32
    %c0_i32_1 = arith.constant 0 : i32
    return %arg0, %c0_i32, %c0_i32_0 : i32, i32, i32
  }
  func.func @transform_1(%arg0: i32) -> (i32, i32) {
    %c0_i32 = arith.constant 0 : i32
    %c0_i32_0 = arith.constant 0 : i32
    %c0_i32_1 = arith.constant 0 : i32
    return %c0_i32, %c0_i32_0 : i32, i32
  }
  func.func @transform_2(%arg0: i32) -> (i32, i32) {
    %c0_i32 = arith.constant 0 : i32
    %c0_i32_0 = arith.constant 0 : i32
    %c0_i32_1 = arith.constant 0 : i32
    return %c0_i32, %c0_i32_0 : i32, i32
  }
  func.func @transform_3(%arg0: i32) -> (i32, i32) {
    %c0_i32 = arith.constant 0 : i32
    %c0_i32_0 = arith.constant 0 : i32
    %c0_i32_1 = arith.constant 0 : i32
    return %c0_i32, %c0_i32_0 : i32, i32
  }
  func.func @transform_4(%arg0: i32) -> (i32, i32) {
    %c0_i32 = arith.constant 0 : i32
    %c0_i32_0 = arith.constant 0 : i32
    %c0_i32_1 = arith.constant 0 : i32
    return %c0_i32, %c0_i32_0 : i32, i32
  }
  func.func @transform_5(%arg0: i32) -> (i32, i32) {
    %c0_i32 = arith.constant 0 : i32
    %c0_i32_0 = arith.constant 0 : i32
    %c0_i32_1 = arith.constant 0 : i32
    return %c0_i32, %c0_i32_0 : i32, i32
  }
  func.func @transform_6(%arg0: i32) -> (i32, i32) {
    %c0_i32 = arith.constant 0 : i32
    %c0_i32_0 = arith.constant 0 : i32
    %c0_i32_1 = arith.constant 0 : i32
    return %c0_i32, %c0_i32_0 : i32, i32
  }
  func.func @transform_7(%arg0: i32) -> (i32, i32) {
    %c0_i32 = arith.constant 0 : i32
    %c0_i32_0 = arith.constant 0 : i32
    %c0_i32_1 = arith.constant 0 : i32
    return %c0_i32, %c0_i32_0 : i32, i32
  }
  func.func @transform_8(%arg0: i32) -> (i32, i32) {
    %c0_i32 = arith.constant 0 : i32
    %c0_i32_0 = arith.constant 0 : i32
    %c0_i32_1 = arith.constant 0 : i32
    return %c0_i32, %c0_i32_0 : i32, i32
  }
  func.func @transform_9(%arg0: i32) -> (i32, i32) {
    %c0_i32 = arith.constant 0 : i32
    %c0_i32_0 = arith.constant 0 : i32
    %c0_i32_1 = arith.constant 0 : i32
    return %c0_i32, %c0_i32_0 : i32, i32
  }
  func.func @transform_10(%arg0: i32) -> (i32, i32) {
    %c0_i32 = arith.constant 0 : i32
    %c0_i32_0 = arith.constant 0 : i32
    %c0_i32_1 = arith.constant 0 : i32
    return %c0_i32, %c0_i32_0 : i32, i32
  }
  func.func @transform_11(%arg0: i32) -> (i32, i32) {
    %c0_i32 = arith.constant 0 : i32
    %c0_i32_0 = arith.constant 0 : i32
    %c0_i32_1 = arith.constant 0 : i32
    return %c0_i32, %c0_i32_0 : i32, i32
  }
  func.func @transform_12(%arg0: i32) -> (i32, i32) {
    %c0_i32 = arith.constant 0 : i32
    %c0_i32_0 = arith.constant 0 : i32
    %c0_i32_1 = arith.constant 0 : i32
    return %c0_i32, %c0_i32_0 : i32, i32
  }
  func.func @transform_13(%arg0: i32) -> (i32, i32) {
    %c0_i32 = arith.constant 0 : i32
    %c0_i32_0 = arith.constant 0 : i32
    %c0_i32_1 = arith.constant 0 : i32
    return %c0_i32, %c0_i32_0 : i32, i32
  }
  func.func @transform_14(%arg0: i32) -> (i32, i32, i32) {
    %c0_i32 = arith.constant 0 : i32
    %c0_i32_0 = arith.constant 0 : i32
    %c0_i32_1 = arith.constant 0 : i32
    return %arg0, %c0_i32, %c0_i32_0 : i32, i32, i32
  }
}

module attributes {stable_mosaic.version = 11 : i64} {
  func.func @_fused_block_kernel(%arg0: i32, %arg1: memref<1x8x256xf32, #tpu.memory_space<vmem>>, %arg2: memref<256x128xbf16, #tpu.memory_space<vmem>>, %arg3: memref<1x128xf32, #tpu.memory_space<vmem>>, %arg4: memref<1x128xf32, #tpu.memory_space<vmem>>, %arg5: memref<1x128xf32, #tpu.memory_space<vmem>>, %arg6: memref<128x384xbf16, #tpu.memory_space<vmem>>, %arg7: memref<128x128xbf16, #tpu.memory_space<vmem>>, %arg8: memref<1x128xf32, #tpu.memory_space<vmem>>, %arg9: memref<1x128xf32, #tpu.memory_space<vmem>>, %arg10: memref<1x128xf32, #tpu.memory_space<vmem>>, %arg11: memref<128x512xbf16, #tpu.memory_space<vmem>>, %arg12: memref<1x512xf32, #tpu.memory_space<vmem>>, %arg13: memref<512x128xbf16, #tpu.memory_space<vmem>>, %arg14: memref<1x128xf32, #tpu.memory_space<vmem>>, %arg15: memref<1x8x128xf32, #tpu.memory_space<vmem>>) attributes {dimension_semantics = [#tpu.dimension_semantics<parallel>], iteration_bounds = array<i64: 2>, scalar_prefetch = 0 : i64, scratch_operands = 0 : i64, tpu.core_type = #tpu.core_type<tc>, window_params = [{transform_indices = @transform_0, window_bounds = array<i64: 1, 8, 256>}, {pipeline_mode = #tpu.pipeline_mode<synchronous>, transform_indices = @transform_1, window_bounds = array<i64: 256, 128>}, {pipeline_mode = #tpu.pipeline_mode<synchronous>, transform_indices = @transform_2, window_bounds = array<i64: 1, 128>}, {pipeline_mode = #tpu.pipeline_mode<synchronous>, transform_indices = @transform_3, window_bounds = array<i64: 1, 128>}, {pipeline_mode = #tpu.pipeline_mode<synchronous>, transform_indices = @transform_4, window_bounds = array<i64: 1, 128>}, {pipeline_mode = #tpu.pipeline_mode<synchronous>, transform_indices = @transform_5, window_bounds = array<i64: 128, 384>}, {pipeline_mode = #tpu.pipeline_mode<synchronous>, transform_indices = @transform_6, window_bounds = array<i64: 128, 128>}, {pipeline_mode = #tpu.pipeline_mode<synchronous>, transform_indices = @transform_7, window_bounds = array<i64: 1, 128>}, {pipeline_mode = #tpu.pipeline_mode<synchronous>, transform_indices = @transform_8, window_bounds = array<i64: 1, 128>}, {pipeline_mode = #tpu.pipeline_mode<synchronous>, transform_indices = @transform_9, window_bounds = array<i64: 1, 128>}, {pipeline_mode = #tpu.pipeline_mode<synchronous>, transform_indices = @transform_10, window_bounds = array<i64: 128, 512>}, {pipeline_mode = #tpu.pipeline_mode<synchronous>, transform_indices = @transform_11, window_bounds = array<i64: 1, 512>}, {pipeline_mode = #tpu.pipeline_mode<synchronous>, transform_indices = @transform_12, window_bounds = array<i64: 512, 128>}, {pipeline_mode = #tpu.pipeline_mode<synchronous>, transform_indices = @transform_13, window_bounds = array<i64: 1, 128>}, {transform_indices = @transform_14, window_bounds = array<i64: 1, 8, 128>}]} {
    %c0 = arith.constant 0 : index
    %c0_0 = arith.constant 0 : index
    %c0_1 = arith.constant 0 : index
    %0 = vector.load %arg1[%c0, %c0_0, %c0_1] : memref<1x8x256xf32, #tpu.memory_space<vmem>>, vector<1x8x256xf32>
    %1 = vector.shape_cast %0 : vector<1x8x256xf32> to vector<8x256xf32>
    %2 = arith.truncf %1 : vector<8x256xf32> to vector<8x256xbf16>
    %c0_2 = arith.constant 0 : index
    %c0_3 = arith.constant 0 : index
    %3 = vector.load %arg2[%c0_2, %c0_3] : memref<256x128xbf16, #tpu.memory_space<vmem>>, vector<256x128xbf16>
    %cst = arith.constant dense<0.000000e+00> : vector<8x128xf32>
    %4 = tpu.matmul %2, %3, %cst {dimension_numbers = #tpu.dot_dimension_numbers<[1], [0], [0], [1], [0, 0, 1, 1], [], []>} : vector<8x256xbf16>, vector<256x128xbf16>, vector<8x128xf32> -> vector<8x128xf32>
    %c0_4 = arith.constant 0 : index
    %c0_5 = arith.constant 0 : index
    %5 = vector.load %arg3[%c0_4, %c0_5] : memref<1x128xf32, #tpu.memory_space<vmem>>, vector<1x128xf32>
    %6 = vector.broadcast %5 : vector<1x128xf32> to vector<8x128xf32>
    %7 = arith.addf %4, %6 : vector<8x128xf32>
    %cst_6 = arith.constant 0.000000e+00 : f32
    %8 = vector.broadcast %cst_6 : f32 to vector<8x128xf32>
    %9 = arith.maximumf %7, %8 : vector<8x128xf32>
    %c0_7 = arith.constant 0 : index
    %c0_8 = arith.constant 0 : index
    %10 = vector.load %arg4[%c0_7, %c0_8] : memref<1x128xf32, #tpu.memory_space<vmem>>, vector<1x128xf32>
    %c0_9 = arith.constant 0 : index
    %c0_10 = arith.constant 0 : index
    %11 = vector.load %arg5[%c0_9, %c0_10] : memref<1x128xf32, #tpu.memory_space<vmem>>, vector<1x128xf32>
    %cst_11 = arith.constant dense<0.000000e+00> : vector<8xf32>
    %12 = vector.multi_reduction <add>, %9, %cst_11 [1] : vector<8x128xf32> to vector<8xf32>
    %13 = vector.shape_cast %12 : vector<8xf32> to vector<8x1xf32>
    %cst_12 = arith.constant 1.280000e+02 : f32
    %14 = vector.broadcast %cst_12 : f32 to vector<8x1xf32>
    %15 = arith.divf %13, %14 : vector<8x1xf32>
    %16 = vector.broadcast %15 : vector<8x1xf32> to vector<8x128xf32>
    %17 = arith.subf %9, %16 : vector<8x128xf32>
    %18 = arith.mulf %17, %17 : vector<8x128xf32>
    %cst_13 = arith.constant dense<0.000000e+00> : vector<8xf32>
    %19 = vector.multi_reduction <add>, %18, %cst_13 [1] : vector<8x128xf32> to vector<8xf32>
    %20 = vector.shape_cast %19 : vector<8xf32> to vector<8x1xf32>
    %cst_14 = arith.constant 1.280000e+02 : f32
    %21 = vector.broadcast %cst_14 : f32 to vector<8x1xf32>
    %22 = arith.divf %20, %21 : vector<8x1xf32>
    %23 = vector.broadcast %15 : vector<8x1xf32> to vector<8x128xf32>
    %24 = arith.subf %9, %23 : vector<8x128xf32>
    %cst_15 = arith.constant 9.99999974E-6 : f32
    %25 = vector.broadcast %cst_15 : f32 to vector<8x1xf32>
    %26 = arith.addf %22, %25 : vector<8x1xf32>
    %27 = math.rsqrt %26 : vector<8x1xf32>
    %28 = vector.broadcast %27 : vector<8x1xf32> to vector<8x128xf32>
    %29 = arith.mulf %24, %28 : vector<8x128xf32>
    %30 = vector.broadcast %10 : vector<1x128xf32> to vector<8x128xf32>
    %31 = arith.mulf %29, %30 : vector<8x128xf32>
    %32 = vector.broadcast %11 : vector<1x128xf32> to vector<8x128xf32>
    %33 = arith.addf %31, %32 : vector<8x128xf32>
    %34 = arith.truncf %33 : vector<8x128xf32> to vector<8x128xbf16>
    %c0_16 = arith.constant 0 : index
    %c0_17 = arith.constant 0 : index
    %35 = vector.load %arg6[%c0_16, %c0_17] : memref<128x384xbf16, #tpu.memory_space<vmem>>, vector<128x384xbf16>
    %cst_18 = arith.constant dense<0.000000e+00> : vector<8x384xf32>
    %36 = tpu.matmul %34, %35, %cst_18 {dimension_numbers = #tpu.dot_dimension_numbers<[1], [0], [0], [1], [0, 0, 1, 1], [], []>} : vector<8x128xbf16>, vector<128x384xbf16>, vector<8x384xf32> -> vector<8x384xf32>
    %37 = tpu.iota {dimensions = array<i32: 0>} : vector<8x8xi32>
    %38 = tpu.iota {dimensions = array<i32: 1>} : vector<8x8xi32>
    %39 = arith.cmpi sle, %38, %37 : vector<8x8xi32>
    %c0_19 = arith.constant 0 : index
    %c0_20 = arith.constant 0 : index
    %40 = vector.load %arg7[%c0_19, %c0_20] : memref<128x128xbf16, #tpu.memory_space<vmem>>, vector<128x128xbf16>
    %cst_21 = arith.constant 0.000000e+00 : f32
    %41 = vector.broadcast %cst_21 : f32 to vector<8x128xf32>
    %42 = vector.extract_strided_slice %36 {offsets = [0, 0], sizes = [8, 32], strides = [1, 1]} : vector<8x384xf32> to vector<8x32xf32>
    %43 = vector.extract_strided_slice %36 {offsets = [0, 128], sizes = [8, 32], strides = [1, 1]} : vector<8x384xf32> to vector<8x32xf32>
    %44 = vector.extract_strided_slice %36 {offsets = [0, 256], sizes = [8, 32], strides = [1, 1]} : vector<8x384xf32> to vector<8x32xf32>
    %cst_22 = arith.constant dense<0.000000e+00> : vector<8x8xf32>
    %45 = tpu.matmul %42, %43, %cst_22 {dimension_numbers = #tpu.dot_dimension_numbers<[1], [1], [0], [0], [0, 0, 1, 0], [], []>} : vector<8x32xf32>, vector<8x32xf32>, vector<8x8xf32> -> vector<8x8xf32>
    %cst_23 = arith.constant 0.176776692 : f32
    %46 = vector.broadcast %cst_23 : f32 to vector<8x8xf32>
    %47 = arith.mulf %45, %46 : vector<8x8xf32>
    %cst_24 = arith.constant 0xFF800000 : f32
    %48 = vector.broadcast %cst_24 : f32 to vector<8x8xf32>
    %49 = arith.select %39, %47, %48 : vector<8x8xi1>, vector<8x8xf32>
    %cst_25 = arith.constant dense<0xFF800000> : vector<8xf32>
    %50 = vector.multi_reduction <maximumf>, %49, %cst_25 [1] : vector<8x8xf32> to vector<8xf32>
    %51 = vector.shape_cast %50 : vector<8xf32> to vector<8x1xf32>
    %52 = vector.broadcast %51 : vector<8x1xf32> to vector<8x8xf32>
    %53 = arith.subf %49, %52 : vector<8x8xf32>
    %54 = math.exp %53 : vector<8x8xf32>
    %cst_26 = arith.constant dense<0.000000e+00> : vector<8xf32>
    %55 = vector.multi_reduction <add>, %54, %cst_26 [1] : vector<8x8xf32> to vector<8xf32>
    %56 = vector.shape_cast %55 : vector<8xf32> to vector<8x1xf32>
    %57 = tpu.reciprocal %56 {approx = true} : vector<8x1xf32> -> vector<8x1xf32>
    %58 = vector.broadcast %57 : vector<8x1xf32> to vector<8x8xf32>
    %59 = arith.mulf %54, %58 : vector<8x8xf32>
    %cst_27 = arith.constant dense<0.000000e+00> : vector<8x32xf32>
    %60 = tpu.matmul %59, %44, %cst_27 {dimension_numbers = #tpu.dot_dimension_numbers<[1], [0], [0], [1], [0, 0, 1, 1], [], []>} : vector<8x8xf32>, vector<8x32xf32>, vector<8x32xf32> -> vector<8x32xf32>
    %61 = arith.truncf %60 : vector<8x32xf32> to vector<8x32xbf16>
    %62 = vector.extract_strided_slice %40 {offsets = [0, 0], sizes = [32, 128], strides = [1, 1]} : vector<128x128xbf16> to vector<32x128xbf16>
    %cst_28 = arith.constant dense<0.000000e+00> : vector<8x128xf32>
    %63 = tpu.matmul %61, %62, %cst_28 {dimension_numbers = #tpu.dot_dimension_numbers<[1], [0], [0], [1], [0, 0, 1, 1], [], []>} : vector<8x32xbf16>, vector<32x128xbf16>, vector<8x128xf32> -> vector<8x128xf32>
    %64 = arith.addf %41, %63 : vector<8x128xf32>
    %65 = vector.extract_strided_slice %36 {offsets = [0, 32], sizes = [8, 32], strides = [1, 1]} : vector<8x384xf32> to vector<8x32xf32>
    %66 = vector.extract_strided_slice %36 {offsets = [0, 160], sizes = [8, 32], strides = [1, 1]} : vector<8x384xf32> to vector<8x32xf32>
    %67 = vector.extract_strided_slice %36 {offsets = [0, 288], sizes = [8, 32], strides = [1, 1]} : vector<8x384xf32> to vector<8x32xf32>
    %cst_29 = arith.constant dense<0.000000e+00> : vector<8x8xf32>
    %68 = tpu.matmul %65, %66, %cst_29 {dimension_numbers = #tpu.dot_dimension_numbers<[1], [1], [0], [0], [0, 0, 1, 0], [], []>} : vector<8x32xf32>, vector<8x32xf32>, vector<8x8xf32> -> vector<8x8xf32>
    %cst_30 = arith.constant 0.176776692 : f32
    %69 = vector.broadcast %cst_30 : f32 to vector<8x8xf32>
    %70 = arith.mulf %68, %69 : vector<8x8xf32>
    %cst_31 = arith.constant 0xFF800000 : f32
    %71 = vector.broadcast %cst_31 : f32 to vector<8x8xf32>
    %72 = arith.select %39, %70, %71 : vector<8x8xi1>, vector<8x8xf32>
    %cst_32 = arith.constant dense<0xFF800000> : vector<8xf32>
    %73 = vector.multi_reduction <maximumf>, %72, %cst_32 [1] : vector<8x8xf32> to vector<8xf32>
    %74 = vector.shape_cast %73 : vector<8xf32> to vector<8x1xf32>
    %75 = vector.broadcast %74 : vector<8x1xf32> to vector<8x8xf32>
    %76 = arith.subf %72, %75 : vector<8x8xf32>
    %77 = math.exp %76 : vector<8x8xf32>
    %cst_33 = arith.constant dense<0.000000e+00> : vector<8xf32>
    %78 = vector.multi_reduction <add>, %77, %cst_33 [1] : vector<8x8xf32> to vector<8xf32>
    %79 = vector.shape_cast %78 : vector<8xf32> to vector<8x1xf32>
    %80 = tpu.reciprocal %79 {approx = true} : vector<8x1xf32> -> vector<8x1xf32>
    %81 = vector.broadcast %80 : vector<8x1xf32> to vector<8x8xf32>
    %82 = arith.mulf %77, %81 : vector<8x8xf32>
    %cst_34 = arith.constant dense<0.000000e+00> : vector<8x32xf32>
    %83 = tpu.matmul %82, %67, %cst_34 {dimension_numbers = #tpu.dot_dimension_numbers<[1], [0], [0], [1], [0, 0, 1, 1], [], []>} : vector<8x8xf32>, vector<8x32xf32>, vector<8x32xf32> -> vector<8x32xf32>
    %84 = arith.truncf %83 : vector<8x32xf32> to vector<8x32xbf16>
    %85 = vector.extract_strided_slice %40 {offsets = [32, 0], sizes = [32, 128], strides = [1, 1]} : vector<128x128xbf16> to vector<32x128xbf16>
    %cst_35 = arith.constant dense<0.000000e+00> : vector<8x128xf32>
    %86 = tpu.matmul %84, %85, %cst_35 {dimension_numbers = #tpu.dot_dimension_numbers<[1], [0], [0], [1], [0, 0, 1, 1], [], []>} : vector<8x32xbf16>, vector<32x128xbf16>, vector<8x128xf32> -> vector<8x128xf32>
    %87 = arith.addf %64, %86 : vector<8x128xf32>
    %88 = vector.extract_strided_slice %36 {offsets = [0, 64], sizes = [8, 32], strides = [1, 1]} : vector<8x384xf32> to vector<8x32xf32>
    %89 = vector.extract_strided_slice %36 {offsets = [0, 192], sizes = [8, 32], strides = [1, 1]} : vector<8x384xf32> to vector<8x32xf32>
    %90 = vector.extract_strided_slice %36 {offsets = [0, 320], sizes = [8, 32], strides = [1, 1]} : vector<8x384xf32> to vector<8x32xf32>
    %cst_36 = arith.constant dense<0.000000e+00> : vector<8x8xf32>
    %91 = tpu.matmul %88, %89, %cst_36 {dimension_numbers = #tpu.dot_dimension_numbers<[1], [1], [0], [0], [0, 0, 1, 0], [], []>} : vector<8x32xf32>, vector<8x32xf32>, vector<8x8xf32> -> vector<8x8xf32>
    %cst_37 = arith.constant 0.176776692 : f32
    %92 = vector.broadcast %cst_37 : f32 to vector<8x8xf32>
    %93 = arith.mulf %91, %92 : vector<8x8xf32>
    %cst_38 = arith.constant 0xFF800000 : f32
    %94 = vector.broadcast %cst_38 : f32 to vector<8x8xf32>
    %95 = arith.select %39, %93, %94 : vector<8x8xi1>, vector<8x8xf32>
    %cst_39 = arith.constant dense<0xFF800000> : vector<8xf32>
    %96 = vector.multi_reduction <maximumf>, %95, %cst_39 [1] : vector<8x8xf32> to vector<8xf32>
    %97 = vector.shape_cast %96 : vector<8xf32> to vector<8x1xf32>
    %98 = vector.broadcast %97 : vector<8x1xf32> to vector<8x8xf32>
    %99 = arith.subf %95, %98 : vector<8x8xf32>
    %100 = math.exp %99 : vector<8x8xf32>
    %cst_40 = arith.constant dense<0.000000e+00> : vector<8xf32>
    %101 = vector.multi_reduction <add>, %100, %cst_40 [1] : vector<8x8xf32> to vector<8xf32>
    %102 = vector.shape_cast %101 : vector<8xf32> to vector<8x1xf32>
    %103 = tpu.reciprocal %102 {approx = true} : vector<8x1xf32> -> vector<8x1xf32>
    %104 = vector.broadcast %103 : vector<8x1xf32> to vector<8x8xf32>
    %105 = arith.mulf %100, %104 : vector<8x8xf32>
    %cst_41 = arith.constant dense<0.000000e+00> : vector<8x32xf32>
    %106 = tpu.matmul %105, %90, %cst_41 {dimension_numbers = #tpu.dot_dimension_numbers<[1], [0], [0], [1], [0, 0, 1, 1], [], []>} : vector<8x8xf32>, vector<8x32xf32>, vector<8x32xf32> -> vector<8x32xf32>
    %107 = arith.truncf %106 : vector<8x32xf32> to vector<8x32xbf16>
    %108 = vector.extract_strided_slice %40 {offsets = [64, 0], sizes = [32, 128], strides = [1, 1]} : vector<128x128xbf16> to vector<32x128xbf16>
    %cst_42 = arith.constant dense<0.000000e+00> : vector<8x128xf32>
    %109 = tpu.matmul %107, %108, %cst_42 {dimension_numbers = #tpu.dot_dimension_numbers<[1], [0], [0], [1], [0, 0, 1, 1], [], []>} : vector<8x32xbf16>, vector<32x128xbf16>, vector<8x128xf32> -> vector<8x128xf32>
    %110 = arith.addf %87, %109 : vector<8x128xf32>
    %111 = vector.extract_strided_slice %36 {offsets = [0, 96], sizes = [8, 32], strides = [1, 1]} : vector<8x384xf32> to vector<8x32xf32>
    %112 = vector.extract_strided_slice %36 {offsets = [0, 224], sizes = [8, 32], strides = [1, 1]} : vector<8x384xf32> to vector<8x32xf32>
    %113 = vector.extract_strided_slice %36 {offsets = [0, 352], sizes = [8, 32], strides = [1, 1]} : vector<8x384xf32> to vector<8x32xf32>
    %cst_43 = arith.constant dense<0.000000e+00> : vector<8x8xf32>
    %114 = tpu.matmul %111, %112, %cst_43 {dimension_numbers = #tpu.dot_dimension_numbers<[1], [1], [0], [0], [0, 0, 1, 0], [], []>} : vector<8x32xf32>, vector<8x32xf32>, vector<8x8xf32> -> vector<8x8xf32>
    %cst_44 = arith.constant 0.176776692 : f32
    %115 = vector.broadcast %cst_44 : f32 to vector<8x8xf32>
    %116 = arith.mulf %114, %115 : vector<8x8xf32>
    %cst_45 = arith.constant 0xFF800000 : f32
    %117 = vector.broadcast %cst_45 : f32 to vector<8x8xf32>
    %118 = arith.select %39, %116, %117 : vector<8x8xi1>, vector<8x8xf32>
    %cst_46 = arith.constant dense<0xFF800000> : vector<8xf32>
    %119 = vector.multi_reduction <maximumf>, %118, %cst_46 [1] : vector<8x8xf32> to vector<8xf32>
    %120 = vector.shape_cast %119 : vector<8xf32> to vector<8x1xf32>
    %121 = vector.broadcast %120 : vector<8x1xf32> to vector<8x8xf32>
    %122 = arith.subf %118, %121 : vector<8x8xf32>
    %123 = math.exp %122 : vector<8x8xf32>
    %cst_47 = arith.constant dense<0.000000e+00> : vector<8xf32>
    %124 = vector.multi_reduction <add>, %123, %cst_47 [1] : vector<8x8xf32> to vector<8xf32>
    %125 = vector.shape_cast %124 : vector<8xf32> to vector<8x1xf32>
    %126 = tpu.reciprocal %125 {approx = true} : vector<8x1xf32> -> vector<8x1xf32>
    %127 = vector.broadcast %126 : vector<8x1xf32> to vector<8x8xf32>
    %128 = arith.mulf %123, %127 : vector<8x8xf32>
    %cst_48 = arith.constant dense<0.000000e+00> : vector<8x32xf32>
    %129 = tpu.matmul %128, %113, %cst_48 {dimension_numbers = #tpu.dot_dimension_numbers<[1], [0], [0], [1], [0, 0, 1, 1], [], []>} : vector<8x8xf32>, vector<8x32xf32>, vector<8x32xf32> -> vector<8x32xf32>
    %130 = arith.truncf %129 : vector<8x32xf32> to vector<8x32xbf16>
    %131 = vector.extract_strided_slice %40 {offsets = [96, 0], sizes = [32, 128], strides = [1, 1]} : vector<128x128xbf16> to vector<32x128xbf16>
    %cst_49 = arith.constant dense<0.000000e+00> : vector<8x128xf32>
    %132 = tpu.matmul %130, %131, %cst_49 {dimension_numbers = #tpu.dot_dimension_numbers<[1], [0], [0], [1], [0, 0, 1, 1], [], []>} : vector<8x32xbf16>, vector<32x128xbf16>, vector<8x128xf32> -> vector<8x128xf32>
    %133 = arith.addf %110, %132 : vector<8x128xf32>
    %134 = arith.addf %9, %133 : vector<8x128xf32>
    %c0_50 = arith.constant 0 : index
    %c0_51 = arith.constant 0 : index
    %135 = vector.load %arg8[%c0_50, %c0_51] : memref<1x128xf32, #tpu.memory_space<vmem>>, vector<1x128xf32>
    %136 = vector.broadcast %135 : vector<1x128xf32> to vector<8x128xf32>
    %137 = arith.addf %134, %136 : vector<8x128xf32>
    %c0_52 = arith.constant 0 : index
    %c0_53 = arith.constant 0 : index
    %138 = vector.load %arg9[%c0_52, %c0_53] : memref<1x128xf32, #tpu.memory_space<vmem>>, vector<1x128xf32>
    %c0_54 = arith.constant 0 : index
    %c0_55 = arith.constant 0 : index
    %139 = vector.load %arg10[%c0_54, %c0_55] : memref<1x128xf32, #tpu.memory_space<vmem>>, vector<1x128xf32>
    %cst_56 = arith.constant dense<0.000000e+00> : vector<8xf32>
    %140 = vector.multi_reduction <add>, %137, %cst_56 [1] : vector<8x128xf32> to vector<8xf32>
    %141 = vector.shape_cast %140 : vector<8xf32> to vector<8x1xf32>
    %cst_57 = arith.constant 1.280000e+02 : f32
    %142 = vector.broadcast %cst_57 : f32 to vector<8x1xf32>
    %143 = arith.divf %141, %142 : vector<8x1xf32>
    %144 = vector.broadcast %143 : vector<8x1xf32> to vector<8x128xf32>
    %145 = arith.subf %137, %144 : vector<8x128xf32>
    %146 = arith.mulf %145, %145 : vector<8x128xf32>
    %cst_58 = arith.constant dense<0.000000e+00> : vector<8xf32>
    %147 = vector.multi_reduction <add>, %146, %cst_58 [1] : vector<8x128xf32> to vector<8xf32>
    %148 = vector.shape_cast %147 : vector<8xf32> to vector<8x1xf32>
    %cst_59 = arith.constant 1.280000e+02 : f32
    %149 = vector.broadcast %cst_59 : f32 to vector<8x1xf32>
    %150 = arith.divf %148, %149 : vector<8x1xf32>
    %151 = vector.broadcast %143 : vector<8x1xf32> to vector<8x128xf32>
    %152 = arith.subf %137, %151 : vector<8x128xf32>
    %cst_60 = arith.constant 9.99999974E-6 : f32
    %153 = vector.broadcast %cst_60 : f32 to vector<8x1xf32>
    %154 = arith.addf %150, %153 : vector<8x1xf32>
    %155 = math.rsqrt %154 : vector<8x1xf32>
    %156 = vector.broadcast %155 : vector<8x1xf32> to vector<8x128xf32>
    %157 = arith.mulf %152, %156 : vector<8x128xf32>
    %158 = vector.broadcast %138 : vector<1x128xf32> to vector<8x128xf32>
    %159 = arith.mulf %157, %158 : vector<8x128xf32>
    %160 = vector.broadcast %139 : vector<1x128xf32> to vector<8x128xf32>
    %161 = arith.addf %159, %160 : vector<8x128xf32>
    %162 = arith.truncf %161 : vector<8x128xf32> to vector<8x128xbf16>
    %c0_61 = arith.constant 0 : index
    %c0_62 = arith.constant 0 : index
    %163 = vector.load %arg11[%c0_61, %c0_62] : memref<128x512xbf16, #tpu.memory_space<vmem>>, vector<128x512xbf16>
    %cst_63 = arith.constant dense<0.000000e+00> : vector<8x512xf32>
    %164 = tpu.matmul %162, %163, %cst_63 {dimension_numbers = #tpu.dot_dimension_numbers<[1], [0], [0], [1], [0, 0, 1, 1], [], []>} : vector<8x128xbf16>, vector<128x512xbf16>, vector<8x512xf32> -> vector<8x512xf32>
    %c0_64 = arith.constant 0 : index
    %c0_65 = arith.constant 0 : index
    %165 = vector.load %arg12[%c0_64, %c0_65] : memref<1x512xf32, #tpu.memory_space<vmem>>, vector<1x512xf32>
    %166 = vector.broadcast %165 : vector<1x512xf32> to vector<8x512xf32>
    %167 = arith.addf %164, %166 : vector<8x512xf32>
    %cst_66 = arith.constant 0.000000e+00 : f32
    %168 = vector.broadcast %cst_66 : f32 to vector<8x512xf32>
    %169 = arith.maximumf %167, %168 : vector<8x512xf32>
    %170 = arith.truncf %169 : vector<8x512xf32> to vector<8x512xbf16>
    %c0_67 = arith.constant 0 : index
    %c0_68 = arith.constant 0 : index
    %171 = vector.load %arg13[%c0_67, %c0_68] : memref<512x128xbf16, #tpu.memory_space<vmem>>, vector<512x128xbf16>
    %cst_69 = arith.constant dense<0.000000e+00> : vector<8x128xf32>
    %172 = tpu.matmul %170, %171, %cst_69 {dimension_numbers = #tpu.dot_dimension_numbers<[1], [0], [0], [1], [0, 0, 1, 1], [], []>} : vector<8x512xbf16>, vector<512x128xbf16>, vector<8x128xf32> -> vector<8x128xf32>
    %c0_70 = arith.constant 0 : index
    %c0_71 = arith.constant 0 : index
    %173 = vector.load %arg14[%c0_70, %c0_71] : memref<1x128xf32, #tpu.memory_space<vmem>>, vector<1x128xf32>
    %174 = vector.broadcast %173 : vector<1x128xf32> to vector<8x128xf32>
    %175 = arith.addf %172, %174 : vector<8x128xf32>
    %176 = arith.addf %137, %175 : vector<8x128xf32>
    %c0_72 = arith.constant 0 : index
    %c0_73 = arith.constant 0 : index
    %c0_74 = arith.constant 0 : index
    %177 = vector.load %arg15[%c0_72, %c0_73, %c0_74] : memref<1x8x128xf32, #tpu.memory_space<vmem>>, vector<1x8x128xf32>
    %178 = vector.shape_cast %177 : vector<1x8x128xf32> to vector<8x128xf32>
    %179 = vector.shape_cast %176 : vector<8x128xf32> to vector<1x8x128xf32>
    tpu.vector_store %arg15[%c0_72, %c0_73, %c0_74], %179 {strides = array<i32>} : memref<1x8x128xf32, #tpu.memory_space<vmem>>, vector<1x8x128xf32>,
    return
  }
  func.func @transform_0(%arg0: i32) -> (i32, i32, i32) {
    %c0_i32 = arith.constant 0 : i32
    %c0_i32_0 = arith.constant 0 : i32
    %c0_i32_1 = arith.constant 0 : i32
    return %arg0, %c0_i32, %c0_i32_0 : i32, i32, i32
  }
  func.func @transform_1(%arg0: i32) -> (i32, i32) {
    %c0_i32 = arith.constant 0 : i32
    %c0_i32_0 = arith.constant 0 : i32
    %c0_i32_1 = arith.constant 0 : i32
    return %c0_i32, %c0_i32_0 : i32, i32
  }
  func.func @transform_2(%arg0: i32) -> (i32, i32) {
    %c0_i32 = arith.constant 0 : i32
    %c0_i32_0 = arith.constant 0 : i32
    %c0_i32_1 = arith.constant 0 : i32
    return %c0_i32, %c0_i32_0 : i32, i32
  }
  func.func @transform_3(%arg0: i32) -> (i32, i32) {
    %c0_i32 = arith.constant 0 : i32
    %c0_i32_0 = arith.constant 0 : i32
    %c0_i32_1 = arith.constant 0 : i32
    return %c0_i32, %c0_i32_0 : i32, i32
  }
  func.func @transform_4(%arg0: i32) -> (i32, i32) {
    %c0_i32 = arith.constant 0 : i32
    %c0_i32_0 = arith.constant 0 : i32
    %c0_i32_1 = arith.constant 0 : i32
    return %c0_i32, %c0_i32_0 : i32, i32
  }
  func.func @transform_5(%arg0: i32) -> (i32, i32) {
    %c0_i32 = arith.constant 0 : i32
    %c0_i32_0 = arith.constant 0 : i32
    %c0_i32_1 = arith.constant 0 : i32
    return %c0_i32, %c0_i32_0 : i32, i32
  }
  func.func @transform_6(%arg0: i32) -> (i32, i32) {
    %c0_i32 = arith.constant 0 : i32
    %c0_i32_0 = arith.constant 0 : i32
    %c0_i32_1 = arith.constant 0 : i32
    return %c0_i32, %c0_i32_0 : i32, i32
  }
  func.func @transform_7(%arg0: i32) -> (i32, i32) {
    %c0_i32 = arith.constant 0 : i32
    %c0_i32_0 = arith.constant 0 : i32
    %c0_i32_1 = arith.constant 0 : i32
    return %c0_i32, %c0_i32_0 : i32, i32
  }
  func.func @transform_8(%arg0: i32) -> (i32, i32) {
    %c0_i32 = arith.constant 0 : i32
    %c0_i32_0 = arith.constant 0 : i32
    %c0_i32_1 = arith.constant 0 : i32
    return %c0_i32, %c0_i32_0 : i32, i32
  }
  func.func @transform_9(%arg0: i32) -> (i32, i32) {
    %c0_i32 = arith.constant 0 : i32
    %c0_i32_0 = arith.constant 0 : i32
    %c0_i32_1 = arith.constant 0 : i32
    return %c0_i32, %c0_i32_0 : i32, i32
  }
  func.func @transform_10(%arg0: i32) -> (i32, i32) {
    %c0_i32 = arith.constant 0 : i32
    %c0_i32_0 = arith.constant 0 : i32
    %c0_i32_1 = arith.constant 0 : i32
    return %c0_i32, %c0_i32_0 : i32, i32
  }
  func.func @transform_11(%arg0: i32) -> (i32, i32) {
    %c0_i32 = arith.constant 0 : i32
    %c0_i32_0 = arith.constant 0 : i32
    %c0_i32_1 = arith.constant 0 : i32
    return %c0_i32, %c0_i32_0 : i32, i32
  }
  func.func @transform_12(%arg0: i32) -> (i32, i32) {
    %c0_i32 = arith.constant 0 : i32
    %c0_i32_0 = arith.constant 0 : i32
    %c0_i32_1 = arith.constant 0 : i32
    return %c0_i32, %c0_i32_0 : i32, i32
  }
  func.func @transform_13(%arg0: i32) -> (i32, i32) {
    %c0_i32 = arith.constant 0 : i32
    %c0_i32_0 = arith.constant 0 : i32
    %c0_i32_1 = arith.constant 0 : i32
    return %c0_i32, %c0_i32_0 : i32, i32
  }
  func.func @transform_14(%arg0: i32) -> (i32, i32, i32) {
    %c0_i32 = arith.constant 0 : i32
    %c0_i32_0 = arith.constant 0 : i32
    %c0_i32_1 = arith.constant 0 : i32
    return %arg0, %c0_i32, %c0_i32_0 : i32, i32, i32
  }
}

</mosaic_0001>

<llo_original>
// kernel: nanogpt_forward.7
$region0: #{nanogpt_forward.7}
  #allocation0 [shape = 'u32[]', space=smem, size = 0x4, offset = 0x4, fixed_abs, tag = 'smem constant byte address 0x4 - core index']
  #allocation1 [shape = 'u32[72,128]{1,0:T(1,128)}', space=vmem, size = 0x9000, scoped, tag = 'internal scratch']
  %s0 = inlined_call_operand.vmem [shape: f32[2,8,64], index: 0, kind: input, shape index: {}]
  %s1 = inlined_call_operand.vmem [shape: bf16[64,128], index: 1, kind: input, shape index: {}]
  %s2 = inlined_call_operand.vmem [shape: f32[1,128], index: 2, kind: input, shape index: {}]
  %s3 = inlined_call_operand.hbm [shape: f32[2,8,128], index: 3, kind: output, shape index: {}]
  %s4 = sld [smem:[#allocation0]]
  $region45: #{nanogpt_forward.7} parent=0
    _
  %s6 = ssub.s32 1, %s4
  %s7 = scalar_select 0, %s6, %s4
  $region1: #{nanogpt_forward.7} parent=0
    #allocation2 [shape = 'u8[8192]{0}', space=vmem, size = 0x2000, scoped, tag = 'output window, operand 0']
    #allocation3 [shape = 's32[2]{0}', space=sflag, size = 0x8, scoped, tag = 'scoped memory for nanogpt_forward.7']
    %8 = vsyncpa [#allocation3], 0
    %s9 = scalar_lea.sflag [#allocation3], 1
    %10 = vsyncpa %s9, 0
    loop: start=0, step=1, limit=4
    $region2: #{nanogpt_forward.7} parent=1 // loop_pre_header
      _
    $region3: #{nanogpt_forward.7} parent=1 // loop_header
      %s12 = sphi 0, %s16
      %p13 = scmp.ge.s32.totalorder %s12, 4
      %s22 = sphi 0, %s24
      %s25 = sphi 0, %s22
      %s26 = sphi 0, %s25
      %s42 = sphi 0, %s26
      %s46 = sphi 0, %s46
      %s48 = sphi 0, %s46
      %s49 = sphi 0, %s48
      %s63 = sphi 0, %s49
      %s67 = sphi 0, %s67
      %s69 = sphi 0, %s67
      %s70 = sphi 0, %s69
      %s84 = sphi 0, %s70
      %s90 = sphi 0, %s92
      %s93 = sphi 0, %s90
      %s94 = sphi 0, %s93
      %s110 = sphi 0, %s94
    $region4: #{nanogpt_forward.7} parent=1 // loop_header_branch
      %15 = sbr.rel (%p13) target = $region8
    $region5: #{nanogpt_forward.7} parent=1 // loop_body
      %s17 = ssub.s32 %s12, 1
      %s18 = ssub.s32 %s12, 2
      %s19 = sadd.s32 %s12, 1
      %s20 = ssub.s32 %s12, %s19
      %p21 = scmp.eq.s32.totalorder %s20, 0
      %s23 = sadd.s32 %s22, 1
      %s24 = scalar_select %p21, %s22, %s23
      %p27 = pneg %p21
      %p28 = scmp.eq.s32.totalorder %s12, 1
      %p29 = por %p27, %p28
      %p30 = scmp.ne.s32.totalorder %s22, %s25
      %p31 = scmp.eq.s32.totalorder %s12, 0
      %p32 = por %p30, %p31
      %p33 = scmp.ne.s32.totalorder %s22, %s25
      %p34 = scmp.eq.s32.totalorder %s17, 1
      %p35 = por %p33, %p34
      %p36 = scmp.ne.s32.totalorder %s25, %s26
      %p37 = scmp.eq.s32.totalorder %s17, 0
      %p38 = por %p36, %p37
      %p39 = scmp.ne.s32.totalorder %s25, %s26
      %p40 = scmp.eq.s32.totalorder %s18, 1
      %p41 = por %p39, %p40
      %p43 = scmp.ne.s32.totalorder %s26, %s42
      %p44 = scmp.eq.s32.totalorder %s18, 0
      %p45 = por %p43, %p44
      %s47 = sadd.s32 %s46, 1
      %p50 = scmp.eq.s32.totalorder %s12, 1
      %p51 = scmp.ne.s32.totalorder %s46, %s48
      %p52 = scmp.eq.s32.totalorder %s12, 0
      %p53 = por %p51, %p52
      %p54 = scmp.ne.s32.totalorder %s46, %s48
      %p55 = scmp.eq.s32.totalorder %s17, 1
      %p56 = por %p54, %p55
      %p57 = scmp.ne.s32.totalorder %s48, %s49
      %p58 = scmp.eq.s32.totalorder %s17, 0
      %p59 = por %p57, %p58
      %p60 = scmp.ne.s32.totalorder %s48, %s49
      %p61 = scmp.eq.s32.totalorder %s18, 1
      %p62 = por %p60, %p61
      %p64 = scmp.ne.s32.totalorder %s49, %s63
      %p65 = scmp.eq.s32.totalorder %s18, 0
      %p66 = por %p64, %p65
      %s68 = sadd.s32 %s67, 1
      %p71 = scmp.eq.s32.totalorder %s12, 1
      %p72 = scmp.ne.s32.totalorder %s67, %s69
      %p73 = scmp.eq.s32.totalorder %s12, 0
      %p74 = por %p72, %p73
      %p75 = scmp.ne.s32.totalorder %s67, %s69
      %p76 = scmp.eq.s32.totalorder %s17, 1
      %p77 = por %p75, %p76
      %p78 = scmp.ne.s32.totalorder %s69, %s70
      %p79 = scmp.eq.s32.totalorder %s17, 0
      %p80 = por %p78, %p79
      %p81 = scmp.ne.s32.totalorder %s69, %s70
      %p82 = scmp.eq.s32.totalorder %s18, 1
      %p83 = por %p81, %p82
      %p85 = scmp.ne.s32.totalorder %s70, %s84
      %p86 = scmp.eq.s32.totalorder %s18, 0
      %p87 = por %p85, %p86
      %s88 = ssub.s32 %s12, %s19
      %p89 = scmp.eq.s32.totalorder %s88, 0
      %s91 = sadd.s32 %s90, 1
      %s92 = scalar_select %p89, %s90, %s91
      %p95 = pneg %p89
      %p96 = scmp.eq.s32.totalorder %s12, 1
      %p97 = por %p95, %p96
      %p98 = scmp.ne.s32.totalorder %s90, %s93
      %p99 = scmp.eq.s32.totalorder %s12, 0
      %p100 = por %p98, %p99
      %p101 = scmp.ne.s32.totalorder %s90, %s93
      %p102 = scmp.eq.s32.totalorder %s17, 1
      %p103 = por %p101, %p102
      %p104 = scmp.ne.s32.totalorder %s93, %s94
      %p105 = scmp.eq.s32.totalorder %s17, 0
      %p106 = por %p104, %p105
      %p107 = scmp.ne.s32.totalorder %s93, %s94
      %p108 = scmp.eq.s32.totalorder %s18, 1
      %p109 = por %p107, %p108
      %p111 = scmp.ne.s32.totalorder %s94, %s110
      %p112 = scmp.eq.s32.totalorder %s18, 0
      %p113 = por %p111, %p112
      %p114 = scmp.le.s32.totalorder 1, %s12
      %p115 = scmp.lt.s32.totalorder %s12, 3
      %p116 = pnand %p114, %p115
      %p117 = pneg %p116
      // Predicated region
      $region9: #{nanogpt_forward.7} parent=5 // pred_check
        _
      $region10: #{nanogpt_forward.7} parent=5 // pred_check_branch
        %119 = sbr.rel (%p116) target = $region12
      $region11: #{nanogpt_forward.7} parent=5 // pred_region
        %s120 = ssub.s32 %s12, 1
        // Predicated region
        $region13: #{nanogpt_forward.7} parent=11 // pred_check
          %p121 = pneg %p59
        $region14: #{nanogpt_forward.7} parent=11 // pred_check_branch
          %123 = sbr.rel (%p121) target = $region16
        $region15: #{nanogpt_forward.7} parent=11 // pred_region
          _
        $region16: #{nanogpt_forward.7} parent=11 // pred_fallthru
          _
        // Predicated region
        $region17: #{nanogpt_forward.7} parent=11 // pred_check
          %p124 = pneg %p80
        $region18: #{nanogpt_forward.7} parent=11 // pred_check_branch
          %126 = sbr.rel (%p124) target = $region20
        $region19: #{nanogpt_forward.7} parent=11 // pred_region
          _
        $region20: #{nanogpt_forward.7} parent=11 // pred_fallthru
          _
      $region12: #{nanogpt_forward.7} parent=5 // pred_fallthru
        _
      %p127 = scmp.lt.s32.totalorder %s12, 2
      // Predicated region
      $region21: #{nanogpt_forward.7} parent=5 // pred_check
        %p128 = pneg %p127
      $region22: #{nanogpt_forward.7} parent=5 // pred_check_branch
        %130 = sbr.rel (%p128) target = $region24
      $region23: #{nanogpt_forward.7} parent=5 // pred_region
        // Predicated region
        $region25: #{nanogpt_forward.7} parent=23 // pred_check
          %p131 = pneg %p32
        $region26: #{nanogpt_forward.7} parent=23 // pred_check_branch
          %133 = sbr.rel (%p131) target = $region28
        $region27: #{nanogpt_forward.7} parent=23 // pred_region
          %p134 = scmp.lt.s32.totalorder %s12, 1
          %s135 = scalar_select %p134, %s12, 1
          %s136 = smul.addr %s135, 8
          %s137 = scalar_lea.vmem %s0, %s136
        $region28: #{nanogpt_forward.7} parent=23 // pred_fallthru
          _
      $region24: #{nanogpt_forward.7} parent=5 // pred_fallthru
        _
      %p138 = scmp.le.s32.totalorder 1, %s12
      %p139 = scmp.lt.s32.totalorder %s12, 3
      %p140 = pnand %p138, %p139
      %p141 = pneg %p140
      // Predicated region
      $region29: #{nanogpt_forward.7} parent=5 // pred_check
        _
      $region30: #{nanogpt_forward.7} parent=5 // pred_check_branch
        %143 = sbr.rel (%p140) target = $region32
      $region31: #{nanogpt_forward.7} parent=5 // pred_region
        %s144 = ssub.s32 %s12, 1
        %p145 = scmp.lt.s32.totalorder %s17, 1
        %s146 = scalar_select %p145, %s17, 1
        %s147 = smul.addr %s146, 8
        %s148 = scalar_lea.vmem %s0, %s147
        %p149 = pneg %p38
        %p150 = pneg %p35
        %p151 = pneg %p59
        %p152 = pneg %p56
        %p153 = pneg %p80
        %p154 = pneg %p77
        %p155 = pneg %p106
        %p156 = pneg %p103
        %s157 = sand.u32 %s93, 1
        %s158 = scalar_lea.sflag [#allocation3], %s157
        %s159 = sand.u32 %s93, 1
        %s160 = smul.addr %s159, 8
        %s161 = scalar_lea.vmem [#allocation2], %s160
        %p162 = scmp.lt.s32.totalorder %s17, 1
        %s163 = scalar_select %p162, %s17, 1
        %s164 = smul.addr %s163, 8
        %s165 = scalar_lea.vmem %s0, %s164
        %v167 = vld [vmem:[%s165] sm:$0xff]
        %v168 = vpack.c.bf16 %v167, %v167
        %v169 = vld [vmem:[%s1] sm:$0xf]
        %v170 = vld [vmem:[%s1 + $0x4] sm:$0xf]
        %v171 = vld [vmem:[%s1 + $0x8] sm:$0xf]
        %v172 = vld [vmem:[%s1 + $0xc] sm:$0xf]
        %v173 = vld [vmem:[%s1 + $0x10] sm:$0xf]
        %v174 = vld [vmem:[%s1 + $0x14] sm:$0xf]
        %v175 = vld [vmem:[%s1 + $0x18] sm:$0xf]
        %v176 = vld [vmem:[%s1 + $0x1c] sm:$0xf]
        %v177 = vld [vmem:[%s2] sm:$0x1]
        %v179 = vperm.slane %v177, 0
        %v189 = vunpack.c.l.b16 %v169
        %v190 = vunpack.c.l.b16 %v170
        %v191 = vunpack.c.l.b16 %v171
        %v192 = vunpack.c.l.b16 %v172
        %v193 = vunpack.c.l.b16 %v173
        %v194 = vunpack.c.l.b16 %v174
        %v195 = vunpack.c.l.b16 %v175
        %v196 = vunpack.c.l.b16 %v176
        %v197 = vpack.c.b16 %v190, %v189
        %v198 = vpack.c.b16 %v192, %v191
        %v199 = vpack.c.b16 %v194, %v193
        %v200 = vpack.c.b16 %v196, %v195
        %vm205 = vcmask 523264
        %v207 = vsel %vm205, %v168, 0
        %209 = vmatpush.bf16.msra.mxu0 0
        %210 = vmatpush.bf16.msra.mxu0 0
        %211 = vmatpush.bf16.msra.mxu0 0
        %212 = vmatpush.bf16.msra.mxu0 0
        %213 = vmatpush.bf16.msra.mxu0 %v200
        %214 = vmatpush.bf16.msra.mxu0 %v199
        %215 = vmatpush.bf16.msra.mxu0 %v198
        %216 = vmatpush.bf16.msra.mxu0 %v197
        %217 = vmatmul.bf16.gmra.mxu0 %v207
        %v218 = vpop.f32.mrf.mxu0
        %v219 = vadd.f32 %v179, %v218
        %v220 = vpop.f32.mrf.mxu0
        %221 = vdwg.mxu0
        %222 = vst [vmem:[%s161] sm:$0xff] %v219
        %s223 = sand.u32 %s93, 1
        %s224 = scalar_lea.sflag [#allocation3], %s223
        %s225 = sand.u32 %s93, 1
        %s226 = smul.addr %s225, 8
        %s227 = scalar_lea.vmem [#allocation2], %s226
        // Predicated region
        $region33: #{nanogpt_forward.7} parent=31 // pred_check
          %p228 = pneg %p103
        $region34: #{nanogpt_forward.7} parent=31 // pred_check_branch
          %230 = sbr.rel (%p228) target = $region36
        $region35: #{nanogpt_forward.7} parent=31 // pred_region
          %232 = vsyncadd %s224, 0
          %s233 = smul.addr %s17, 8
          %s234 = scalar_lea.hbm %s3, %s233
          %s236 = sshll.u32 %s227, 4
          %s237 = int_to_ptr.vmem [resolvable:$true] %s236
          %s238 = sshll.u32 %s234, 4
          %s239 = int_to_ptr.hbm [resolvable:$true] %s238
          %241 = dma.vmem_to_hbm [thread:$0]  %s237, 128, %s239, %s224
        $region36: #{nanogpt_forward.7} parent=31 // pred_fallthru
          _
      $region32: #{nanogpt_forward.7} parent=5 // pred_fallthru
        _
      %p242 = scmp.le.s32.totalorder 2, %s12
      // Predicated region
      $region37: #{nanogpt_forward.7} parent=5 // pred_check
        %p243 = pneg %p242
      $region38: #{nanogpt_forward.7} parent=5 // pred_check_branch
        %245 = sbr.rel (%p243) target = $region40
      $region39: #{nanogpt_forward.7} parent=5 // pred_region
        %s246 = ssub.s32 %s12, 2
        // Predicated region
        $region41: #{nanogpt_forward.7} parent=39 // pred_check
          %p247 = pneg %p109
        $region42: #{nanogpt_forward.7} parent=39 // pred_check_branch
          %249 = sbr.rel (%p247) target = $region44
        $region43: #{nanogpt_forward.7} parent=39 // pred_region
          %s250 = sand.u32 %s94, 1
          %s251 = scalar_lea.sflag [#allocation3], %s250
          %s252 = sand.u32 %s94, 1
          %s253 = smul.addr %s252, 8
          %s254 = scalar_lea.vmem [#allocation2], %s253
          %256 = dma.done %s251, 128
        $region44: #{nanogpt_forward.7} parent=39 // pred_fallthru
          _
      $region40: #{nanogpt_forward.7} parent=5 // pred_fallthru
        _
    $region6: #{nanogpt_forward.7} parent=1 // loop_footer
      %s16 = sadd.s32 1, %s12
    $region7: #{nanogpt_forward.7} parent=1 // loop_footer_branch
      %11 = sbr.rel target = $region3
    $region8: #{nanogpt_forward.7} parent=1 // loop_exit
      _
    %257 = vsyncpa [#allocation3], 1
    %s258 = scalar_lea.sflag [#allocation3], 1
    %259 = vsyncpa %s258, 1

// kernel: nanogpt_forward.6
$region0: #{nanogpt_forward.6}
  #allocation0 [shape = 'u32[]', space=smem, size = 0x4, offset = 0x4, fixed_abs, tag = 'smem constant byte address 0x4 - core index']
  #allocation1 [shape = 'u32[72,128]{1,0:T(1,128)}', space=vmem, size = 0x9000, scoped, tag = 'internal scratch']
  %s0 = inlined_call_operand.vmem [shape: f32[2,8,128], index: 0, kind: input, shape index: {}]
  %s1 = inlined_call_operand.vmem [shape: bf16[128,64], index: 1, kind: input, shape index: {}]
  %s2 = inlined_call_operand.hbm [shape: f32[1,64], index: 2, kind: input, shape index: {}]
  %s3 = inlined_call_operand.hbm [shape: f32[1,64], index: 3, kind: input, shape index: {}]
  %s4 = inlined_call_operand.hbm [shape: f32[1,64], index: 4, kind: input, shape index: {}]
  %s5 = inlined_call_operand.vmem [shape: bf16[64,192], index: 5, kind: input, shape index: {}]
  %s6 = inlined_call_operand.vmem [shape: bf16[64,64], index: 6, kind: input, shape index: {}]
  %s7 = inlined_call_operand.hbm [shape: f32[1,64], index: 7, kind: input, shape index: {}]
  %s8 = inlined_call_operand.hbm [shape: f32[1,64], index: 8, kind: input, shape index: {}]
  %s9 = inlined_call_operand.hbm [shape: f32[1,64], index: 9, kind: input, shape index: {}]
  %s10 = inlined_call_operand.vmem [shape: bf16[64,256], index: 10, kind: input, shape index: {}]
  %s11 = inlined_call_operand.vmem [shape: f32[1,256], index: 11, kind: input, shape index: {}]
  %s12 = inlined_call_operand.vmem [shape: bf16[256,64], index: 12, kind: input, shape index: {}]
  %s13 = inlined_call_operand.hbm [shape: f32[1,64], index: 13, kind: input, shape index: {}]
  %s14 = inlined_call_operand.vmem [shape: f32[2,8,64], index: 14, kind: output, shape index: {}]
  %s15 = sld [smem:[#allocation0]]
  $region117: #{nanogpt_forward.6} parent=0
    _
  %s17 = ssub.s32 1, %s15
  %s18 = scalar_select 0, %s17, %s15
  $region1: #{nanogpt_forward.6} parent=0
    #allocation2 [shape = 'u8[512]{0}', space=vmem, size = 0x400, scoped, tag = 'input window, operand 2, single buffered']
    #allocation3 [shape = 's32[2]{0}', space=sflag, size = 0x8, scoped, tag = 'scoped memory for nanogpt_forward.6']
    #allocation4 [shape = 'u8[512]{0}', space=vmem, size = 0x400, scoped, tag = 'input window, operand 3, single buffered']
    #allocation5 [shape = 's32[1]{0}', space=sflag, size = 0x4, scoped, tag = 'scoped memory for nanogpt_forward.6']
    #allocation6 [shape = 'u8[512]{0}', space=vmem, size = 0x400, scoped, tag = 'input window, operand 4, single buffered']
    #allocation7 [shape = 'u8[512]{0}', space=vmem, size = 0x400, scoped, tag = 'input window, operand 7, single buffered']
    #allocation8 [shape = 's32[1]{0}', space=sflag, size = 0x4, scoped, tag = 'scoped memory for nanogpt_forward.6']
    #allocation9 [shape = 'u8[512]{0}', space=vmem, size = 0x400, scoped, tag = 'input window, operand 8, single buffered']
    #allocation10 [shape = 'u8[512]{0}', space=vmem, size = 0x400, scoped, tag = 'input window, operand 9, single buffered']
    #allocation11 [shape = 's32[1]{0}', space=sflag, size = 0x4, scoped, tag = 'scoped memory for nanogpt_forward.6']
    #allocation12 [shape = 'u8[512]{0}', space=vmem, size = 0x400, scoped, tag = 'input window, operand 13, single buffered']
    %19 = vsyncpa [#allocation3], 0
    %20 = vsyncpa [#allocation5], 0
    %21 = vsyncpa [#allocation8], 0
    %22 = vsyncpa [#allocation11], 0
    loop: start=0, step=1, limit=4
    $region2: #{nanogpt_forward.6} parent=1 // loop_pre_header
      _
    $region3: #{nanogpt_forward.6} parent=1 // loop_header
      %s24 = sphi 0, %s28
      %p25 = scmp.ge.s32.totalorder %s24, 4
      %s34 = sphi 0, %s36
      %s37 = sphi 0, %s34
      %s38 = sphi 0, %s37
      %s54 = sphi 0, %s38
      %s58 = sphi 0, %s58
      %s60 = sphi 0, %s58
      %s61 = sphi 0, %s60
      %s75 = sphi 0, %s61
      %s79 = sphi 0, %s79
      %s81 = sphi 0, %s79
      %s82 = sphi 0, %s81
      %s96 = sphi 0, %s82
      %s100 = sphi 0, %s100
      %s102 = sphi 0, %s100
      %s103 = sphi 0, %s102
      %s117 = sphi 0, %s103
      %s121 = sphi 0, %s121
      %s123 = sphi 0, %s121
      %s124 = sphi 0, %s123
      %s138 = sphi 0, %s124
      %s142 = sphi 0, %s142
      %s144 = sphi 0, %s142
      %s145 = sphi 0, %s144
      %s159 = sphi 0, %s145
      %s163 = sphi 0, %s163
      %s165 = sphi 0, %s163
      %s166 = sphi 0, %s165
      %s180 = sphi 0, %s166
      %s184 = sphi 0, %s184
      %s186 = sphi 0, %s184
      %s187 = sphi 0, %s186
      %s201 = sphi 0, %s187
      %s205 = sphi 0, %s205
      %s207 = sphi 0, %s205
      %s208 = sphi 0, %s207
      %s222 = sphi 0, %s208
      %s226 = sphi 0, %s226
      %s228 = sphi 0, %s226
      %s229 = sphi 0, %s228
      %s243 = sphi 0, %s229
      %s247 = sphi 0, %s247
      %s249 = sphi 0, %s247
      %s250 = sphi 0, %s249
      %s264 = sphi 0, %s250
      %s268 = sphi 0, %s268
      %s270 = sphi 0, %s268
      %s271 = sphi 0, %s270
      %s285 = sphi 0, %s271
      %s289 = sphi 0, %s289
      %s291 = sphi 0, %s289
      %s292 = sphi 0, %s291
      %s306 = sphi 0, %s292
      %s310 = sphi 0, %s310
      %s312 = sphi 0, %s310
      %s313 = sphi 0, %s312
      %s327 = sphi 0, %s313
      %s333 = sphi 0, %s335
      %s336 = sphi 0, %s333
      %s337 = sphi 0, %s336
      %s353 = sphi 0, %s337
    $region4: #{nanogpt_forward.6} parent=1 // loop_header_branch
      %27 = sbr.rel (%p25) target = $region8
    $region5: #{nanogpt_forward.6} parent=1 // loop_body
      %s29 = ssub.s32 %s24, 1
      %s30 = ssub.s32 %s24, 2
      %s31 = sadd.s32 %s24, 1
      %s32 = ssub.s32 %s24, %s31
      %p33 = scmp.eq.s32.totalorder %s32, 0
      %s35 = sadd.s32 %s34, 1
      %s36 = scalar_select %p33, %s34, %s35
      %p39 = pneg %p33
      %p40 = scmp.eq.s32.totalorder %s24, 1
      %p41 = por %p39, %p40
      %p42 = scmp.ne.s32.totalorder %s34, %s37
      %p43 = scmp.eq.s32.totalorder %s24, 0
      %p44 = por %p42, %p43
      %p45 = scmp.ne.s32.totalorder %s34, %s37
      %p46 = scmp.eq.s32.totalorder %s29, 1
      %p47 = por %p45, %p46
      %p48 = scmp.ne.s32.totalorder %s37, %s38
      %p49 = scmp.eq.s32.totalorder %s29, 0
      %p50 = por %p48, %p49
      %p51 = scmp.ne.s32.totalorder %s37, %s38
      %p52 = scmp.eq.s32.totalorder %s30, 1
      %p53 = por %p51, %p52
      %p55 = scmp.ne.s32.totalorder %s38, %s54
      %p56 = scmp.eq.s32.totalorder %s30, 0
      %p57 = por %p55, %p56
      %s59 = sadd.s32 %s58, 1
      %p62 = scmp.eq.s32.totalorder %s24, 1
      %p63 = scmp.ne.s32.totalorder %s58, %s60
      %p64 = scmp.eq.s32.totalorder %s24, 0
      %p65 = por %p63, %p64
      %p66 = scmp.ne.s32.totalorder %s58, %s60
      %p67 = scmp.eq.s32.totalorder %s29, 1
      %p68 = por %p66, %p67
      %p69 = scmp.ne.s32.totalorder %s60, %s61
      %p70 = scmp.eq.s32.totalorder %s29, 0
      %p71 = por %p69, %p70
      %p72 = scmp.ne.s32.totalorder %s60, %s61
      %p73 = scmp.eq.s32.totalorder %s30, 1
      %p74 = por %p72, %p73
      %p76 = scmp.ne.s32.totalorder %s61, %s75
      %p77 = scmp.eq.s32.totalorder %s30, 0
      %p78 = por %p76, %p77
      %s80 = sadd.s32 %s79, 1
      %p83 = scmp.eq.s32.totalorder %s24, 1
      %p84 = scmp.ne.s32.totalorder %s79, %s81
      %p85 = scmp.eq.s32.totalorder %s24, 0
      %p86 = por %p84, %p85
      %p87 = scmp.ne.s32.totalorder %s79, %s81
      %p88 = scmp.eq.s32.totalorder %s29, 1
      %p89 = por %p87, %p88
      %p90 = scmp.ne.s32.totalorder %s81, %s82
      %p91 = scmp.eq.s32.totalorder %s29, 0
      %p92 = por %p90, %p91
      %p93 = scmp.ne.s32.totalorder %s81, %s82
      %p94 = scmp.eq.s32.totalorder %s30, 1
      %p95 = por %p93, %p94
      %p97 = scmp.ne.s32.totalorder %s82, %s96
      %p98 = scmp.eq.s32.totalorder %s30, 0
      %p99 = por %p97, %p98
      %s101 = sadd.s32 %s100, 1
      %p104 = scmp.eq.s32.totalorder %s24, 1
      %p105 = scmp.ne.s32.totalorder %s100, %s102
      %p106 = scmp.eq.s32.totalorder %s24, 0
      %p107 = por %p105, %p106
      %p108 = scmp.ne.s32.totalorder %s100, %s102
      %p109 = scmp.eq.s32.totalorder %s29, 1
      %p110 = por %p108, %p109
      %p111 = scmp.ne.s32.totalorder %s102, %s103
      %p112 = scmp.eq.s32.totalorder %s29, 0
      %p113 = por %p111, %p112
      %p114 = scmp.ne.s32.totalorder %s102, %s103
      %p115 = scmp.eq.s32.totalorder %s30, 1
      %p116 = por %p114, %p115
      %p118 = scmp.ne.s32.totalorder %s103, %s117
      %p119 = scmp.eq.s32.totalorder %s30, 0
      %p120 = por %p118, %p119
      %s122 = sadd.s32 %s121, 1
      %p125 = scmp.eq.s32.totalorder %s24, 1
      %p126 = scmp.ne.s32.totalorder %s121, %s123
      %p127 = scmp.eq.s32.totalorder %s24, 0
      %p128 = por %p126, %p127
      %p129 = scmp.ne.s32.totalorder %s121, %s123
      %p130 = scmp.eq.s32.totalorder %s29, 1
      %p131 = por %p129, %p130
      %p132 = scmp.ne.s32.totalorder %s123, %s124
      %p133 = scmp.eq.s32.totalorder %s29, 0
      %p134 = por %p132, %p133
      %p135 = scmp.ne.s32.totalorder %s123, %s124
      %p136 = scmp.eq.s32.totalorder %s30, 1
      %p137 = por %p135, %p136
      %p139 = scmp.ne.s32.totalorder %s124, %s138
      %p140 = scmp.eq.s32.totalorder %s30, 0
      %p141 = por %p139, %p140
      %s143 = sadd.s32 %s142, 1
      %p146 = scmp.eq.s32.totalorder %s24, 1
      %p147 = scmp.ne.s32.totalorder %s142, %s144
      %p148 = scmp.eq.s32.totalorder %s24, 0
      %p149 = por %p147, %p148
      %p150 = scmp.ne.s32.totalorder %s142, %s144
      %p151 = scmp.eq.s32.totalorder %s29, 1
      %p152 = por %p150, %p151
      %p153 = scmp.ne.s32.totalorder %s144, %s145
      %p154 = scmp.eq.s32.totalorder %s29, 0
      %p155 = por %p153, %p154
      %p156 = scmp.ne.s32.totalorder %s144, %s145
      %p157 = scmp.eq.s32.totalorder %s30, 1
      %p158 = por %p156, %p157
      %p160 = scmp.ne.s32.totalorder %s145, %s159
      %p161 = scmp.eq.s32.totalorder %s30, 0
      %p162 = por %p160, %p161
      %s164 = sadd.s32 %s163, 1
      %p167 = scmp.eq.s32.totalorder %s24, 1
      %p168 = scmp.ne.s32.totalorder %s163, %s165
      %p169 = scmp.eq.s32.totalorder %s24, 0
      %p170 = por %p168, %p169
      %p171 = scmp.ne.s32.totalorder %s163, %s165
      %p172 = scmp.eq.s32.totalorder %s29, 1
      %p173 = por %p171, %p172
      %p174 = scmp.ne.s32.totalorder %s165, %s166
      %p175 = scmp.eq.s32.totalorder %s29, 0
      %p176 = por %p174, %p175
      %p177 = scmp.ne.s32.totalorder %s165, %s166
      %p178 = scmp.eq.s32.totalorder %s30, 1
      %p179 = por %p177, %p178
      %p181 = scmp.ne.s32.totalorder %s166, %s180
      %p182 = scmp.eq.s32.totalorder %s30, 0
      %p183 = por %p181, %p182
      %s185 = sadd.s32 %s184, 1
      %p188 = scmp.eq.s32.totalorder %s24, 1
      %p189 = scmp.ne.s32.totalorder %s184, %s186
      %p190 = scmp.eq.s32.totalorder %s24, 0
      %p191 = por %p189, %p190
      %p192 = scmp.ne.s32.totalorder %s184, %s186
      %p193 = scmp.eq.s32.totalorder %s29, 1
      %p194 = por %p192, %p193
      %p195 = scmp.ne.s32.totalorder %s186, %s187
      %p196 = scmp.eq.s32.totalorder %s29, 0
      %p197 = por %p195, %p196
      %p198 = scmp.ne.s32.totalorder %s186, %s187
      %p199 = scmp.eq.s32.totalorder %s30, 1
      %p200 = por %p198, %p199
      %p202 = scmp.ne.s32.totalorder %s187, %s201
      %p203 = scmp.eq.s32.totalorder %s30, 0
      %p204 = por %p202, %p203
      %s206 = sadd.s32 %s205, 1
      %p209 = scmp.eq.s32.totalorder %s24, 1
      %p210 = scmp.ne.s32.totalorder %s205, %s207
      %p211 = scmp.eq.s32.totalorder %s24, 0
      %p212 = por %p210, %p211
      %p213 = scmp.ne.s32.totalorder %s205, %s207
      %p214 = scmp.eq.s32.totalorder %s29, 1
      %p215 = por %p213, %p214
      %p216 = scmp.ne.s32.totalorder %s207, %s208
      %p217 = scmp.eq.s32.totalorder %s29, 0
      %p218 = por %p216, %p217
      %p219 = scmp.ne.s32.totalorder %s207, %s208
      %p220 = scmp.eq.s32.totalorder %s30, 1
      %p221 = por %p219, %p220
      %p223 = scmp.ne.s32.totalorder %s208, %s222
      %p224 = scmp.eq.s32.totalorder %s30, 0
      %p225 = por %p223, %p224
      %s227 = sadd.s32 %s226, 1
      %p230 = scmp.eq.s32.totalorder %s24, 1
      %p231 = scmp.ne.s32.totalorder %s226, %s228
      %p232 = scmp.eq.s32.totalorder %s24, 0
      %p233 = por %p231, %p232
      %p234 = scmp.ne.s32.totalorder %s226, %s228
      %p235 = scmp.eq.s32.totalorder %s29, 1
      %p236 = por %p234, %p235
      %p237 = scmp.ne.s32.totalorder %s228, %s229
      %p238 = scmp.eq.s32.totalorder %s29, 0
      %p239 = por %p237, %p238
      %p240 = scmp.ne.s32.totalorder %s228, %s229
      %p241 = scmp.eq.s32.totalorder %s30, 1
      %p242 = por %p240, %p241
      %p244 = scmp.ne.s32.totalorder %s229, %s243
      %p245 = scmp.eq.s32.totalorder %s30, 0
      %p246 = por %p244, %p245
      %s248 = sadd.s32 %s247, 1
      %p251 = scmp.eq.s32.totalorder %s24, 1
      %p252 = scmp.ne.s32.totalorder %s247, %s249
      %p253 = scmp.eq.s32.totalorder %s24, 0
      %p254 = por %p252, %p253
      %p255 = scmp.ne.s32.totalorder %s247, %s249
      %p256 = scmp.eq.s32.totalorder %s29, 1
      %p257 = por %p255, %p256
      %p258 = scmp.ne.s32.totalorder %s249, %s250
      %p259 = scmp.eq.s32.totalorder %s29, 0
      %p260 = por %p258, %p259
      %p261 = scmp.ne.s32.totalorder %s249, %s250
      %p262 = scmp.eq.s32.totalorder %s30, 1
      %p263 = por %p261, %p262
      %p265 = scmp.ne.s32.totalorder %s250, %s264
      %p266 = scmp.eq.s32.totalorder %s30, 0
      %p267 = por %p265, %p266
      %s269 = sadd.s32 %s268, 1
      %p272 = scmp.eq.s32.totalorder %s24, 1
      %p273 = scmp.ne.s32.totalorder %s268, %s270
      %p274 = scmp.eq.s32.totalorder %s24, 0
      %p275 = por %p273, %p274
      %p276 = scmp.ne.s32.totalorder %s268, %s270
      %p277 = scmp.eq.s32.totalorder %s29, 1
      %p278 = por %p276, %p277
      %p279 = scmp.ne.s32.totalorder %s270, %s271
      %p280 = scmp.eq.s32.totalorder %s29, 0
      %p281 = por %p279, %p280
      %p282 = scmp.ne.s32.totalorder %s270, %s271
      %p283 = scmp.eq.s32.totalorder %s30, 1
      %p284 = por %p282, %p283
      %p286 = scmp.ne.s32.totalorder %s271, %s285
      %p287 = scmp.eq.s32.totalorder %s30, 0
      %p288 = por %p286, %p287
      %s290 = sadd.s32 %s289, 1
      %p293 = scmp.eq.s32.totalorder %s24, 1
      %p294 = scmp.ne.s32.totalorder %s289, %s291
      %p295 = scmp.eq.s32.totalorder %s24, 0
      %p296 = por %p294, %p295
      %p297 = scmp.ne.s32.totalorder %s289, %s291
      %p298 = scmp.eq.s32.totalorder %s29, 1
      %p299 = por %p297, %p298
      %p300 = scmp.ne.s32.totalorder %s291, %s292
      %p301 = scmp.eq.s32.totalorder %s29, 0
      %p302 = por %p300, %p301
      %p303 = scmp.ne.s32.totalorder %s291, %s292
      %p304 = scmp.eq.s32.totalorder %s30, 1
      %p305 = por %p303, %p304
      %p307 = scmp.ne.s32.totalorder %s292, %s306
      %p308 = scmp.eq.s32.totalorder %s30, 0
      %p309 = por %p307, %p308
      %s311 = sadd.s32 %s310, 1
      %p314 = scmp.eq.s32.totalorder %s24, 1
      %p315 = scmp.ne.s32.totalorder %s310, %s312
      %p316 = scmp.eq.s32.totalorder %s24, 0
      %p317 = por %p315, %p316
      %p318 = scmp.ne.s32.totalorder %s310, %s312
      %p319 = scmp.eq.s32.totalorder %s29, 1
      %p320 = por %p318, %p319
      %p321 = scmp.ne.s32.totalorder %s312, %s313
      %p322 = scmp.eq.s32.totalorder %s29, 0
      %p323 = por %p321, %p322
      %p324 = scmp.ne.s32.totalorder %s312, %s313
      %p325 = scmp.eq.s32.totalorder %s30, 1
      %p326 = por %p324, %p325
      %p328 = scmp.ne.s32.totalorder %s313, %s327
      %p329 = scmp.eq.s32.totalorder %s30, 0
      %p330 = por %p328, %p329
      %s331 = ssub.s32 %s24, %s31
      %p332 = scmp.eq.s32.totalorder %s331, 0
      %s334 = sadd.s32 %s333, 1
      %s335 = scalar_select %p332, %s333, %s334
      %p338 = pneg %p332
      %p339 = scmp.eq.s32.totalorder %s24, 1
      %p340 = por %p338, %p339
      %p341 = scmp.ne.s32.totalorder %s333, %s336
      %p342 = scmp.eq.s32.totalorder %s24, 0
      %p343 = por %p341, %p342
      %p344 = scmp.ne.s32.totalorder %s333, %s336
      %p345 = scmp.eq.s32.totalorder %s29, 1
      %p346 = por %p344, %p345
      %p347 = scmp.ne.s32.totalorder %s336, %s337
      %p348 = scmp.eq.s32.totalorder %s29, 0
      %p349 = por %p347, %p348
      %p350 = scmp.ne.s32.totalorder %s336, %s337
      %p351 = scmp.eq.s32.totalorder %s30, 1
      %p352 = por %p350, %p351
      %p354 = scmp.ne.s32.totalorder %s337, %s353
      %p355 = scmp.eq.s32.totalorder %s30, 0
      %p356 = por %p354, %p355
      %p357 = scmp.le.s32.totalorder 1, %s24
      %p358 = scmp.lt.s32.totalorder %s24, 3
      %p359 = pnand %p357, %p358
      %p360 = pneg %p359
      // Predicated region
      $region9: #{nanogpt_forward.6} parent=5 // pred_check
        _
      $region10: #{nanogpt_forward.6} parent=5 // pred_check_branch
        %362 = sbr.rel (%p359) target = $region12
      $region11: #{nanogpt_forward.6} parent=5 // pred_region
        %s363 = ssub.s32 %s24, 1
        // Predicated region
        $region13: #{nanogpt_forward.6} parent=11 // pred_check
          %p364 = pneg %p71
        $region14: #{nanogpt_forward.6} parent=11 // pred_check_branch
          %366 = sbr.rel (%p364) target = $region16
        $region15: #{nanogpt_forward.6} parent=11 // pred_region
          _
        $region16: #{nanogpt_forward.6} parent=11 // pred_fallthru
          _
        // Predicated region
        $region17: #{nanogpt_forward.6} parent=11 // pred_check
          %p367 = pneg %p92
        $region18: #{nanogpt_forward.6} parent=11 // pred_check_branch
          %369 = sbr.rel (%p367) target = $region20
        $region19: #{nanogpt_forward.6} parent=11 // pred_region
          %371 = vsyncadd [#allocation3], 0
          %s373 = sshll.u32 %s2, 4
          %s374 = int_to_ptr.hbm [resolvable:$true] %s373
          %s375 = sshll.u32 [#allocation2], 4
          %s376 = int_to_ptr.vmem [resolvable:$true] %s375
          %378 = dma.hbm_to_vmem [thread:$0]  %s374, 16, %s376, [#allocation3]
        $region20: #{nanogpt_forward.6} parent=11 // pred_fallthru
          _
        // Predicated region
        $region21: #{nanogpt_forward.6} parent=11 // pred_check
          %p379 = pneg %p113
        $region22: #{nanogpt_forward.6} parent=11 // pred_check_branch
          %381 = sbr.rel (%p379) target = $region24
        $region23: #{nanogpt_forward.6} parent=11 // pred_region
          %383 = vsyncadd [#allocation5], 0
          %s385 = sshll.u32 %s3, 4
          %s386 = int_to_ptr.hbm [resolvable:$true] %s385
          %s387 = sshll.u32 [#allocation4], 4
          %s388 = int_to_ptr.vmem [resolvable:$true] %s387
          %390 = dma.hbm_to_vmem [thread:$0]  %s386, 16, %s388, [#allocation5]
        $region24: #{nanogpt_forward.6} parent=11 // pred_fallthru
          _
        // Predicated region
        $region25: #{nanogpt_forward.6} parent=11 // pred_check
          %p391 = pneg %p134
        $region26: #{nanogpt_forward.6} parent=11 // pred_check_branch
          %393 = sbr.rel (%p391) target = $region28
        $region27: #{nanogpt_forward.6} parent=11 // pred_region
          %395 = vsyncadd [#allocation5], 0
          %s397 = sshll.u32 %s4, 4
          %s398 = int_to_ptr.hbm [resolvable:$true] %s397
          %s399 = sshll.u32 [#allocation6], 4
          %s400 = int_to_ptr.vmem [resolvable:$true] %s399
          %402 = dma.hbm_to_vmem [thread:$0]  %s398, 16, %s400, [#allocation5]
        $region28: #{nanogpt_forward.6} parent=11 // pred_fallthru
          _
        // Predicated region
        $region29: #{nanogpt_forward.6} parent=11 // pred_check
          %p403 = pneg %p155
        $region30: #{nanogpt_forward.6} parent=11 // pred_check_branch
          %405 = sbr.rel (%p403) target = $region32
        $region31: #{nanogpt_forward.6} parent=11 // pred_region
          _
        $region32: #{nanogpt_forward.6} parent=11 // pred_fallthru
          _
        // Predicated region
        $region33: #{nanogpt_forward.6} parent=11 // pred_check
          %p406 = pneg %p176
        $region34: #{nanogpt_forward.6} parent=11 // pred_check_branch
          %408 = sbr.rel (%p406) target = $region36
        $region35: #{nanogpt_forward.6} parent=11 // pred_region
          _
        $region36: #{nanogpt_forward.6} parent=11 // pred_fallthru
          _
        // Predicated region
        $region37: #{nanogpt_forward.6} parent=11 // pred_check
          %p409 = pneg %p197
        $region38: #{nanogpt_forward.6} parent=11 // pred_check_branch
          %411 = sbr.rel (%p409) target = $region40
        $region39: #{nanogpt_forward.6} parent=11 // pred_region
          %413 = vsyncadd [#allocation8], 0
          %s415 = sshll.u32 %s7, 4
          %s416 = int_to_ptr.hbm [resolvable:$true] %s415
          %s417 = sshll.u32 [#allocation7], 4
          %s418 = int_to_ptr.vmem [resolvable:$true] %s417
          %420 = dma.hbm_to_vmem [thread:$0]  %s416, 16, %s418, [#allocation8]
        $region40: #{nanogpt_forward.6} parent=11 // pred_fallthru
          _
        // Predicated region
        $region41: #{nanogpt_forward.6} parent=11 // pred_check
          %p421 = pneg %p218
        $region42: #{nanogpt_forward.6} parent=11 // pred_check_branch
          %423 = sbr.rel (%p421) target = $region44
        $region43: #{nanogpt_forward.6} parent=11 // pred_region
          %425 = vsyncadd [#allocation8], 0
          %s427 = sshll.u32 %s8, 4
          %s428 = int_to_ptr.hbm [resolvable:$true] %s427
          %s429 = sshll.u32 [#allocation9], 4
          %s430 = int_to_ptr.vmem [resolvable:$true] %s429
          %432 = dma.hbm_to_vmem [thread:$0]  %s428, 16, %s430, [#allocation8]
        $region44: #{nanogpt_forward.6} parent=11 // pred_fallthru
          _
        // Predicated region
        $region45: #{nanogpt_forward.6} parent=11 // pred_check
          %p433 = pneg %p239
        $region46: #{nanogpt_forward.6} parent=11 // pred_check_branch
          %435 = sbr.rel (%p433) target = $region48
        $region47: #{nanogpt_forward.6} parent=11 // pred_region
          %437 = vsyncadd [#allocation11], 0
          %s439 = sshll.u32 %s9, 4
          %s440 = int_to_ptr.hbm [resolvable:$true] %s439
          %s441 = sshll.u32 [#allocation10], 4
          %s442 = int_to_ptr.vmem [resolvable:$true] %s441
          %444 = dma.hbm_to_vmem [thread:$0]  %s440, 16, %s442, [#allocation11]
        $region48: #{nanogpt_forward.6} parent=11 // pred_fallthru
          _
        // Predicated region
        $region49: #{nanogpt_forward.6} parent=11 // pred_check
          %p445 = pneg %p260
        $region50: #{nanogpt_forward.6} parent=11 // pred_check_branch
          %447 = sbr.rel (%p445) target = $region52
        $region51: #{nanogpt_forward.6} parent=11 // pred_region
          _
        $region52: #{nanogpt_forward.6} parent=11 // pred_fallthru
          _
        // Predicated region
        $region53: #{nanogpt_forward.6} parent=11 // pred_check
          %p448 = pneg %p281
        $region54: #{nanogpt_forward.6} parent=11 // pred_check_branch
          %450 = sbr.rel (%p448) target = $region56
        $region55: #{nanogpt_forward.6} parent=11 // pred_region
          _
        $region56: #{nanogpt_forward.6} parent=11 // pred_fallthru
          _
        // Predicated region
        $region57: #{nanogpt_forward.6} parent=11 // pred_check
          %p451 = pneg %p302
        $region58: #{nanogpt_forward.6} parent=11 // pred_check_branch
          %453 = sbr.rel (%p451) target = $region60
        $region59: #{nanogpt_forward.6} parent=11 // pred_region
          _
        $region60: #{nanogpt_forward.6} parent=11 // pred_fallthru
          _
        // Predicated region
        $region61: #{nanogpt_forward.6} parent=11 // pred_check
          %p454 = pneg %p323
        $region62: #{nanogpt_forward.6} parent=11 // pred_check_branch
          %456 = sbr.rel (%p454) target = $region64
        $region63: #{nanogpt_forward.6} parent=11 // pred_region
          %458 = vsyncadd [#allocation11], 0
          %s460 = sshll.u32 %s13, 4
          %s461 = int_to_ptr.hbm [resolvable:$true] %s460
          %s462 = sshll.u32 [#allocation12], 4
          %s463 = int_to_ptr.vmem [resolvable:$true] %s462
          %465 = dma.hbm_to_vmem [thread:$0]  %s461, 16, %s463, [#allocation11]
        $region64: #{nanogpt_forward.6} parent=11 // pred_fallthru
          _
      $region12: #{nanogpt_forward.6} parent=5 // pred_fallthru
        _
      %p466 = scmp.lt.s32.totalorder %s24, 2
      // Predicated region
      $region65: #{nanogpt_forward.6} parent=5 // pred_check
        %p467 = pneg %p466
      $region66: #{nanogpt_forward.6} parent=5 // pred_check_branch
        %469 = sbr.rel (%p467) target = $region68
      $region67: #{nanogpt_forward.6} parent=5 // pred_region
        // Predicated region
        $region69: #{nanogpt_forward.6} parent=67 // pred_check
          %p470 = pneg %p44
        $region70: #{nanogpt_forward.6} parent=67 // pred_check_branch
          %472 = sbr.rel (%p470) target = $region72
        $region71: #{nanogpt_forward.6} parent=67 // pred_region
          %p473 = scmp.lt.s32.totalorder %s24, 1
          %s474 = scalar_select %p473, %s24, 1
          %s475 = smul.addr %s474, 8
          %s476 = scalar_lea.vmem %s0, %s475
        $region72: #{nanogpt_forward.6} parent=67 // pred_fallthru
          _
      $region68: #{nanogpt_forward.6} parent=5 // pred_fallthru
        _
      %p477 = scmp.le.s32.totalorder 1, %s24
      %p478 = scmp.lt.s32.totalorder %s24, 3
      %p479 = pnand %p477, %p478
      %p480 = pneg %p479
      // Predicated region
      $region73: #{nanogpt_forward.6} parent=5 // pred_check
        _
      $region74: #{nanogpt_forward.6} parent=5 // pred_check_branch
        %482 = sbr.rel (%p479) target = $region76
      $region75: #{nanogpt_forward.6} parent=5 // pred_region
        %s483 = ssub.s32 %s24, 1
        // Predicated region
        $region77: #{nanogpt_forward.6} parent=75 // pred_check
          %p484 = pneg %p92
        $region78: #{nanogpt_forward.6} parent=75 // pred_check_branch
          %486 = sbr.rel (%p484) target = $region80
        $region79: #{nanogpt_forward.6} parent=75 // pred_region
          %488 = dma.done [#allocation3], 16
        $region80: #{nanogpt_forward.6} parent=75 // pred_fallthru
          _
        // Predicated region
        $region81: #{nanogpt_forward.6} parent=75 // pred_check
          %p489 = pneg %p113
        $region82: #{nanogpt_forward.6} parent=75 // pred_check_branch
          %491 = sbr.rel (%p489) target = $region84
        $region83: #{nanogpt_forward.6} parent=75 // pred_region
          %493 = dma.done [#allocation5], 16
        $region84: #{nanogpt_forward.6} parent=75 // pred_fallthru
          _
        // Predicated region
        $region85: #{nanogpt_forward.6} parent=75 // pred_check
          %p494 = pneg %p134
        $region86: #{nanogpt_forward.6} parent=75 // pred_check_branch
          %496 = sbr.rel (%p494) target = $region88
        $region87: #{nanogpt_forward.6} parent=75 // pred_region
          %498 = dma.done [#allocation5], 16
        $region88: #{nanogpt_forward.6} parent=75 // pred_fallthru
          _
        // Predicated region
        $region89: #{nanogpt_forward.6} parent=75 // pred_check
          %p499 = pneg %p197
        $region90: #{nanogpt_forward.6} parent=75 // pred_check_branch
          %501 = sbr.rel (%p499) target = $region92
        $region91: #{nanogpt_forward.6} parent=75 // pred_region
          %503 = dma.done [#allocation8], 16
        $region92: #{nanogpt_forward.6} parent=75 // pred_fallthru
          _
        // Predicated region
        $region93: #{nanogpt_forward.6} parent=75 // pred_check
          %p504 = pneg %p218
        $region94: #{nanogpt_forward.6} parent=75 // pred_check_branch
          %506 = sbr.rel (%p504) target = $region96
        $region95: #{nanogpt_forward.6} parent=75 // pred_region
          %508 = dma.done [#allocation8], 16
        $region96: #{nanogpt_forward.6} parent=75 // pred_fallthru
          _
        // Predicated region
        $region97: #{nanogpt_forward.6} parent=75 // pred_check
          %p509 = pneg %p239
        $region98: #{nanogpt_forward.6} parent=75 // pred_check_branch
          %511 = sbr.rel (%p509) target = $region100
        $region99: #{nanogpt_forward.6} parent=75 // pred_region
          %513 = dma.done [#allocation11], 16
        $region100: #{nanogpt_forward.6} parent=75 // pred_fallthru
          _
        // Predicated region
        $region101: #{nanogpt_forward.6} parent=75 // pred_check
          %p514 = pneg %p323
        $region102: #{nanogpt_forward.6} parent=75 // pred_check_branch
          %516 = sbr.rel (%p514) target = $region104
        $region103: #{nanogpt_forward.6} parent=75 // pred_region
          %518 = dma.done [#allocation11], 16
        $region104: #{nanogpt_forward.6} parent=75 // pred_fallthru
          _
        %p519 = scmp.lt.s32.totalorder %s29, 1
        %s520 = scalar_select %p519, %s29, 1
        %s521 = smul.addr %s520, 8
        %s522 = scalar_lea.vmem %s0, %s521
        %p523 = pneg %p50
        %p524 = pneg %p47
        %p525 = pneg %p71
        %p526 = pneg %p68
        %p527 = pneg %p92
        %p528 = pneg %p89
        %p529 = pneg %p113
        %p530 = pneg %p110
        %p531 = pneg %p134
        %p532 = pneg %p131
        %p533 = pneg %p155
        %p534 = pneg %p152
        %p535 = pneg %p176
        %p536 = pneg %p173
        %p537 = pneg %p197
        %p538 = pneg %p194
        %p539 = pneg %p218
        %p540 = pneg %p215
        %p541 = pneg %p239
        %p542 = pneg %p236
        %p543 = pneg %p260
        %p544 = pneg %p257
        %p545 = pneg %p281
        %p546 = pneg %p278
        %p547 = pneg %p302
        %p548 = pneg %p299
        %p549 = pneg %p323
        %p550 = pneg %p320
        %p551 = pneg %p349
        %p552 = pneg %p346
        %p553 = scmp.lt.s32.totalorder %s29, 1
        %s554 = scalar_select %p553, %s29, 1
        %s555 = smul.addr %s554, 8
        %s556 = scalar_lea.vmem %s14, %s555
        %p557 = scmp.lt.s32.totalorder %s29, 1
        %s558 = scalar_select %p557, %s29, 1
        %s559 = smul.addr %s558, 8
        %s560 = scalar_lea.vmem %s0, %s559
        %p561 = scmp.lt.s32.totalorder %s29, 1
        %s562 = scalar_select %p561, %s29, 1
        %s563 = smul.addr %s562, 8
        %s564 = scalar_lea.vmem %s14, %s563
        %v566 = vld [vmem:[%s560] sm:$0xff]
        %v567 = vpack.c.bf16 %v566, %v566
        %v568 = vld [vmem:[%s1] sm:$0xf]
        %v569 = vld [vmem:[%s1 + $0x4] sm:$0xf]
        %v570 = vld [vmem:[%s1 + $0x8] sm:$0xf]
        %v571 = vld [vmem:[%s1 + $0xc] sm:$0xf]
        %v572 = vld [vmem:[%s1 + $0x10] sm:$0xf]
        %v573 = vld [vmem:[%s1 + $0x14] sm:$0xf]
        %v574 = vld [vmem:[%s1 + $0x18] sm:$0xf]
        %v575 = vld [vmem:[%s1 + $0x1c] sm:$0xf]
        %v576 = vld [vmem:[%s1 + $0x20] sm:$0xf]
        %v577 = vld [vmem:[%s1 + $0x24] sm:$0xf]
        %v578 = vld [vmem:[%s1 + $0x28] sm:$0xf]
        %v579 = vld [vmem:[%s1 + $0x2c] sm:$0xf]
        %v580 = vld [vmem:[%s1 + $0x30] sm:$0xf]
        %v581 = vld [vmem:[%s1 + $0x34] sm:$0xf]
        %v582 = vld [vmem:[%s1 + $0x38] sm:$0xf]
        %v583 = vld [vmem:[%s1 + $0x3c] sm:$0xf]
        %v584 = vld [vmem:[#allocation2] sm:$0x1]
        %v586 = vperm.slane %v584, 0
        %v604 = vunpack.c.l.b16 %v568
        %v605 = vunpack.c.l.b16 %v569
        %v606 = vunpack.c.l.b16 %v570
        %v607 = vunpack.c.l.b16 %v571
        %v608 = vunpack.c.l.b16 %v572
        %v609 = vunpack.c.l.b16 %v573
        %v610 = vunpack.c.l.b16 %v574
        %v611 = vunpack.c.l.b16 %v575
        %v612 = vunpack.c.l.b16 %v576
        %v613 = vunpack.c.l.b16 %v577
        %v614 = vunpack.c.l.b16 %v578
        %v615 = vunpack.c.l.b16 %v579
        %v616 = vunpack.c.l.b16 %v580
        %v617 = vunpack.c.l.b16 %v581
        %v618 = vunpack.c.l.b16 %v582
        %v619 = vunpack.c.l.b16 %v583
        %v620 = vpack.c.b16 %v605, %v604
        %v621 = vpack.c.b16 %v607, %v606
        %v622 = vpack.c.b16 %v609, %v608
        %v623 = vpack.c.b16 %v611, %v610
        %v624 = vpack.c.b16 %v613, %v612
        %v625 = vpack.c.b16 %v615, %v614
        %v626 = vpack.c.b16 %v617, %v616
        %v627 = vpack.c.b16 %v619, %v618
        %636 = vmatpush.bf16.msra.mxu0 %v627
        %637 = vmatpush.bf16.msra.mxu0 %v626
        %638 = vmatpush.bf16.msra.mxu0 %v625
        %639 = vmatpush.bf16.msra.mxu0 %v624
        %640 = vmatpush.bf16.msra.mxu0 %v623
        %641 = vmatpush.bf16.msra.mxu0 %v622
        %642 = vmatpush.bf16.msra.mxu0 %v621
        %643 = vmatpush.bf16.msra.mxu0 %v620
        %644 = vmatmul.bf16.gmra.mxu0 %v567
        %v645 = vpop.f32.mrf.mxu0
        %v646 = vadd.f32 %v586, %v645
        %v647 = vpop.f32.mrf.mxu0
        %648 = vdwg.mxu0
        %v649 = vmax.f32 %v646, 0.0
        %v650 = vld [vmem:[#allocation4] sm:$0x1]
        %v651 = vld [vmem:[#allocation6] sm:$0x1]
        %vm652 = vcmask 523264
        %v653 = vsel %vm652, %v649, 0.0
        %654 = vadd.xlane.f32.xlu0 %v653
        %v655 = vpop.xlane.xlu0 %654
        %v656 = vrcp.pop 64.0
        %v657 = vmul.f32 64.0, %v656
        %v658 = vsub.f32 1.0, %v657
        %v659 = vmul.f32 %v656, %v658
        %v660 = vadd.f32 %v656, %v659
        %vm661 = vweird.f32 %v656
        %v662 = vsel %vm661, %v656, %v660
        %v663 = vmul.f32 %v655, %v662
        %v664 = vsub.f32 %v649, %v663
        %v665 = vmul.f32 %v664, %v664
        %v666 = vsel %vm652, %v665, 0.0
        %667 = vadd.xlane.f32.xlu0 %v666
        %v668 = vpop.xlane.xlu0 %667
        %v669 = vmul.f32 %v668, %v662
        %v670 = vadd.f32 %v669, 1e-05
        %v671 = vrsqrt.pop %v670
        %v672 = vmul.f32 %v671, %v670
        %v673 = vmul.f32 %v672, %v671
        %v674 = vmul.f32 0.5, %v673
        %v675 = vsub.f32 1.5, %v674
        %v676 = vmul.f32 %v671, %v675
        %vm677 = vweird.f32 %v670
        %vm678 = vweird.f32 %v671
        %vm679 = vmor %vm677, %vm678
        %v680 = vsel %vm679, %v671, %v676
        %v681 = vmul.f32 %v664, %v680
        %v683 = vperm.slane %v650, 0
        %v685 = vmul.f32 %v681, %v683
        %v687 = vperm.slane %v651, 0
        %v689 = vadd.f32 %v685, %v687
        %v690 = vpack.c.bf16 %v689, %v689
        %v691 = vld [vmem:[%s5] sm:$0xff]
        %v692 = vld [vmem:[%s5 + $0x8] sm:$0xff]
        %v693 = vld [vmem:[%s5 + $0x10] sm:$0xff]
        %v694 = vld [vmem:[%s5 + $0x18] sm:$0xff]
        %v695 = vld [vmem:[%s5 + $0x20] sm:$0xff]
        %v696 = vld [vmem:[%s5 + $0x28] sm:$0xff]
        %v697 = vld [vmem:[%s5 + $0x30] sm:$0xff]
        %v698 = vld [vmem:[%s5 + $0x38] sm:$0xff]
        %v707 = vunpack.c.l.b16 %v691
        %v708 = vunpack.c.h.b16 %v691
        %v709 = vunpack.c.l.b16 %v692
        %v710 = vunpack.c.h.b16 %v692
        %v711 = vunpack.c.l.b16 %v693
        %v712 = vunpack.c.h.b16 %v693
        %v713 = vunpack.c.l.b16 %v694
        %v714 = vunpack.c.h.b16 %v694
        %v715 = vunpack.c.l.b16 %v695
        %v716 = vunpack.c.h.b16 %v695
        %v717 = vunpack.c.l.b16 %v696
        %v718 = vunpack.c.h.b16 %v696
        %v719 = vunpack.c.l.b16 %v697
        %v720 = vunpack.c.h.b16 %v697
        %v721 = vunpack.c.l.b16 %v698
        %v722 = vunpack.c.h.b16 %v698
        %v723 = vpack.c.b16 %v709, %v707
        %v724 = vpack.c.b16 %v710, %v708
        %v725 = vpack.c.b16 %v713, %v711
        %v726 = vpack.c.b16 %v714, %v712
        %v727 = vpack.c.b16 %v717, %v715
        %v728 = vpack.c.b16 %v718, %v716
        %v729 = vpack.c.b16 %v721, %v719
        %v730 = vpack.c.b16 %v722, %v720
        %v740 = vsel %vm652, %v690, 0
        %742 = vmatpush.bf16.msra.mxu0 0
        %743 = vmatpush.bf16.msra.mxu0 0
        %744 = vmatpush.bf16.msra.mxu0 0
        %745 = vmatpush.bf16.msra.mxu0 0
        %746 = vmatpush.bf16.msra.mxu0 %v729
        %747 = vmatpush.bf16.msra.mxu0 %v727
        %748 = vmatpush.bf16.msra.mxu0 %v725
        %749 = vmatpush.bf16.msra.mxu0 %v723
        %750 = vmatmul.bf16.gmra.mxu0 %v740
        %v751 = vpop.f32.mrf.mxu0
        %v752 = vadd.f32 0.0, %v751
        %v753 = vpop.f32.mrf.mxu0
        %754 = vdwg.mxu0
        %755 = vmatpush.bf16.msra.mxu0 0
        %756 = vmatpush.bf16.msra.mxu0 0
        %757 = vmatpush.bf16.msra.mxu0 0
        %758 = vmatpush.bf16.msra.mxu0 0
        %759 = vmatpush.bf16.msra.mxu0 %v730
        %760 = vmatpush.bf16.msra.mxu0 %v728
        %761 = vmatpush.bf16.msra.mxu0 %v726
        %762 = vmatpush.bf16.msra.mxu0 %v724
        %763 = vmatmul.bf16.gmra.mxu0 %v740
        %v764 = vpop.f32.mrf.mxu0
        %v765 = vadd.f32 0.0, %v764
        %v766 = vpop.f32.mrf.mxu0
        %767 = vdwg.mxu0
        %v768 = vlaneseq
        %v769 = vshrl.u32 %v768, 7
        %v770 = vlaneseq
        %v771 = vand.u32 %v770, 127
        %vm772 = vcmp.le.s32.totalorder %v771, %v769
        %v773 = vld [vmem:[%s6] sm:$0xf]
        %v774 = vld [vmem:[%s6 + $0x4] sm:$0xf]
        %v775 = vld [vmem:[%s6 + $0x8] sm:$0xf]
        %v776 = vld [vmem:[%s6 + $0xc] sm:$0xf]
        %v777 = vld [vmem:[%s6 + $0x10] sm:$0xf]
        %v778 = vld [vmem:[%s6 + $0x14] sm:$0xf]
        %v779 = vld [vmem:[%s6 + $0x18] sm:$0xf]
        %v780 = vld [vmem:[%s6 + $0x1c] sm:$0xf]
        %782 = vrot.lane.b32.xlu0 %v752, 64
        %v783 = vpop.permute.xlu0 %782
        %vm784 = vcmask 130048
        %v785 = vsel %vm784, %v752, 0
        %v787 = vsel %vm784, %v783, 0
        %789 = vmatpush.xpose.msra.mxu0 0.0
        %790 = vmatpush.xpose.msra.mxu0 0.0
        %791 = vmatpush.xpose.msra.mxu0 0.0
        %792 = vmatpush.xpose.msra.mxu0 0.0
        %793 = vmatpush.xpose.msra.mxu0 0.0
        %794 = vmatpush.xpose.msra.mxu0 0.0
        %795 = vmatpush.xpose.msra.mxu0 0.0
        %796 = vmatpush.xpose.msra.mxu0 0.0
        %797 = vmatpush.xpose.msra.mxu0 0.0
        %798 = vmatpush.xpose.msra.mxu0 0.0
        %799 = vmatpush.xpose.msra.mxu0 0.0
        %800 = vmatpush.xpose.msra.mxu0 0.0
        %801 = vmatpush.xpose.msra.mxu0 0.0
        %802 = vmatpush.xpose.msra.mxu0 0.0
        %803 = vmatpush.xpose.msra.mxu0 0.0
        %804 = vmatpush.xpose.msra.mxu0 %v787
        %805 = vmatmul.f32.gmra.mxu0 %v785
        %v806 = vpop.f32.mrf.mxu0
        %v807 = vadd.f32 0.0, %v806
        %808 = vdwg.mxu0
        %v809 = vmul.f32 %v807, 0.25
        %v810 = vsel %vm772, %v809, -inf
        %vm811 = vcmask 64512
        %v812 = vsel %vm811, %v810, -inf
        %813 = vmax.xlane.f32.xlu0 %v812
        %v814 = vpop.xlane.xlu0 %813
        %v815 = vsub.f32 %v810, %v814
        %v816 = vmul.f32 %v815, 1.442695
        %v817 = vpow.pop %v816
        %v818 = vsel %vm811, %v817, 0.0
        %819 = vadd.xlane.f32.xlu0 %v818
        %v820 = vpop.xlane.xlu0 %819
        %v821 = vrcp.pop %v820
        %v822 = vmul.f32 %v817, %v821
        %v824 = vsel %vm811, %v822, 0
        %826 = vmatpush.msra.mxu0 0.0
        %827 = vmatpush.msra.mxu0 0.0
        %828 = vmatpush.msra.mxu0 0.0
        %829 = vmatpush.msra.mxu0 0.0
        %830 = vmatpush.msra.mxu0 0.0
        %831 = vmatpush.msra.mxu0 0.0
        %832 = vmatpush.msra.mxu0 0.0
        %833 = vmatpush.msra.mxu0 0.0
        %834 = vmatpush.msra.mxu0 0.0
        %835 = vmatpush.msra.mxu0 0.0
        %836 = vmatpush.msra.mxu0 0.0
        %837 = vmatpush.msra.mxu0 0.0
        %838 = vmatpush.msra.mxu0 0.0
        %839 = vmatpush.msra.mxu0 0.0
        %840 = vmatpush.msra.mxu0 0.0
        %841 = vmatpush.msra.mxu0 %v765
        %842 = vmatmul.f32.gmra.mxu0 %v824
        %v843 = vpop.f32.mrf.mxu0
        %v844 = vadd.f32 0.0, %v843
        %845 = vdwg.mxu0
        %v846 = vpack.c.bf16 %v844, %v844
        %847 = vrot.lane.b32.xlu0 %v752, 112
        %v848 = vpop.permute.xlu0 %847
        %849 = vrot.lane.b32.xlu0 %v752, 48
        %v850 = vpop.permute.xlu0 %849
        %v851 = vsel %vm784, %v848, 0
        %v853 = vsel %vm784, %v850, 0
        %855 = vmatpush.xpose.msra.mxu0 0.0
        %856 = vmatpush.xpose.msra.mxu0 0.0
        %857 = vmatpush.xpose.msra.mxu0 0.0
        %858 = vmatpush.xpose.msra.mxu0 0.0
        %859 = vmatpush.xpose.msra.mxu0 0.0
        %860 = vmatpush.xpose.msra.mxu0 0.0
        %861 = vmatpush.xpose.msra.mxu0 0.0
        %862 = vmatpush.xpose.msra.mxu0 0.0
        %863 = vmatpush.xpose.msra.mxu0 0.0
        %864 = vmatpush.xpose.msra.mxu0 0.0
        %865 = vmatpush.xpose.msra.mxu0 0.0
        %866 = vmatpush.xpose.msra.mxu0 0.0
        %867 = vmatpush.xpose.msra.mxu0 0.0
        %868 = vmatpush.xpose.msra.mxu0 0.0
        %869 = vmatpush.xpose.msra.mxu0 0.0
        %870 = vmatpush.xpose.msra.mxu0 %v853
        %871 = vmatmul.f32.gmra.mxu0 %v851
        %v872 = vpop.f32.mrf.mxu0
        %v873 = vadd.f32 0.0, %v872
        %874 = vdwg.mxu0
        %v875 = vmul.f32 %v873, 0.25
        %v876 = vsel %vm772, %v875, -inf
        %v877 = vsel %vm811, %v876, -inf
        %878 = vmax.xlane.f32.xlu0 %v877
        %v879 = vpop.xlane.xlu0 %878
        %v880 = vsub.f32 %v876, %v879
        %v881 = vmul.f32 %v880, 1.442695
        %v882 = vpow.pop %v881
        %v883 = vsel %vm811, %v882, 0.0
        %884 = vadd.xlane.f32.xlu0 %v883
        %v885 = vpop.xlane.xlu0 %884
        %v886 = vrcp.pop %v885
        %v887 = vmul.f32 %v882, %v886
        %889 = vrot.lane.b32.xlu0 %v765, 112
        %v890 = vpop.permute.xlu0 %889
        %v893 = vsel %vm811, %v887, 0
        %895 = vmatpush.msra.mxu0 0.0
        %896 = vmatpush.msra.mxu0 0.0
        %897 = vmatpush.msra.mxu0 0.0
        %898 = vmatpush.msra.mxu0 0.0
        %899 = vmatpush.msra.mxu0 0.0
        %900 = vmatpush.msra.mxu0 0.0
        %901 = vmatpush.msra.mxu0 0.0
        %902 = vmatpush.msra.mxu0 0.0
        %903 = vmatpush.msra.mxu0 0.0
        %904 = vmatpush.msra.mxu0 0.0
        %905 = vmatpush.msra.mxu0 0.0
        %906 = vmatpush.msra.mxu0 0.0
        %907 = vmatpush.msra.mxu0 0.0
        %908 = vmatpush.msra.mxu0 0.0
        %909 = vmatpush.msra.mxu0 0.0
        %910 = vmatpush.msra.mxu0 %v890
        %911 = vmatmul.f32.gmra.mxu0 %v893
        %v912 = vpop.f32.mrf.mxu0
        %v913 = vadd.f32 0.0, %v912
        %914 = vdwg.mxu0
        %v915 = vpack.c.bf16 %v913, %v913
        %v918 = vunpack.c.l.b16 %v775
        %v919 = vunpack.c.l.b16 %v776
        %v920 = vpack.c.b16 %v919, %v918
        %v923 = vsel %vm784, %v915, 0
        %925 = vmatpush.bf16.msra.mxu0 0
        %926 = vmatpush.bf16.msra.mxu0 0
        %927 = vmatpush.bf16.msra.mxu0 0
        %928 = vmatpush.bf16.msra.mxu0 0
        %929 = vmatpush.bf16.msra.mxu0 0
        %930 = vmatpush.bf16.msra.mxu0 0
        %931 = vmatpush.bf16.msra.mxu0 0
        %932 = vmatpush.bf16.msra.mxu0 %v920
        %933 = vmatmul.bf16.gmra.mxu0 %v923
        %v934 = vpop.f32.mrf.mxu0
        %v935 = vadd.f32 0.0, %v934
        %v936 = vpop.f32.mrf.mxu0
        %937 = vdwg.mxu0
        %v940 = vunpack.c.l.b16 %v773
        %v941 = vunpack.c.l.b16 %v774
        %v942 = vpack.c.b16 %v941, %v940
        %v945 = vsel %vm784, %v846, 0
        %947 = vmatpush.bf16.msra.mxu0 0
        %948 = vmatpush.bf16.msra.mxu0 0
        %949 = vmatpush.bf16.msra.mxu0 0
        %950 = vmatpush.bf16.msra.mxu0 0
        %951 = vmatpush.bf16.msra.mxu0 0
        %952 = vmatpush.bf16.msra.mxu0 0
        %953 = vmatpush.bf16.msra.mxu0 0
        %954 = vmatpush.bf16.msra.mxu0 %v942
        %955 = vmatmul.bf16.gmra.mxu0 %v945
        %v956 = vpop.f32.mrf.mxu0
        %v957 = vadd.f32 %v935, %v956
        %v958 = vpop.f32.mrf.mxu0
        %959 = vdwg.mxu0
        %960 = vrot.lane.b32.xlu0 %v752, 96
        %v961 = vpop.permute.xlu0 %960
        %962 = vrot.lane.b32.xlu0 %v752, 32
        %v963 = vpop.permute.xlu0 %962
        %v964 = vsel %vm784, %v961, 0
        %v966 = vsel %vm784, %v963, 0
        %968 = vmatpush.xpose.msra.mxu0 0.0
        %969 = vmatpush.xpose.msra.mxu0 0.0
        %970 = vmatpush.xpose.msra.mxu0 0.0
        %971 = vmatpush.xpose.msra.mxu0 0.0
        %972 = vmatpush.xpose.msra.mxu0 0.0
        %973 = vmatpush.xpose.msra.mxu0 0.0
        %974 = vmatpush.xpose.msra.mxu0 0.0
        %975 = vmatpush.xpose.msra.mxu0 0.0
        %976 = vmatpush.xpose.msra.mxu0 0.0
        %977 = vmatpush.xpose.msra.mxu0 0.0
        %978 = vmatpush.xpose.msra.mxu0 0.0
        %979 = vmatpush.xpose.msra.mxu0 0.0
        %980 = vmatpush.xpose.msra.mxu0 0.0
        %981 = vmatpush.xpose.msra.mxu0 0.0
        %982 = vmatpush.xpose.msra.mxu0 0.0
        %983 = vmatpush.xpose.msra.mxu0 %v966
        %984 = vmatmul.f32.gmra.mxu0 %v964
        %v985 = vpop.f32.mrf.mxu0
        %v986 = vadd.f32 0.0, %v985
        %987 = vdwg.mxu0
        %v988 = vmul.f32 %v986, 0.25
        %v989 = vsel %vm772, %v988, -inf
        %v990 = vsel %vm811, %v989, -inf
        %991 = vmax.xlane.f32.xlu0 %v990
        %v992 = vpop.xlane.xlu0 %991
        %v993 = vsub.f32 %v989, %v992
        %v994 = vmul.f32 %v993, 1.442695
        %v995 = vpow.pop %v994
        %v996 = vsel %vm811, %v995, 0.0
        %997 = vadd.xlane.f32.xlu0 %v996
        %v998 = vpop.xlane.xlu0 %997
        %v999 = vrcp.pop %v998
        %v1000 = vmul.f32 %v995, %v999
        %1001 = vrot.lane.b32.xlu0 %v765, 96
        %v1002 = vpop.permute.xlu0 %1001
        %v1005 = vsel %vm811, %v1000, 0
        %1007 = vmatpush.msra.mxu0 0.0
        %1008 = vmatpush.msra.mxu0 0.0
        %1009 = vmatpush.msra.mxu0 0.0
        %1010 = vmatpush.msra.mxu0 0.0
        %1011 = vmatpush.msra.mxu0 0.0
        %1012 = vmatpush.msra.mxu0 0.0
        %1013 = vmatpush.msra.mxu0 0.0
        %1014 = vmatpush.msra.mxu0 0.0
        %1015 = vmatpush.msra.mxu0 0.0
        %1016 = vmatpush.msra.mxu0 0.0
        %1017 = vmatpush.msra.mxu0 0.0
        %1018 = vmatpush.msra.mxu0 0.0
        %1019 = vmatpush.msra.mxu0 0.0
        %1020 = vmatpush.msra.mxu0 0.0
        %1021 = vmatpush.msra.mxu0 0.0
        %1022 = vmatpush.msra.mxu0 %v1002
        %1023 = vmatmul.f32.gmra.mxu0 %v1005
        %v1024 = vpop.f32.mrf.mxu0
        %v1025 = vadd.f32 0.0, %v1024
        %1026 = vdwg.mxu0
        %v1027 = vpack.c.bf16 %v1025, %v1025
        %v1030 = vunpack.c.l.b16 %v777
        %v1031 = vunpack.c.l.b16 %v778
        %v1032 = vpack.c.b16 %v1031, %v1030
        %v1035 = vsel %vm784, %v1027, 0
        %1037 = vmatpush.bf16.msra.mxu0 0
        %1038 = vmatpush.bf16.msra.mxu0 0
        %1039 = vmatpush.bf16.msra.mxu0 0
        %1040 = vmatpush.bf16.msra.mxu0 0
        %1041 = vmatpush.bf16.msra.mxu0 0
        %1042 = vmatpush.bf16.msra.mxu0 0
        %1043 = vmatpush.bf16.msra.mxu0 0
        %1044 = vmatpush.bf16.msra.mxu0 %v1032
        %1045 = vmatmul.bf16.gmra.mxu0 %v1035
        %v1046 = vpop.f32.mrf.mxu0
        %v1047 = vadd.f32 0.0, %v1046
        %v1048 = vpop.f32.mrf.mxu0
        %1049 = vdwg.mxu0
        %v1050 = vadd.f32 %v957, %v1047
        %1051 = vrot.lane.b32.xlu0 %v752, 80
        %v1052 = vpop.permute.xlu0 %1051
        %1053 = vrot.lane.b32.xlu0 %v752, 16
        %v1054 = vpop.permute.xlu0 %1053
        %v1055 = vsel %vm784, %v1052, 0
        %v1057 = vsel %vm784, %v1054, 0
        %1059 = vmatpush.xpose.msra.mxu0 0.0
        %1060 = vmatpush.xpose.msra.mxu0 0.0
        %1061 = vmatpush.xpose.msra.mxu0 0.0
        %1062 = vmatpush.xpose.msra.mxu0 0.0
        %1063 = vmatpush.xpose.msra.mxu0 0.0
        %1064 = vmatpush.xpose.msra.mxu0 0.0
        %1065 = vmatpush.xpose.msra.mxu0 0.0
        %1066 = vmatpush.xpose.msra.mxu0 0.0
        %1067 = vmatpush.xpose.msra.mxu0 0.0
        %1068 = vmatpush.xpose.msra.mxu0 0.0
        %1069 = vmatpush.xpose.msra.mxu0 0.0
        %1070 = vmatpush.xpose.msra.mxu0 0.0
        %1071 = vmatpush.xpose.msra.mxu0 0.0
        %1072 = vmatpush.xpose.msra.mxu0 0.0
        %1073 = vmatpush.xpose.msra.mxu0 0.0
        %1074 = vmatpush.xpose.msra.mxu0 %v1057
        %1075 = vmatmul.f32.gmra.mxu0 %v1055
        %v1076 = vpop.f32.mrf.mxu0
        %v1077 = vadd.f32 0.0, %v1076
        %1078 = vdwg.mxu0
        %v1079 = vmul.f32 %v1077, 0.25
        %v1080 = vsel %vm772, %v1079, -inf
        %v1081 = vsel %vm811, %v1080, -inf
        %1082 = vmax.xlane.f32.xlu0 %v1081
        %v1083 = vpop.xlane.xlu0 %1082
        %v1084 = vsub.f32 %v1080, %v1083
        %v1085 = vmul.f32 %v1084, 1.442695
        %v1086 = vpow.pop %v1085
        %v1087 = vsel %vm811, %v1086, 0.0
        %1088 = vadd.xlane.f32.xlu0 %v1087
        %v1089 = vpop.xlane.xlu0 %1088
        %v1090 = vrcp.pop %v1089
        %v1091 = vmul.f32 %v1086, %v1090
        %1092 = vrot.lane.b32.xlu0 %v765, 80
        %v1093 = vpop.permute.xlu0 %1092
        %v1096 = vsel %vm811, %v1091, 0
        %1098 = vmatpush.msra.mxu0 0.0
        %1099 = vmatpush.msra.mxu0 0.0
        %1100 = vmatpush.msra.mxu0 0.0
        %1101 = vmatpush.msra.mxu0 0.0
        %1102 = vmatpush.msra.mxu0 0.0
        %1103 = vmatpush.msra.mxu0 0.0
        %1104 = vmatpush.msra.mxu0 0.0
        %1105 = vmatpush.msra.mxu0 0.0
        %1106 = vmatpush.msra.mxu0 0.0
        %1107 = vmatpush.msra.mxu0 0.0
        %1108 = vmatpush.msra.mxu0 0.0
        %1109 = vmatpush.msra.mxu0 0.0
        %1110 = vmatpush.msra.mxu0 0.0
        %1111 = vmatpush.msra.mxu0 0.0
        %1112 = vmatpush.msra.mxu0 0.0
        %1113 = vmatpush.msra.mxu0 %v1093
        %1114 = vmatmul.f32.gmra.mxu0 %v1096
        %v1115 = vpop.f32.mrf.mxu0
        %v1116 = vadd.f32 0.0, %v1115
        %1117 = vdwg.mxu0
        %v1118 = vpack.c.bf16 %v1116, %v1116
        %v1121 = vunpack.c.l.b16 %v779
        %v1122 = vunpack.c.l.b16 %v780
        %v1123 = vpack.c.b16 %v1122, %v1121
        %v1126 = vsel %vm784, %v1118, 0
        %1128 = vmatpush.bf16.msra.mxu0 0
        %1129 = vmatpush.bf16.msra.mxu0 0
        %1130 = vmatpush.bf16.msra.mxu0 0
        %1131 = vmatpush.bf16.msra.mxu0 0
        %1132 = vmatpush.bf16.msra.mxu0 0
        %1133 = vmatpush.bf16.msra.mxu0 0
        %1134 = vmatpush.bf16.msra.mxu0 0
        %1135 = vmatpush.bf16.msra.mxu0 %v1123
        %1136 = vmatmul.bf16.gmra.mxu0 %v1126
        %v1137 = vpop.f32.mrf.mxu0
        %v1138 = vadd.f32 0.0, %v1137
        %v1139 = vpop.f32.mrf.mxu0
        %1140 = vdwg.mxu0
        %v1141 = vadd.f32 %v1050, %v1138
        %v1142 = vadd.f32 %v649, %v1141
        %v1143 = vld [vmem:[#allocation7] sm:$0x1]
        %v1145 = vperm.slane %v1143, 0
        %v1147 = vadd.f32 %v1142, %v1145
        %v1148 = vld [vmem:[#allocation9] sm:$0x1]
        %v1149 = vld [vmem:[#allocation10] sm:$0x1]
        %v1150 = vsel %vm652, %v1147, 0.0
        %1151 = vadd.xlane.f32.xlu0 %v1150
        %v1152 = vpop.xlane.xlu0 %1151
        %v1153 = vmul.f32 %v1152, %v662
        %v1154 = vsub.f32 %v1147, %v1153
        %v1155 = vmul.f32 %v1154, %v1154
        %v1156 = vsel %vm652, %v1155, 0.0
        %1157 = vadd.xlane.f32.xlu0 %v1156
        %v1158 = vpop.xlane.xlu0 %1157
        %v1159 = vmul.f32 %v1158, %v662
        %v1160 = vadd.f32 %v1159, 1e-05
        %v1161 = vrsqrt.pop %v1160
        %v1162 = vmul.f32 %v1161, %v1160
        %v1163 = vmul.f32 %v1162, %v1161
        %v1164 = vmul.f32 0.5, %v1163
        %v1165 = vsub.f32 1.5, %v1164
        %v1166 = vmul.f32 %v1161, %v1165
        %vm1167 = vweird.f32 %v1160
        %vm1168 = vweird.f32 %v1161
        %vm1169 = vmor %vm1167, %vm1168
        %v1170 = vsel %vm1169, %v1161, %v1166
        %v1171 = vmul.f32 %v1154, %v1170
        %v1173 = vperm.slane %v1148, 0
        %v1175 = vmul.f32 %v1171, %v1173
        %v1177 = vperm.slane %v1149, 0
        %v1179 = vadd.f32 %v1175, %v1177
        %v1180 = vpack.c.bf16 %v1179, %v1179
        %v1181 = vld [vmem:[%s10] sm:$0xff]
        %v1182 = vld [vmem:[%s10 + $0x8] sm:$0xff]
        %v1183 = vld [vmem:[%s10 + $0x10] sm:$0xff]
        %v1184 = vld [vmem:[%s10 + $0x18] sm:$0xff]
        %v1185 = vld [vmem:[%s10 + $0x20] sm:$0xff]
        %v1186 = vld [vmem:[%s10 + $0x28] sm:$0xff]
        %v1187 = vld [vmem:[%s10 + $0x30] sm:$0xff]
        %v1188 = vld [vmem:[%s10 + $0x38] sm:$0xff]
        %v1189 = vld [vmem:[%s11] sm:$0x3]
        %v1191 = vperm.slane %v1189, 0
        %v1192 = vperm.slane %v1189, 1
        %v1203 = vunpack.c.l.b16 %v1181
        %v1204 = vunpack.c.h.b16 %v1181
        %v1205 = vunpack.c.l.b16 %v1182
        %v1206 = vunpack.c.h.b16 %v1182
        %v1207 = vunpack.c.l.b16 %v1183
        %v1208 = vunpack.c.h.b16 %v1183
        %v1209 = vunpack.c.l.b16 %v1184
        %v1210 = vunpack.c.h.b16 %v1184
        %v1211 = vunpack.c.l.b16 %v1185
        %v1212 = vunpack.c.h.b16 %v1185
        %v1213 = vunpack.c.l.b16 %v1186
        %v1214 = vunpack.c.h.b16 %v1186
        %v1215 = vunpack.c.l.b16 %v1187
        %v1216 = vunpack.c.h.b16 %v1187
        %v1217 = vunpack.c.l.b16 %v1188
        %v1218 = vunpack.c.h.b16 %v1188
        %v1219 = vpack.c.b16 %v1205, %v1203
        %v1220 = vpack.c.b16 %v1206, %v1204
        %v1221 = vpack.c.b16 %v1209, %v1207
        %v1222 = vpack.c.b16 %v1210, %v1208
        %v1223 = vpack.c.b16 %v1213, %v1211
        %v1224 = vpack.c.b16 %v1214, %v1212
        %v1225 = vpack.c.b16 %v1217, %v1215
        %v1226 = vpack.c.b16 %v1218, %v1216
        %v1236 = vsel %vm652, %v1180, 0
        %1238 = vmatpush.bf16.msra.mxu0 0
        %1239 = vmatpush.bf16.msra.mxu0 0
        %1240 = vmatpush.bf16.msra.mxu0 0
        %1241 = vmatpush.bf16.msra.mxu0 0
        %1242 = vmatpush.bf16.msra.mxu0 %v1225
        %1243 = vmatpush.bf16.msra.mxu0 %v1223
        %1244 = vmatpush.bf16.msra.mxu0 %v1221
        %1245 = vmatpush.bf16.msra.mxu0 %v1219
        %1246 = vmatmul.bf16.gmra.mxu0 %v1236
        %v1247 = vpop.f32.mrf.mxu0
        %v1248 = vadd.f32 %v1191, %v1247
        %v1249 = vpop.f32.mrf.mxu0
        %1250 = vdwg.mxu0
        %1251 = vmatpush.bf16.msra.mxu0 0
        %1252 = vmatpush.bf16.msra.mxu0 0
        %1253 = vmatpush.bf16.msra.mxu0 0
        %1254 = vmatpush.bf16.msra.mxu0 0
        %1255 = vmatpush.bf16.msra.mxu0 %v1226
        %1256 = vmatpush.bf16.msra.mxu0 %v1224
        %1257 = vmatpush.bf16.msra.mxu0 %v1222
        %1258 = vmatpush.bf16.msra.mxu0 %v1220
        %1259 = vmatmul.bf16.gmra.mxu0 %v1236
        %v1260 = vpop.f32.mrf.mxu0
        %v1261 = vadd.f32 %v1192, %v1260
        %v1262 = vpop.f32.mrf.mxu0
        %1263 = vdwg.mxu0
        %v1264 = vmax.f32 %v1248, 0.0
        %v1265 = vmax.f32 %v1261, 0.0
        %v1266 = vpack.c.bf16 %v1264, %v1264
        %v1267 = vpack.c.bf16 %v1265, %v1265
        %v1268 = vld [vmem:[%s12] sm:$0xf]
        %v1269 = vld [vmem:[%s12 + $0x4] sm:$0xf]
        %v1270 = vld [vmem:[%s12 + $0x8] sm:$0xf]
        %v1271 = vld [vmem:[%s12 + $0xc] sm:$0xf]
        %v1272 = vld [vmem:[%s12 + $0x10] sm:$0xf]
        %v1273 = vld [vmem:[%s12 + $0x14] sm:$0xf]
        %v1274 = vld [vmem:[%s12 + $0x18] sm:$0xf]
        %v1275 = vld [vmem:[%s12 + $0x1c] sm:$0xf]
        %v1276 = vld [vmem:[%s12 + $0x20] sm:$0xf]
        %v1277 = vld [vmem:[%s12 + $0x24] sm:$0xf]
        %v1278 = vld [vmem:[%s12 + $0x28] sm:$0xf]
        %v1279 = vld [vmem:[%s12 + $0x2c] sm:$0xf]
        %v1280 = vld [vmem:[%s12 + $0x30] sm:$0xf]
        %v1281 = vld [vmem:[%s12 + $0x34] sm:$0xf]
        %v1282 = vld [vmem:[%s12 + $0x38] sm:$0xf]
        %v1283 = vld [vmem:[%s12 + $0x3c] sm:$0xf]
        %v1284 = vld [vmem:[%s12 + $0x40] sm:$0xf]
        %v1285 = vld [vmem:[%s12 + $0x44] sm:$0xf]
        %v1286 = vld [vmem:[%s12 + $0x48] sm:$0xf]
        %v1287 = vld [vmem:[%s12 + $0x4c] sm:$0xf]
        %v1288 = vld [vmem:[%s12 + $0x50] sm:$0xf]
        %v1289 = vld [vmem:[%s12 + $0x54] sm:$0xf]
        %v1290 = vld [vmem:[%s12 + $0x58] sm:$0xf]
        %v1291 = vld [vmem:[%s12 + $0x5c] sm:$0xf]
        %v1292 = vld [vmem:[%s12 + $0x60] sm:$0xf]
        %v1293 = vld [vmem:[%s12 + $0x64] sm:$0xf]
        %v1294 = vld [vmem:[%s12 + $0x68] sm:$0xf]
        %v1295 = vld [vmem:[%s12 + $0x6c] sm:$0xf]
        %v1296 = vld [vmem:[%s12 + $0x70] sm:$0xf]
        %v1297 = vld [vmem:[%s12 + $0x74] sm:$0xf]
        %v1298 = vld [vmem:[%s12 + $0x78] sm:$0xf]
        %v1299 = vld [vmem:[%s12 + $0x7c] sm:$0xf]
        %v1300 = vld [vmem:[#allocation12] sm:$0x1]
        %v1302 = vperm.slane %v1300, 0
        %v1336 = vunpack.c.l.b16 %v1268
        %v1337 = vunpack.c.l.b16 %v1269
        %v1338 = vunpack.c.l.b16 %v1270
        %v1339 = vunpack.c.l.b16 %v1271
        %v1340 = vunpack.c.l.b16 %v1272
        %v1341 = vunpack.c.l.b16 %v1273
        %v1342 = vunpack.c.l.b16 %v1274
        %v1343 = vunpack.c.l.b16 %v1275
        %v1344 = vunpack.c.l.b16 %v1276
        %v1345 = vunpack.c.l.b16 %v1277
        %v1346 = vunpack.c.l.b16 %v1278
        %v1347 = vunpack.c.l.b16 %v1279
        %v1348 = vunpack.c.l.b16 %v1280
        %v1349 = vunpack.c.l.b16 %v1281
        %v1350 = vunpack.c.l.b16 %v1282
        %v1351 = vunpack.c.l.b16 %v1283
        %v1352 = vunpack.c.l.b16 %v1284
        %v1353 = vunpack.c.l.b16 %v1285
        %v1354 = vunpack.c.l.b16 %v1286
        %v1355 = vunpack.c.l.b16 %v1287
        %v1356 = vunpack.c.l.b16 %v1288
        %v1357 = vunpack.c.l.b16 %v1289
        %v1358 = vunpack.c.l.b16 %v1290
        %v1359 = vunpack.c.l.b16 %v1291
        %v1360 = vunpack.c.l.b16 %v1292
        %v1361 = vunpack.c.l.b16 %v1293
        %v1362 = vunpack.c.l.b16 %v1294
        %v1363 = vunpack.c.l.b16 %v1295
        %v1364 = vunpack.c.l.b16 %v1296
        %v1365 = vunpack.c.l.b16 %v1297
        %v1366 = vunpack.c.l.b16 %v1298
        %v1367 = vunpack.c.l.b16 %v1299
        %v1368 = vpack.c.b16 %v1337, %v1336
        %v1369 = vpack.c.b16 %v1339, %v1338
        %v1370 = vpack.c.b16 %v1341, %v1340
        %v1371 = vpack.c.b16 %v1343, %v1342
        %v1372 = vpack.c.b16 %v1345, %v1344
        %v1373 = vpack.c.b16 %v1347, %v1346
        %v1374 = vpack.c.b16 %v1349, %v1348
        %v1375 = vpack.c.b16 %v1351, %v1350
        %v1376 = vpack.c.b16 %v1353, %v1352
        %v1377 = vpack.c.b16 %v1355, %v1354
        %v1378 = vpack.c.b16 %v1357, %v1356
        %v1379 = vpack.c.b16 %v1359, %v1358
        %v1380 = vpack.c.b16 %v1361, %v1360
        %v1381 = vpack.c.b16 %v1363, %v1362
        %v1382 = vpack.c.b16 %v1365, %v1364
        %v1383 = vpack.c.b16 %v1367, %v1366
        %1400 = vmatpush.bf16.msra.mxu0 %v1375
        %1401 = vmatpush.bf16.msra.mxu0 %v1374
        %1402 = vmatpush.bf16.msra.mxu0 %v1373
        %1403 = vmatpush.bf16.msra.mxu0 %v1372
        %1404 = vmatpush.bf16.msra.mxu0 %v1371
        %1405 = vmatpush.bf16.msra.mxu0 %v1370
        %1406 = vmatpush.bf16.msra.mxu0 %v1369
        %1407 = vmatpush.bf16.msra.mxu0 %v1368
        %1408 = vmatmul.bf16.gmra.mxu0 %v1266
        %v1409 = vpop.f32.mrf.mxu0
        %v1410 = vadd.f32 %v1302, %v1409
        %v1411 = vpop.f32.mrf.mxu0
        %1412 = vdwg.mxu0
        %1413 = vmatpush.bf16.msra.mxu0 %v1383
        %1414 = vmatpush.bf16.msra.mxu0 %v1382
        %1415 = vmatpush.bf16.msra.mxu0 %v1381
        %1416 = vmatpush.bf16.msra.mxu0 %v1380
        %1417 = vmatpush.bf16.msra.mxu0 %v1379
        %1418 = vmatpush.bf16.msra.mxu0 %v1378
        %1419 = vmatpush.bf16.msra.mxu0 %v1377
        %1420 = vmatpush.bf16.msra.mxu0 %v1376
        %1421 = vmatmul.bf16.gmra.mxu0 %v1267
        %v1422 = vpop.f32.mrf.mxu0
        %v1423 = vadd.f32 %v1410, %v1422
        %v1424 = vpop.f32.mrf.mxu0
        %1425 = vdwg.mxu0
        %v1426 = vadd.f32 %v1147, %v1423
        %1427 = vst.msk [vmem:[%s564] sm:$0xff] %vm652, %v1426
        %p1428 = scmp.lt.s32.totalorder %s29, 1
        %s1429 = scalar_select %p1428, %s29, 1
        %s1430 = smul.addr %s1429, 8
        %s1431 = scalar_lea.vmem %s14, %s1430
        // Predicated region
        $region105: #{nanogpt_forward.6} parent=75 // pred_check
          %p1432 = pneg %p346
        $region106: #{nanogpt_forward.6} parent=75 // pred_check_branch
          %1434 = sbr.rel (%p1432) target = $region108
        $region107: #{nanogpt_forward.6} parent=75 // pred_region
          _
        $region108: #{nanogpt_forward.6} parent=75 // pred_fallthru
          _
      $region76: #{nanogpt_forward.6} parent=5 // pred_fallthru
        _
      %p1435 = scmp.le.s32.totalorder 2, %s24
      // Predicated region
      $region109: #{nanogpt_forward.6} parent=5 // pred_check
        %p1436 = pneg %p1435
      $region110: #{nanogpt_forward.6} parent=5 // pred_check_branch
        %1438 = sbr.rel (%p1436) target = $region112
      $region111: #{nanogpt_forward.6} parent=5 // pred_region
        %s1439 = ssub.s32 %s24, 2
        // Predicated region
        $region113: #{nanogpt_forward.6} parent=111 // pred_check
          %p1440 = pneg %p352
        $region114: #{nanogpt_forward.6} parent=111 // pred_check_branch
          %1442 = sbr.rel (%p1440) target = $region116
        $region115: #{nanogpt_forward.6} parent=111 // pred_region
          %p1443 = scmp.lt.s32.totalorder %s30, 1
          %s1444 = scalar_select %p1443, %s30, 1
          %s1445 = smul.addr %s1444, 8
          %s1446 = scalar_lea.vmem %s14, %s1445
        $region116: #{nanogpt_forward.6} parent=111 // pred_fallthru
          _
      $region112: #{nanogpt_forward.6} parent=5 // pred_fallthru
        _
    $region6: #{nanogpt_forward.6} parent=1 // loop_footer
      %s28 = sadd.s32 1, %s24
    $region7: #{nanogpt_forward.6} parent=1 // loop_footer_branch
      %23 = sbr.rel target = $region3
    $region8: #{nanogpt_forward.6} parent=1 // loop_exit
      _
    %1447 = vsyncpa [#allocation3], 1
    %s1448 = scalar_lea.sflag [#allocation3], 1
    %1449 = vsyncpa %s1448, 1
    %1450 = vsyncpa [#allocation5], 1
    %1451 = vsyncpa [#allocation8], 1
    %1452 = vsyncpa [#allocation11], 1

// kernel: nanogpt_forward.5
$region0: #{nanogpt_forward.5}
  #allocation0 [shape = 'u32[]', space=smem, size = 0x4, offset = 0x4, fixed_abs, tag = 'smem constant byte address 0x4 - core index']
  #allocation1 [shape = 'u32[72,128]{1,0:T(1,128)}', space=vmem, size = 0x9000, scoped, tag = 'internal scratch']
  %s0 = inlined_call_operand.vmem [shape: f32[2,8,256], index: 0, kind: input, shape index: {}]
  %s1 = inlined_call_operand.hbm [shape: bf16[256,128], index: 1, kind: input, shape index: {}]
  %s2 = inlined_call_operand.hbm [shape: f32[1,128], index: 2, kind: input, shape index: {}]
  %s3 = inlined_call_operand.hbm [shape: f32[1,128], index: 3, kind: input, shape index: {}]
  %s4 = inlined_call_operand.hbm [shape: f32[1,128], index: 4, kind: input, shape index: {}]
  %s5 = inlined_call_operand.vmem [shape: bf16[128,384], index: 5, kind: input, shape index: {}]
  %s6 = inlined_call_operand.vmem [shape: bf16[128,128], index: 6, kind: input, shape index: {}]
  %s7 = inlined_call_operand.hbm [shape: f32[1,128], index: 7, kind: input, shape index: {}]
  %s8 = inlined_call_operand.hbm [shape: f32[1,128], index: 8, kind: input, shape index: {}]
  %s9 = inlined_call_operand.hbm [shape: f32[1,128], index: 9, kind: input, shape index: {}]
  %s10 = inlined_call_operand.hbm [shape: bf16[128,512], index: 10, kind: input, shape index: {}]
  %s11 = inlined_call_operand.vmem [shape: f32[1,512], index: 11, kind: input, shape index: {}]
  %s12 = inlined_call_operand.hbm [shape: bf16[512,128], index: 12, kind: input, shape index: {}]
  %s13 = inlined_call_operand.hbm [shape: f32[1,128], index: 13, kind: input, shape index: {}]
  %s14 = inlined_call_operand.vmem [shape: f32[2,8,128], index: 14, kind: output, shape index: {}]
  %s15 = sld [smem:[#allocation0]]
  $region129: #{nanogpt_forward.5} parent=0
    _
  %s17 = ssub.s32 1, %s15
  %s18 = scalar_select 0, %s17, %s15
  $region1: #{nanogpt_forward.5} parent=0
    #allocation2 [shape = 'u8[65536]{0}', space=vmem, size = 0x10000, scoped, tag = 'input window, operand 1, single buffered']
    #allocation3 [shape = 's32[2]{0}', space=sflag, size = 0x8, scoped, tag = 'scoped memory for nanogpt_forward.5']
    #allocation4 [shape = 'u8[512]{0}', space=vmem, size = 0x400, scoped, tag = 'input window, operand 2, single buffered']
    #allocation5 [shape = 's32[1]{0}', space=sflag, size = 0x4, scoped, tag = 'scoped memory for nanogpt_forward.5']
    #allocation6 [shape = 'u8[512]{0}', space=vmem, size = 0x400, scoped, tag = 'input window, operand 3, single buffered']
    #allocation7 [shape = 'u8[512]{0}', space=vmem, size = 0x400, scoped, tag = 'input window, operand 4, single buffered']
    #allocation8 [shape = 's32[1]{0}', space=sflag, size = 0x4, scoped, tag = 'scoped memory for nanogpt_forward.5']
    #allocation9 [shape = 'u8[512]{0}', space=vmem, size = 0x400, scoped, tag = 'input window, operand 7, single buffered']
    #allocation10 [shape = 'u8[512]{0}', space=vmem, size = 0x400, scoped, tag = 'input window, operand 8, single buffered']
    #allocation11 [shape = 's32[1]{0}', space=sflag, size = 0x4, scoped, tag = 'scoped memory for nanogpt_forward.5']
    #allocation12 [shape = 'u8[512]{0}', space=vmem, size = 0x400, scoped, tag = 'input window, operand 9, single buffered']
    #allocation13 [shape = 'u8[131072]{0}', space=vmem, size = 0x20000, scoped, tag = 'input window, operand 10, single buffered']
    #allocation14 [shape = 's32[1]{0}', space=sflag, size = 0x4, scoped, tag = 'scoped memory for nanogpt_forward.5']
    #allocation15 [shape = 'u8[131072]{0}', space=vmem, size = 0x20000, scoped, tag = 'input window, operand 12, single buffered']
    #allocation16 [shape = 'u8[512]{0}', space=vmem, size = 0x400, scoped, tag = 'input window, operand 13, single buffered']
    #allocation17 [shape = 's32[1]{0}', space=sflag, size = 0x4, scoped, tag = 'scoped memory for nanogpt_forward.5']
    %19 = vsyncpa [#allocation3], 0
    %20 = vsyncpa [#allocation5], 0
    %21 = vsyncpa [#allocation8], 0
    %22 = vsyncpa [#allocation11], 0
    %23 = vsyncpa [#allocation14], 0
    %24 = vsyncpa [#allocation17], 0
    loop: start=0, step=1, limit=4
    $region2: #{nanogpt_forward.5} parent=1 // loop_pre_header
      _
    $region3: #{nanogpt_forward.5} parent=1 // loop_header
      %s26 = sphi 0, %s30
      %p27 = scmp.ge.s32.totalorder %s26, 4
      %s36 = sphi 0, %s38
      %s39 = sphi 0, %s36
      %s40 = sphi 0, %s39
      %s56 = sphi 0, %s40
      %s60 = sphi 0, %s60
      %s62 = sphi 0, %s60
      %s63 = sphi 0, %s62
      %s77 = sphi 0, %s63
      %s81 = sphi 0, %s81
      %s83 = sphi 0, %s81
      %s84 = sphi 0, %s83
      %s98 = sphi 0, %s84
      %s102 = sphi 0, %s102
      %s104 = sphi 0, %s102
      %s105 = sphi 0, %s104
      %s119 = sphi 0, %s105
      %s123 = sphi 0, %s123
      %s125 = sphi 0, %s123
      %s126 = sphi 0, %s125
      %s140 = sphi 0, %s126
      %s144 = sphi 0, %s144
      %s146 = sphi 0, %s144
      %s147 = sphi 0, %s146
      %s161 = sphi 0, %s147
      %s165 = sphi 0, %s165
      %s167 = sphi 0, %s165
      %s168 = sphi 0, %s167
      %s182 = sphi 0, %s168
      %s186 = sphi 0, %s186
      %s188 = sphi 0, %s186
      %s189 = sphi 0, %s188
      %s203 = sphi 0, %s189
      %s207 = sphi 0, %s207
      %s209 = sphi 0, %s207
      %s210 = sphi 0, %s209
      %s224 = sphi 0, %s210
      %s228 = sphi 0, %s228
      %s230 = sphi 0, %s228
      %s231 = sphi 0, %s230
      %s245 = sphi 0, %s231
      %s249 = sphi 0, %s249
      %s251 = sphi 0, %s249
      %s252 = sphi 0, %s251
      %s266 = sphi 0, %s252
      %s270 = sphi 0, %s270
      %s272 = sphi 0, %s270
      %s273 = sphi 0, %s272
      %s287 = sphi 0, %s273
      %s291 = sphi 0, %s291
      %s293 = sphi 0, %s291
      %s294 = sphi 0, %s293
      %s308 = sphi 0, %s294
      %s312 = sphi 0, %s312
      %s314 = sphi 0, %s312
      %s315 = sphi 0, %s314
      %s329 = sphi 0, %s315
      %s335 = sphi 0, %s337
      %s338 = sphi 0, %s335
      %s339 = sphi 0, %s338
      %s355 = sphi 0, %s339
    $region4: #{nanogpt_forward.5} parent=1 // loop_header_branch
      %29 = sbr.rel (%p27) target = $region8
    $region5: #{nanogpt_forward.5} parent=1 // loop_body
      %s31 = ssub.s32 %s26, 1
      %s32 = ssub.s32 %s26, 2
      %s33 = sadd.s32 %s26, 1
      %s34 = ssub.s32 %s26, %s33
      %p35 = scmp.eq.s32.totalorder %s34, 0
      %s37 = sadd.s32 %s36, 1
      %s38 = scalar_select %p35, %s36, %s37
      %p41 = pneg %p35
      %p42 = scmp.eq.s32.totalorder %s26, 1
      %p43 = por %p41, %p42
      %p44 = scmp.ne.s32.totalorder %s36, %s39
      %p45 = scmp.eq.s32.totalorder %s26, 0
      %p46 = por %p44, %p45
      %p47 = scmp.ne.s32.totalorder %s36, %s39
      %p48 = scmp.eq.s32.totalorder %s31, 1
      %p49 = por %p47, %p48
      %p50 = scmp.ne.s32.totalorder %s39, %s40
      %p51 = scmp.eq.s32.totalorder %s31, 0
      %p52 = por %p50, %p51
      %p53 = scmp.ne.s32.totalorder %s39, %s40
      %p54 = scmp.eq.s32.totalorder %s32, 1
      %p55 = por %p53, %p54
      %p57 = scmp.ne.s32.totalorder %s40, %s56
      %p58 = scmp.eq.s32.totalorder %s32, 0
      %p59 = por %p57, %p58
      %s61 = sadd.s32 %s60, 1
      %p64 = scmp.eq.s32.totalorder %s26, 1
      %p65 = scmp.ne.s32.totalorder %s60, %s62
      %p66 = scmp.eq.s32.totalorder %s26, 0
      %p67 = por %p65, %p66
      %p68 = scmp.ne.s32.totalorder %s60, %s62
      %p69 = scmp.eq.s32.totalorder %s31, 1
      %p70 = por %p68, %p69
      %p71 = scmp.ne.s32.totalorder %s62, %s63
      %p72 = scmp.eq.s32.totalorder %s31, 0
      %p73 = por %p71, %p72
      %p74 = scmp.ne.s32.totalorder %s62, %s63
      %p75 = scmp.eq.s32.totalorder %s32, 1
      %p76 = por %p74, %p75
      %p78 = scmp.ne.s32.totalorder %s63, %s77
      %p79 = scmp.eq.s32.totalorder %s32, 0
      %p80 = por %p78, %p79
      %s82 = sadd.s32 %s81, 1
      %p85 = scmp.eq.s32.totalorder %s26, 1
      %p86 = scmp.ne.s32.totalorder %s81, %s83
      %p87 = scmp.eq.s32.totalorder %s26, 0
      %p88 = por %p86, %p87
      %p89 = scmp.ne.s32.totalorder %s81, %s83
      %p90 = scmp.eq.s32.totalorder %s31, 1
      %p91 = por %p89, %p90
      %p92 = scmp.ne.s32.totalorder %s83, %s84
      %p93 = scmp.eq.s32.totalorder %s31, 0
      %p94 = por %p92, %p93
      %p95 = scmp.ne.s32.totalorder %s83, %s84
      %p96 = scmp.eq.s32.totalorder %s32, 1
      %p97 = por %p95, %p96
      %p99 = scmp.ne.s32.totalorder %s84, %s98
      %p100 = scmp.eq.s32.totalorder %s32, 0
      %p101 = por %p99, %p100
      %s103 = sadd.s32 %s102, 1
      %p106 = scmp.eq.s32.totalorder %s26, 1
      %p107 = scmp.ne.s32.totalorder %s102, %s104
      %p108 = scmp.eq.s32.totalorder %s26, 0
      %p109 = por %p107, %p108
      %p110 = scmp.ne.s32.totalorder %s102, %s104
      %p111 = scmp.eq.s32.totalorder %s31, 1
      %p112 = por %p110, %p111
      %p113 = scmp.ne.s32.totalorder %s104, %s105
      %p114 = scmp.eq.s32.totalorder %s31, 0
      %p115 = por %p113, %p114
      %p116 = scmp.ne.s32.totalorder %s104, %s105
      %p117 = scmp.eq.s32.totalorder %s32, 1
      %p118 = por %p116, %p117
      %p120 = scmp.ne.s32.totalorder %s105, %s119
      %p121 = scmp.eq.s32.totalorder %s32, 0
      %p122 = por %p120, %p121
      %s124 = sadd.s32 %s123, 1
      %p127 = scmp.eq.s32.totalorder %s26, 1
      %p128 = scmp.ne.s32.totalorder %s123, %s125
      %p129 = scmp.eq.s32.totalorder %s26, 0
      %p130 = por %p128, %p129
      %p131 = scmp.ne.s32.totalorder %s123, %s125
      %p132 = scmp.eq.s32.totalorder %s31, 1
      %p133 = por %p131, %p132
      %p134 = scmp.ne.s32.totalorder %s125, %s126
      %p135 = scmp.eq.s32.totalorder %s31, 0
      %p136 = por %p134, %p135
      %p137 = scmp.ne.s32.totalorder %s125, %s126
      %p138 = scmp.eq.s32.totalorder %s32, 1
      %p139 = por %p137, %p138
      %p141 = scmp.ne.s32.totalorder %s126, %s140
      %p142 = scmp.eq.s32.totalorder %s32, 0
      %p143 = por %p141, %p142
      %s145 = sadd.s32 %s144, 1
      %p148 = scmp.eq.s32.totalorder %s26, 1
      %p149 = scmp.ne.s32.totalorder %s144, %s146
      %p150 = scmp.eq.s32.totalorder %s26, 0
      %p151 = por %p149, %p150
      %p152 = scmp.ne.s32.totalorder %s144, %s146
      %p153 = scmp.eq.s32.totalorder %s31, 1
      %p154 = por %p152, %p153
      %p155 = scmp.ne.s32.totalorder %s146, %s147
      %p156 = scmp.eq.s32.totalorder %s31, 0
      %p157 = por %p155, %p156
      %p158 = scmp.ne.s32.totalorder %s146, %s147
      %p159 = scmp.eq.s32.totalorder %s32, 1
      %p160 = por %p158, %p159
      %p162 = scmp.ne.s32.totalorder %s147, %s161
      %p163 = scmp.eq.s32.totalorder %s32, 0
      %p164 = por %p162, %p163
      %s166 = sadd.s32 %s165, 1
      %p169 = scmp.eq.s32.totalorder %s26, 1
      %p170 = scmp.ne.s32.totalorder %s165, %s167
      %p171 = scmp.eq.s32.totalorder %s26, 0
      %p172 = por %p170, %p171
      %p173 = scmp.ne.s32.totalorder %s165, %s167
      %p174 = scmp.eq.s32.totalorder %s31, 1
      %p175 = por %p173, %p174
      %p176 = scmp.ne.s32.totalorder %s167, %s168
      %p177 = scmp.eq.s32.totalorder %s31, 0
      %p178 = por %p176, %p177
      %p179 = scmp.ne.s32.totalorder %s167, %s168
      %p180 = scmp.eq.s32.totalorder %s32, 1
      %p181 = por %p179, %p180
      %p183 = scmp.ne.s32.totalorder %s168, %s182
      %p184 = scmp.eq.s32.totalorder %s32, 0
      %p185 = por %p183, %p184
      %s187 = sadd.s32 %s186, 1
      %p190 = scmp.eq.s32.totalorder %s26, 1
      %p191 = scmp.ne.s32.totalorder %s186, %s188
      %p192 = scmp.eq.s32.totalorder %s26, 0
      %p193 = por %p191, %p192
      %p194 = scmp.ne.s32.totalorder %s186, %s188
      %p195 = scmp.eq.s32.totalorder %s31, 1
      %p196 = por %p194, %p195
      %p197 = scmp.ne.s32.totalorder %s188, %s189
      %p198 = scmp.eq.s32.totalorder %s31, 0
      %p199 = por %p197, %p198
      %p200 = scmp.ne.s32.totalorder %s188, %s189
      %p201 = scmp.eq.s32.totalorder %s32, 1
      %p202 = por %p200, %p201
      %p204 = scmp.ne.s32.totalorder %s189, %s203
      %p205 = scmp.eq.s32.totalorder %s32, 0
      %p206 = por %p204, %p205
      %s208 = sadd.s32 %s207, 1
      %p211 = scmp.eq.s32.totalorder %s26, 1
      %p212 = scmp.ne.s32.totalorder %s207, %s209
      %p213 = scmp.eq.s32.totalorder %s26, 0
      %p214 = por %p212, %p213
      %p215 = scmp.ne.s32.totalorder %s207, %s209
      %p216 = scmp.eq.s32.totalorder %s31, 1
      %p217 = por %p215, %p216
      %p218 = scmp.ne.s32.totalorder %s209, %s210
      %p219 = scmp.eq.s32.totalorder %s31, 0
      %p220 = por %p218, %p219
      %p221 = scmp.ne.s32.totalorder %s209, %s210
      %p222 = scmp.eq.s32.totalorder %s32, 1
      %p223 = por %p221, %p222
      %p225 = scmp.ne.s32.totalorder %s210, %s224
      %p226 = scmp.eq.s32.totalorder %s32, 0
      %p227 = por %p225, %p226
      %s229 = sadd.s32 %s228, 1
      %p232 = scmp.eq.s32.totalorder %s26, 1
      %p233 = scmp.ne.s32.totalorder %s228, %s230
      %p234 = scmp.eq.s32.totalorder %s26, 0
      %p235 = por %p233, %p234
      %p236 = scmp.ne.s32.totalorder %s228, %s230
      %p237 = scmp.eq.s32.totalorder %s31, 1
      %p238 = por %p236, %p237
      %p239 = scmp.ne.s32.totalorder %s230, %s231
      %p240 = scmp.eq.s32.totalorder %s31, 0
      %p241 = por %p239, %p240
      %p242 = scmp.ne.s32.totalorder %s230, %s231
      %p243 = scmp.eq.s32.totalorder %s32, 1
      %p244 = por %p242, %p243
      %p246 = scmp.ne.s32.totalorder %s231, %s245
      %p247 = scmp.eq.s32.totalorder %s32, 0
      %p248 = por %p246, %p247
      %s250 = sadd.s32 %s249, 1
      %p253 = scmp.eq.s32.totalorder %s26, 1
      %p254 = scmp.ne.s32.totalorder %s249, %s251
      %p255 = scmp.eq.s32.totalorder %s26, 0
      %p256 = por %p254, %p255
      %p257 = scmp.ne.s32.totalorder %s249, %s251
      %p258 = scmp.eq.s32.totalorder %s31, 1
      %p259 = por %p257, %p258
      %p260 = scmp.ne.s32.totalorder %s251, %s252
      %p261 = scmp.eq.s32.totalorder %s31, 0
      %p262 = por %p260, %p261
      %p263 = scmp.ne.s32.totalorder %s251, %s252
      %p264 = scmp.eq.s32.totalorder %s32, 1
      %p265 = por %p263, %p264
      %p267 = scmp.ne.s32.totalorder %s252, %s266
      %p268 = scmp.eq.s32.totalorder %s32, 0
      %p269 = por %p267, %p268
      %s271 = sadd.s32 %s270, 1
      %p274 = scmp.eq.s32.totalorder %s26, 1
      %p275 = scmp.ne.s32.totalorder %s270, %s272
      %p276 = scmp.eq.s32.totalorder %s26, 0
      %p277 = por %p275, %p276
      %p278 = scmp.ne.s32.totalorder %s270, %s272
      %p279 = scmp.eq.s32.totalorder %s31, 1
      %p280 = por %p278, %p279
      %p281 = scmp.ne.s32.totalorder %s272, %s273
      %p282 = scmp.eq.s32.totalorder %s31, 0
      %p283 = por %p281, %p282
      %p284 = scmp.ne.s32.totalorder %s272, %s273
      %p285 = scmp.eq.s32.totalorder %s32, 1
      %p286 = por %p284, %p285
      %p288 = scmp.ne.s32.totalorder %s273, %s287
      %p289 = scmp.eq.s32.totalorder %s32, 0
      %p290 = por %p288, %p289
      %s292 = sadd.s32 %s291, 1
      %p295 = scmp.eq.s32.totalorder %s26, 1
      %p296 = scmp.ne.s32.totalorder %s291, %s293
      %p297 = scmp.eq.s32.totalorder %s26, 0
      %p298 = por %p296, %p297
      %p299 = scmp.ne.s32.totalorder %s291, %s293
      %p300 = scmp.eq.s32.totalorder %s31, 1
      %p301 = por %p299, %p300
      %p302 = scmp.ne.s32.totalorder %s293, %s294
      %p303 = scmp.eq.s32.totalorder %s31, 0
      %p304 = por %p302, %p303
      %p305 = scmp.ne.s32.totalorder %s293, %s294
      %p306 = scmp.eq.s32.totalorder %s32, 1
      %p307 = por %p305, %p306
      %p309 = scmp.ne.s32.totalorder %s294, %s308
      %p310 = scmp.eq.s32.totalorder %s32, 0
      %p311 = por %p309, %p310
      %s313 = sadd.s32 %s312, 1
      %p316 = scmp.eq.s32.totalorder %s26, 1
      %p317 = scmp.ne.s32.totalorder %s312, %s314
      %p318 = scmp.eq.s32.totalorder %s26, 0
      %p319 = por %p317, %p318
      %p320 = scmp.ne.s32.totalorder %s312, %s314
      %p321 = scmp.eq.s32.totalorder %s31, 1
      %p322 = por %p320, %p321
      %p323 = scmp.ne.s32.totalorder %s314, %s315
      %p324 = scmp.eq.s32.totalorder %s31, 0
      %p325 = por %p323, %p324
      %p326 = scmp.ne.s32.totalorder %s314, %s315
      %p327 = scmp.eq.s32.totalorder %s32, 1
      %p328 = por %p326, %p327
      %p330 = scmp.ne.s32.totalorder %s315, %s329
      %p331 = scmp.eq.s32.totalorder %s32, 0
      %p332 = por %p330, %p331
      %s333 = ssub.s32 %s26, %s33
      %p334 = scmp.eq.s32.totalorder %s333, 0
      %s336 = sadd.s32 %s335, 1
      %s337 = scalar_select %p334, %s335, %s336
      %p340 = pneg %p334
      %p341 = scmp.eq.s32.totalorder %s26, 1
      %p342 = por %p340, %p341
      %p343 = scmp.ne.s32.totalorder %s335, %s338
      %p344 = scmp.eq.s32.totalorder %s26, 0
      %p345 = por %p343, %p344
      %p346 = scmp.ne.s32.totalorder %s335, %s338
      %p347 = scmp.eq.s32.totalorder %s31, 1
      %p348 = por %p346, %p347
      %p349 = scmp.ne.s32.totalorder %s338, %s339
      %p350 = scmp.eq.s32.totalorder %s31, 0
      %p351 = por %p349, %p350
      %p352 = scmp.ne.s32.totalorder %s338, %s339
      %p353 = scmp.eq.s32.totalorder %s32, 1
      %p354 = por %p352, %p353
      %p356 = scmp.ne.s32.totalorder %s339, %s355
      %p357 = scmp.eq.s32.totalorder %s32, 0
      %p358 = por %p356, %p357
      %p359 = scmp.le.s32.totalorder 1, %s26
      %p360 = scmp.lt.s32.totalorder %s26, 3
      %p361 = pnand %p359, %p360
      %p362 = pneg %p361
      // Predicated region
      $region9: #{nanogpt_forward.5} parent=5 // pred_check
        _
      $region10: #{nanogpt_forward.5} parent=5 // pred_check_branch
        %364 = sbr.rel (%p361) target = $region12
      $region11: #{nanogpt_forward.5} parent=5 // pred_region
        %s365 = ssub.s32 %s26, 1
        // Predicated region
        $region13: #{nanogpt_forward.5} parent=11 // pred_check
          %p366 = pneg %p73
        $region14: #{nanogpt_forward.5} parent=11 // pred_check_branch
          %368 = sbr.rel (%p366) target = $region16
        $region15: #{nanogpt_forward.5} parent=11 // pred_region
          %370 = vsyncadd [#allocation3], 0
          %s371 = sshll.u32 %s1, 4
          %s372 = int_to_ptr.hbm [resolvable:$true] %s371
          %s373 = sshll.u32 [#allocation2], 4
          %s374 = int_to_ptr.vmem [resolvable:$true] %s373
          %379 = dma.hbm_to_vmem [thread:$0]  %s372, 2048, %s374, [#allocation3], 64, 64, 4
        $region16: #{nanogpt_forward.5} parent=11 // pred_fallthru
          _
        // Predicated region
        $region17: #{nanogpt_forward.5} parent=11 // pred_check
          %p380 = pneg %p94
        $region18: #{nanogpt_forward.5} parent=11 // pred_check_branch
          %382 = sbr.rel (%p380) target = $region20
        $region19: #{nanogpt_forward.5} parent=11 // pred_region
          %384 = vsyncadd [#allocation5], 0
          %s386 = sshll.u32 %s2, 4
          %s387 = int_to_ptr.hbm [resolvable:$true] %s386
          %s388 = sshll.u32 [#allocation4], 4
          %s389 = int_to_ptr.vmem [resolvable:$true] %s388
          %391 = dma.hbm_to_vmem [thread:$0]  %s387, 16, %s389, [#allocation5]
        $region20: #{nanogpt_forward.5} parent=11 // pred_fallthru
          _
        // Predicated region
        $region21: #{nanogpt_forward.5} parent=11 // pred_check
          %p392 = pneg %p115
        $region22: #{nanogpt_forward.5} parent=11 // pred_check_branch
          %394 = sbr.rel (%p392) target = $region24
        $region23: #{nanogpt_forward.5} parent=11 // pred_region
          %396 = vsyncadd [#allocation5], 0
          %s398 = sshll.u32 %s3, 4
          %s399 = int_to_ptr.hbm [resolvable:$true] %s398
          %s400 = sshll.u32 [#allocation6], 4
          %s401 = int_to_ptr.vmem [resolvable:$true] %s400
          %403 = dma.hbm_to_vmem [thread:$0]  %s399, 16, %s401, [#allocation5]
        $region24: #{nanogpt_forward.5} parent=11 // pred_fallthru
          _
        // Predicated region
        $region25: #{nanogpt_forward.5} parent=11 // pred_check
          %p404 = pneg %p136
        $region26: #{nanogpt_forward.5} parent=11 // pred_check_branch
          %406 = sbr.rel (%p404) target = $region28
        $region27: #{nanogpt_forward.5} parent=11 // pred_region
          %408 = vsyncadd [#allocation8], 0
          %s410 = sshll.u32 %s4, 4
          %s411 = int_to_ptr.hbm [resolvable:$true] %s410
          %s412 = sshll.u32 [#allocation7], 4
          %s413 = int_to_ptr.vmem [resolvable:$true] %s412
          %415 = dma.hbm_to_vmem [thread:$0]  %s411, 16, %s413, [#allocation8]
        $region28: #{nanogpt_forward.5} parent=11 // pred_fallthru
          _
        // Predicated region
        $region29: #{nanogpt_forward.5} parent=11 // pred_check
          %p416 = pneg %p157
        $region30: #{nanogpt_forward.5} parent=11 // pred_check_branch
          %418 = sbr.rel (%p416) target = $region32
        $region31: #{nanogpt_forward.5} parent=11 // pred_region
          _
        $region32: #{nanogpt_forward.5} parent=11 // pred_fallthru
          _
        // Predicated region
        $region33: #{nanogpt_forward.5} parent=11 // pred_check
          %p419 = pneg %p178
        $region34: #{nanogpt_forward.5} parent=11 // pred_check_branch
          %421 = sbr.rel (%p419) target = $region36
        $region35: #{nanogpt_forward.5} parent=11 // pred_region
          _
        $region36: #{nanogpt_forward.5} parent=11 // pred_fallthru
          _
        // Predicated region
        $region37: #{nanogpt_forward.5} parent=11 // pred_check
          %p422 = pneg %p199
        $region38: #{nanogpt_forward.5} parent=11 // pred_check_branch
          %424 = sbr.rel (%p422) target = $region40
        $region39: #{nanogpt_forward.5} parent=11 // pred_region
          %426 = vsyncadd [#allocation8], 0
          %s428 = sshll.u32 %s7, 4
          %s429 = int_to_ptr.hbm [resolvable:$true] %s428
          %s430 = sshll.u32 [#allocation9], 4
          %s431 = int_to_ptr.vmem [resolvable:$true] %s430
          %433 = dma.hbm_to_vmem [thread:$0]  %s429, 16, %s431, [#allocation8]
        $region40: #{nanogpt_forward.5} parent=11 // pred_fallthru
          _
        // Predicated region
        $region41: #{nanogpt_forward.5} parent=11 // pred_check
          %p434 = pneg %p220
        $region42: #{nanogpt_forward.5} parent=11 // pred_check_branch
          %436 = sbr.rel (%p434) target = $region44
        $region43: #{nanogpt_forward.5} parent=11 // pred_region
          %438 = vsyncadd [#allocation11], 0
          %s440 = sshll.u32 %s8, 4
          %s441 = int_to_ptr.hbm [resolvable:$true] %s440
          %s442 = sshll.u32 [#allocation10], 4
          %s443 = int_to_ptr.vmem [resolvable:$true] %s442
          %445 = dma.hbm_to_vmem [thread:$0]  %s441, 16, %s443, [#allocation11]
        $region44: #{nanogpt_forward.5} parent=11 // pred_fallthru
          _
        // Predicated region
        $region45: #{nanogpt_forward.5} parent=11 // pred_check
          %p446 = pneg %p241
        $region46: #{nanogpt_forward.5} parent=11 // pred_check_branch
          %448 = sbr.rel (%p446) target = $region48
        $region47: #{nanogpt_forward.5} parent=11 // pred_region
          %450 = vsyncadd [#allocation11], 0
          %s452 = sshll.u32 %s9, 4
          %s453 = int_to_ptr.hbm [resolvable:$true] %s452
          %s454 = sshll.u32 [#allocation12], 4
          %s455 = int_to_ptr.vmem [resolvable:$true] %s454
          %457 = dma.hbm_to_vmem [thread:$0]  %s453, 16, %s455, [#allocation11]
        $region48: #{nanogpt_forward.5} parent=11 // pred_fallthru
          _
        // Predicated region
        $region49: #{nanogpt_forward.5} parent=11 // pred_check
          %p458 = pneg %p262
        $region50: #{nanogpt_forward.5} parent=11 // pred_check_branch
          %460 = sbr.rel (%p458) target = $region52
        $region51: #{nanogpt_forward.5} parent=11 // pred_region
          %462 = vsyncadd [#allocation14], 0
          %s463 = sshll.u32 %s10, 4
          %s464 = int_to_ptr.hbm [resolvable:$true] %s463
          %s465 = sshll.u32 [#allocation13], 4
          %s466 = int_to_ptr.vmem [resolvable:$true] %s465
          %471 = dma.hbm_to_vmem [thread:$0]  %s464, 4096, %s466, [#allocation14], 256, 256, 16
        $region52: #{nanogpt_forward.5} parent=11 // pred_fallthru
          _
        // Predicated region
        $region53: #{nanogpt_forward.5} parent=11 // pred_check
          %p472 = pneg %p283
        $region54: #{nanogpt_forward.5} parent=11 // pred_check_branch
          %474 = sbr.rel (%p472) target = $region56
        $region55: #{nanogpt_forward.5} parent=11 // pred_region
          _
        $region56: #{nanogpt_forward.5} parent=11 // pred_fallthru
          _
        // Predicated region
        $region57: #{nanogpt_forward.5} parent=11 // pred_check
          %p475 = pneg %p304
        $region58: #{nanogpt_forward.5} parent=11 // pred_check_branch
          %477 = sbr.rel (%p475) target = $region60
        $region59: #{nanogpt_forward.5} parent=11 // pred_region
          %479 = vsyncadd [#allocation14], 0
          %s480 = sshll.u32 %s12, 4
          %s481 = int_to_ptr.hbm [resolvable:$true] %s480
          %s482 = sshll.u32 [#allocation15], 4
          %s483 = int_to_ptr.vmem [resolvable:$true] %s482
          %488 = dma.hbm_to_vmem [thread:$0]  %s481, 4096, %s483, [#allocation14], 64, 64, 4
        $region60: #{nanogpt_forward.5} parent=11 // pred_fallthru
          _
        // Predicated region
        $region61: #{nanogpt_forward.5} parent=11 // pred_check
          %p489 = pneg %p325
        $region62: #{nanogpt_forward.5} parent=11 // pred_check_branch
          %491 = sbr.rel (%p489) target = $region64
        $region63: #{nanogpt_forward.5} parent=11 // pred_region
          %493 = vsyncadd [#allocation17], 0
          %s495 = sshll.u32 %s13, 4
          %s496 = int_to_ptr.hbm [resolvable:$true] %s495
          %s497 = sshll.u32 [#allocation16], 4
          %s498 = int_to_ptr.vmem [resolvable:$true] %s497
          %500 = dma.hbm_to_vmem [thread:$0]  %s496, 16, %s498, [#allocation17]
        $region64: #{nanogpt_forward.5} parent=11 // pred_fallthru
          _
      $region12: #{nanogpt_forward.5} parent=5 // pred_fallthru
        _
      %p501 = scmp.lt.s32.totalorder %s26, 2
      // Predicated region
      $region65: #{nanogpt_forward.5} parent=5 // pred_check
        %p502 = pneg %p501
      $region66: #{nanogpt_forward.5} parent=5 // pred_check_branch
        %504 = sbr.rel (%p502) target = $region68
      $region67: #{nanogpt_forward.5} parent=5 // pred_region
        // Predicated region
        $region69: #{nanogpt_forward.5} parent=67 // pred_check
          %p505 = pneg %p46
        $region70: #{nanogpt_forward.5} parent=67 // pred_check_branch
          %507 = sbr.rel (%p505) target = $region72
        $region71: #{nanogpt_forward.5} parent=67 // pred_region
          %p508 = scmp.lt.s32.totalorder %s26, 1
          %s509 = scalar_select %p508, %s26, 1
          %s510 = smul.addr %s509, 2
          %s511 = smul.addr %s510, 8
          %s512 = scalar_lea.vmem %s0, %s511
        $region72: #{nanogpt_forward.5} parent=67 // pred_fallthru
          _
      $region68: #{nanogpt_forward.5} parent=5 // pred_fallthru
        _
      %p513 = scmp.le.s32.totalorder 1, %s26
      %p514 = scmp.lt.s32.totalorder %s26, 3
      %p515 = pnand %p513, %p514
      %p516 = pneg %p515
      // Predicated region
      $region73: #{nanogpt_forward.5} parent=5 // pred_check
        _
      $region74: #{nanogpt_forward.5} parent=5 // pred_check_branch
        %518 = sbr.rel (%p515) target = $region76
      $region75: #{nanogpt_forward.5} parent=5 // pred_region
        %s519 = ssub.s32 %s26, 1
        // Predicated region
        $region77: #{nanogpt_forward.5} parent=75 // pred_check
          %p520 = pneg %p73
        $region78: #{nanogpt_forward.5} parent=75 // pred_check_branch
          %522 = sbr.rel (%p520) target = $region80
        $region79: #{nanogpt_forward.5} parent=75 // pred_region
          %524 = dma.done [#allocation3], 2048
        $region80: #{nanogpt_forward.5} parent=75 // pred_fallthru
          _
        // Predicated region
        $region81: #{nanogpt_forward.5} parent=75 // pred_check
          %p525 = pneg %p94
        $region82: #{nanogpt_forward.5} parent=75 // pred_check_branch
          %527 = sbr.rel (%p525) target = $region84
        $region83: #{nanogpt_forward.5} parent=75 // pred_region
          %529 = dma.done [#allocation5], 16
        $region84: #{nanogpt_forward.5} parent=75 // pred_fallthru
          _
        // Predicated region
        $region85: #{nanogpt_forward.5} parent=75 // pred_check
          %p530 = pneg %p115
        $region86: #{nanogpt_forward.5} parent=75 // pred_check_branch
          %532 = sbr.rel (%p530) target = $region88
        $region87: #{nanogpt_forward.5} parent=75 // pred_region
          %534 = dma.done [#allocation5], 16
        $region88: #{nanogpt_forward.5} parent=75 // pred_fallthru
          _
        // Predicated region
        $region89: #{nanogpt_forward.5} parent=75 // pred_check
          %p535 = pneg %p136
        $region90: #{nanogpt_forward.5} parent=75 // pred_check_branch
          %537 = sbr.rel (%p535) target = $region92
        $region91: #{nanogpt_forward.5} parent=75 // pred_region
          %539 = dma.done [#allocation8], 16
        $region92: #{nanogpt_forward.5} parent=75 // pred_fallthru
          _
        // Predicated region
        $region93: #{nanogpt_forward.5} parent=75 // pred_check
          %p540 = pneg %p199
        $region94: #{nanogpt_forward.5} parent=75 // pred_check_branch
          %542 = sbr.rel (%p540) target = $region96
        $region95: #{nanogpt_forward.5} parent=75 // pred_region
          %544 = dma.done [#allocation8], 16
        $region96: #{nanogpt_forward.5} parent=75 // pred_fallthru
          _
        // Predicated region
        $region97: #{nanogpt_forward.5} parent=75 // pred_check
          %p545 = pneg %p220
        $region98: #{nanogpt_forward.5} parent=75 // pred_check_branch
          %547 = sbr.rel (%p545) target = $region100
        $region99: #{nanogpt_forward.5} parent=75 // pred_region
          %549 = dma.done [#allocation11], 16
        $region100: #{nanogpt_forward.5} parent=75 // pred_fallthru
          _
        // Predicated region
        $region101: #{nanogpt_forward.5} parent=75 // pred_check
          %p550 = pneg %p241
        $region102: #{nanogpt_forward.5} parent=75 // pred_check_branch
          %552 = sbr.rel (%p550) target = $region104
        $region103: #{nanogpt_forward.5} parent=75 // pred_region
          %554 = dma.done [#allocation11], 16
        $region104: #{nanogpt_forward.5} parent=75 // pred_fallthru
          _
        // Predicated region
        $region105: #{nanogpt_forward.5} parent=75 // pred_check
          %p555 = pneg %p262
        $region106: #{nanogpt_forward.5} parent=75 // pred_check_branch
          %557 = sbr.rel (%p555) target = $region108
        $region107: #{nanogpt_forward.5} parent=75 // pred_region
          %559 = dma.done [#allocation14], 4096
        $region108: #{nanogpt_forward.5} parent=75 // pred_fallthru
          _
        // Predicated region
        $region109: #{nanogpt_forward.5} parent=75 // pred_check
          %p560 = pneg %p304
        $region110: #{nanogpt_forward.5} parent=75 // pred_check_branch
          %562 = sbr.rel (%p560) target = $region112
        $region111: #{nanogpt_forward.5} parent=75 // pred_region
          %564 = dma.done [#allocation14], 4096
        $region112: #{nanogpt_forward.5} parent=75 // pred_fallthru
          _
        // Predicated region
        $region113: #{nanogpt_forward.5} parent=75 // pred_check
          %p565 = pneg %p325
        $region114: #{nanogpt_forward.5} parent=75 // pred_check_branch
          %567 = sbr.rel (%p565) target = $region116
        $region115: #{nanogpt_forward.5} parent=75 // pred_region
          %569 = dma.done [#allocation17], 16
        $region116: #{nanogpt_forward.5} parent=75 // pred_fallthru
          _
        %p570 = scmp.lt.s32.totalorder %s31, 1
        %s571 = scalar_select %p570, %s31, 1
        %s572 = smul.addr %s571, 2
        %s573 = smul.addr %s572, 8
        %s574 = scalar_lea.vmem %s0, %s573
        %p575 = pneg %p52
        %p576 = pneg %p49
        %p577 = pneg %p73
        %p578 = pneg %p70
        %p579 = pneg %p94
        %p580 = pneg %p91
        %p581 = pneg %p115
        %p582 = pneg %p112
        %p583 = pneg %p136
        %p584 = pneg %p133
        %p585 = pneg %p157
        %p586 = pneg %p154
        %p587 = pneg %p178
        %p588 = pneg %p175
        %p589 = pneg %p199
        %p590 = pneg %p196
        %p591 = pneg %p220
        %p592 = pneg %p217
        %p593 = pneg %p241
        %p594 = pneg %p238
        %p595 = pneg %p262
        %p596 = pneg %p259
        %p597 = pneg %p283
        %p598 = pneg %p280
        %p599 = pneg %p304
        %p600 = pneg %p301
        %p601 = pneg %p325
        %p602 = pneg %p322
        %p603 = pneg %p351
        %p604 = pneg %p348
        %p605 = scmp.lt.s32.totalorder %s31, 1
        %s606 = scalar_select %p605, %s31, 1
        %s607 = smul.addr %s606, 8
        %s608 = scalar_lea.vmem %s14, %s607
        %p609 = scmp.lt.s32.totalorder %s31, 1
        %s610 = scalar_select %p609, %s31, 1
        %s611 = smul.addr %s610, 2
        %s612 = smul.addr %s611, 8
        %s613 = scalar_lea.vmem %s0, %s612
        %p614 = scmp.lt.s32.totalorder %s31, 1
        %s615 = scalar_select %p614, %s31, 1
        %s616 = smul.addr %s615, 8
        %s617 = scalar_lea.vmem %s14, %s616
        %v619 = vld [vmem:[%s613] sm:$0xff]
        %v620 = vld [vmem:[%s613 + $0x8] sm:$0xff]
        %v621 = vpack.c.bf16 %v619, %v619
        %v622 = vpack.c.bf16 %v620, %v620
        %v623 = vld [vmem:[#allocation2] sm:$0xf]
        %v624 = vld [vmem:[#allocation2 + $0x4] sm:$0xf]
        %v625 = vld [vmem:[#allocation2 + $0x8] sm:$0xf]
        %v626 = vld [vmem:[#allocation2 + $0xc] sm:$0xf]
        %v627 = vld [vmem:[#allocation2 + $0x10] sm:$0xf]
        %v628 = vld [vmem:[#allocation2 + $0x14] sm:$0xf]
        %v629 = vld [vmem:[#allocation2 + $0x18] sm:$0xf]
        %v630 = vld [vmem:[#allocation2 + $0x1c] sm:$0xf]
        %v631 = vld [vmem:[#allocation2 + $0x20] sm:$0xf]
        %v632 = vld [vmem:[#allocation2 + $0x24] sm:$0xf]
        %v633 = vld [vmem:[#allocation2 + $0x28] sm:$0xf]
        %v634 = vld [vmem:[#allocation2 + $0x2c] sm:$0xf]
        %v635 = vld [vmem:[#allocation2 + $0x30] sm:$0xf]
        %v636 = vld [vmem:[#allocation2 + $0x34] sm:$0xf]
        %v637 = vld [vmem:[#allocation2 + $0x38] sm:$0xf]
        %v638 = vld [vmem:[#allocation2 + $0x3c] sm:$0xf]
        %v639 = vld [vmem:[#allocation2 + $0x40] sm:$0xf]
        %v640 = vld [vmem:[#allocation2 + $0x44] sm:$0xf]
        %v641 = vld [vmem:[#allocation2 + $0x48] sm:$0xf]
        %v642 = vld [vmem:[#allocation2 + $0x4c] sm:$0xf]
        %v643 = vld [vmem:[#allocation2 + $0x50] sm:$0xf]
        %v644 = vld [vmem:[#allocation2 + $0x54] sm:$0xf]
        %v645 = vld [vmem:[#allocation2 + $0x58] sm:$0xf]
        %v646 = vld [vmem:[#allocation2 + $0x5c] sm:$0xf]
        %v647 = vld [vmem:[#allocation2 + $0x60] sm:$0xf]
        %v648 = vld [vmem:[#allocation2 + $0x64] sm:$0xf]
        %v649 = vld [vmem:[#allocation2 + $0x68] sm:$0xf]
        %v650 = vld [vmem:[#allocation2 + $0x6c] sm:$0xf]
        %v651 = vld [vmem:[#allocation2 + $0x70] sm:$0xf]
        %v652 = vld [vmem:[#allocation2 + $0x74] sm:$0xf]
        %v653 = vld [vmem:[#allocation2 + $0x78] sm:$0xf]
        %v654 = vld [vmem:[#allocation2 + $0x7c] sm:$0xf]
        %v655 = vld [vmem:[#allocation4] sm:$0x1]
        %v657 = vperm.slane %v655, 0
        %v691 = vunpack.c.l.b16 %v623
        %v692 = vunpack.c.l.b16 %v624
        %v693 = vunpack.c.l.b16 %v625
        %v694 = vunpack.c.l.b16 %v626
        %v695 = vunpack.c.l.b16 %v627
        %v696 = vunpack.c.l.b16 %v628
        %v697 = vunpack.c.l.b16 %v629
        %v698 = vunpack.c.l.b16 %v630
        %v699 = vunpack.c.l.b16 %v631
        %v700 = vunpack.c.l.b16 %v632
        %v701 = vunpack.c.l.b16 %v633
        %v702 = vunpack.c.l.b16 %v634
        %v703 = vunpack.c.l.b16 %v635
        %v704 = vunpack.c.l.b16 %v636
        %v705 = vunpack.c.l.b16 %v637
        %v706 = vunpack.c.l.b16 %v638
        %v707 = vunpack.c.l.b16 %v639
        %v708 = vunpack.c.l.b16 %v640
        %v709 = vunpack.c.l.b16 %v641
        %v710 = vunpack.c.l.b16 %v642
        %v711 = vunpack.c.l.b16 %v643
        %v712 = vunpack.c.l.b16 %v644
        %v713 = vunpack.c.l.b16 %v645
        %v714 = vunpack.c.l.b16 %v646
        %v715 = vunpack.c.l.b16 %v647
        %v716 = vunpack.c.l.b16 %v648
        %v717 = vunpack.c.l.b16 %v649
        %v718 = vunpack.c.l.b16 %v650
        %v719 = vunpack.c.l.b16 %v651
        %v720 = vunpack.c.l.b16 %v652
        %v721 = vunpack.c.l.b16 %v653
        %v722 = vunpack.c.l.b16 %v654
        %v723 = vpack.c.b16 %v692, %v691
        %v724 = vpack.c.b16 %v694, %v693
        %v725 = vpack.c.b16 %v696, %v695
        %v726 = vpack.c.b16 %v698, %v697
        %v727 = vpack.c.b16 %v700, %v699
        %v728 = vpack.c.b16 %v702, %v701
        %v729 = vpack.c.b16 %v704, %v703
        %v730 = vpack.c.b16 %v706, %v705
        %v731 = vpack.c.b16 %v708, %v707
        %v732 = vpack.c.b16 %v710, %v709
        %v733 = vpack.c.b16 %v712, %v711
        %v734 = vpack.c.b16 %v714, %v713
        %v735 = vpack.c.b16 %v716, %v715
        %v736 = vpack.c.b16 %v718, %v717
        %v737 = vpack.c.b16 %v720, %v719
        %v738 = vpack.c.b16 %v722, %v721
        %755 = vmatpush.bf16.msra.mxu0 %v730
        %756 = vmatpush.bf16.msra.mxu0 %v729
        %757 = vmatpush.bf16.msra.mxu0 %v728
        %758 = vmatpush.bf16.msra.mxu0 %v727
        %759 = vmatpush.bf16.msra.mxu0 %v726
        %760 = vmatpush.bf16.msra.mxu0 %v725
        %761 = vmatpush.bf16.msra.mxu0 %v724
        %762 = vmatpush.bf16.msra.mxu0 %v723
        %763 = vmatmul.bf16.gmra.mxu0 %v621
        %v764 = vpop.f32.mrf.mxu0
        %v765 = vadd.f32 %v657, %v764
        %v766 = vpop.f32.mrf.mxu0
        %767 = vdwg.mxu0
        %768 = vmatpush.bf16.msra.mxu0 %v738
        %769 = vmatpush.bf16.msra.mxu0 %v737
        %770 = vmatpush.bf16.msra.mxu0 %v736
        %771 = vmatpush.bf16.msra.mxu0 %v735
        %772 = vmatpush.bf16.msra.mxu0 %v734
        %773 = vmatpush.bf16.msra.mxu0 %v733
        %774 = vmatpush.bf16.msra.mxu0 %v732
        %775 = vmatpush.bf16.msra.mxu0 %v731
        %776 = vmatmul.bf16.gmra.mxu0 %v622
        %v777 = vpop.f32.mrf.mxu0
        %v778 = vadd.f32 %v765, %v777
        %v779 = vpop.f32.mrf.mxu0
        %780 = vdwg.mxu0
        %v781 = vmax.f32 %v778, 0.0
        %v782 = vld [vmem:[#allocation6] sm:$0x1]
        %v783 = vld [vmem:[#allocation7] sm:$0x1]
        %784 = vadd.xlane.f32.xlu0 %v781
        %v785 = vpop.xlane.xlu0 %784
        %v786 = vrcp.pop 128.0
        %v787 = vmul.f32 128.0, %v786
        %v788 = vsub.f32 1.0, %v787
        %v789 = vmul.f32 %v786, %v788
        %v790 = vadd.f32 %v786, %v789
        %vm791 = vweird.f32 %v786
        %v792 = vsel %vm791, %v786, %v790
        %v793 = vmul.f32 %v785, %v792
        %v794 = vsub.f32 %v781, %v793
        %v795 = vmul.f32 %v794, %v794
        %796 = vadd.xlane.f32.xlu0 %v795
        %v797 = vpop.xlane.xlu0 %796
        %v798 = vmul.f32 %v797, %v792
        %v799 = vadd.f32 %v798, 1e-05
        %v800 = vrsqrt.pop %v799
        %v801 = vmul.f32 %v800, %v799
        %v802 = vmul.f32 %v801, %v800
        %v803 = vmul.f32 0.5, %v802
        %v804 = vsub.f32 1.5, %v803
        %v805 = vmul.f32 %v800, %v804
        %vm806 = vweird.f32 %v799
        %vm807 = vweird.f32 %v800
        %vm808 = vmor %vm806, %vm807
        %v809 = vsel %vm808, %v800, %v805
        %v810 = vmul.f32 %v794, %v809
        %v812 = vperm.slane %v782, 0
        %v814 = vmul.f32 %v810, %v812
        %v816 = vperm.slane %v783, 0
        %v818 = vadd.f32 %v814, %v816
        %v819 = vpack.c.bf16 %v818, %v818
        %v820 = vld [vmem:[%s5] sm:$0xff]
        %v821 = vld [vmem:[%s5 + $0x8] sm:$0xf]
        %v822 = vld [vmem:[%s5 + $0xc] sm:$0xff]
        %v823 = vld [vmem:[%s5 + $0x14] sm:$0xf]
        %v824 = vld [vmem:[%s5 + $0x18] sm:$0xff]
        %v825 = vld [vmem:[%s5 + $0x20] sm:$0xf]
        %v826 = vld [vmem:[%s5 + $0x24] sm:$0xff]
        %v827 = vld [vmem:[%s5 + $0x2c] sm:$0xf]
        %v828 = vld [vmem:[%s5 + $0x30] sm:$0xff]
        %v829 = vld [vmem:[%s5 + $0x38] sm:$0xf]
        %v830 = vld [vmem:[%s5 + $0x3c] sm:$0xff]
        %v831 = vld [vmem:[%s5 + $0x44] sm:$0xf]
        %v832 = vld [vmem:[%s5 + $0x48] sm:$0xff]
        %v833 = vld [vmem:[%s5 + $0x50] sm:$0xf]
        %v834 = vld [vmem:[%s5 + $0x54] sm:$0xff]
        %v835 = vld [vmem:[%s5 + $0x5c] sm:$0xf]
        %v836 = vld [vmem:[%s5 + $0x60] sm:$0xff]
        %v837 = vld [vmem:[%s5 + $0x68] sm:$0xf]
        %v838 = vld [vmem:[%s5 + $0x6c] sm:$0xff]
        %v839 = vld [vmem:[%s5 + $0x74] sm:$0xf]
        %v840 = vld [vmem:[%s5 + $0x78] sm:$0xff]
        %v841 = vld [vmem:[%s5 + $0x80] sm:$0xf]
        %v842 = vld [vmem:[%s5 + $0x84] sm:$0xff]
        %v843 = vld [vmem:[%s5 + $0x8c] sm:$0xf]
        %v844 = vld [vmem:[%s5 + $0x90] sm:$0xff]
        %v845 = vld [vmem:[%s5 + $0x98] sm:$0xf]
        %v846 = vld [vmem:[%s5 + $0x9c] sm:$0xff]
        %v847 = vld [vmem:[%s5 + $0xa4] sm:$0xf]
        %v848 = vld [vmem:[%s5 + $0xa8] sm:$0xff]
        %v849 = vld [vmem:[%s5 + $0xb0] sm:$0xf]
        %v850 = vld [vmem:[%s5 + $0xb4] sm:$0xff]
        %v851 = vld [vmem:[%s5 + $0xbc] sm:$0xf]
        %v884 = vunpack.c.l.b16 %v820
        %v885 = vunpack.c.h.b16 %v820
        %v886 = vunpack.c.l.b16 %v821
        %v887 = vunpack.c.l.b16 %v822
        %v888 = vunpack.c.h.b16 %v822
        %v889 = vunpack.c.l.b16 %v823
        %v890 = vunpack.c.l.b16 %v824
        %v891 = vunpack.c.h.b16 %v824
        %v892 = vunpack.c.l.b16 %v825
        %v893 = vunpack.c.l.b16 %v826
        %v894 = vunpack.c.h.b16 %v826
        %v895 = vunpack.c.l.b16 %v827
        %v896 = vunpack.c.l.b16 %v828
        %v897 = vunpack.c.h.b16 %v828
        %v898 = vunpack.c.l.b16 %v829
        %v899 = vunpack.c.l.b16 %v830
        %v900 = vunpack.c.h.b16 %v830
        %v901 = vunpack.c.l.b16 %v831
        %v902 = vunpack.c.l.b16 %v832
        %v903 = vunpack.c.h.b16 %v832
        %v904 = vunpack.c.l.b16 %v833
        %v905 = vunpack.c.l.b16 %v834
        %v906 = vunpack.c.h.b16 %v834
        %v907 = vunpack.c.l.b16 %v835
        %v908 = vunpack.c.l.b16 %v836
        %v909 = vunpack.c.h.b16 %v836
        %v910 = vunpack.c.l.b16 %v837
        %v911 = vunpack.c.l.b16 %v838
        %v912 = vunpack.c.h.b16 %v838
        %v913 = vunpack.c.l.b16 %v839
        %v914 = vunpack.c.l.b16 %v840
        %v915 = vunpack.c.h.b16 %v840
        %v916 = vunpack.c.l.b16 %v841
        %v917 = vunpack.c.l.b16 %v842
        %v918 = vunpack.c.h.b16 %v842
        %v919 = vunpack.c.l.b16 %v843
        %v920 = vunpack.c.l.b16 %v844
        %v921 = vunpack.c.h.b16 %v844
        %v922 = vunpack.c.l.b16 %v845
        %v923 = vunpack.c.l.b16 %v846
        %v924 = vunpack.c.h.b16 %v846
        %v925 = vunpack.c.l.b16 %v847
        %v926 = vunpack.c.l.b16 %v848
        %v927 = vunpack.c.h.b16 %v848
        %v928 = vunpack.c.l.b16 %v849
        %v929 = vunpack.c.l.b16 %v850
        %v930 = vunpack.c.h.b16 %v850
        %v931 = vunpack.c.l.b16 %v851
        %v932 = vpack.c.b16 %v887, %v884
        %v933 = vpack.c.b16 %v888, %v885
        %v934 = vpack.c.b16 %v889, %v886
        %v935 = vpack.c.b16 %v893, %v890
        %v936 = vpack.c.b16 %v894, %v891
        %v937 = vpack.c.b16 %v895, %v892
        %v938 = vpack.c.b16 %v899, %v896
        %v939 = vpack.c.b16 %v900, %v897
        %v940 = vpack.c.b16 %v901, %v898
        %v941 = vpack.c.b16 %v905, %v902
        %v942 = vpack.c.b16 %v906, %v903
        %v943 = vpack.c.b16 %v907, %v904
        %v944 = vpack.c.b16 %v911, %v908
        %v945 = vpack.c.b16 %v912, %v909
        %v946 = vpack.c.b16 %v913, %v910
        %v947 = vpack.c.b16 %v917, %v914
        %v948 = vpack.c.b16 %v918, %v915
        %v949 = vpack.c.b16 %v919, %v916
        %v950 = vpack.c.b16 %v923, %v920
        %v951 = vpack.c.b16 %v924, %v921
        %v952 = vpack.c.b16 %v925, %v922
        %v953 = vpack.c.b16 %v929, %v926
        %v954 = vpack.c.b16 %v930, %v927
        %v955 = vpack.c.b16 %v931, %v928
        %980 = vmatpush.bf16.msra.mxu0 %v953
        %981 = vmatpush.bf16.msra.mxu0 %v950
        %982 = vmatpush.bf16.msra.mxu0 %v947
        %983 = vmatpush.bf16.msra.mxu0 %v944
        %984 = vmatpush.bf16.msra.mxu0 %v941
        %985 = vmatpush.bf16.msra.mxu0 %v938
        %986 = vmatpush.bf16.msra.mxu0 %v935
        %987 = vmatpush.bf16.msra.mxu0 %v932
        %988 = vmatmul.bf16.gmra.mxu0 %v819
        %v989 = vpop.f32.mrf.mxu0
        %v990 = vadd.f32 0.0, %v989
        %v991 = vpop.f32.mrf.mxu0
        %992 = vdwg.mxu0
        %993 = vmatpush.bf16.msra.mxu0 %v954
        %994 = vmatpush.bf16.msra.mxu0 %v951
        %995 = vmatpush.bf16.msra.mxu0 %v948
        %996 = vmatpush.bf16.msra.mxu0 %v945
        %997 = vmatpush.bf16.msra.mxu0 %v942
        %998 = vmatpush.bf16.msra.mxu0 %v939
        %999 = vmatpush.bf16.msra.mxu0 %v936
        %1000 = vmatpush.bf16.msra.mxu0 %v933
        %1001 = vmatmul.bf16.gmra.mxu0 %v819
        %v1002 = vpop.f32.mrf.mxu0
        %v1003 = vadd.f32 0.0, %v1002
        %v1004 = vpop.f32.mrf.mxu0
        %1005 = vdwg.mxu0
        %1006 = vmatpush.bf16.msra.mxu0 %v955
        %1007 = vmatpush.bf16.msra.mxu0 %v952
        %1008 = vmatpush.bf16.msra.mxu0 %v949
        %1009 = vmatpush.bf16.msra.mxu0 %v946
        %1010 = vmatpush.bf16.msra.mxu0 %v943
        %1011 = vmatpush.bf16.msra.mxu0 %v940
        %1012 = vmatpush.bf16.msra.mxu0 %v937
        %1013 = vmatpush.bf16.msra.mxu0 %v934
        %1014 = vmatmul.bf16.gmra.mxu0 %v819
        %v1015 = vpop.f32.mrf.mxu0
        %v1016 = vadd.f32 0.0, %v1015
        %v1017 = vpop.f32.mrf.mxu0
        %1018 = vdwg.mxu0
        %v1019 = vlaneseq
        %v1020 = vshrl.u32 %v1019, 7
        %v1021 = vlaneseq
        %v1022 = vand.u32 %v1021, 127
        %vm1023 = vcmp.le.s32.totalorder %v1022, %v1020
        %v1024 = vld [vmem:[%s6] sm:$0xf]
        %v1025 = vld [vmem:[%s6 + $0x4] sm:$0xf]
        %v1026 = vld [vmem:[%s6 + $0x8] sm:$0xf]
        %v1027 = vld [vmem:[%s6 + $0xc] sm:$0xf]
        %v1028 = vld [vmem:[%s6 + $0x10] sm:$0xf]
        %v1029 = vld [vmem:[%s6 + $0x14] sm:$0xf]
        %v1030 = vld [vmem:[%s6 + $0x18] sm:$0xf]
        %v1031 = vld [vmem:[%s6 + $0x1c] sm:$0xf]
        %v1032 = vld [vmem:[%s6 + $0x20] sm:$0xf]
        %v1033 = vld [vmem:[%s6 + $0x24] sm:$0xf]
        %v1034 = vld [vmem:[%s6 + $0x28] sm:$0xf]
        %v1035 = vld [vmem:[%s6 + $0x2c] sm:$0xf]
        %v1036 = vld [vmem:[%s6 + $0x30] sm:$0xf]
        %v1037 = vld [vmem:[%s6 + $0x34] sm:$0xf]
        %v1038 = vld [vmem:[%s6 + $0x38] sm:$0xf]
        %v1039 = vld [vmem:[%s6 + $0x3c] sm:$0xf]
        %vm1040 = vcmask 261120
        %v1042 = vsel %vm1040, %v990, 0
        %v1045 = vsel %vm1040, %v1003, 0
        %1047 = vmatpush.xpose.msra.mxu0 0.0
        %1048 = vmatpush.xpose.msra.mxu0 0.0
        %1049 = vmatpush.xpose.msra.mxu0 0.0
        %1050 = vmatpush.xpose.msra.mxu0 0.0
        %1051 = vmatpush.xpose.msra.mxu0 0.0
        %1052 = vmatpush.xpose.msra.mxu0 0.0
        %1053 = vmatpush.xpose.msra.mxu0 0.0
        %1054 = vmatpush.xpose.msra.mxu0 0.0
        %1055 = vmatpush.xpose.msra.mxu0 0.0
        %1056 = vmatpush.xpose.msra.mxu0 0.0
        %1057 = vmatpush.xpose.msra.mxu0 0.0
        %1058 = vmatpush.xpose.msra.mxu0 0.0
        %1059 = vmatpush.xpose.msra.mxu0 0.0
        %1060 = vmatpush.xpose.msra.mxu0 0.0
        %1061 = vmatpush.xpose.msra.mxu0 0.0
        %1062 = vmatpush.xpose.msra.mxu0 %v1045
        %1063 = vmatmul.f32.gmra.mxu0 %v1042
        %v1064 = vpop.f32.mrf.mxu0
        %v1065 = vadd.f32 0.0, %v1064
        %1066 = vdwg.mxu0
        %v1067 = vmul.f32 %v1065, 0.17677669
        %v1068 = vsel %vm1023, %v1067, -inf
        %vm1069 = vcmask 64512
        %v1070 = vsel %vm1069, %v1068, -inf
        %1071 = vmax.xlane.f32.xlu0 %v1070
        %v1072 = vpop.xlane.xlu0 %1071
        %v1073 = vsub.f32 %v1068, %v1072
        %v1074 = vmul.f32 %v1073, 1.442695
        %v1075 = vpow.pop %v1074
        %v1076 = vsel %vm1069, %v1075, 0.0
        %1077 = vadd.xlane.f32.xlu0 %v1076
        %v1078 = vpop.xlane.xlu0 %1077
        %v1079 = vrcp.pop %v1078
        %v1080 = vmul.f32 %v1075, %v1079
        %v1082 = vsel %vm1069, %v1080, 0
        %1084 = vmatpush.msra.mxu0 0.0
        %1085 = vmatpush.msra.mxu0 0.0
        %1086 = vmatpush.msra.mxu0 0.0
        %1087 = vmatpush.msra.mxu0 0.0
        %1088 = vmatpush.msra.mxu0 0.0
        %1089 = vmatpush.msra.mxu0 0.0
        %1090 = vmatpush.msra.mxu0 0.0
        %1091 = vmatpush.msra.mxu0 0.0
        %1092 = vmatpush.msra.mxu0 0.0
        %1093 = vmatpush.msra.mxu0 0.0
        %1094 = vmatpush.msra.mxu0 0.0
        %1095 = vmatpush.msra.mxu0 0.0
        %1096 = vmatpush.msra.mxu0 0.0
        %1097 = vmatpush.msra.mxu0 0.0
        %1098 = vmatpush.msra.mxu0 0.0
        %1099 = vmatpush.msra.mxu0 %v1016
        %1100 = vmatmul.f32.gmra.mxu0 %v1082
        %v1101 = vpop.f32.mrf.mxu0
        %v1102 = vadd.f32 0.0, %v1101
        %1103 = vdwg.mxu0
        %v1104 = vpack.c.bf16 %v1102, %v1102
        %1105 = vrot.lane.b32.xlu0 %v990, 96
        %v1106 = vpop.permute.xlu0 %1105
        %1107 = vrot.lane.b32.xlu0 %v1003, 96
        %v1108 = vpop.permute.xlu0 %1107
        %v1109 = vsel %vm1040, %v1106, 0
        %v1111 = vsel %vm1040, %v1108, 0
        %1113 = vmatpush.xpose.msra.mxu0 0.0
        %1114 = vmatpush.xpose.msra.mxu0 0.0
        %1115 = vmatpush.xpose.msra.mxu0 0.0
        %1116 = vmatpush.xpose.msra.mxu0 0.0
        %1117 = vmatpush.xpose.msra.mxu0 0.0
        %1118 = vmatpush.xpose.msra.mxu0 0.0
        %1119 = vmatpush.xpose.msra.mxu0 0.0
        %1120 = vmatpush.xpose.msra.mxu0 0.0
        %1121 = vmatpush.xpose.msra.mxu0 0.0
        %1122 = vmatpush.xpose.msra.mxu0 0.0
        %1123 = vmatpush.xpose.msra.mxu0 0.0
        %1124 = vmatpush.xpose.msra.mxu0 0.0
        %1125 = vmatpush.xpose.msra.mxu0 0.0
        %1126 = vmatpush.xpose.msra.mxu0 0.0
        %1127 = vmatpush.xpose.msra.mxu0 0.0
        %1128 = vmatpush.xpose.msra.mxu0 %v1111
        %1129 = vmatmul.f32.gmra.mxu0 %v1109
        %v1130 = vpop.f32.mrf.mxu0
        %v1131 = vadd.f32 0.0, %v1130
        %1132 = vdwg.mxu0
        %v1133 = vmul.f32 %v1131, 0.17677669
        %v1134 = vsel %vm1023, %v1133, -inf
        %v1135 = vsel %vm1069, %v1134, -inf
        %1136 = vmax.xlane.f32.xlu0 %v1135
        %v1137 = vpop.xlane.xlu0 %1136
        %v1138 = vsub.f32 %v1134, %v1137
        %v1139 = vmul.f32 %v1138, 1.442695
        %v1140 = vpow.pop %v1139
        %v1141 = vsel %vm1069, %v1140, 0.0
        %1142 = vadd.xlane.f32.xlu0 %v1141
        %v1143 = vpop.xlane.xlu0 %1142
        %v1144 = vrcp.pop %v1143
        %v1145 = vmul.f32 %v1140, %v1144
        %1147 = vrot.lane.b32.xlu0 %v1016, 96
        %v1148 = vpop.permute.xlu0 %1147
        %v1151 = vsel %vm1069, %v1145, 0
        %1153 = vmatpush.msra.mxu0 0.0
        %1154 = vmatpush.msra.mxu0 0.0
        %1155 = vmatpush.msra.mxu0 0.0
        %1156 = vmatpush.msra.mxu0 0.0
        %1157 = vmatpush.msra.mxu0 0.0
        %1158 = vmatpush.msra.mxu0 0.0
        %1159 = vmatpush.msra.mxu0 0.0
        %1160 = vmatpush.msra.mxu0 0.0
        %1161 = vmatpush.msra.mxu0 0.0
        %1162 = vmatpush.msra.mxu0 0.0
        %1163 = vmatpush.msra.mxu0 0.0
        %1164 = vmatpush.msra.mxu0 0.0
        %1165 = vmatpush.msra.mxu0 0.0
        %1166 = vmatpush.msra.mxu0 0.0
        %1167 = vmatpush.msra.mxu0 0.0
        %1168 = vmatpush.msra.mxu0 %v1148
        %1169 = vmatmul.f32.gmra.mxu0 %v1151
        %v1170 = vpop.f32.mrf.mxu0
        %v1171 = vadd.f32 0.0, %v1170
        %1172 = vdwg.mxu0
        %v1173 = vpack.c.bf16 %v1171, %v1171
        %v1178 = vunpack.c.l.b16 %v1028
        %v1179 = vunpack.c.l.b16 %v1029
        %v1180 = vunpack.c.l.b16 %v1030
        %v1181 = vunpack.c.l.b16 %v1031
        %v1182 = vpack.c.b16 %v1179, %v1178
        %v1183 = vpack.c.b16 %v1181, %v1180
        %v1187 = vsel %vm1040, %v1173, 0
        %1189 = vmatpush.bf16.msra.mxu0 0
        %1190 = vmatpush.bf16.msra.mxu0 0
        %1191 = vmatpush.bf16.msra.mxu0 0
        %1192 = vmatpush.bf16.msra.mxu0 0
        %1193 = vmatpush.bf16.msra.mxu0 0
        %1194 = vmatpush.bf16.msra.mxu0 0
        %1195 = vmatpush.bf16.msra.mxu0 %v1183
        %1196 = vmatpush.bf16.msra.mxu0 %v1182
        %1197 = vmatmul.bf16.gmra.mxu0 %v1187
        %v1198 = vpop.f32.mrf.mxu0
        %v1199 = vadd.f32 0.0, %v1198
        %v1200 = vpop.f32.mrf.mxu0
        %1201 = vdwg.mxu0
        %v1206 = vunpack.c.l.b16 %v1024
        %v1207 = vunpack.c.l.b16 %v1025
        %v1208 = vunpack.c.l.b16 %v1026
        %v1209 = vunpack.c.l.b16 %v1027
        %v1210 = vpack.c.b16 %v1207, %v1206
        %v1211 = vpack.c.b16 %v1209, %v1208
        %v1215 = vsel %vm1040, %v1104, 0
        %1217 = vmatpush.bf16.msra.mxu0 0
        %1218 = vmatpush.bf16.msra.mxu0 0
        %1219 = vmatpush.bf16.msra.mxu0 0
        %1220 = vmatpush.bf16.msra.mxu0 0
        %1221 = vmatpush.bf16.msra.mxu0 0
        %1222 = vmatpush.bf16.msra.mxu0 0
        %1223 = vmatpush.bf16.msra.mxu0 %v1211
        %1224 = vmatpush.bf16.msra.mxu0 %v1210
        %1225 = vmatmul.bf16.gmra.mxu0 %v1215
        %v1226 = vpop.f32.mrf.mxu0
        %v1227 = vadd.f32 %v1199, %v1226
        %v1228 = vpop.f32.mrf.mxu0
        %1229 = vdwg.mxu0
        %1230 = vrot.lane.b32.xlu0 %v990, 64
        %v1231 = vpop.permute.xlu0 %1230
        %1232 = vrot.lane.b32.xlu0 %v1003, 64
        %v1233 = vpop.permute.xlu0 %1232
        %v1234 = vsel %vm1040, %v1231, 0
        %v1236 = vsel %vm1040, %v1233, 0
        %1238 = vmatpush.xpose.msra.mxu0 0.0
        %1239 = vmatpush.xpose.msra.mxu0 0.0
        %1240 = vmatpush.xpose.msra.mxu0 0.0
        %1241 = vmatpush.xpose.msra.mxu0 0.0
        %1242 = vmatpush.xpose.msra.mxu0 0.0
        %1243 = vmatpush.xpose.msra.mxu0 0.0
        %1244 = vmatpush.xpose.msra.mxu0 0.0
        %1245 = vmatpush.xpose.msra.mxu0 0.0
        %1246 = vmatpush.xpose.msra.mxu0 0.0
        %1247 = vmatpush.xpose.msra.mxu0 0.0
        %1248 = vmatpush.xpose.msra.mxu0 0.0
        %1249 = vmatpush.xpose.msra.mxu0 0.0
        %1250 = vmatpush.xpose.msra.mxu0 0.0
        %1251 = vmatpush.xpose.msra.mxu0 0.0
        %1252 = vmatpush.xpose.msra.mxu0 0.0
        %1253 = vmatpush.xpose.msra.mxu0 %v1236
        %1254 = vmatmul.f32.gmra.mxu0 %v1234
        %v1255 = vpop.f32.mrf.mxu0
        %v1256 = vadd.f32 0.0, %v1255
        %1257 = vdwg.mxu0
        %v1258 = vmul.f32 %v1256, 0.17677669
        %v1259 = vsel %vm1023, %v1258, -inf
        %v1260 = vsel %vm1069, %v1259, -inf
        %1261 = vmax.xlane.f32.xlu0 %v1260
        %v1262 = vpop.xlane.xlu0 %1261
        %v1263 = vsub.f32 %v1259, %v1262
        %v1264 = vmul.f32 %v1263, 1.442695
        %v1265 = vpow.pop %v1264
        %v1266 = vsel %vm1069, %v1265, 0.0
        %1267 = vadd.xlane.f32.xlu0 %v1266
        %v1268 = vpop.xlane.xlu0 %1267
        %v1269 = vrcp.pop %v1268
        %v1270 = vmul.f32 %v1265, %v1269
        %1271 = vrot.lane.b32.xlu0 %v1016, 64
        %v1272 = vpop.permute.xlu0 %1271
        %v1275 = vsel %vm1069, %v1270, 0
        %1277 = vmatpush.msra.mxu0 0.0
        %1278 = vmatpush.msra.mxu0 0.0
        %1279 = vmatpush.msra.mxu0 0.0
        %1280 = vmatpush.msra.mxu0 0.0
        %1281 = vmatpush.msra.mxu0 0.0
        %1282 = vmatpush.msra.mxu0 0.0
        %1283 = vmatpush.msra.mxu0 0.0
        %1284 = vmatpush.msra.mxu0 0.0
        %1285 = vmatpush.msra.mxu0 0.0
        %1286 = vmatpush.msra.mxu0 0.0
        %1287 = vmatpush.msra.mxu0 0.0
        %1288 = vmatpush.msra.mxu0 0.0
        %1289 = vmatpush.msra.mxu0 0.0
        %1290 = vmatpush.msra.mxu0 0.0
        %1291 = vmatpush.msra.mxu0 0.0
        %1292 = vmatpush.msra.mxu0 %v1272
        %1293 = vmatmul.f32.gmra.mxu0 %v1275
        %v1294 = vpop.f32.mrf.mxu0
        %v1295 = vadd.f32 0.0, %v1294
        %1296 = vdwg.mxu0
        %v1297 = vpack.c.bf16 %v1295, %v1295
        %v1302 = vunpack.c.l.b16 %v1032
        %v1303 = vunpack.c.l.b16 %v1033
        %v1304 = vunpack.c.l.b16 %v1034
        %v1305 = vunpack.c.l.b16 %v1035
        %v1306 = vpack.c.b16 %v1303, %v1302
        %v1307 = vpack.c.b16 %v1305, %v1304
        %v1311 = vsel %vm1040, %v1297, 0
        %1313 = vmatpush.bf16.msra.mxu0 0
        %1314 = vmatpush.bf16.msra.mxu0 0
        %1315 = vmatpush.bf16.msra.mxu0 0
        %1316 = vmatpush.bf16.msra.mxu0 0
        %1317 = vmatpush.bf16.msra.mxu0 0
        %1318 = vmatpush.bf16.msra.mxu0 0
        %1319 = vmatpush.bf16.msra.mxu0 %v1307
        %1320 = vmatpush.bf16.msra.mxu0 %v1306
        %1321 = vmatmul.bf16.gmra.mxu0 %v1311
        %v1322 = vpop.f32.mrf.mxu0
        %v1323 = vadd.f32 0.0, %v1322
        %v1324 = vpop.f32.mrf.mxu0
        %1325 = vdwg.mxu0
        %v1326 = vadd.f32 %v1227, %v1323
        %1327 = vrot.lane.b32.xlu0 %v990, 32
        %v1328 = vpop.permute.xlu0 %1327
        %1329 = vrot.lane.b32.xlu0 %v1003, 32
        %v1330 = vpop.permute.xlu0 %1329
        %v1331 = vsel %vm1040, %v1328, 0
        %v1333 = vsel %vm1040, %v1330, 0
        %1335 = vmatpush.xpose.msra.mxu0 0.0
        %1336 = vmatpush.xpose.msra.mxu0 0.0
        %1337 = vmatpush.xpose.msra.mxu0 0.0
        %1338 = vmatpush.xpose.msra.mxu0 0.0
        %1339 = vmatpush.xpose.msra.mxu0 0.0
        %1340 = vmatpush.xpose.msra.mxu0 0.0
        %1341 = vmatpush.xpose.msra.mxu0 0.0
        %1342 = vmatpush.xpose.msra.mxu0 0.0
        %1343 = vmatpush.xpose.msra.mxu0 0.0
        %1344 = vmatpush.xpose.msra.mxu0 0.0
        %1345 = vmatpush.xpose.msra.mxu0 0.0
        %1346 = vmatpush.xpose.msra.mxu0 0.0
        %1347 = vmatpush.xpose.msra.mxu0 0.0
        %1348 = vmatpush.xpose.msra.mxu0 0.0
        %1349 = vmatpush.xpose.msra.mxu0 0.0
        %1350 = vmatpush.xpose.msra.mxu0 %v1333
        %1351 = vmatmul.f32.gmra.mxu0 %v1331
        %v1352 = vpop.f32.mrf.mxu0
        %v1353 = vadd.f32 0.0, %v1352
        %1354 = vdwg.mxu0
        %v1355 = vmul.f32 %v1353, 0.17677669
        %v1356 = vsel %vm1023, %v1355, -inf
        %v1357 = vsel %vm1069, %v1356, -inf
        %1358 = vmax.xlane.f32.xlu0 %v1357
        %v1359 = vpop.xlane.xlu0 %1358
        %v1360 = vsub.f32 %v1356, %v1359
        %v1361 = vmul.f32 %v1360, 1.442695
        %v1362 = vpow.pop %v1361
        %v1363 = vsel %vm1069, %v1362, 0.0
        %1364 = vadd.xlane.f32.xlu0 %v1363
        %v1365 = vpop.xlane.xlu0 %1364
        %v1366 = vrcp.pop %v1365
        %v1367 = vmul.f32 %v1362, %v1366
        %1368 = vrot.lane.b32.xlu0 %v1016, 32
        %v1369 = vpop.permute.xlu0 %1368
        %v1372 = vsel %vm1069, %v1367, 0
        %1374 = vmatpush.msra.mxu0 0.0
        %1375 = vmatpush.msra.mxu0 0.0
        %1376 = vmatpush.msra.mxu0 0.0
        %1377 = vmatpush.msra.mxu0 0.0
        %1378 = vmatpush.msra.mxu0 0.0
        %1379 = vmatpush.msra.mxu0 0.0
        %1380 = vmatpush.msra.mxu0 0.0
        %1381 = vmatpush.msra.mxu0 0.0
        %1382 = vmatpush.msra.mxu0 0.0
        %1383 = vmatpush.msra.mxu0 0.0
        %1384 = vmatpush.msra.mxu0 0.0
        %1385 = vmatpush.msra.mxu0 0.0
        %1386 = vmatpush.msra.mxu0 0.0
        %1387 = vmatpush.msra.mxu0 0.0
        %1388 = vmatpush.msra.mxu0 0.0
        %1389 = vmatpush.msra.mxu0 %v1369
        %1390 = vmatmul.f32.gmra.mxu0 %v1372
        %v1391 = vpop.f32.mrf.mxu0
        %v1392 = vadd.f32 0.0, %v1391
        %1393 = vdwg.mxu0
        %v1394 = vpack.c.bf16 %v1392, %v1392
        %v1399 = vunpack.c.l.b16 %v1036
        %v1400 = vunpack.c.l.b16 %v1037
        %v1401 = vunpack.c.l.b16 %v1038
        %v1402 = vunpack.c.l.b16 %v1039
        %v1403 = vpack.c.b16 %v1400, %v1399
        %v1404 = vpack.c.b16 %v1402, %v1401
        %v1408 = vsel %vm1040, %v1394, 0
        %1410 = vmatpush.bf16.msra.mxu0 0
        %1411 = vmatpush.bf16.msra.mxu0 0
        %1412 = vmatpush.bf16.msra.mxu0 0
        %1413 = vmatpush.bf16.msra.mxu0 0
        %1414 = vmatpush.bf16.msra.mxu0 0
        %1415 = vmatpush.bf16.msra.mxu0 0
        %1416 = vmatpush.bf16.msra.mxu0 %v1404
        %1417 = vmatpush.bf16.msra.mxu0 %v1403
        %1418 = vmatmul.bf16.gmra.mxu0 %v1408
        %v1419 = vpop.f32.mrf.mxu0
        %v1420 = vadd.f32 0.0, %v1419
        %v1421 = vpop.f32.mrf.mxu0
        %1422 = vdwg.mxu0
        %v1423 = vadd.f32 %v1326, %v1420
        %v1424 = vadd.f32 %v781, %v1423
        %v1425 = vld [vmem:[#allocation9] sm:$0x1]
        %v1427 = vperm.slane %v1425, 0
        %v1429 = vadd.f32 %v1424, %v1427
        %v1430 = vld [vmem:[#allocation10] sm:$0x1]
        %v1431 = vld [vmem:[#allocation12] sm:$0x1]
        %1432 = vadd.xlane.f32.xlu0 %v1429
        %v1433 = vpop.xlane.xlu0 %1432
        %v1434 = vmul.f32 %v1433, %v792
        %v1435 = vsub.f32 %v1429, %v1434
        %v1436 = vmul.f32 %v1435, %v1435
        %1437 = vadd.xlane.f32.xlu0 %v1436
        %v1438 = vpop.xlane.xlu0 %1437
        %v1439 = vmul.f32 %v1438, %v792
        %v1440 = vadd.f32 %v1439, 1e-05
        %v1441 = vrsqrt.pop %v1440
        %v1442 = vmul.f32 %v1441, %v1440
        %v1443 = vmul.f32 %v1442, %v1441
        %v1444 = vmul.f32 0.5, %v1443
        %v1445 = vsub.f32 1.5, %v1444
        %v1446 = vmul.f32 %v1441, %v1445
        %vm1447 = vweird.f32 %v1440
        %vm1448 = vweird.f32 %v1441
        %vm1449 = vmor %vm1447, %vm1448
        %v1450 = vsel %vm1449, %v1441, %v1446
        %v1451 = vmul.f32 %v1435, %v1450
        %v1453 = vperm.slane %v1430, 0
        %v1455 = vmul.f32 %v1451, %v1453
        %v1457 = vperm.slane %v1431, 0
        %v1459 = vadd.f32 %v1455, %v1457
        %v1460 = vpack.c.bf16 %v1459, %v1459
        %v1461 = vld [vmem:[#allocation13] sm:$0xff]
        %v1462 = vld [vmem:[#allocation13 + $0x8] sm:$0xff]
        %v1463 = vld [vmem:[#allocation13 + $0x10] sm:$0xff]
        %v1464 = vld [vmem:[#allocation13 + $0x18] sm:$0xff]
        %v1465 = vld [vmem:[#allocation13 + $0x20] sm:$0xff]
        %v1466 = vld [vmem:[#allocation13 + $0x28] sm:$0xff]
        %v1467 = vld [vmem:[#allocation13 + $0x30] sm:$0xff]
        %v1468 = vld [vmem:[#allocation13 + $0x38] sm:$0xff]
        %v1469 = vld [vmem:[#allocation13 + $0x40] sm:$0xff]
        %v1470 = vld [vmem:[#allocation13 + $0x48] sm:$0xff]
        %v1471 = vld [vmem:[#allocation13 + $0x50] sm:$0xff]
        %v1472 = vld [vmem:[#allocation13 + $0x58] sm:$0xff]
        %v1473 = vld [vmem:[#allocation13 + $0x60] sm:$0xff]
        %v1474 = vld [vmem:[#allocation13 + $0x68] sm:$0xff]
        %v1475 = vld [vmem:[#allocation13 + $0x70] sm:$0xff]
        %v1476 = vld [vmem:[#allocation13 + $0x78] sm:$0xff]
        %v1477 = vld [vmem:[#allocation13 + $0x80] sm:$0xff]
        %v1478 = vld [vmem:[#allocation13 + $0x88] sm:$0xff]
        %v1479 = vld [vmem:[#allocation13 + $0x90] sm:$0xff]
        %v1480 = vld [vmem:[#allocation13 + $0x98] sm:$0xff]
        %v1481 = vld [vmem:[#allocation13 + $0xa0] sm:$0xff]
        %v1482 = vld [vmem:[#allocation13 + $0xa8] sm:$0xff]
        %v1483 = vld [vmem:[#allocation13 + $0xb0] sm:$0xff]
        %v1484 = vld [vmem:[#allocation13 + $0xb8] sm:$0xff]
        %v1485 = vld [vmem:[#allocation13 + $0xc0] sm:$0xff]
        %v1486 = vld [vmem:[#allocation13 + $0xc8] sm:$0xff]
        %v1487 = vld [vmem:[#allocation13 + $0xd0] sm:$0xff]
        %v1488 = vld [vmem:[#allocation13 + $0xd8] sm:$0xff]
        %v1489 = vld [vmem:[#allocation13 + $0xe0] sm:$0xff]
        %v1490 = vld [vmem:[#allocation13 + $0xe8] sm:$0xff]
        %v1491 = vld [vmem:[#allocation13 + $0xf0] sm:$0xff]
        %v1492 = vld [vmem:[#allocation13 + $0xf8] sm:$0xff]
        %v1493 = vld [vmem:[%s11] sm:$0xf]
        %v1495 = vperm.slane %v1493, 0
        %v1496 = vperm.slane %v1493, 1
        %v1497 = vperm.slane %v1493, 2
        %v1498 = vperm.slane %v1493, 3
        %v1535 = vunpack.c.l.b16 %v1461
        %v1536 = vunpack.c.h.b16 %v1461
        %v1537 = vunpack.c.l.b16 %v1462
        %v1538 = vunpack.c.h.b16 %v1462
        %v1539 = vunpack.c.l.b16 %v1463
        %v1540 = vunpack.c.h.b16 %v1463
        %v1541 = vunpack.c.l.b16 %v1464
        %v1542 = vunpack.c.h.b16 %v1464
        %v1543 = vunpack.c.l.b16 %v1465
        %v1544 = vunpack.c.h.b16 %v1465
        %v1545 = vunpack.c.l.b16 %v1466
        %v1546 = vunpack.c.h.b16 %v1466
        %v1547 = vunpack.c.l.b16 %v1467
        %v1548 = vunpack.c.h.b16 %v1467
        %v1549 = vunpack.c.l.b16 %v1468
        %v1550 = vunpack.c.h.b16 %v1468
        %v1551 = vunpack.c.l.b16 %v1469
        %v1552 = vunpack.c.h.b16 %v1469
        %v1553 = vunpack.c.l.b16 %v1470
        %v1554 = vunpack.c.h.b16 %v1470
        %v1555 = vunpack.c.l.b16 %v1471
        %v1556 = vunpack.c.h.b16 %v1471
        %v1557 = vunpack.c.l.b16 %v1472
        %v1558 = vunpack.c.h.b16 %v1472
        %v1559 = vunpack.c.l.b16 %v1473
        %v1560 = vunpack.c.h.b16 %v1473
        %v1561 = vunpack.c.l.b16 %v1474
        %v1562 = vunpack.c.h.b16 %v1474
        %v1563 = vunpack.c.l.b16 %v1475
        %v1564 = vunpack.c.h.b16 %v1475
        %v1565 = vunpack.c.l.b16 %v1476
        %v1566 = vunpack.c.h.b16 %v1476
        %v1567 = vunpack.c.l.b16 %v1477
        %v1568 = vunpack.c.h.b16 %v1477
        %v1569 = vunpack.c.l.b16 %v1478
        %v1570 = vunpack.c.h.b16 %v1478
        %v1571 = vunpack.c.l.b16 %v1479
        %v1572 = vunpack.c.h.b16 %v1479
        %v1573 = vunpack.c.l.b16 %v1480
        %v1574 = vunpack.c.h.b16 %v1480
        %v1575 = vunpack.c.l.b16 %v1481
        %v1576 = vunpack.c.h.b16 %v1481
        %v1577 = vunpack.c.l.b16 %v1482
        %v1578 = vunpack.c.h.b16 %v1482
        %v1579 = vunpack.c.l.b16 %v1483
        %v1580 = vunpack.c.h.b16 %v1483
        %v1581 = vunpack.c.l.b16 %v1484
        %v1582 = vunpack.c.h.b16 %v1484
        %v1583 = vunpack.c.l.b16 %v1485
        %v1584 = vunpack.c.h.b16 %v1485
        %v1585 = vunpack.c.l.b16 %v1486
        %v1586 = vunpack.c.h.b16 %v1486
        %v1587 = vunpack.c.l.b16 %v1487
        %v1588 = vunpack.c.h.b16 %v1487
        %v1589 = vunpack.c.l.b16 %v1488
        %v1590 = vunpack.c.h.b16 %v1488
        %v1591 = vunpack.c.l.b16 %v1489
        %v1592 = vunpack.c.h.b16 %v1489
        %v1593 = vunpack.c.l.b16 %v1490
        %v1594 = vunpack.c.h.b16 %v1490
        %v1595 = vunpack.c.l.b16 %v1491
        %v1596 = vunpack.c.h.b16 %v1491
        %v1597 = vunpack.c.l.b16 %v1492
        %v1598 = vunpack.c.h.b16 %v1492
        %v1599 = vpack.c.b16 %v1539, %v1535
        %v1600 = vpack.c.b16 %v1540, %v1536
        %v1601 = vpack.c.b16 %v1541, %v1537
        %v1602 = vpack.c.b16 %v1542, %v1538
        %v1603 = vpack.c.b16 %v1547, %v1543
        %v1604 = vpack.c.b16 %v1548, %v1544
        %v1605 = vpack.c.b16 %v1549, %v1545
        %v1606 = vpack.c.b16 %v1550, %v1546
        %v1607 = vpack.c.b16 %v1555, %v1551
        %v1608 = vpack.c.b16 %v1556, %v1552
        %v1609 = vpack.c.b16 %v1557, %v1553
        %v1610 = vpack.c.b16 %v1558, %v1554
        %v1611 = vpack.c.b16 %v1563, %v1559
        %v1612 = vpack.c.b16 %v1564, %v1560
        %v1613 = vpack.c.b16 %v1565, %v1561
        %v1614 = vpack.c.b16 %v1566, %v1562
        %v1615 = vpack.c.b16 %v1571, %v1567
        %v1616 = vpack.c.b16 %v1572, %v1568
        %v1617 = vpack.c.b16 %v1573, %v1569
        %v1618 = vpack.c.b16 %v1574, %v1570
        %v1619 = vpack.c.b16 %v1579, %v1575
        %v1620 = vpack.c.b16 %v1580, %v1576
        %v1621 = vpack.c.b16 %v1581, %v1577
        %v1622 = vpack.c.b16 %v1582, %v1578
        %v1623 = vpack.c.b16 %v1587, %v1583
        %v1624 = vpack.c.b16 %v1588, %v1584
        %v1625 = vpack.c.b16 %v1589, %v1585
        %v1626 = vpack.c.b16 %v1590, %v1586
        %v1627 = vpack.c.b16 %v1595, %v1591
        %v1628 = vpack.c.b16 %v1596, %v1592
        %v1629 = vpack.c.b16 %v1597, %v1593
        %v1630 = vpack.c.b16 %v1598, %v1594
        %1663 = vmatpush.bf16.msra.mxu0 %v1627
        %1664 = vmatpush.bf16.msra.mxu0 %v1623
        %1665 = vmatpush.bf16.msra.mxu0 %v1619
        %1666 = vmatpush.bf16.msra.mxu0 %v1615
        %1667 = vmatpush.bf16.msra.mxu0 %v1611
        %1668 = vmatpush.bf16.msra.mxu0 %v1607
        %1669 = vmatpush.bf16.msra.mxu0 %v1603
        %1670 = vmatpush.bf16.msra.mxu0 %v1599
        %1671 = vmatmul.bf16.gmra.mxu0 %v1460
        %v1672 = vpop.f32.mrf.mxu0
        %v1673 = vadd.f32 %v1495, %v1672
        %v1674 = vpop.f32.mrf.mxu0
        %1675 = vdwg.mxu0
        %1676 = vmatpush.bf16.msra.mxu0 %v1628
        %1677 = vmatpush.bf16.msra.mxu0 %v1624
        %1678 = vmatpush.bf16.msra.mxu0 %v1620
        %1679 = vmatpush.bf16.msra.mxu0 %v1616
        %1680 = vmatpush.bf16.msra.mxu0 %v1612
        %1681 = vmatpush.bf16.msra.mxu0 %v1608
        %1682 = vmatpush.bf16.msra.mxu0 %v1604
        %1683 = vmatpush.bf16.msra.mxu0 %v1600
        %1684 = vmatmul.bf16.gmra.mxu0 %v1460
        %v1685 = vpop.f32.mrf.mxu0
        %v1686 = vadd.f32 %v1496, %v1685
        %v1687 = vpop.f32.mrf.mxu0
        %1688 = vdwg.mxu0
        %1689 = vmatpush.bf16.msra.mxu0 %v1629
        %1690 = vmatpush.bf16.msra.mxu0 %v1625
        %1691 = vmatpush.bf16.msra.mxu0 %v1621
        %1692 = vmatpush.bf16.msra.mxu0 %v1617
        %1693 = vmatpush.bf16.msra.mxu0 %v1613
        %1694 = vmatpush.bf16.msra.mxu0 %v1609
        %1695 = vmatpush.bf16.msra.mxu0 %v1605
        %1696 = vmatpush.bf16.msra.mxu0 %v1601
        %1697 = vmatmul.bf16.gmra.mxu0 %v1460
        %v1698 = vpop.f32.mrf.mxu0
        %v1699 = vadd.f32 %v1497, %v1698
        %v1700 = vpop.f32.mrf.mxu0
        %1701 = vdwg.mxu0
        %1702 = vmatpush.bf16.msra.mxu0 %v1630
        %1703 = vmatpush.bf16.msra.mxu0 %v1626
        %1704 = vmatpush.bf16.msra.mxu0 %v1622
        %1705 = vmatpush.bf16.msra.mxu0 %v1618
        %1706 = vmatpush.bf16.msra.mxu0 %v1614
        %1707 = vmatpush.bf16.msra.mxu0 %v1610
        %1708 = vmatpush.bf16.msra.mxu0 %v1606
        %1709 = vmatpush.bf16.msra.mxu0 %v1602
        %1710 = vmatmul.bf16.gmra.mxu0 %v1460
        %v1711 = vpop.f32.mrf.mxu0
        %v1712 = vadd.f32 %v1498, %v1711
        %v1713 = vpop.f32.mrf.mxu0
        %1714 = vdwg.mxu0
        %v1715 = vmax.f32 %v1673, 0.0
        %v1716 = vmax.f32 %v1686, 0.0
        %v1717 = vmax.f32 %v1699, 0.0
        %v1718 = vmax.f32 %v1712, 0.0
        %v1719 = vpack.c.bf16 %v1715, %v1715
        %v1720 = vpack.c.bf16 %v1716, %v1716
        %v1721 = vpack.c.bf16 %v1717, %v1717
        %v1722 = vpack.c.bf16 %v1718, %v1718
        %v1723 = vld [vmem:[#allocation15] sm:$0xf]
        %v1724 = vld [vmem:[#allocation15 + $0x4] sm:$0xf]
        %v1725 = vld [vmem:[#allocation15 + $0x8] sm:$0xf]
        %v1726 = vld [vmem:[#allocation15 + $0xc] sm:$0xf]
        %v1727 = vld [vmem:[#allocation15 + $0x10] sm:$0xf]
        %v1728 = vld [vmem:[#allocation15 + $0x14] sm:$0xf]
        %v1729 = vld [vmem:[#allocation15 + $0x18] sm:$0xf]
        %v1730 = vld [vmem:[#allocation15 + $0x1c] sm:$0xf]
        %v1731 = vld [vmem:[#allocation15 + $0x20] sm:$0xf]
        %v1732 = vld [vmem:[#allocation15 + $0x24] sm:$0xf]
        %v1733 = vld [vmem:[#allocation15 + $0x28] sm:$0xf]
        %v1734 = vld [vmem:[#allocation15 + $0x2c] sm:$0xf]
        %v1735 = vld [vmem:[#allocation15 + $0x30] sm:$0xf]
        %v1736 = vld [vmem:[#allocation15 + $0x34] sm:$0xf]
        %v1737 = vld [vmem:[#allocation15 + $0x38] sm:$0xf]
        %v1738 = vld [vmem:[#allocation15 + $0x3c] sm:$0xf]
        %v1739 = vld [vmem:[#allocation15 + $0x40] sm:$0xf]
        %v1740 = vld [vmem:[#allocation15 + $0x44] sm:$0xf]
        %v1741 = vld [vmem:[#allocation15 + $0x48] sm:$0xf]
        %v1742 = vld [vmem:[#allocation15 + $0x4c] sm:$0xf]
        %v1743 = vld [vmem:[#allocation15 + $0x50] sm:$0xf]
        %v1744 = vld [vmem:[#allocation15 + $0x54] sm:$0xf]
        %v1745 = vld [vmem:[#allocation15 + $0x58] sm:$0xf]
        %v1746 = vld [vmem:[#allocation15 + $0x5c] sm:$0xf]
        %v1747 = vld [vmem:[#allocation15 + $0x60] sm:$0xf]
        %v1748 = vld [vmem:[#allocation15 + $0x64] sm:$0xf]
        %v1749 = vld [vmem:[#allocation15 + $0x68] sm:$0xf]
        %v1750 = vld [vmem:[#allocation15 + $0x6c] sm:$0xf]
        %v1751 = vld [vmem:[#allocation15 + $0x70] sm:$0xf]
        %v1752 = vld [vmem:[#allocation15 + $0x74] sm:$0xf]
        %v1753 = vld [vmem:[#allocation15 + $0x78] sm:$0xf]
        %v1754 = vld [vmem:[#allocation15 + $0x7c] sm:$0xf]
        %v1755 = vld [vmem:[#allocation15 + $0x80] sm:$0xf]
        %v1756 = vld [vmem:[#allocation15 + $0x84] sm:$0xf]
        %v1757 = vld [vmem:[#allocation15 + $0x88] sm:$0xf]
        %v1758 = vld [vmem:[#allocation15 + $0x8c] sm:$0xf]
        %v1759 = vld [vmem:[#allocation15 + $0x90] sm:$0xf]
        %v1760 = vld [vmem:[#allocation15 + $0x94] sm:$0xf]
        %v1761 = vld [vmem:[#allocation15 + $0x98] sm:$0xf]
        %v1762 = vld [vmem:[#allocation15 + $0x9c] sm:$0xf]
        %v1763 = vld [vmem:[#allocation15 + $0xa0] sm:$0xf]
        %v1764 = vld [vmem:[#allocation15 + $0xa4] sm:$0xf]
        %v1765 = vld [vmem:[#allocation15 + $0xa8] sm:$0xf]
        %v1766 = vld [vmem:[#allocation15 + $0xac] sm:$0xf]
        %v1767 = vld [vmem:[#allocation15 + $0xb0] sm:$0xf]
        %v1768 = vld [vmem:[#allocation15 + $0xb4] sm:$0xf]
        %v1769 = vld [vmem:[#allocation15 + $0xb8] sm:$0xf]
        %v1770 = vld [vmem:[#allocation15 + $0xbc] sm:$0xf]
        %v1771 = vld [vmem:[#allocation15 + $0xc0] sm:$0xf]
        %v1772 = vld [vmem:[#allocation15 + $0xc4] sm:$0xf]
        %v1773 = vld [vmem:[#allocation15 + $0xc8] sm:$0xf]
        %v1774 = vld [vmem:[#allocation15 + $0xcc] sm:$0xf]
        %v1775 = vld [vmem:[#allocation15 + $0xd0] sm:$0xf]
        %v1776 = vld [vmem:[#allocation15 + $0xd4] sm:$0xf]
        %v1777 = vld [vmem:[#allocation15 + $0xd8] sm:$0xf]
        %v1778 = vld [vmem:[#allocation15 + $0xdc] sm:$0xf]
        %v1779 = vld [vmem:[#allocation15 + $0xe0] sm:$0xf]
        %v1780 = vld [vmem:[#allocation15 + $0xe4] sm:$0xf]
        %v1781 = vld [vmem:[#allocation15 + $0xe8] sm:$0xf]
        %v1782 = vld [vmem:[#allocation15 + $0xec] sm:$0xf]
        %v1783 = vld [vmem:[#allocation15 + $0xf0] sm:$0xf]
        %v1784 = vld [vmem:[#allocation15 + $0xf4] sm:$0xf]
        %v1785 = vld [vmem:[#allocation15 + $0xf8] sm:$0xf]
        %v1786 = vld [vmem:[#allocation15 + $0xfc] sm:$0xf]
        %v1787 = vld [vmem:[#allocation16] sm:$0x1]
        %v1789 = vperm.slane %v1787, 0
        %v1855 = vunpack.c.l.b16 %v1723
        %v1856 = vunpack.c.l.b16 %v1724
        %v1857 = vunpack.c.l.b16 %v1725
        %v1858 = vunpack.c.l.b16 %v1726
        %v1859 = vunpack.c.l.b16 %v1727
        %v1860 = vunpack.c.l.b16 %v1728
        %v1861 = vunpack.c.l.b16 %v1729
        %v1862 = vunpack.c.l.b16 %v1730
        %v1863 = vunpack.c.l.b16 %v1731
        %v1864 = vunpack.c.l.b16 %v1732
        %v1865 = vunpack.c.l.b16 %v1733
        %v1866 = vunpack.c.l.b16 %v1734
        %v1867 = vunpack.c.l.b16 %v1735
        %v1868 = vunpack.c.l.b16 %v1736
        %v1869 = vunpack.c.l.b16 %v1737
        %v1870 = vunpack.c.l.b16 %v1738
        %v1871 = vunpack.c.l.b16 %v1739
        %v1872 = vunpack.c.l.b16 %v1740
        %v1873 = vunpack.c.l.b16 %v1741
        %v1874 = vunpack.c.l.b16 %v1742
        %v1875 = vunpack.c.l.b16 %v1743
        %v1876 = vunpack.c.l.b16 %v1744
        %v1877 = vunpack.c.l.b16 %v1745
        %v1878 = vunpack.c.l.b16 %v1746
        %v1879 = vunpack.c.l.b16 %v1747
        %v1880 = vunpack.c.l.b16 %v1748
        %v1881 = vunpack.c.l.b16 %v1749
        %v1882 = vunpack.c.l.b16 %v1750
        %v1883 = vunpack.c.l.b16 %v1751
        %v1884 = vunpack.c.l.b16 %v1752
        %v1885 = vunpack.c.l.b16 %v1753
        %v1886 = vunpack.c.l.b16 %v1754
        %v1887 = vunpack.c.l.b16 %v1755
        %v1888 = vunpack.c.l.b16 %v1756
        %v1889 = vunpack.c.l.b16 %v1757
        %v1890 = vunpack.c.l.b16 %v1758
        %v1891 = vunpack.c.l.b16 %v1759
        %v1892 = vunpack.c.l.b16 %v1760
        %v1893 = vunpack.c.l.b16 %v1761
        %v1894 = vunpack.c.l.b16 %v1762
        %v1895 = vunpack.c.l.b16 %v1763
        %v1896 = vunpack.c.l.b16 %v1764
        %v1897 = vunpack.c.l.b16 %v1765
        %v1898 = vunpack.c.l.b16 %v1766
        %v1899 = vunpack.c.l.b16 %v1767
        %v1900 = vunpack.c.l.b16 %v1768
        %v1901 = vunpack.c.l.b16 %v1769
        %v1902 = vunpack.c.l.b16 %v1770
        %v1903 = vunpack.c.l.b16 %v1771
        %v1904 = vunpack.c.l.b16 %v1772
        %v1905 = vunpack.c.l.b16 %v1773
        %v1906 = vunpack.c.l.b16 %v1774
        %v1907 = vunpack.c.l.b16 %v1775
        %v1908 = vunpack.c.l.b16 %v1776
        %v1909 = vunpack.c.l.b16 %v1777
        %v1910 = vunpack.c.l.b16 %v1778
        %v1911 = vunpack.c.l.b16 %v1779
        %v1912 = vunpack.c.l.b16 %v1780
        %v1913 = vunpack.c.l.b16 %v1781
        %v1914 = vunpack.c.l.b16 %v1782
        %v1915 = vunpack.c.l.b16 %v1783
        %v1916 = vunpack.c.l.b16 %v1784
        %v1917 = vunpack.c.l.b16 %v1785
        %v1918 = vunpack.c.l.b16 %v1786
        %v1919 = vpack.c.b16 %v1856, %v1855
        %v1920 = vpack.c.b16 %v1858, %v1857
        %v1921 = vpack.c.b16 %v1860, %v1859
        %v1922 = vpack.c.b16 %v1862, %v1861
        %v1923 = vpack.c.b16 %v1864, %v1863
        %v1924 = vpack.c.b16 %v1866, %v1865
        %v1925 = vpack.c.b16 %v1868, %v1867
        %v1926 = vpack.c.b16 %v1870, %v1869
        %v1927 = vpack.c.b16 %v1872, %v1871
        %v1928 = vpack.c.b16 %v1874, %v1873
        %v1929 = vpack.c.b16 %v1876, %v1875
        %v1930 = vpack.c.b16 %v1878, %v1877
        %v1931 = vpack.c.b16 %v1880, %v1879
        %v1932 = vpack.c.b16 %v1882, %v1881
        %v1933 = vpack.c.b16 %v1884, %v1883
        %v1934 = vpack.c.b16 %v1886, %v1885
        %v1935 = vpack.c.b16 %v1888, %v1887
        %v1936 = vpack.c.b16 %v1890, %v1889
        %v1937 = vpack.c.b16 %v1892, %v1891
        %v1938 = vpack.c.b16 %v1894, %v1893
        %v1939 = vpack.c.b16 %v1896, %v1895
        %v1940 = vpack.c.b16 %v1898, %v1897
        %v1941 = vpack.c.b16 %v1900, %v1899
        %v1942 = vpack.c.b16 %v1902, %v1901
        %v1943 = vpack.c.b16 %v1904, %v1903
        %v1944 = vpack.c.b16 %v1906, %v1905
        %v1945 = vpack.c.b16 %v1908, %v1907
        %v1946 = vpack.c.b16 %v1910, %v1909
        %v1947 = vpack.c.b16 %v1912, %v1911
        %v1948 = vpack.c.b16 %v1914, %v1913
        %v1949 = vpack.c.b16 %v1916, %v1915
        %v1950 = vpack.c.b16 %v1918, %v1917
        %1983 = vmatpush.bf16.msra.mxu0 %v1926
        %1984 = vmatpush.bf16.msra.mxu0 %v1925
        %1985 = vmatpush.bf16.msra.mxu0 %v1924
        %1986 = vmatpush.bf16.msra.mxu0 %v1923
        %1987 = vmatpush.bf16.msra.mxu0 %v1922
        %1988 = vmatpush.bf16.msra.mxu0 %v1921
        %1989 = vmatpush.bf16.msra.mxu0 %v1920
        %1990 = vmatpush.bf16.msra.mxu0 %v1919
        %1991 = vmatmul.bf16.gmra.mxu0 %v1719
        %v1992 = vpop.f32.mrf.mxu0
        %v1993 = vadd.f32 %v1789, %v1992
        %v1994 = vpop.f32.mrf.mxu0
        %1995 = vdwg.mxu0
        %1996 = vmatpush.bf16.msra.mxu0 %v1934
        %1997 = vmatpush.bf16.msra.mxu0 %v1933
        %1998 = vmatpush.bf16.msra.mxu0 %v1932
        %1999 = vmatpush.bf16.msra.mxu0 %v1931
        %2000 = vmatpush.bf16.msra.mxu0 %v1930
        %2001 = vmatpush.bf16.msra.mxu0 %v1929
        %2002 = vmatpush.bf16.msra.mxu0 %v1928
        %2003 = vmatpush.bf16.msra.mxu0 %v1927
        %2004 = vmatmul.bf16.gmra.mxu0 %v1720
        %v2005 = vpop.f32.mrf.mxu0
        %v2006 = vadd.f32 %v1993, %v2005
        %v2007 = vpop.f32.mrf.mxu0
        %2008 = vdwg.mxu0
        %2009 = vmatpush.bf16.msra.mxu0 %v1942
        %2010 = vmatpush.bf16.msra.mxu0 %v1941
        %2011 = vmatpush.bf16.msra.mxu0 %v1940
        %2012 = vmatpush.bf16.msra.mxu0 %v1939
        %2013 = vmatpush.bf16.msra.mxu0 %v1938
        %2014 = vmatpush.bf16.msra.mxu0 %v1937
        %2015 = vmatpush.bf16.msra.mxu0 %v1936
        %2016 = vmatpush.bf16.msra.mxu0 %v1935
        %2017 = vmatmul.bf16.gmra.mxu0 %v1721
        %v2018 = vpop.f32.mrf.mxu0
        %v2019 = vadd.f32 %v2006, %v2018
        %v2020 = vpop.f32.mrf.mxu0
        %2021 = vdwg.mxu0
        %2022 = vmatpush.bf16.msra.mxu0 %v1950
        %2023 = vmatpush.bf16.msra.mxu0 %v1949
        %2024 = vmatpush.bf16.msra.mxu0 %v1948
        %2025 = vmatpush.bf16.msra.mxu0 %v1947
        %2026 = vmatpush.bf16.msra.mxu0 %v1946
        %2027 = vmatpush.bf16.msra.mxu0 %v1945
        %2028 = vmatpush.bf16.msra.mxu0 %v1944
        %2029 = vmatpush.bf16.msra.mxu0 %v1943
        %2030 = vmatmul.bf16.gmra.mxu0 %v1722
        %v2031 = vpop.f32.mrf.mxu0
        %v2032 = vadd.f32 %v2019, %v2031
        %v2033 = vpop.f32.mrf.mxu0
        %2034 = vdwg.mxu0
        %v2035 = vadd.f32 %v1429, %v2032
        %2036 = vst [vmem:[%s617] sm:$0xff] %v2035
        %p2037 = scmp.lt.s32.totalorder %s31, 1
        %s2038 = scalar_select %p2037, %s31, 1
        %s2039 = smul.addr %s2038, 8
        %s2040 = scalar_lea.vmem %s14, %s2039
        // Predicated region
        $region117: #{nanogpt_forward.5} parent=75 // pred_check
          %p2041 = pneg %p348
        $region118: #{nanogpt_forward.5} parent=75 // pred_check_branch
          %2043 = sbr.rel (%p2041) target = $region120
        $region119: #{nanogpt_forward.5} parent=75 // pred_region
          _
        $region120: #{nanogpt_forward.5} parent=75 // pred_fallthru
          _
      $region76: #{nanogpt_forward.5} parent=5 // pred_fallthru
        _
      %p2044 = scmp.le.s32.totalorder 2, %s26
      // Predicated region
      $region121: #{nanogpt_forward.5} parent=5 // pred_check
        %p2045 = pneg %p2044
      $region122: #{nanogpt_forward.5} parent=5 // pred_check_branch
        %2047 = sbr.rel (%p2045) target = $region124
      $region123: #{nanogpt_forward.5} parent=5 // pred_region
        %s2048 = ssub.s32 %s26, 2
        // Predicated region
        $region125: #{nanogpt_forward.5} parent=123 // pred_check
          %p2049 = pneg %p354
        $region126: #{nanogpt_forward.5} parent=123 // pred_check_branch
          %2051 = sbr.rel (%p2049) target = $region128
        $region127: #{nanogpt_forward.5} parent=123 // pred_region
          %p2052 = scmp.lt.s32.totalorder %s32, 1
          %s2053 = scalar_select %p2052, %s32, 1
          %s2054 = smul.addr %s2053, 8
          %s2055 = scalar_lea.vmem %s14, %s2054
        $region128: #{nanogpt_forward.5} parent=123 // pred_fallthru
          _
      $region124: #{nanogpt_forward.5} parent=5 // pred_fallthru
        _
    $region6: #{nanogpt_forward.5} parent=1 // loop_footer
      %s30 = sadd.s32 1, %s26
    $region7: #{nanogpt_forward.5} parent=1 // loop_footer_branch
      %25 = sbr.rel target = $region3
    $region8: #{nanogpt_forward.5} parent=1 // loop_exit
      _
    %2056 = vsyncpa [#allocation3], 1
    %s2057 = scalar_lea.sflag [#allocation3], 1
    %2058 = vsyncpa %s2057, 1
    %2059 = vsyncpa [#allocation5], 1
    %2060 = vsyncpa [#allocation8], 1
    %2061 = vsyncpa [#allocation11], 1
    %2062 = vsyncpa [#allocation14], 1
    %2063 = vsyncpa [#allocation17], 1

// kernel: nanogpt_forward.4
$region0: #{nanogpt_forward.4}
  #allocation0 [shape = 'u32[]', space=smem, size = 0x4, offset = 0x4, fixed_abs, tag = 'smem constant byte address 0x4 - core index']
  #allocation1 [shape = 'u32[72,128]{1,0:T(1,128)}', space=vmem, size = 0x9000, scoped, tag = 'internal scratch']
  %s0 = inlined_call_operand.vmem [shape: f32[2,8,32], index: 0, kind: input, shape index: {}]
  %s1 = inlined_call_operand.vmem [shape: bf16[32,256], index: 1, kind: input, shape index: {}]
  %s2 = inlined_call_operand.vmem [shape: f32[1,256], index: 2, kind: input, shape index: {}]
  %s3 = inlined_call_operand.vmem [shape: f32[1,256], index: 3, kind: input, shape index: {}]
  %s4 = inlined_call_operand.vmem [shape: f32[1,256], index: 4, kind: input, shape index: {}]
  %s5 = inlined_call_operand.hbm [shape: bf16[256,768], index: 5, kind: input, shape index: {}]
  %s6 = inlined_call_operand.hbm [shape: bf16[256,256], index: 6, kind: input, shape index: {}]
  %s7 = inlined_call_operand.vmem [shape: f32[1,256], index: 7, kind: input, shape index: {}]
  %s8 = inlined_call_operand.vmem [shape: f32[1,256], index: 8, kind: input, shape index: {}]
  %s9 = inlined_call_operand.vmem [shape: f32[1,256], index: 9, kind: input, shape index: {}]
  %s10 = inlined_call_operand.hbm [shape: bf16[256,1024], index: 10, kind: input, shape index: {}]
  %s11 = inlined_call_operand.vmem [shape: f32[1,1024], index: 11, kind: input, shape index: {}]
  %s12 = inlined_call_operand.hbm [shape: bf16[1024,256], index: 12, kind: input, shape index: {}]
  %s13 = inlined_call_operand.hbm [shape: f32[1,256], index: 13, kind: input, shape index: {}]
  %s14 = inlined_call_operand.vmem [shape: f32[2,8,256], index: 14, kind: output, shape index: {}]
  %s15 = sld [smem:[#allocation0]]
  $region109: #{nanogpt_forward.4} parent=0
    _
  %s17 = ssub.s32 1, %s15
  %s18 = scalar_select 0, %s17, %s15
  $region1: #{nanogpt_forward.4} parent=0
    #allocation2 [shape = 'u8[393216]{0}', space=vmem, size = 0x60000, scoped, tag = 'input window, operand 5, single buffered']
    #allocation3 [shape = 's32[2]{0}', space=sflag, size = 0x8, scoped, tag = 'scoped memory for nanogpt_forward.4']
    #allocation4 [shape = 'u8[131072]{0}', space=vmem, size = 0x20000, scoped, tag = 'input window, operand 6, single buffered']
    #allocation5 [shape = 's32[1]{0}', space=sflag, size = 0x4, scoped, tag = 'scoped memory for nanogpt_forward.4']
    #allocation6 [shape = 'u8[524288]{0}', space=vmem, size = 0x80000, scoped, tag = 'input window, operand 10, single buffered']
    #allocation7 [shape = 'u8[524288]{0}', space=vmem, size = 0x80000, scoped, tag = 'input window, operand 12, single buffered']
    #allocation8 [shape = 's32[1]{0}', space=sflag, size = 0x4, scoped, tag = 'scoped memory for nanogpt_forward.4']
    #allocation9 [shape = 'u8[1024]{0}', space=vmem, size = 0x400, scoped, tag = 'input window, operand 13, single buffered']
    %19 = vsyncpa [#allocation3], 0
    %20 = vsyncpa [#allocation5], 0
    %21 = vsyncpa [#allocation8], 0
    loop: start=0, step=1, limit=4
    $region2: #{nanogpt_forward.4} parent=1 // loop_pre_header
      _
    $region3: #{nanogpt_forward.4} parent=1 // loop_header
      %s23 = sphi 0, %s27
      %p24 = scmp.ge.s32.totalorder %s23, 4
      %s33 = sphi 0, %s35
      %s36 = sphi 0, %s33
      %s37 = sphi 0, %s36
      %s53 = sphi 0, %s37
      %s57 = sphi 0, %s57
      %s59 = sphi 0, %s57
      %s60 = sphi 0, %s59
      %s74 = sphi 0, %s60
      %s78 = sphi 0, %s78
      %s80 = sphi 0, %s78
      %s81 = sphi 0, %s80
      %s95 = sphi 0, %s81
      %s99 = sphi 0, %s99
      %s101 = sphi 0, %s99
      %s102 = sphi 0, %s101
      %s116 = sphi 0, %s102
      %s120 = sphi 0, %s120
      %s122 = sphi 0, %s120
      %s123 = sphi 0, %s122
      %s137 = sphi 0, %s123
      %s141 = sphi 0, %s141
      %s143 = sphi 0, %s141
      %s144 = sphi 0, %s143
      %s158 = sphi 0, %s144
      %s162 = sphi 0, %s162
      %s164 = sphi 0, %s162
      %s165 = sphi 0, %s164
      %s179 = sphi 0, %s165
      %s183 = sphi 0, %s183
      %s185 = sphi 0, %s183
      %s186 = sphi 0, %s185
      %s200 = sphi 0, %s186
      %s204 = sphi 0, %s204
      %s206 = sphi 0, %s204
      %s207 = sphi 0, %s206
      %s221 = sphi 0, %s207
      %s225 = sphi 0, %s225
      %s227 = sphi 0, %s225
      %s228 = sphi 0, %s227
      %s242 = sphi 0, %s228
      %s246 = sphi 0, %s246
      %s248 = sphi 0, %s246
      %s249 = sphi 0, %s248
      %s263 = sphi 0, %s249
      %s267 = sphi 0, %s267
      %s269 = sphi 0, %s267
      %s270 = sphi 0, %s269
      %s284 = sphi 0, %s270
      %s288 = sphi 0, %s288
      %s290 = sphi 0, %s288
      %s291 = sphi 0, %s290
      %s305 = sphi 0, %s291
      %s309 = sphi 0, %s309
      %s311 = sphi 0, %s309
      %s312 = sphi 0, %s311
      %s326 = sphi 0, %s312
      %s332 = sphi 0, %s334
      %s335 = sphi 0, %s332
      %s336 = sphi 0, %s335
      %s352 = sphi 0, %s336
    $region4: #{nanogpt_forward.4} parent=1 // loop_header_branch
      %26 = sbr.rel (%p24) target = $region8
    $region5: #{nanogpt_forward.4} parent=1 // loop_body
      %s28 = ssub.s32 %s23, 1
      %s29 = ssub.s32 %s23, 2
      %s30 = sadd.s32 %s23, 1
      %s31 = ssub.s32 %s23, %s30
      %p32 = scmp.eq.s32.totalorder %s31, 0
      %s34 = sadd.s32 %s33, 1
      %s35 = scalar_select %p32, %s33, %s34
      %p38 = pneg %p32
      %p39 = scmp.eq.s32.totalorder %s23, 1
      %p40 = por %p38, %p39
      %p41 = scmp.ne.s32.totalorder %s33, %s36
      %p42 = scmp.eq.s32.totalorder %s23, 0
      %p43 = por %p41, %p42
      %p44 = scmp.ne.s32.totalorder %s33, %s36
      %p45 = scmp.eq.s32.totalorder %s28, 1
      %p46 = por %p44, %p45
      %p47 = scmp.ne.s32.totalorder %s36, %s37
      %p48 = scmp.eq.s32.totalorder %s28, 0
      %p49 = por %p47, %p48
      %p50 = scmp.ne.s32.totalorder %s36, %s37
      %p51 = scmp.eq.s32.totalorder %s29, 1
      %p52 = por %p50, %p51
      %p54 = scmp.ne.s32.totalorder %s37, %s53
      %p55 = scmp.eq.s32.totalorder %s29, 0
      %p56 = por %p54, %p55
      %s58 = sadd.s32 %s57, 1
      %p61 = scmp.eq.s32.totalorder %s23, 1
      %p62 = scmp.ne.s32.totalorder %s57, %s59
      %p63 = scmp.eq.s32.totalorder %s23, 0
      %p64 = por %p62, %p63
      %p65 = scmp.ne.s32.totalorder %s57, %s59
      %p66 = scmp.eq.s32.totalorder %s28, 1
      %p67 = por %p65, %p66
      %p68 = scmp.ne.s32.totalorder %s59, %s60
      %p69 = scmp.eq.s32.totalorder %s28, 0
      %p70 = por %p68, %p69
      %p71 = scmp.ne.s32.totalorder %s59, %s60
      %p72 = scmp.eq.s32.totalorder %s29, 1
      %p73 = por %p71, %p72
      %p75 = scmp.ne.s32.totalorder %s60, %s74
      %p76 = scmp.eq.s32.totalorder %s29, 0
      %p77 = por %p75, %p76
      %s79 = sadd.s32 %s78, 1
      %p82 = scmp.eq.s32.totalorder %s23, 1
      %p83 = scmp.ne.s32.totalorder %s78, %s80
      %p84 = scmp.eq.s32.totalorder %s23, 0
      %p85 = por %p83, %p84
      %p86 = scmp.ne.s32.totalorder %s78, %s80
      %p87 = scmp.eq.s32.totalorder %s28, 1
      %p88 = por %p86, %p87
      %p89 = scmp.ne.s32.totalorder %s80, %s81
      %p90 = scmp.eq.s32.totalorder %s28, 0
      %p91 = por %p89, %p90
      %p92 = scmp.ne.s32.totalorder %s80, %s81
      %p93 = scmp.eq.s32.totalorder %s29, 1
      %p94 = por %p92, %p93
      %p96 = scmp.ne.s32.totalorder %s81, %s95
      %p97 = scmp.eq.s32.totalorder %s29, 0
      %p98 = por %p96, %p97
      %s100 = sadd.s32 %s99, 1
      %p103 = scmp.eq.s32.totalorder %s23, 1
      %p104 = scmp.ne.s32.totalorder %s99, %s101
      %p105 = scmp.eq.s32.totalorder %s23, 0
      %p106 = por %p104, %p105
      %p107 = scmp.ne.s32.totalorder %s99, %s101
      %p108 = scmp.eq.s32.totalorder %s28, 1
      %p109 = por %p107, %p108
      %p110 = scmp.ne.s32.totalorder %s101, %s102
      %p111 = scmp.eq.s32.totalorder %s28, 0
      %p112 = por %p110, %p111
      %p113 = scmp.ne.s32.totalorder %s101, %s102
      %p114 = scmp.eq.s32.totalorder %s29, 1
      %p115 = por %p113, %p114
      %p117 = scmp.ne.s32.totalorder %s102, %s116
      %p118 = scmp.eq.s32.totalorder %s29, 0
      %p119 = por %p117, %p118
      %s121 = sadd.s32 %s120, 1
      %p124 = scmp.eq.s32.totalorder %s23, 1
      %p125 = scmp.ne.s32.totalorder %s120, %s122
      %p126 = scmp.eq.s32.totalorder %s23, 0
      %p127 = por %p125, %p126
      %p128 = scmp.ne.s32.totalorder %s120, %s122
      %p129 = scmp.eq.s32.totalorder %s28, 1
      %p130 = por %p128, %p129
      %p131 = scmp.ne.s32.totalorder %s122, %s123
      %p132 = scmp.eq.s32.totalorder %s28, 0
      %p133 = por %p131, %p132
      %p134 = scmp.ne.s32.totalorder %s122, %s123
      %p135 = scmp.eq.s32.totalorder %s29, 1
      %p136 = por %p134, %p135
      %p138 = scmp.ne.s32.totalorder %s123, %s137
      %p139 = scmp.eq.s32.totalorder %s29, 0
      %p140 = por %p138, %p139
      %s142 = sadd.s32 %s141, 1
      %p145 = scmp.eq.s32.totalorder %s23, 1
      %p146 = scmp.ne.s32.totalorder %s141, %s143
      %p147 = scmp.eq.s32.totalorder %s23, 0
      %p148 = por %p146, %p147
      %p149 = scmp.ne.s32.totalorder %s141, %s143
      %p150 = scmp.eq.s32.totalorder %s28, 1
      %p151 = por %p149, %p150
      %p152 = scmp.ne.s32.totalorder %s143, %s144
      %p153 = scmp.eq.s32.totalorder %s28, 0
      %p154 = por %p152, %p153
      %p155 = scmp.ne.s32.totalorder %s143, %s144
      %p156 = scmp.eq.s32.totalorder %s29, 1
      %p157 = por %p155, %p156
      %p159 = scmp.ne.s32.totalorder %s144, %s158
      %p160 = scmp.eq.s32.totalorder %s29, 0
      %p161 = por %p159, %p160
      %s163 = sadd.s32 %s162, 1
      %p166 = scmp.eq.s32.totalorder %s23, 1
      %p167 = scmp.ne.s32.totalorder %s162, %s164
      %p168 = scmp.eq.s32.totalorder %s23, 0
      %p169 = por %p167, %p168
      %p170 = scmp.ne.s32.totalorder %s162, %s164
      %p171 = scmp.eq.s32.totalorder %s28, 1
      %p172 = por %p170, %p171
      %p173 = scmp.ne.s32.totalorder %s164, %s165
      %p174 = scmp.eq.s32.totalorder %s28, 0
      %p175 = por %p173, %p174
      %p176 = scmp.ne.s32.totalorder %s164, %s165
      %p177 = scmp.eq.s32.totalorder %s29, 1
      %p178 = por %p176, %p177
      %p180 = scmp.ne.s32.totalorder %s165, %s179
      %p181 = scmp.eq.s32.totalorder %s29, 0
      %p182 = por %p180, %p181
      %s184 = sadd.s32 %s183, 1
      %p187 = scmp.eq.s32.totalorder %s23, 1
      %p188 = scmp.ne.s32.totalorder %s183, %s185
      %p189 = scmp.eq.s32.totalorder %s23, 0
      %p190 = por %p188, %p189
      %p191 = scmp.ne.s32.totalorder %s183, %s185
      %p192 = scmp.eq.s32.totalorder %s28, 1
      %p193 = por %p191, %p192
      %p194 = scmp.ne.s32.totalorder %s185, %s186
      %p195 = scmp.eq.s32.totalorder %s28, 0
      %p196 = por %p194, %p195
      %p197 = scmp.ne.s32.totalorder %s185, %s186
      %p198 = scmp.eq.s32.totalorder %s29, 1
      %p199 = por %p197, %p198
      %p201 = scmp.ne.s32.totalorder %s186, %s200
      %p202 = scmp.eq.s32.totalorder %s29, 0
      %p203 = por %p201, %p202
      %s205 = sadd.s32 %s204, 1
      %p208 = scmp.eq.s32.totalorder %s23, 1
      %p209 = scmp.ne.s32.totalorder %s204, %s206
      %p210 = scmp.eq.s32.totalorder %s23, 0
      %p211 = por %p209, %p210
      %p212 = scmp.ne.s32.totalorder %s204, %s206
      %p213 = scmp.eq.s32.totalorder %s28, 1
      %p214 = por %p212, %p213
      %p215 = scmp.ne.s32.totalorder %s206, %s207
      %p216 = scmp.eq.s32.totalorder %s28, 0
      %p217 = por %p215, %p216
      %p218 = scmp.ne.s32.totalorder %s206, %s207
      %p219 = scmp.eq.s32.totalorder %s29, 1
      %p220 = por %p218, %p219
      %p222 = scmp.ne.s32.totalorder %s207, %s221
      %p223 = scmp.eq.s32.totalorder %s29, 0
      %p224 = por %p222, %p223
      %s226 = sadd.s32 %s225, 1
      %p229 = scmp.eq.s32.totalorder %s23, 1
      %p230 = scmp.ne.s32.totalorder %s225, %s227
      %p231 = scmp.eq.s32.totalorder %s23, 0
      %p232 = por %p230, %p231
      %p233 = scmp.ne.s32.totalorder %s225, %s227
      %p234 = scmp.eq.s32.totalorder %s28, 1
      %p235 = por %p233, %p234
      %p236 = scmp.ne.s32.totalorder %s227, %s228
      %p237 = scmp.eq.s32.totalorder %s28, 0
      %p238 = por %p236, %p237
      %p239 = scmp.ne.s32.totalorder %s227, %s228
      %p240 = scmp.eq.s32.totalorder %s29, 1
      %p241 = por %p239, %p240
      %p243 = scmp.ne.s32.totalorder %s228, %s242
      %p244 = scmp.eq.s32.totalorder %s29, 0
      %p245 = por %p243, %p244
      %s247 = sadd.s32 %s246, 1
      %p250 = scmp.eq.s32.totalorder %s23, 1
      %p251 = scmp.ne.s32.totalorder %s246, %s248
      %p252 = scmp.eq.s32.totalorder %s23, 0
      %p253 = por %p251, %p252
      %p254 = scmp.ne.s32.totalorder %s246, %s248
      %p255 = scmp.eq.s32.totalorder %s28, 1
      %p256 = por %p254, %p255
      %p257 = scmp.ne.s32.totalorder %s248, %s249
      %p258 = scmp.eq.s32.totalorder %s28, 0
      %p259 = por %p257, %p258
      %p260 = scmp.ne.s32.totalorder %s248, %s249
      %p261 = scmp.eq.s32.totalorder %s29, 1
      %p262 = por %p260, %p261
      %p264 = scmp.ne.s32.totalorder %s249, %s263
      %p265 = scmp.eq.s32.totalorder %s29, 0
      %p266 = por %p264, %p265
      %s268 = sadd.s32 %s267, 1
      %p271 = scmp.eq.s32.totalorder %s23, 1
      %p272 = scmp.ne.s32.totalorder %s267, %s269
      %p273 = scmp.eq.s32.totalorder %s23, 0
      %p274 = por %p272, %p273
      %p275 = scmp.ne.s32.totalorder %s267, %s269
      %p276 = scmp.eq.s32.totalorder %s28, 1
      %p277 = por %p275, %p276
      %p278 = scmp.ne.s32.totalorder %s269, %s270
      %p279 = scmp.eq.s32.totalorder %s28, 0
      %p280 = por %p278, %p279
      %p281 = scmp.ne.s32.totalorder %s269, %s270
      %p282 = scmp.eq.s32.totalorder %s29, 1
      %p283 = por %p281, %p282
      %p285 = scmp.ne.s32.totalorder %s270, %s284
      %p286 = scmp.eq.s32.totalorder %s29, 0
      %p287 = por %p285, %p286
      %s289 = sadd.s32 %s288, 1
      %p292 = scmp.eq.s32.totalorder %s23, 1
      %p293 = scmp.ne.s32.totalorder %s288, %s290
      %p294 = scmp.eq.s32.totalorder %s23, 0
      %p295 = por %p293, %p294
      %p296 = scmp.ne.s32.totalorder %s288, %s290
      %p297 = scmp.eq.s32.totalorder %s28, 1
      %p298 = por %p296, %p297
      %p299 = scmp.ne.s32.totalorder %s290, %s291
      %p300 = scmp.eq.s32.totalorder %s28, 0
      %p301 = por %p299, %p300
      %p302 = scmp.ne.s32.totalorder %s290, %s291
      %p303 = scmp.eq.s32.totalorder %s29, 1
      %p304 = por %p302, %p303
      %p306 = scmp.ne.s32.totalorder %s291, %s305
      %p307 = scmp.eq.s32.totalorder %s29, 0
      %p308 = por %p306, %p307
      %s310 = sadd.s32 %s309, 1
      %p313 = scmp.eq.s32.totalorder %s23, 1
      %p314 = scmp.ne.s32.totalorder %s309, %s311
      %p315 = scmp.eq.s32.totalorder %s23, 0
      %p316 = por %p314, %p315
      %p317 = scmp.ne.s32.totalorder %s309, %s311
      %p318 = scmp.eq.s32.totalorder %s28, 1
      %p319 = por %p317, %p318
      %p320 = scmp.ne.s32.totalorder %s311, %s312
      %p321 = scmp.eq.s32.totalorder %s28, 0
      %p322 = por %p320, %p321
      %p323 = scmp.ne.s32.totalorder %s311, %s312
      %p324 = scmp.eq.s32.totalorder %s29, 1
      %p325 = por %p323, %p324
      %p327 = scmp.ne.s32.totalorder %s312, %s326
      %p328 = scmp.eq.s32.totalorder %s29, 0
      %p329 = por %p327, %p328
      %s330 = ssub.s32 %s23, %s30
      %p331 = scmp.eq.s32.totalorder %s330, 0
      %s333 = sadd.s32 %s332, 1
      %s334 = scalar_select %p331, %s332, %s333
      %p337 = pneg %p331
      %p338 = scmp.eq.s32.totalorder %s23, 1
      %p339 = por %p337, %p338
      %p340 = scmp.ne.s32.totalorder %s332, %s335
      %p341 = scmp.eq.s32.totalorder %s23, 0
      %p342 = por %p340, %p341
      %p343 = scmp.ne.s32.totalorder %s332, %s335
      %p344 = scmp.eq.s32.totalorder %s28, 1
      %p345 = por %p343, %p344
      %p346 = scmp.ne.s32.totalorder %s335, %s336
      %p347 = scmp.eq.s32.totalorder %s28, 0
      %p348 = por %p346, %p347
      %p349 = scmp.ne.s32.totalorder %s335, %s336
      %p350 = scmp.eq.s32.totalorder %s29, 1
      %p351 = por %p349, %p350
      %p353 = scmp.ne.s32.totalorder %s336, %s352
      %p354 = scmp.eq.s32.totalorder %s29, 0
      %p355 = por %p353, %p354
      %p356 = scmp.le.s32.totalorder 1, %s23
      %p357 = scmp.lt.s32.totalorder %s23, 3
      %p358 = pnand %p356, %p357
      %p359 = pneg %p358
      // Predicated region
      $region9: #{nanogpt_forward.4} parent=5 // pred_check
        _
      $region10: #{nanogpt_forward.4} parent=5 // pred_check_branch
        %361 = sbr.rel (%p358) target = $region12
      $region11: #{nanogpt_forward.4} parent=5 // pred_region
        %s362 = ssub.s32 %s23, 1
        // Predicated region
        $region13: #{nanogpt_forward.4} parent=11 // pred_check
          %p363 = pneg %p70
        $region14: #{nanogpt_forward.4} parent=11 // pred_check_branch
          %365 = sbr.rel (%p363) target = $region16
        $region15: #{nanogpt_forward.4} parent=11 // pred_region
          _
        $region16: #{nanogpt_forward.4} parent=11 // pred_fallthru
          _
        // Predicated region
        $region17: #{nanogpt_forward.4} parent=11 // pred_check
          %p366 = pneg %p91
        $region18: #{nanogpt_forward.4} parent=11 // pred_check_branch
          %368 = sbr.rel (%p366) target = $region20
        $region19: #{nanogpt_forward.4} parent=11 // pred_region
          _
        $region20: #{nanogpt_forward.4} parent=11 // pred_fallthru
          _
        // Predicated region
        $region21: #{nanogpt_forward.4} parent=11 // pred_check
          %p369 = pneg %p112
        $region22: #{nanogpt_forward.4} parent=11 // pred_check_branch
          %371 = sbr.rel (%p369) target = $region24
        $region23: #{nanogpt_forward.4} parent=11 // pred_region
          _
        $region24: #{nanogpt_forward.4} parent=11 // pred_fallthru
          _
        // Predicated region
        $region25: #{nanogpt_forward.4} parent=11 // pred_check
          %p372 = pneg %p133
        $region26: #{nanogpt_forward.4} parent=11 // pred_check_branch
          %374 = sbr.rel (%p372) target = $region28
        $region27: #{nanogpt_forward.4} parent=11 // pred_region
          _
        $region28: #{nanogpt_forward.4} parent=11 // pred_fallthru
          _
        // Predicated region
        $region29: #{nanogpt_forward.4} parent=11 // pred_check
          %p375 = pneg %p154
        $region30: #{nanogpt_forward.4} parent=11 // pred_check_branch
          %377 = sbr.rel (%p375) target = $region32
        $region31: #{nanogpt_forward.4} parent=11 // pred_region
          %379 = vsyncadd [#allocation3], 0
          %s380 = sshll.u32 %s5, 4
          %s381 = int_to_ptr.hbm [resolvable:$true] %s380
          %s382 = sshll.u32 [#allocation2], 4
          %s383 = int_to_ptr.vmem [resolvable:$true] %s382
          %388 = dma.hbm_to_vmem [thread:$0]  %s381, 12288, %s383, [#allocation3], 384, 384, 24
        $region32: #{nanogpt_forward.4} parent=11 // pred_fallthru
          _
        // Predicated region
        $region33: #{nanogpt_forward.4} parent=11 // pred_check
          %p389 = pneg %p175
        $region34: #{nanogpt_forward.4} parent=11 // pred_check_branch
          %391 = sbr.rel (%p389) target = $region36
        $region35: #{nanogpt_forward.4} parent=11 // pred_region
          %393 = vsyncadd [#allocation5], 0
          %s394 = sshll.u32 %s6, 4
          %s395 = int_to_ptr.hbm [resolvable:$true] %s394
          %s396 = sshll.u32 [#allocation4], 4
          %s397 = int_to_ptr.vmem [resolvable:$true] %s396
          %402 = dma.hbm_to_vmem [thread:$0]  %s395, 4096, %s397, [#allocation5], 128, 128, 8
        $region36: #{nanogpt_forward.4} parent=11 // pred_fallthru
          _
        // Predicated region
        $region37: #{nanogpt_forward.4} parent=11 // pred_check
          %p403 = pneg %p196
        $region38: #{nanogpt_forward.4} parent=11 // pred_check_branch
          %405 = sbr.rel (%p403) target = $region40
        $region39: #{nanogpt_forward.4} parent=11 // pred_region
          _
        $region40: #{nanogpt_forward.4} parent=11 // pred_fallthru
          _
        // Predicated region
        $region41: #{nanogpt_forward.4} parent=11 // pred_check
          %p406 = pneg %p217
        $region42: #{nanogpt_forward.4} parent=11 // pred_check_branch
          %408 = sbr.rel (%p406) target = $region44
        $region43: #{nanogpt_forward.4} parent=11 // pred_region
          _
        $region44: #{nanogpt_forward.4} parent=11 // pred_fallthru
          _
        // Predicated region
        $region45: #{nanogpt_forward.4} parent=11 // pred_check
          %p409 = pneg %p238
        $region46: #{nanogpt_forward.4} parent=11 // pred_check_branch
          %411 = sbr.rel (%p409) target = $region48
        $region47: #{nanogpt_forward.4} parent=11 // pred_region
          _
        $region48: #{nanogpt_forward.4} parent=11 // pred_fallthru
          _
        // Predicated region
        $region49: #{nanogpt_forward.4} parent=11 // pred_check
          %p412 = pneg %p259
        $region50: #{nanogpt_forward.4} parent=11 // pred_check_branch
          %414 = sbr.rel (%p412) target = $region52
        $region51: #{nanogpt_forward.4} parent=11 // pred_region
          %416 = vsyncadd [#allocation5], 0
          %s417 = sshll.u32 %s10, 4
          %s418 = int_to_ptr.hbm [resolvable:$true] %s417
          %s419 = sshll.u32 [#allocation6], 4
          %s420 = int_to_ptr.vmem [resolvable:$true] %s419
          %425 = dma.hbm_to_vmem [thread:$0]  %s418, 16384, %s420, [#allocation5], 512, 512, 32
        $region52: #{nanogpt_forward.4} parent=11 // pred_fallthru
          _
        // Predicated region
        $region53: #{nanogpt_forward.4} parent=11 // pred_check
          %p426 = pneg %p280
        $region54: #{nanogpt_forward.4} parent=11 // pred_check_branch
          %428 = sbr.rel (%p426) target = $region56
        $region55: #{nanogpt_forward.4} parent=11 // pred_region
          _
        $region56: #{nanogpt_forward.4} parent=11 // pred_fallthru
          _
        // Predicated region
        $region57: #{nanogpt_forward.4} parent=11 // pred_check
          %p429 = pneg %p301
        $region58: #{nanogpt_forward.4} parent=11 // pred_check_branch
          %431 = sbr.rel (%p429) target = $region60
        $region59: #{nanogpt_forward.4} parent=11 // pred_region
          %433 = vsyncadd [#allocation8], 0
          %s434 = sshll.u32 %s12, 4
          %s435 = int_to_ptr.hbm [resolvable:$true] %s434
          %s436 = sshll.u32 [#allocation7], 4
          %s437 = int_to_ptr.vmem [resolvable:$true] %s436
          %442 = dma.hbm_to_vmem [thread:$0]  %s435, 16384, %s437, [#allocation8], 128, 128, 8
        $region60: #{nanogpt_forward.4} parent=11 // pred_fallthru
          _
        // Predicated region
        $region61: #{nanogpt_forward.4} parent=11 // pred_check
          %p443 = pneg %p322
        $region62: #{nanogpt_forward.4} parent=11 // pred_check_branch
          %445 = sbr.rel (%p443) target = $region64
        $region63: #{nanogpt_forward.4} parent=11 // pred_region
          %447 = vsyncadd [#allocation8], 0
          %s449 = sshll.u32 %s13, 4
          %s450 = int_to_ptr.hbm [resolvable:$true] %s449
          %s451 = sshll.u32 [#allocation9], 4
          %s452 = int_to_ptr.vmem [resolvable:$true] %s451
          %454 = dma.hbm_to_vmem [thread:$0]  %s450, 32, %s452, [#allocation8]
        $region64: #{nanogpt_forward.4} parent=11 // pred_fallthru
          _
      $region12: #{nanogpt_forward.4} parent=5 // pred_fallthru
        _
      %p455 = scmp.lt.s32.totalorder %s23, 2
      // Predicated region
      $region65: #{nanogpt_forward.4} parent=5 // pred_check
        %p456 = pneg %p455
      $region66: #{nanogpt_forward.4} parent=5 // pred_check_branch
        %458 = sbr.rel (%p456) target = $region68
      $region67: #{nanogpt_forward.4} parent=5 // pred_region
        // Predicated region
        $region69: #{nanogpt_forward.4} parent=67 // pred_check
          %p459 = pneg %p43
        $region70: #{nanogpt_forward.4} parent=67 // pred_check_branch
          %461 = sbr.rel (%p459) target = $region72
        $region71: #{nanogpt_forward.4} parent=67 // pred_region
          %p462 = scmp.lt.s32.totalorder %s23, 1
          %s463 = scalar_select %p462, %s23, 1
          %s464 = smul.addr %s463, 8
          %s465 = scalar_lea.vmem %s0, %s464
        $region72: #{nanogpt_forward.4} parent=67 // pred_fallthru
          _
      $region68: #{nanogpt_forward.4} parent=5 // pred_fallthru
        _
      %p466 = scmp.le.s32.totalorder 1, %s23
      %p467 = scmp.lt.s32.totalorder %s23, 3
      %p468 = pnand %p466, %p467
      %p469 = pneg %p468
      // Predicated region
      $region73: #{nanogpt_forward.4} parent=5 // pred_check
        _
      $region74: #{nanogpt_forward.4} parent=5 // pred_check_branch
        %471 = sbr.rel (%p468) target = $region76
      $region75: #{nanogpt_forward.4} parent=5 // pred_region
        %s472 = ssub.s32 %s23, 1
        // Predicated region
        $region77: #{nanogpt_forward.4} parent=75 // pred_check
          %p473 = pneg %p154
        $region78: #{nanogpt_forward.4} parent=75 // pred_check_branch
          %475 = sbr.rel (%p473) target = $region80
        $region79: #{nanogpt_forward.4} parent=75 // pred_region
          %477 = dma.done [#allocation3], 12288
        $region80: #{nanogpt_forward.4} parent=75 // pred_fallthru
          _
        // Predicated region
        $region81: #{nanogpt_forward.4} parent=75 // pred_check
          %p478 = pneg %p175
        $region82: #{nanogpt_forward.4} parent=75 // pred_check_branch
          %480 = sbr.rel (%p478) target = $region84
        $region83: #{nanogpt_forward.4} parent=75 // pred_region
          %482 = dma.done [#allocation5], 4096
        $region84: #{nanogpt_forward.4} parent=75 // pred_fallthru
          _
        // Predicated region
        $region85: #{nanogpt_forward.4} parent=75 // pred_check
          %p483 = pneg %p259
        $region86: #{nanogpt_forward.4} parent=75 // pred_check_branch
          %485 = sbr.rel (%p483) target = $region88
        $region87: #{nanogpt_forward.4} parent=75 // pred_region
          %487 = dma.done [#allocation5], 16384
        $region88: #{nanogpt_forward.4} parent=75 // pred_fallthru
          _
        // Predicated region
        $region89: #{nanogpt_forward.4} parent=75 // pred_check
          %p488 = pneg %p301
        $region90: #{nanogpt_forward.4} parent=75 // pred_check_branch
          %490 = sbr.rel (%p488) target = $region92
        $region91: #{nanogpt_forward.4} parent=75 // pred_region
          %492 = dma.done [#allocation8], 16384
        $region92: #{nanogpt_forward.4} parent=75 // pred_fallthru
          _
        // Predicated region
        $region93: #{nanogpt_forward.4} parent=75 // pred_check
          %p493 = pneg %p322
        $region94: #{nanogpt_forward.4} parent=75 // pred_check_branch
          %495 = sbr.rel (%p493) target = $region96
        $region95: #{nanogpt_forward.4} parent=75 // pred_region
          %497 = dma.done [#allocation8], 32
        $region96: #{nanogpt_forward.4} parent=75 // pred_fallthru
          _
        %p498 = scmp.lt.s32.totalorder %s28, 1
        %s499 = scalar_select %p498, %s28, 1
        %s500 = smul.addr %s499, 8
        %s501 = scalar_lea.vmem %s0, %s500
        %p502 = pneg %p49
        %p503 = pneg %p46
        %p504 = pneg %p70
        %p505 = pneg %p67
        %p506 = pneg %p91
        %p507 = pneg %p88
        %p508 = pneg %p112
        %p509 = pneg %p109
        %p510 = pneg %p133
        %p511 = pneg %p130
        %p512 = pneg %p154
        %p513 = pneg %p151
        %p514 = pneg %p175
        %p515 = pneg %p172
        %p516 = pneg %p196
        %p517 = pneg %p193
        %p518 = pneg %p217
        %p519 = pneg %p214
        %p520 = pneg %p238
        %p521 = pneg %p235
        %p522 = pneg %p259
        %p523 = pneg %p256
        %p524 = pneg %p280
        %p525 = pneg %p277
        %p526 = pneg %p301
        %p527 = pneg %p298
        %p528 = pneg %p322
        %p529 = pneg %p319
        %p530 = pneg %p348
        %p531 = pneg %p345
        %p532 = scmp.lt.s32.totalorder %s28, 1
        %s533 = scalar_select %p532, %s28, 1
        %s534 = smul.addr %s533, 2
        %s535 = smul.addr %s534, 8
        %s536 = scalar_lea.vmem %s14, %s535
        %p537 = scmp.lt.s32.totalorder %s28, 1
        %s538 = scalar_select %p537, %s28, 1
        %s539 = smul.addr %s538, 8
        %s540 = scalar_lea.vmem %s0, %s539
        %p541 = scmp.lt.s32.totalorder %s28, 1
        %s542 = scalar_select %p541, %s28, 1
        %s543 = smul.addr %s542, 2
        %s544 = smul.addr %s543, 8
        %s545 = scalar_lea.vmem %s14, %s544
        %v547 = vld [vmem:[%s540] sm:$0xff]
        %v548 = vpack.c.bf16 %v547, %v547
        %v549 = vld [vmem:[%s1] sm:$0xff]
        %v550 = vld [vmem:[%s1 + $0x8] sm:$0xff]
        %v551 = vld [vmem:[%s1 + $0x10] sm:$0xff]
        %v552 = vld [vmem:[%s1 + $0x18] sm:$0xff]
        %v553 = vld [vmem:[%s2] sm:$0x3]
        %v555 = vperm.slane %v553, 0
        %v556 = vperm.slane %v553, 1
        %v563 = vunpack.c.l.b16 %v549
        %v564 = vunpack.c.h.b16 %v549
        %v565 = vunpack.c.l.b16 %v550
        %v566 = vunpack.c.h.b16 %v550
        %v567 = vunpack.c.l.b16 %v551
        %v568 = vunpack.c.h.b16 %v551
        %v569 = vunpack.c.l.b16 %v552
        %v570 = vunpack.c.h.b16 %v552
        %v571 = vpack.c.b16 %v565, %v563
        %v572 = vpack.c.b16 %v566, %v564
        %v573 = vpack.c.b16 %v569, %v567
        %v574 = vpack.c.b16 %v570, %v568
        %vm579 = vcmask 261120
        %v581 = vsel %vm579, %v548, 0
        %583 = vmatpush.bf16.msra.mxu0 0
        %584 = vmatpush.bf16.msra.mxu0 0
        %585 = vmatpush.bf16.msra.mxu0 0
        %586 = vmatpush.bf16.msra.mxu0 0
        %587 = vmatpush.bf16.msra.mxu0 0
        %588 = vmatpush.bf16.msra.mxu0 0
        %589 = vmatpush.bf16.msra.mxu0 %v573
        %590 = vmatpush.bf16.msra.mxu0 %v571
        %591 = vmatmul.bf16.gmra.mxu0 %v581
        %v592 = vpop.f32.mrf.mxu0
        %v593 = vadd.f32 %v555, %v592
        %v594 = vpop.f32.mrf.mxu0
        %595 = vdwg.mxu0
        %596 = vmatpush.bf16.msra.mxu0 0
        %597 = vmatpush.bf16.msra.mxu0 0
        %598 = vmatpush.bf16.msra.mxu0 0
        %599 = vmatpush.bf16.msra.mxu0 0
        %600 = vmatpush.bf16.msra.mxu0 0
        %601 = vmatpush.bf16.msra.mxu0 0
        %602 = vmatpush.bf16.msra.mxu0 %v574
        %603 = vmatpush.bf16.msra.mxu0 %v572
        %604 = vmatmul.bf16.gmra.mxu0 %v581
        %v605 = vpop.f32.mrf.mxu0
        %v606 = vadd.f32 %v556, %v605
        %v607 = vpop.f32.mrf.mxu0
        %608 = vdwg.mxu0
        %v609 = vmax.f32 %v593, 0.0
        %v610 = vmax.f32 %v606, 0.0
        %v611 = vld [vmem:[%s3] sm:$0x3]
        %v612 = vld [vmem:[%s4] sm:$0x3]
        %v613 = vadd.f32 %v609, %v610
        %614 = vadd.xlane.f32.xlu0 %v613
        %v615 = vpop.xlane.xlu0 %614
        %v616 = vrcp.pop 256.0
        %v617 = vmul.f32 256.0, %v616
        %v618 = vsub.f32 1.0, %v617
        %v619 = vmul.f32 %v616, %v618
        %v620 = vadd.f32 %v616, %v619
        %vm621 = vweird.f32 %v616
        %v622 = vsel %vm621, %v616, %v620
        %v623 = vmul.f32 %v615, %v622
        %v624 = vsub.f32 %v609, %v623
        %v625 = vsub.f32 %v610, %v623
        %v626 = vmul.f32 %v624, %v624
        %v627 = vmul.f32 %v625, %v625
        %v628 = vadd.f32 %v626, %v627
        %629 = vadd.xlane.f32.xlu0 %v628
        %v630 = vpop.xlane.xlu0 %629
        %v631 = vmul.f32 %v630, %v622
        %v632 = vadd.f32 %v631, 1e-05
        %v633 = vrsqrt.pop %v632
        %v634 = vmul.f32 %v633, %v632
        %v635 = vmul.f32 %v634, %v633
        %v636 = vmul.f32 0.5, %v635
        %v637 = vsub.f32 1.5, %v636
        %v638 = vmul.f32 %v633, %v637
        %vm639 = vweird.f32 %v632
        %vm640 = vweird.f32 %v633
        %vm641 = vmor %vm639, %vm640
        %v642 = vsel %vm641, %v633, %v638
        %v643 = vmul.f32 %v624, %v642
        %v644 = vmul.f32 %v625, %v642
        %v646 = vperm.slane %v611, 0
        %v647 = vperm.slane %v611, 1
        %v650 = vmul.f32 %v643, %v646
        %v651 = vmul.f32 %v644, %v647
        %v653 = vperm.slane %v612, 0
        %v654 = vperm.slane %v612, 1
        %v657 = vadd.f32 %v650, %v653
        %v658 = vadd.f32 %v651, %v654
        %v659 = vpack.c.bf16 %v657, %v657
        %v660 = vpack.c.bf16 %v658, %v658
        %v661 = vld [vmem:[#allocation2] sm:$0xff]
        %v662 = vld [vmem:[#allocation2 + $0x8] sm:$0xff]
        %v663 = vld [vmem:[#allocation2 + $0x10] sm:$0xff]
        %v664 = vld [vmem:[#allocation2 + $0x18] sm:$0xff]
        %v665 = vld [vmem:[#allocation2 + $0x20] sm:$0xff]
        %v666 = vld [vmem:[#allocation2 + $0x28] sm:$0xff]
        %v667 = vld [vmem:[#allocation2 + $0x30] sm:$0xff]
        %v668 = vld [vmem:[#allocation2 + $0x38] sm:$0xff]
        %v669 = vld [vmem:[#allocation2 + $0x40] sm:$0xff]
        %v670 = vld [vmem:[#allocation2 + $0x48] sm:$0xff]
        %v671 = vld [vmem:[#allocation2 + $0x50] sm:$0xff]
        %v672 = vld [vmem:[#allocation2 + $0x58] sm:$0xff]
        %v673 = vld [vmem:[#allocation2 + $0x60] sm:$0xff]
        %v674 = vld [vmem:[#allocation2 + $0x68] sm:$0xff]
        %v675 = vld [vmem:[#allocation2 + $0x70] sm:$0xff]
        %v676 = vld [vmem:[#allocation2 + $0x78] sm:$0xff]
        %v677 = vld [vmem:[#allocation2 + $0x80] sm:$0xff]
        %v678 = vld [vmem:[#allocation2 + $0x88] sm:$0xff]
        %v679 = vld [vmem:[#allocation2 + $0x90] sm:$0xff]
        %v680 = vld [vmem:[#allocation2 + $0x98] sm:$0xff]
        %v681 = vld [vmem:[#allocation2 + $0xa0] sm:$0xff]
        %v682 = vld [vmem:[#allocation2 + $0xa8] sm:$0xff]
        %v683 = vld [vmem:[#allocation2 + $0xb0] sm:$0xff]
        %v684 = vld [vmem:[#allocation2 + $0xb8] sm:$0xff]
        %v685 = vld [vmem:[#allocation2 + $0xc0] sm:$0xff]
        %v686 = vld [vmem:[#allocation2 + $0xc8] sm:$0xff]
        %v687 = vld [vmem:[#allocation2 + $0xd0] sm:$0xff]
        %v688 = vld [vmem:[#allocation2 + $0xd8] sm:$0xff]
        %v689 = vld [vmem:[#allocation2 + $0xe0] sm:$0xff]
        %v690 = vld [vmem:[#allocation2 + $0xe8] sm:$0xff]
        %v691 = vld [vmem:[#allocation2 + $0xf0] sm:$0xff]
        %v692 = vld [vmem:[#allocation2 + $0xf8] sm:$0xff]
        %v693 = vld [vmem:[#allocation2 + $0x100] sm:$0xff]
        %v694 = vld [vmem:[#allocation2 + $0x108] sm:$0xff]
        %v695 = vld [vmem:[#allocation2 + $0x110] sm:$0xff]
        %v696 = vld [vmem:[#allocation2 + $0x118] sm:$0xff]
        %v697 = vld [vmem:[#allocation2 + $0x120] sm:$0xff]
        %v698 = vld [vmem:[#allocation2 + $0x128] sm:$0xff]
        %v699 = vld [vmem:[#allocation2 + $0x130] sm:$0xff]
        %v700 = vld [vmem:[#allocation2 + $0x138] sm:$0xff]
        %v701 = vld [vmem:[#allocation2 + $0x140] sm:$0xff]
        %v702 = vld [vmem:[#allocation2 + $0x148] sm:$0xff]
        %v703 = vld [vmem:[#allocation2 + $0x150] sm:$0xff]
        %v704 = vld [vmem:[#allocation2 + $0x158] sm:$0xff]
        %v705 = vld [vmem:[#allocation2 + $0x160] sm:$0xff]
        %v706 = vld [vmem:[#allocation2 + $0x168] sm:$0xff]
        %v707 = vld [vmem:[#allocation2 + $0x170] sm:$0xff]
        %v708 = vld [vmem:[#allocation2 + $0x178] sm:$0xff]
        %v709 = vld [vmem:[#allocation2 + $0x180] sm:$0xff]
        %v710 = vld [vmem:[#allocation2 + $0x188] sm:$0xff]
        %v711 = vld [vmem:[#allocation2 + $0x190] sm:$0xff]
        %v712 = vld [vmem:[#allocation2 + $0x198] sm:$0xff]
        %v713 = vld [vmem:[#allocation2 + $0x1a0] sm:$0xff]
        %v714 = vld [vmem:[#allocation2 + $0x1a8] sm:$0xff]
        %v715 = vld [vmem:[#allocation2 + $0x1b0] sm:$0xff]
        %v716 = vld [vmem:[#allocation2 + $0x1b8] sm:$0xff]
        %v717 = vld [vmem:[#allocation2 + $0x1c0] sm:$0xff]
        %v718 = vld [vmem:[#allocation2 + $0x1c8] sm:$0xff]
        %v719 = vld [vmem:[#allocation2 + $0x1d0] sm:$0xff]
        %v720 = vld [vmem:[#allocation2 + $0x1d8] sm:$0xff]
        %v721 = vld [vmem:[#allocation2 + $0x1e0] sm:$0xff]
        %v722 = vld [vmem:[#allocation2 + $0x1e8] sm:$0xff]
        %v723 = vld [vmem:[#allocation2 + $0x1f0] sm:$0xff]
        %v724 = vld [vmem:[#allocation2 + $0x1f8] sm:$0xff]
        %v725 = vld [vmem:[#allocation2 + $0x200] sm:$0xff]
        %v726 = vld [vmem:[#allocation2 + $0x208] sm:$0xff]
        %v727 = vld [vmem:[#allocation2 + $0x210] sm:$0xff]
        %v728 = vld [vmem:[#allocation2 + $0x218] sm:$0xff]
        %v729 = vld [vmem:[#allocation2 + $0x220] sm:$0xff]
        %v730 = vld [vmem:[#allocation2 + $0x228] sm:$0xff]
        %v731 = vld [vmem:[#allocation2 + $0x230] sm:$0xff]
        %v732 = vld [vmem:[#allocation2 + $0x238] sm:$0xff]
        %v733 = vld [vmem:[#allocation2 + $0x240] sm:$0xff]
        %v734 = vld [vmem:[#allocation2 + $0x248] sm:$0xff]
        %v735 = vld [vmem:[#allocation2 + $0x250] sm:$0xff]
        %v736 = vld [vmem:[#allocation2 + $0x258] sm:$0xff]
        %v737 = vld [vmem:[#allocation2 + $0x260] sm:$0xff]
        %v738 = vld [vmem:[#allocation2 + $0x268] sm:$0xff]
        %v739 = vld [vmem:[#allocation2 + $0x270] sm:$0xff]
        %v740 = vld [vmem:[#allocation2 + $0x278] sm:$0xff]
        %v741 = vld [vmem:[#allocation2 + $0x280] sm:$0xff]
        %v742 = vld [vmem:[#allocation2 + $0x288] sm:$0xff]
        %v743 = vld [vmem:[#allocation2 + $0x290] sm:$0xff]
        %v744 = vld [vmem:[#allocation2 + $0x298] sm:$0xff]
        %v745 = vld [vmem:[#allocation2 + $0x2a0] sm:$0xff]
        %v746 = vld [vmem:[#allocation2 + $0x2a8] sm:$0xff]
        %v747 = vld [vmem:[#allocation2 + $0x2b0] sm:$0xff]
        %v748 = vld [vmem:[#allocation2 + $0x2b8] sm:$0xff]
        %v749 = vld [vmem:[#allocation2 + $0x2c0] sm:$0xff]
        %v750 = vld [vmem:[#allocation2 + $0x2c8] sm:$0xff]
        %v751 = vld [vmem:[#allocation2 + $0x2d0] sm:$0xff]
        %v752 = vld [vmem:[#allocation2 + $0x2d8] sm:$0xff]
        %v753 = vld [vmem:[#allocation2 + $0x2e0] sm:$0xff]
        %v754 = vld [vmem:[#allocation2 + $0x2e8] sm:$0xff]
        %v755 = vld [vmem:[#allocation2 + $0x2f0] sm:$0xff]
        %v756 = vld [vmem:[#allocation2 + $0x2f8] sm:$0xff]
        %v853 = vunpack.c.l.b16 %v661
        %v854 = vunpack.c.h.b16 %v661
        %v855 = vunpack.c.l.b16 %v662
        %v856 = vunpack.c.h.b16 %v662
        %v857 = vunpack.c.l.b16 %v663
        %v858 = vunpack.c.h.b16 %v663
        %v859 = vunpack.c.l.b16 %v664
        %v860 = vunpack.c.h.b16 %v664
        %v861 = vunpack.c.l.b16 %v665
        %v862 = vunpack.c.h.b16 %v665
        %v863 = vunpack.c.l.b16 %v666
        %v864 = vunpack.c.h.b16 %v666
        %v865 = vunpack.c.l.b16 %v667
        %v866 = vunpack.c.h.b16 %v667
        %v867 = vunpack.c.l.b16 %v668
        %v868 = vunpack.c.h.b16 %v668
        %v869 = vunpack.c.l.b16 %v669
        %v870 = vunpack.c.h.b16 %v669
        %v871 = vunpack.c.l.b16 %v670
        %v872 = vunpack.c.h.b16 %v670
        %v873 = vunpack.c.l.b16 %v671
        %v874 = vunpack.c.h.b16 %v671
        %v875 = vunpack.c.l.b16 %v672
        %v876 = vunpack.c.h.b16 %v672
        %v877 = vunpack.c.l.b16 %v673
        %v878 = vunpack.c.h.b16 %v673
        %v879 = vunpack.c.l.b16 %v674
        %v880 = vunpack.c.h.b16 %v674
        %v881 = vunpack.c.l.b16 %v675
        %v882 = vunpack.c.h.b16 %v675
        %v883 = vunpack.c.l.b16 %v676
        %v884 = vunpack.c.h.b16 %v676
        %v885 = vunpack.c.l.b16 %v677
        %v886 = vunpack.c.h.b16 %v677
        %v887 = vunpack.c.l.b16 %v678
        %v888 = vunpack.c.h.b16 %v678
        %v889 = vunpack.c.l.b16 %v679
        %v890 = vunpack.c.h.b16 %v679
        %v891 = vunpack.c.l.b16 %v680
        %v892 = vunpack.c.h.b16 %v680
        %v893 = vunpack.c.l.b16 %v681
        %v894 = vunpack.c.h.b16 %v681
        %v895 = vunpack.c.l.b16 %v682
        %v896 = vunpack.c.h.b16 %v682
        %v897 = vunpack.c.l.b16 %v683
        %v898 = vunpack.c.h.b16 %v683
        %v899 = vunpack.c.l.b16 %v684
        %v900 = vunpack.c.h.b16 %v684
        %v901 = vunpack.c.l.b16 %v685
        %v902 = vunpack.c.h.b16 %v685
        %v903 = vunpack.c.l.b16 %v686
        %v904 = vunpack.c.h.b16 %v686
        %v905 = vunpack.c.l.b16 %v687
        %v906 = vunpack.c.h.b16 %v687
        %v907 = vunpack.c.l.b16 %v688
        %v908 = vunpack.c.h.b16 %v688
        %v909 = vunpack.c.l.b16 %v689
        %v910 = vunpack.c.h.b16 %v689
        %v911 = vunpack.c.l.b16 %v690
        %v912 = vunpack.c.h.b16 %v690
        %v913 = vunpack.c.l.b16 %v691
        %v914 = vunpack.c.h.b16 %v691
        %v915 = vunpack.c.l.b16 %v692
        %v916 = vunpack.c.h.b16 %v692
        %v917 = vunpack.c.l.b16 %v693
        %v918 = vunpack.c.h.b16 %v693
        %v919 = vunpack.c.l.b16 %v694
        %v920 = vunpack.c.h.b16 %v694
        %v921 = vunpack.c.l.b16 %v695
        %v922 = vunpack.c.h.b16 %v695
        %v923 = vunpack.c.l.b16 %v696
        %v924 = vunpack.c.h.b16 %v696
        %v925 = vunpack.c.l.b16 %v697
        %v926 = vunpack.c.h.b16 %v697
        %v927 = vunpack.c.l.b16 %v698
        %v928 = vunpack.c.h.b16 %v698
        %v929 = vunpack.c.l.b16 %v699
        %v930 = vunpack.c.h.b16 %v699
        %v931 = vunpack.c.l.b16 %v700
        %v932 = vunpack.c.h.b16 %v700
        %v933 = vunpack.c.l.b16 %v701
        %v934 = vunpack.c.h.b16 %v701
        %v935 = vunpack.c.l.b16 %v702
        %v936 = vunpack.c.h.b16 %v702
        %v937 = vunpack.c.l.b16 %v703
        %v938 = vunpack.c.h.b16 %v703
        %v939 = vunpack.c.l.b16 %v704
        %v940 = vunpack.c.h.b16 %v704
        %v941 = vunpack.c.l.b16 %v705
        %v942 = vunpack.c.h.b16 %v705
        %v943 = vunpack.c.l.b16 %v706
        %v944 = vunpack.c.h.b16 %v706
        %v945 = vunpack.c.l.b16 %v707
        %v946 = vunpack.c.h.b16 %v707
        %v947 = vunpack.c.l.b16 %v708
        %v948 = vunpack.c.h.b16 %v708
        %v949 = vunpack.c.l.b16 %v709
        %v950 = vunpack.c.h.b16 %v709
        %v951 = vunpack.c.l.b16 %v710
        %v952 = vunpack.c.h.b16 %v710
        %v953 = vunpack.c.l.b16 %v711
        %v954 = vunpack.c.h.b16 %v711
        %v955 = vunpack.c.l.b16 %v712
        %v956 = vunpack.c.h.b16 %v712
        %v957 = vunpack.c.l.b16 %v713
        %v958 = vunpack.c.h.b16 %v713
        %v959 = vunpack.c.l.b16 %v714
        %v960 = vunpack.c.h.b16 %v714
        %v961 = vunpack.c.l.b16 %v715
        %v962 = vunpack.c.h.b16 %v715
        %v963 = vunpack.c.l.b16 %v716
        %v964 = vunpack.c.h.b16 %v716
        %v965 = vunpack.c.l.b16 %v717
        %v966 = vunpack.c.h.b16 %v717
        %v967 = vunpack.c.l.b16 %v718
        %v968 = vunpack.c.h.b16 %v718
        %v969 = vunpack.c.l.b16 %v719
        %v970 = vunpack.c.h.b16 %v719
        %v971 = vunpack.c.l.b16 %v720
        %v972 = vunpack.c.h.b16 %v720
        %v973 = vunpack.c.l.b16 %v721
        %v974 = vunpack.c.h.b16 %v721
        %v975 = vunpack.c.l.b16 %v722
        %v976 = vunpack.c.h.b16 %v722
        %v977 = vunpack.c.l.b16 %v723
        %v978 = vunpack.c.h.b16 %v723
        %v979 = vunpack.c.l.b16 %v724
        %v980 = vunpack.c.h.b16 %v724
        %v981 = vunpack.c.l.b16 %v725
        %v982 = vunpack.c.h.b16 %v725
        %v983 = vunpack.c.l.b16 %v726
        %v984 = vunpack.c.h.b16 %v726
        %v985 = vunpack.c.l.b16 %v727
        %v986 = vunpack.c.h.b16 %v727
        %v987 = vunpack.c.l.b16 %v728
        %v988 = vunpack.c.h.b16 %v728
        %v989 = vunpack.c.l.b16 %v729
        %v990 = vunpack.c.h.b16 %v729
        %v991 = vunpack.c.l.b16 %v730
        %v992 = vunpack.c.h.b16 %v730
        %v993 = vunpack.c.l.b16 %v731
        %v994 = vunpack.c.h.b16 %v731
        %v995 = vunpack.c.l.b16 %v732
        %v996 = vunpack.c.h.b16 %v732
        %v997 = vunpack.c.l.b16 %v733
        %v998 = vunpack.c.h.b16 %v733
        %v999 = vunpack.c.l.b16 %v734
        %v1000 = vunpack.c.h.b16 %v734
        %v1001 = vunpack.c.l.b16 %v735
        %v1002 = vunpack.c.h.b16 %v735
        %v1003 = vunpack.c.l.b16 %v736
        %v1004 = vunpack.c.h.b16 %v736
        %v1005 = vunpack.c.l.b16 %v737
        %v1006 = vunpack.c.h.b16 %v737
        %v1007 = vunpack.c.l.b16 %v738
        %v1008 = vunpack.c.h.b16 %v738
        %v1009 = vunpack.c.l.b16 %v739
        %v1010 = vunpack.c.h.b16 %v739
        %v1011 = vunpack.c.l.b16 %v740
        %v1012 = vunpack.c.h.b16 %v740
        %v1013 = vunpack.c.l.b16 %v741
        %v1014 = vunpack.c.h.b16 %v741
        %v1015 = vunpack.c.l.b16 %v742
        %v1016 = vunpack.c.h.b16 %v742
        %v1017 = vunpack.c.l.b16 %v743
        %v1018 = vunpack.c.h.b16 %v743
        %v1019 = vunpack.c.l.b16 %v744
        %v1020 = vunpack.c.h.b16 %v744
        %v1021 = vunpack.c.l.b16 %v745
        %v1022 = vunpack.c.h.b16 %v745
        %v1023 = vunpack.c.l.b16 %v746
        %v1024 = vunpack.c.h.b16 %v746
        %v1025 = vunpack.c.l.b16 %v747
        %v1026 = vunpack.c.h.b16 %v747
        %v1027 = vunpack.c.l.b16 %v748
        %v1028 = vunpack.c.h.b16 %v748
        %v1029 = vunpack.c.l.b16 %v749
        %v1030 = vunpack.c.h.b16 %v749
        %v1031 = vunpack.c.l.b16 %v750
        %v1032 = vunpack.c.h.b16 %v750
        %v1033 = vunpack.c.l.b16 %v751
        %v1034 = vunpack.c.h.b16 %v751
        %v1035 = vunpack.c.l.b16 %v752
        %v1036 = vunpack.c.h.b16 %v752
        %v1037 = vunpack.c.l.b16 %v753
        %v1038 = vunpack.c.h.b16 %v753
        %v1039 = vunpack.c.l.b16 %v754
        %v1040 = vunpack.c.h.b16 %v754
        %v1041 = vunpack.c.l.b16 %v755
        %v1042 = vunpack.c.h.b16 %v755
        %v1043 = vunpack.c.l.b16 %v756
        %v1044 = vunpack.c.h.b16 %v756
        %v1045 = vpack.c.b16 %v859, %v853
        %v1046 = vpack.c.b16 %v860, %v854
        %v1047 = vpack.c.b16 %v861, %v855
        %v1048 = vpack.c.b16 %v862, %v856
        %v1049 = vpack.c.b16 %v863, %v857
        %v1050 = vpack.c.b16 %v864, %v858
        %v1051 = vpack.c.b16 %v871, %v865
        %v1052 = vpack.c.b16 %v872, %v866
        %v1053 = vpack.c.b16 %v873, %v867
        %v1054 = vpack.c.b16 %v874, %v868
        %v1055 = vpack.c.b16 %v875, %v869
        %v1056 = vpack.c.b16 %v876, %v870
        %v1057 = vpack.c.b16 %v883, %v877
        %v1058 = vpack.c.b16 %v884, %v878
        %v1059 = vpack.c.b16 %v885, %v879
        %v1060 = vpack.c.b16 %v886, %v880
        %v1061 = vpack.c.b16 %v887, %v881
        %v1062 = vpack.c.b16 %v888, %v882
        %v1063 = vpack.c.b16 %v895, %v889
        %v1064 = vpack.c.b16 %v896, %v890
        %v1065 = vpack.c.b16 %v897, %v891
        %v1066 = vpack.c.b16 %v898, %v892
        %v1067 = vpack.c.b16 %v899, %v893
        %v1068 = vpack.c.b16 %v900, %v894
        %v1069 = vpack.c.b16 %v907, %v901
        %v1070 = vpack.c.b16 %v908, %v902
        %v1071 = vpack.c.b16 %v909, %v903
        %v1072 = vpack.c.b16 %v910, %v904
        %v1073 = vpack.c.b16 %v911, %v905
        %v1074 = vpack.c.b16 %v912, %v906
        %v1075 = vpack.c.b16 %v919, %v913
        %v1076 = vpack.c.b16 %v920, %v914
        %v1077 = vpack.c.b16 %v921, %v915
        %v1078 = vpack.c.b16 %v922, %v916
        %v1079 = vpack.c.b16 %v923, %v917
        %v1080 = vpack.c.b16 %v924, %v918
        %v1081 = vpack.c.b16 %v931, %v925
        %v1082 = vpack.c.b16 %v932, %v926
        %v1083 = vpack.c.b16 %v933, %v927
        %v1084 = vpack.c.b16 %v934, %v928
        %v1085 = vpack.c.b16 %v935, %v929
        %v1086 = vpack.c.b16 %v936, %v930
        %v1087 = vpack.c.b16 %v943, %v937
        %v1088 = vpack.c.b16 %v944, %v938
        %v1089 = vpack.c.b16 %v945, %v939
        %v1090 = vpack.c.b16 %v946, %v940
        %v1091 = vpack.c.b16 %v947, %v941
        %v1092 = vpack.c.b16 %v948, %v942
        %v1093 = vpack.c.b16 %v955, %v949
        %v1094 = vpack.c.b16 %v956, %v950
        %v1095 = vpack.c.b16 %v957, %v951
        %v1096 = vpack.c.b16 %v958, %v952
        %v1097 = vpack.c.b16 %v959, %v953
        %v1098 = vpack.c.b16 %v960, %v954
        %v1099 = vpack.c.b16 %v967, %v961
        %v1100 = vpack.c.b16 %v968, %v962
        %v1101 = vpack.c.b16 %v969, %v963
        %v1102 = vpack.c.b16 %v970, %v964
        %v1103 = vpack.c.b16 %v971, %v965
        %v1104 = vpack.c.b16 %v972, %v966
        %v1105 = vpack.c.b16 %v979, %v973
        %v1106 = vpack.c.b16 %v980, %v974
        %v1107 = vpack.c.b16 %v981, %v975
        %v1108 = vpack.c.b16 %v982, %v976
        %v1109 = vpack.c.b16 %v983, %v977
        %v1110 = vpack.c.b16 %v984, %v978
        %v1111 = vpack.c.b16 %v991, %v985
        %v1112 = vpack.c.b16 %v992, %v986
        %v1113 = vpack.c.b16 %v993, %v987
        %v1114 = vpack.c.b16 %v994, %v988
        %v1115 = vpack.c.b16 %v995, %v989
        %v1116 = vpack.c.b16 %v996, %v990
        %v1117 = vpack.c.b16 %v1003, %v997
        %v1118 = vpack.c.b16 %v1004, %v998
        %v1119 = vpack.c.b16 %v1005, %v999
        %v1120 = vpack.c.b16 %v1006, %v1000
        %v1121 = vpack.c.b16 %v1007, %v1001
        %v1122 = vpack.c.b16 %v1008, %v1002
        %v1123 = vpack.c.b16 %v1015, %v1009
        %v1124 = vpack.c.b16 %v1016, %v1010
        %v1125 = vpack.c.b16 %v1017, %v1011
        %v1126 = vpack.c.b16 %v1018, %v1012
        %v1127 = vpack.c.b16 %v1019, %v1013
        %v1128 = vpack.c.b16 %v1020, %v1014
        %v1129 = vpack.c.b16 %v1027, %v1021
        %v1130 = vpack.c.b16 %v1028, %v1022
        %v1131 = vpack.c.b16 %v1029, %v1023
        %v1132 = vpack.c.b16 %v1030, %v1024
        %v1133 = vpack.c.b16 %v1031, %v1025
        %v1134 = vpack.c.b16 %v1032, %v1026
        %v1135 = vpack.c.b16 %v1039, %v1033
        %v1136 = vpack.c.b16 %v1040, %v1034
        %v1137 = vpack.c.b16 %v1041, %v1035
        %v1138 = vpack.c.b16 %v1042, %v1036
        %v1139 = vpack.c.b16 %v1043, %v1037
        %v1140 = vpack.c.b16 %v1044, %v1038
        %1237 = vmatpush.bf16.msra.mxu0 %v1087
        %1238 = vmatpush.bf16.msra.mxu0 %v1081
        %1239 = vmatpush.bf16.msra.mxu0 %v1075
        %1240 = vmatpush.bf16.msra.mxu0 %v1069
        %1241 = vmatpush.bf16.msra.mxu0 %v1063
        %1242 = vmatpush.bf16.msra.mxu0 %v1057
        %1243 = vmatpush.bf16.msra.mxu0 %v1051
        %1244 = vmatpush.bf16.msra.mxu0 %v1045
        %1245 = vmatmul.bf16.gmra.mxu0 %v659
        %v1246 = vpop.f32.mrf.mxu0
        %v1247 = vadd.f32 0.0, %v1246
        %v1248 = vpop.f32.mrf.mxu0
        %1249 = vdwg.mxu0
        %1250 = vmatpush.bf16.msra.mxu0 %v1135
        %1251 = vmatpush.bf16.msra.mxu0 %v1129
        %1252 = vmatpush.bf16.msra.mxu0 %v1123
        %1253 = vmatpush.bf16.msra.mxu0 %v1117
        %1254 = vmatpush.bf16.msra.mxu0 %v1111
        %1255 = vmatpush.bf16.msra.mxu0 %v1105
        %1256 = vmatpush.bf16.msra.mxu0 %v1099
        %1257 = vmatpush.bf16.msra.mxu0 %v1093
        %1258 = vmatmul.bf16.gmra.mxu0 %v660
        %v1259 = vpop.f32.mrf.mxu0
        %v1260 = vadd.f32 %v1247, %v1259
        %v1261 = vpop.f32.mrf.mxu0
        %1262 = vdwg.mxu0
        %1263 = vmatpush.bf16.msra.mxu0 %v1088
        %1264 = vmatpush.bf16.msra.mxu0 %v1082
        %1265 = vmatpush.bf16.msra.mxu0 %v1076
        %1266 = vmatpush.bf16.msra.mxu0 %v1070
        %1267 = vmatpush.bf16.msra.mxu0 %v1064
        %1268 = vmatpush.bf16.msra.mxu0 %v1058
        %1269 = vmatpush.bf16.msra.mxu0 %v1052
        %1270 = vmatpush.bf16.msra.mxu0 %v1046
        %1271 = vmatmul.bf16.gmra.mxu0 %v659
        %v1272 = vpop.f32.mrf.mxu0
        %v1273 = vadd.f32 0.0, %v1272
        %v1274 = vpop.f32.mrf.mxu0
        %1275 = vdwg.mxu0
        %1276 = vmatpush.bf16.msra.mxu0 %v1136
        %1277 = vmatpush.bf16.msra.mxu0 %v1130
        %1278 = vmatpush.bf16.msra.mxu0 %v1124
        %1279 = vmatpush.bf16.msra.mxu0 %v1118
        %1280 = vmatpush.bf16.msra.mxu0 %v1112
        %1281 = vmatpush.bf16.msra.mxu0 %v1106
        %1282 = vmatpush.bf16.msra.mxu0 %v1100
        %1283 = vmatpush.bf16.msra.mxu0 %v1094
        %1284 = vmatmul.bf16.gmra.mxu0 %v660
        %v1285 = vpop.f32.mrf.mxu0
        %v1286 = vadd.f32 %v1273, %v1285
        %v1287 = vpop.f32.mrf.mxu0
        %1288 = vdwg.mxu0
        %1289 = vmatpush.bf16.msra.mxu0 %v1089
        %1290 = vmatpush.bf16.msra.mxu0 %v1083
        %1291 = vmatpush.bf16.msra.mxu0 %v1077
        %1292 = vmatpush.bf16.msra.mxu0 %v1071
        %1293 = vmatpush.bf16.msra.mxu0 %v1065
        %1294 = vmatpush.bf16.msra.mxu0 %v1059
        %1295 = vmatpush.bf16.msra.mxu0 %v1053
        %1296 = vmatpush.bf16.msra.mxu0 %v1047
        %1297 = vmatmul.bf16.gmra.mxu0 %v659
        %v1298 = vpop.f32.mrf.mxu0
        %v1299 = vadd.f32 0.0, %v1298
        %v1300 = vpop.f32.mrf.mxu0
        %1301 = vdwg.mxu0
        %1302 = vmatpush.bf16.msra.mxu0 %v1137
        %1303 = vmatpush.bf16.msra.mxu0 %v1131
        %1304 = vmatpush.bf16.msra.mxu0 %v1125
        %1305 = vmatpush.bf16.msra.mxu0 %v1119
        %1306 = vmatpush.bf16.msra.mxu0 %v1113
        %1307 = vmatpush.bf16.msra.mxu0 %v1107
        %1308 = vmatpush.bf16.msra.mxu0 %v1101
        %1309 = vmatpush.bf16.msra.mxu0 %v1095
        %1310 = vmatmul.bf16.gmra.mxu0 %v660
        %v1311 = vpop.f32.mrf.mxu0
        %v1312 = vadd.f32 %v1299, %v1311
        %v1313 = vpop.f32.mrf.mxu0
        %1314 = vdwg.mxu0
        %1315 = vmatpush.bf16.msra.mxu0 %v1090
        %1316 = vmatpush.bf16.msra.mxu0 %v1084
        %1317 = vmatpush.bf16.msra.mxu0 %v1078
        %1318 = vmatpush.bf16.msra.mxu0 %v1072
        %1319 = vmatpush.bf16.msra.mxu0 %v1066
        %1320 = vmatpush.bf16.msra.mxu0 %v1060
        %1321 = vmatpush.bf16.msra.mxu0 %v1054
        %1322 = vmatpush.bf16.msra.mxu0 %v1048
        %1323 = vmatmul.bf16.gmra.mxu0 %v659
        %v1324 = vpop.f32.mrf.mxu0
        %v1325 = vadd.f32 0.0, %v1324
        %v1326 = vpop.f32.mrf.mxu0
        %1327 = vdwg.mxu0
        %1328 = vmatpush.bf16.msra.mxu0 %v1138
        %1329 = vmatpush.bf16.msra.mxu0 %v1132
        %1330 = vmatpush.bf16.msra.mxu0 %v1126
        %1331 = vmatpush.bf16.msra.mxu0 %v1120
        %1332 = vmatpush.bf16.msra.mxu0 %v1114
        %1333 = vmatpush.bf16.msra.mxu0 %v1108
        %1334 = vmatpush.bf16.msra.mxu0 %v1102
        %1335 = vmatpush.bf16.msra.mxu0 %v1096
        %1336 = vmatmul.bf16.gmra.mxu0 %v660
        %v1337 = vpop.f32.mrf.mxu0
        %v1338 = vadd.f32 %v1325, %v1337
        %v1339 = vpop.f32.mrf.mxu0
        %1340 = vdwg.mxu0
        %1341 = vmatpush.bf16.msra.mxu0 %v1091
        %1342 = vmatpush.bf16.msra.mxu0 %v1085
        %1343 = vmatpush.bf16.msra.mxu0 %v1079
        %1344 = vmatpush.bf16.msra.mxu0 %v1073
        %1345 = vmatpush.bf16.msra.mxu0 %v1067
        %1346 = vmatpush.bf16.msra.mxu0 %v1061
        %1347 = vmatpush.bf16.msra.mxu0 %v1055
        %1348 = vmatpush.bf16.msra.mxu0 %v1049
        %1349 = vmatmul.bf16.gmra.mxu0 %v659
        %v1350 = vpop.f32.mrf.mxu0
        %v1351 = vadd.f32 0.0, %v1350
        %v1352 = vpop.f32.mrf.mxu0
        %1353 = vdwg.mxu0
        %1354 = vmatpush.bf16.msra.mxu0 %v1139
        %1355 = vmatpush.bf16.msra.mxu0 %v1133
        %1356 = vmatpush.bf16.msra.mxu0 %v1127
        %1357 = vmatpush.bf16.msra.mxu0 %v1121
        %1358 = vmatpush.bf16.msra.mxu0 %v1115
        %1359 = vmatpush.bf16.msra.mxu0 %v1109
        %1360 = vmatpush.bf16.msra.mxu0 %v1103
        %1361 = vmatpush.bf16.msra.mxu0 %v1097
        %1362 = vmatmul.bf16.gmra.mxu0 %v660
        %v1363 = vpop.f32.mrf.mxu0
        %v1364 = vadd.f32 %v1351, %v1363
        %v1365 = vpop.f32.mrf.mxu0
        %1366 = vdwg.mxu0
        %1367 = vmatpush.bf16.msra.mxu0 %v1092
        %1368 = vmatpush.bf16.msra.mxu0 %v1086
        %1369 = vmatpush.bf16.msra.mxu0 %v1080
        %1370 = vmatpush.bf16.msra.mxu0 %v1074
        %1371 = vmatpush.bf16.msra.mxu0 %v1068
        %1372 = vmatpush.bf16.msra.mxu0 %v1062
        %1373 = vmatpush.bf16.msra.mxu0 %v1056
        %1374 = vmatpush.bf16.msra.mxu0 %v1050
        %1375 = vmatmul.bf16.gmra.mxu0 %v659
        %v1376 = vpop.f32.mrf.mxu0
        %v1377 = vadd.f32 0.0, %v1376
        %v1378 = vpop.f32.mrf.mxu0
        %1379 = vdwg.mxu0
        %1380 = vmatpush.bf16.msra.mxu0 %v1140
        %1381 = vmatpush.bf16.msra.mxu0 %v1134
        %1382 = vmatpush.bf16.msra.mxu0 %v1128
        %1383 = vmatpush.bf16.msra.mxu0 %v1122
        %1384 = vmatpush.bf16.msra.mxu0 %v1116
        %1385 = vmatpush.bf16.msra.mxu0 %v1110
        %1386 = vmatpush.bf16.msra.mxu0 %v1104
        %1387 = vmatpush.bf16.msra.mxu0 %v1098
        %1388 = vmatmul.bf16.gmra.mxu0 %v660
        %v1389 = vpop.f32.mrf.mxu0
        %v1390 = vadd.f32 %v1377, %v1389
        %v1391 = vpop.f32.mrf.mxu0
        %1392 = vdwg.mxu0
        %v1393 = vlaneseq
        %v1394 = vshrl.u32 %v1393, 7
        %v1395 = vlaneseq
        %v1396 = vand.u32 %v1395, 127
        %vm1397 = vcmp.le.s32.totalorder %v1396, %v1394
        %v1398 = vld [vmem:[#allocation4] sm:$0xff]
        %v1399 = vld [vmem:[#allocation4 + $0x8] sm:$0xff]
        %v1400 = vld [vmem:[#allocation4 + $0x10] sm:$0xff]
        %v1401 = vld [vmem:[#allocation4 + $0x18] sm:$0xff]
        %v1402 = vld [vmem:[#allocation4 + $0x20] sm:$0xff]
        %v1403 = vld [vmem:[#allocation4 + $0x28] sm:$0xff]
        %v1404 = vld [vmem:[#allocation4 + $0x30] sm:$0xff]
        %v1405 = vld [vmem:[#allocation4 + $0x38] sm:$0xff]
        %v1406 = vld [vmem:[#allocation4 + $0x40] sm:$0xff]
        %v1407 = vld [vmem:[#allocation4 + $0x48] sm:$0xff]
        %v1408 = vld [vmem:[#allocation4 + $0x50] sm:$0xff]
        %v1409 = vld [vmem:[#allocation4 + $0x58] sm:$0xff]
        %v1410 = vld [vmem:[#allocation4 + $0x60] sm:$0xff]
        %v1411 = vld [vmem:[#allocation4 + $0x68] sm:$0xff]
        %v1412 = vld [vmem:[#allocation4 + $0x70] sm:$0xff]
        %v1413 = vld [vmem:[#allocation4 + $0x78] sm:$0xff]
        %v1414 = vld [vmem:[#allocation4 + $0x80] sm:$0xff]
        %v1415 = vld [vmem:[#allocation4 + $0x88] sm:$0xff]
        %v1416 = vld [vmem:[#allocation4 + $0x90] sm:$0xff]
        %v1417 = vld [vmem:[#allocation4 + $0x98] sm:$0xff]
        %v1418 = vld [vmem:[#allocation4 + $0xa0] sm:$0xff]
        %v1419 = vld [vmem:[#allocation4 + $0xa8] sm:$0xff]
        %v1420 = vld [vmem:[#allocation4 + $0xb0] sm:$0xff]
        %v1421 = vld [vmem:[#allocation4 + $0xb8] sm:$0xff]
        %v1422 = vld [vmem:[#allocation4 + $0xc0] sm:$0xff]
        %v1423 = vld [vmem:[#allocation4 + $0xc8] sm:$0xff]
        %v1424 = vld [vmem:[#allocation4 + $0xd0] sm:$0xff]
        %v1425 = vld [vmem:[#allocation4 + $0xd8] sm:$0xff]
        %v1426 = vld [vmem:[#allocation4 + $0xe0] sm:$0xff]
        %v1427 = vld [vmem:[#allocation4 + $0xe8] sm:$0xff]
        %v1428 = vld [vmem:[#allocation4 + $0xf0] sm:$0xff]
        %v1429 = vld [vmem:[#allocation4 + $0xf8] sm:$0xff]
        %vm1430 = vcmask 523264
        %v1432 = vsel %vm1430, %v1260, 0
        %v1435 = vsel %vm1430, %v1312, 0
        %1437 = vmatpush.xpose.msra.mxu0 0.0
        %1438 = vmatpush.xpose.msra.mxu0 0.0
        %1439 = vmatpush.xpose.msra.mxu0 0.0
        %1440 = vmatpush.xpose.msra.mxu0 0.0
        %1441 = vmatpush.xpose.msra.mxu0 0.0
        %1442 = vmatpush.xpose.msra.mxu0 0.0
        %1443 = vmatpush.xpose.msra.mxu0 0.0
        %1444 = vmatpush.xpose.msra.mxu0 0.0
        %1445 = vmatpush.xpose.msra.mxu0 0.0
        %1446 = vmatpush.xpose.msra.mxu0 0.0
        %1447 = vmatpush.xpose.msra.mxu0 0.0
        %1448 = vmatpush.xpose.msra.mxu0 0.0
        %1449 = vmatpush.xpose.msra.mxu0 0.0
        %1450 = vmatpush.xpose.msra.mxu0 0.0
        %1451 = vmatpush.xpose.msra.mxu0 0.0
        %1452 = vmatpush.xpose.msra.mxu0 %v1435
        %1453 = vmatmul.f32.gmra.mxu0 %v1432
        %v1454 = vpop.f32.mrf.mxu0
        %v1455 = vadd.f32 0.0, %v1454
        %1456 = vdwg.mxu0
        %v1457 = vmul.f32 %v1455, 0.125
        %v1458 = vsel %vm1397, %v1457, -inf
        %vm1459 = vcmask 64512
        %v1460 = vsel %vm1459, %v1458, -inf
        %1461 = vmax.xlane.f32.xlu0 %v1460
        %v1462 = vpop.xlane.xlu0 %1461
        %v1463 = vsub.f32 %v1458, %v1462
        %v1464 = vmul.f32 %v1463, 1.442695
        %v1465 = vpow.pop %v1464
        %v1466 = vsel %vm1459, %v1465, 0.0
        %1467 = vadd.xlane.f32.xlu0 %v1466
        %v1468 = vpop.xlane.xlu0 %1467
        %v1469 = vrcp.pop %v1468
        %v1470 = vmul.f32 %v1465, %v1469
        %v1472 = vsel %vm1459, %v1470, 0
        %1474 = vmatpush.msra.mxu0 0.0
        %1475 = vmatpush.msra.mxu0 0.0
        %1476 = vmatpush.msra.mxu0 0.0
        %1477 = vmatpush.msra.mxu0 0.0
        %1478 = vmatpush.msra.mxu0 0.0
        %1479 = vmatpush.msra.mxu0 0.0
        %1480 = vmatpush.msra.mxu0 0.0
        %1481 = vmatpush.msra.mxu0 0.0
        %1482 = vmatpush.msra.mxu0 0.0
        %1483 = vmatpush.msra.mxu0 0.0
        %1484 = vmatpush.msra.mxu0 0.0
        %1485 = vmatpush.msra.mxu0 0.0
        %1486 = vmatpush.msra.mxu0 0.0
        %1487 = vmatpush.msra.mxu0 0.0
        %1488 = vmatpush.msra.mxu0 0.0
        %1489 = vmatpush.msra.mxu0 %v1364
        %1490 = vmatmul.f32.gmra.mxu0 %v1472
        %v1491 = vpop.f32.mrf.mxu0
        %v1492 = vadd.f32 0.0, %v1491
        %1493 = vdwg.mxu0
        %v1494 = vpack.c.bf16 %v1492, %v1492
        %1495 = vrot.lane.b32.xlu0 %v1260, 64
        %v1496 = vpop.permute.xlu0 %1495
        %1497 = vrot.lane.b32.xlu0 %v1312, 64
        %v1498 = vpop.permute.xlu0 %1497
        %v1499 = vsel %vm1430, %v1496, 0
        %v1501 = vsel %vm1430, %v1498, 0
        %1503 = vmatpush.xpose.msra.mxu0 0.0
        %1504 = vmatpush.xpose.msra.mxu0 0.0
        %1505 = vmatpush.xpose.msra.mxu0 0.0
        %1506 = vmatpush.xpose.msra.mxu0 0.0
        %1507 = vmatpush.xpose.msra.mxu0 0.0
        %1508 = vmatpush.xpose.msra.mxu0 0.0
        %1509 = vmatpush.xpose.msra.mxu0 0.0
        %1510 = vmatpush.xpose.msra.mxu0 0.0
        %1511 = vmatpush.xpose.msra.mxu0 0.0
        %1512 = vmatpush.xpose.msra.mxu0 0.0
        %1513 = vmatpush.xpose.msra.mxu0 0.0
        %1514 = vmatpush.xpose.msra.mxu0 0.0
        %1515 = vmatpush.xpose.msra.mxu0 0.0
        %1516 = vmatpush.xpose.msra.mxu0 0.0
        %1517 = vmatpush.xpose.msra.mxu0 0.0
        %1518 = vmatpush.xpose.msra.mxu0 %v1501
        %1519 = vmatmul.f32.gmra.mxu0 %v1499
        %v1520 = vpop.f32.mrf.mxu0
        %v1521 = vadd.f32 0.0, %v1520
        %1522 = vdwg.mxu0
        %v1523 = vmul.f32 %v1521, 0.125
        %v1524 = vsel %vm1397, %v1523, -inf
        %v1525 = vsel %vm1459, %v1524, -inf
        %1526 = vmax.xlane.f32.xlu0 %v1525
        %v1527 = vpop.xlane.xlu0 %1526
        %v1528 = vsub.f32 %v1524, %v1527
        %v1529 = vmul.f32 %v1528, 1.442695
        %v1530 = vpow.pop %v1529
        %v1531 = vsel %vm1459, %v1530, 0.0
        %1532 = vadd.xlane.f32.xlu0 %v1531
        %v1533 = vpop.xlane.xlu0 %1532
        %v1534 = vrcp.pop %v1533
        %v1535 = vmul.f32 %v1530, %v1534
        %1537 = vrot.lane.b32.xlu0 %v1364, 64
        %v1538 = vpop.permute.xlu0 %1537
        %v1541 = vsel %vm1459, %v1535, 0
        %1543 = vmatpush.msra.mxu0 0.0
        %1544 = vmatpush.msra.mxu0 0.0
        %1545 = vmatpush.msra.mxu0 0.0
        %1546 = vmatpush.msra.mxu0 0.0
        %1547 = vmatpush.msra.mxu0 0.0
        %1548 = vmatpush.msra.mxu0 0.0
        %1549 = vmatpush.msra.mxu0 0.0
        %1550 = vmatpush.msra.mxu0 0.0
        %1551 = vmatpush.msra.mxu0 0.0
        %1552 = vmatpush.msra.mxu0 0.0
        %1553 = vmatpush.msra.mxu0 0.0
        %1554 = vmatpush.msra.mxu0 0.0
        %1555 = vmatpush.msra.mxu0 0.0
        %1556 = vmatpush.msra.mxu0 0.0
        %1557 = vmatpush.msra.mxu0 0.0
        %1558 = vmatpush.msra.mxu0 %v1538
        %1559 = vmatmul.f32.gmra.mxu0 %v1541
        %v1560 = vpop.f32.mrf.mxu0
        %v1561 = vadd.f32 0.0, %v1560
        %1562 = vdwg.mxu0
        %v1563 = vpack.c.bf16 %v1561, %v1561
        %v1572 = vunpack.c.l.b16 %v1406
        %v1573 = vunpack.c.h.b16 %v1406
        %v1574 = vunpack.c.l.b16 %v1407
        %v1575 = vunpack.c.h.b16 %v1407
        %v1576 = vunpack.c.l.b16 %v1408
        %v1577 = vunpack.c.h.b16 %v1408
        %v1578 = vunpack.c.l.b16 %v1409
        %v1579 = vunpack.c.h.b16 %v1409
        %v1580 = vunpack.c.l.b16 %v1410
        %v1581 = vunpack.c.h.b16 %v1410
        %v1582 = vunpack.c.l.b16 %v1411
        %v1583 = vunpack.c.h.b16 %v1411
        %v1584 = vunpack.c.l.b16 %v1412
        %v1585 = vunpack.c.h.b16 %v1412
        %v1586 = vunpack.c.l.b16 %v1413
        %v1587 = vunpack.c.h.b16 %v1413
        %v1588 = vpack.c.b16 %v1574, %v1572
        %v1589 = vpack.c.b16 %v1575, %v1573
        %v1590 = vpack.c.b16 %v1578, %v1576
        %v1591 = vpack.c.b16 %v1579, %v1577
        %v1592 = vpack.c.b16 %v1582, %v1580
        %v1593 = vpack.c.b16 %v1583, %v1581
        %v1594 = vpack.c.b16 %v1586, %v1584
        %v1595 = vpack.c.b16 %v1587, %v1585
        %v1605 = vsel %vm1430, %v1563, 0
        %1607 = vmatpush.bf16.msra.mxu0 0
        %1608 = vmatpush.bf16.msra.mxu0 0
        %1609 = vmatpush.bf16.msra.mxu0 0
        %1610 = vmatpush.bf16.msra.mxu0 0
        %1611 = vmatpush.bf16.msra.mxu0 %v1594
        %1612 = vmatpush.bf16.msra.mxu0 %v1592
        %1613 = vmatpush.bf16.msra.mxu0 %v1590
        %1614 = vmatpush.bf16.msra.mxu0 %v1588
        %1615 = vmatmul.bf16.gmra.mxu0 %v1605
        %v1616 = vpop.f32.mrf.mxu0
        %v1617 = vadd.f32 0.0, %v1616
        %v1618 = vpop.f32.mrf.mxu0
        %1619 = vdwg.mxu0
        %1620 = vmatpush.bf16.msra.mxu0 0
        %1621 = vmatpush.bf16.msra.mxu0 0
        %1622 = vmatpush.bf16.msra.mxu0 0
        %1623 = vmatpush.bf16.msra.mxu0 0
        %1624 = vmatpush.bf16.msra.mxu0 %v1595
        %1625 = vmatpush.bf16.msra.mxu0 %v1593
        %1626 = vmatpush.bf16.msra.mxu0 %v1591
        %1627 = vmatpush.bf16.msra.mxu0 %v1589
        %1628 = vmatmul.bf16.gmra.mxu0 %v1605
        %v1629 = vpop.f32.mrf.mxu0
        %v1630 = vadd.f32 0.0, %v1629
        %v1631 = vpop.f32.mrf.mxu0
        %1632 = vdwg.mxu0
        %v1641 = vunpack.c.l.b16 %v1398
        %v1642 = vunpack.c.h.b16 %v1398
        %v1643 = vunpack.c.l.b16 %v1399
        %v1644 = vunpack.c.h.b16 %v1399
        %v1645 = vunpack.c.l.b16 %v1400
        %v1646 = vunpack.c.h.b16 %v1400
        %v1647 = vunpack.c.l.b16 %v1401
        %v1648 = vunpack.c.h.b16 %v1401
        %v1649 = vunpack.c.l.b16 %v1402
        %v1650 = vunpack.c.h.b16 %v1402
        %v1651 = vunpack.c.l.b16 %v1403
        %v1652 = vunpack.c.h.b16 %v1403
        %v1653 = vunpack.c.l.b16 %v1404
        %v1654 = vunpack.c.h.b16 %v1404
        %v1655 = vunpack.c.l.b16 %v1405
        %v1656 = vunpack.c.h.b16 %v1405
        %v1657 = vpack.c.b16 %v1643, %v1641
        %v1658 = vpack.c.b16 %v1644, %v1642
        %v1659 = vpack.c.b16 %v1647, %v1645
        %v1660 = vpack.c.b16 %v1648, %v1646
        %v1661 = vpack.c.b16 %v1651, %v1649
        %v1662 = vpack.c.b16 %v1652, %v1650
        %v1663 = vpack.c.b16 %v1655, %v1653
        %v1664 = vpack.c.b16 %v1656, %v1654
        %v1674 = vsel %vm1430, %v1494, 0
        %1676 = vmatpush.bf16.msra.mxu0 0
        %1677 = vmatpush.bf16.msra.mxu0 0
        %1678 = vmatpush.bf16.msra.mxu0 0
        %1679 = vmatpush.bf16.msra.mxu0 0
        %1680 = vmatpush.bf16.msra.mxu0 %v1663
        %1681 = vmatpush.bf16.msra.mxu0 %v1661
        %1682 = vmatpush.bf16.msra.mxu0 %v1659
        %1683 = vmatpush.bf16.msra.mxu0 %v1657
        %1684 = vmatmul.bf16.gmra.mxu0 %v1674
        %v1685 = vpop.f32.mrf.mxu0
        %v1686 = vadd.f32 %v1617, %v1685
        %v1687 = vpop.f32.mrf.mxu0
        %1688 = vdwg.mxu0
        %1689 = vmatpush.bf16.msra.mxu0 0
        %1690 = vmatpush.bf16.msra.mxu0 0
        %1691 = vmatpush.bf16.msra.mxu0 0
        %1692 = vmatpush.bf16.msra.mxu0 0
        %1693 = vmatpush.bf16.msra.mxu0 %v1664
        %1694 = vmatpush.bf16.msra.mxu0 %v1662
        %1695 = vmatpush.bf16.msra.mxu0 %v1660
        %1696 = vmatpush.bf16.msra.mxu0 %v1658
        %1697 = vmatmul.bf16.gmra.mxu0 %v1674
        %v1698 = vpop.f32.mrf.mxu0
        %v1699 = vadd.f32 %v1630, %v1698
        %v1700 = vpop.f32.mrf.mxu0
        %1701 = vdwg.mxu0
        %v1703 = vsel %vm1430, %v1286, 0
        %v1706 = vsel %vm1430, %v1338, 0
        %1708 = vmatpush.xpose.msra.mxu0 0.0
        %1709 = vmatpush.xpose.msra.mxu0 0.0
        %1710 = vmatpush.xpose.msra.mxu0 0.0
        %1711 = vmatpush.xpose.msra.mxu0 0.0
        %1712 = vmatpush.xpose.msra.mxu0 0.0
        %1713 = vmatpush.xpose.msra.mxu0 0.0
        %1714 = vmatpush.xpose.msra.mxu0 0.0
        %1715 = vmatpush.xpose.msra.mxu0 0.0
        %1716 = vmatpush.xpose.msra.mxu0 0.0
        %1717 = vmatpush.xpose.msra.mxu0 0.0
        %1718 = vmatpush.xpose.msra.mxu0 0.0
        %1719 = vmatpush.xpose.msra.mxu0 0.0
        %1720 = vmatpush.xpose.msra.mxu0 0.0
        %1721 = vmatpush.xpose.msra.mxu0 0.0
        %1722 = vmatpush.xpose.msra.mxu0 0.0
        %1723 = vmatpush.xpose.msra.mxu0 %v1706
        %1724 = vmatmul.f32.gmra.mxu0 %v1703
        %v1725 = vpop.f32.mrf.mxu0
        %v1726 = vadd.f32 0.0, %v1725
        %1727 = vdwg.mxu0
        %v1728 = vmul.f32 %v1726, 0.125
        %v1729 = vsel %vm1397, %v1728, -inf
        %v1730 = vsel %vm1459, %v1729, -inf
        %1731 = vmax.xlane.f32.xlu0 %v1730
        %v1732 = vpop.xlane.xlu0 %1731
        %v1733 = vsub.f32 %v1729, %v1732
        %v1734 = vmul.f32 %v1733, 1.442695
        %v1735 = vpow.pop %v1734
        %v1736 = vsel %vm1459, %v1735, 0.0
        %1737 = vadd.xlane.f32.xlu0 %v1736
        %v1738 = vpop.xlane.xlu0 %1737
        %v1739 = vrcp.pop %v1738
        %v1740 = vmul.f32 %v1735, %v1739
        %v1742 = vsel %vm1459, %v1740, 0
        %1744 = vmatpush.msra.mxu0 0.0
        %1745 = vmatpush.msra.mxu0 0.0
        %1746 = vmatpush.msra.mxu0 0.0
        %1747 = vmatpush.msra.mxu0 0.0
        %1748 = vmatpush.msra.mxu0 0.0
        %1749 = vmatpush.msra.mxu0 0.0
        %1750 = vmatpush.msra.mxu0 0.0
        %1751 = vmatpush.msra.mxu0 0.0
        %1752 = vmatpush.msra.mxu0 0.0
        %1753 = vmatpush.msra.mxu0 0.0
        %1754 = vmatpush.msra.mxu0 0.0
        %1755 = vmatpush.msra.mxu0 0.0
        %1756 = vmatpush.msra.mxu0 0.0
        %1757 = vmatpush.msra.mxu0 0.0
        %1758 = vmatpush.msra.mxu0 0.0
        %1759 = vmatpush.msra.mxu0 %v1390
        %1760 = vmatmul.f32.gmra.mxu0 %v1742
        %v1761 = vpop.f32.mrf.mxu0
        %v1762 = vadd.f32 0.0, %v1761
        %1763 = vdwg.mxu0
        %v1764 = vpack.c.bf16 %v1762, %v1762
        %v1773 = vunpack.c.l.b16 %v1414
        %v1774 = vunpack.c.h.b16 %v1414
        %v1775 = vunpack.c.l.b16 %v1415
        %v1776 = vunpack.c.h.b16 %v1415
        %v1777 = vunpack.c.l.b16 %v1416
        %v1778 = vunpack.c.h.b16 %v1416
        %v1779 = vunpack.c.l.b16 %v1417
        %v1780 = vunpack.c.h.b16 %v1417
        %v1781 = vunpack.c.l.b16 %v1418
        %v1782 = vunpack.c.h.b16 %v1418
        %v1783 = vunpack.c.l.b16 %v1419
        %v1784 = vunpack.c.h.b16 %v1419
        %v1785 = vunpack.c.l.b16 %v1420
        %v1786 = vunpack.c.h.b16 %v1420
        %v1787 = vunpack.c.l.b16 %v1421
        %v1788 = vunpack.c.h.b16 %v1421
        %v1789 = vpack.c.b16 %v1775, %v1773
        %v1790 = vpack.c.b16 %v1776, %v1774
        %v1791 = vpack.c.b16 %v1779, %v1777
        %v1792 = vpack.c.b16 %v1780, %v1778
        %v1793 = vpack.c.b16 %v1783, %v1781
        %v1794 = vpack.c.b16 %v1784, %v1782
        %v1795 = vpack.c.b16 %v1787, %v1785
        %v1796 = vpack.c.b16 %v1788, %v1786
        %v1806 = vsel %vm1430, %v1764, 0
        %1808 = vmatpush.bf16.msra.mxu0 0
        %1809 = vmatpush.bf16.msra.mxu0 0
        %1810 = vmatpush.bf16.msra.mxu0 0
        %1811 = vmatpush.bf16.msra.mxu0 0
        %1812 = vmatpush.bf16.msra.mxu0 %v1795
        %1813 = vmatpush.bf16.msra.mxu0 %v1793
        %1814 = vmatpush.bf16.msra.mxu0 %v1791
        %1815 = vmatpush.bf16.msra.mxu0 %v1789
        %1816 = vmatmul.bf16.gmra.mxu0 %v1806
        %v1817 = vpop.f32.mrf.mxu0
        %v1818 = vadd.f32 0.0, %v1817
        %v1819 = vpop.f32.mrf.mxu0
        %1820 = vdwg.mxu0
        %1821 = vmatpush.bf16.msra.mxu0 0
        %1822 = vmatpush.bf16.msra.mxu0 0
        %1823 = vmatpush.bf16.msra.mxu0 0
        %1824 = vmatpush.bf16.msra.mxu0 0
        %1825 = vmatpush.bf16.msra.mxu0 %v1796
        %1826 = vmatpush.bf16.msra.mxu0 %v1794
        %1827 = vmatpush.bf16.msra.mxu0 %v1792
        %1828 = vmatpush.bf16.msra.mxu0 %v1790
        %1829 = vmatmul.bf16.gmra.mxu0 %v1806
        %v1830 = vpop.f32.mrf.mxu0
        %v1831 = vadd.f32 0.0, %v1830
        %v1832 = vpop.f32.mrf.mxu0
        %1833 = vdwg.mxu0
        %v1834 = vadd.f32 %v1686, %v1818
        %v1835 = vadd.f32 %v1699, %v1831
        %1836 = vrot.lane.b32.xlu0 %v1286, 64
        %v1837 = vpop.permute.xlu0 %1836
        %1838 = vrot.lane.b32.xlu0 %v1338, 64
        %v1839 = vpop.permute.xlu0 %1838
        %v1840 = vsel %vm1430, %v1837, 0
        %v1842 = vsel %vm1430, %v1839, 0
        %1844 = vmatpush.xpose.msra.mxu0 0.0
        %1845 = vmatpush.xpose.msra.mxu0 0.0
        %1846 = vmatpush.xpose.msra.mxu0 0.0
        %1847 = vmatpush.xpose.msra.mxu0 0.0
        %1848 = vmatpush.xpose.msra.mxu0 0.0
        %1849 = vmatpush.xpose.msra.mxu0 0.0
        %1850 = vmatpush.xpose.msra.mxu0 0.0
        %1851 = vmatpush.xpose.msra.mxu0 0.0
        %1852 = vmatpush.xpose.msra.mxu0 0.0
        %1853 = vmatpush.xpose.msra.mxu0 0.0
        %1854 = vmatpush.xpose.msra.mxu0 0.0
        %1855 = vmatpush.xpose.msra.mxu0 0.0
        %1856 = vmatpush.xpose.msra.mxu0 0.0
        %1857 = vmatpush.xpose.msra.mxu0 0.0
        %1858 = vmatpush.xpose.msra.mxu0 0.0
        %1859 = vmatpush.xpose.msra.mxu0 %v1842
        %1860 = vmatmul.f32.gmra.mxu0 %v1840
        %v1861 = vpop.f32.mrf.mxu0
        %v1862 = vadd.f32 0.0, %v1861
        %1863 = vdwg.mxu0
        %v1864 = vmul.f32 %v1862, 0.125
        %v1865 = vsel %vm1397, %v1864, -inf
        %v1866 = vsel %vm1459, %v1865, -inf
        %1867 = vmax.xlane.f32.xlu0 %v1866
        %v1868 = vpop.xlane.xlu0 %1867
        %v1869 = vsub.f32 %v1865, %v1868
        %v1870 = vmul.f32 %v1869, 1.442695
        %v1871 = vpow.pop %v1870
        %v1872 = vsel %vm1459, %v1871, 0.0
        %1873 = vadd.xlane.f32.xlu0 %v1872
        %v1874 = vpop.xlane.xlu0 %1873
        %v1875 = vrcp.pop %v1874
        %v1876 = vmul.f32 %v1871, %v1875
        %1878 = vrot.lane.b32.xlu0 %v1390, 64
        %v1879 = vpop.permute.xlu0 %1878
        %v1882 = vsel %vm1459, %v1876, 0
        %1884 = vmatpush.msra.mxu0 0.0
        %1885 = vmatpush.msra.mxu0 0.0
        %1886 = vmatpush.msra.mxu0 0.0
        %1887 = vmatpush.msra.mxu0 0.0
        %1888 = vmatpush.msra.mxu0 0.0
        %1889 = vmatpush.msra.mxu0 0.0
        %1890 = vmatpush.msra.mxu0 0.0
        %1891 = vmatpush.msra.mxu0 0.0
        %1892 = vmatpush.msra.mxu0 0.0
        %1893 = vmatpush.msra.mxu0 0.0
        %1894 = vmatpush.msra.mxu0 0.0
        %1895 = vmatpush.msra.mxu0 0.0
        %1896 = vmatpush.msra.mxu0 0.0
        %1897 = vmatpush.msra.mxu0 0.0
        %1898 = vmatpush.msra.mxu0 0.0
        %1899 = vmatpush.msra.mxu0 %v1879
        %1900 = vmatmul.f32.gmra.mxu0 %v1882
        %v1901 = vpop.f32.mrf.mxu0
        %v1902 = vadd.f32 0.0, %v1901
        %1903 = vdwg.mxu0
        %v1904 = vpack.c.bf16 %v1902, %v1902
        %v1913 = vunpack.c.l.b16 %v1422
        %v1914 = vunpack.c.h.b16 %v1422
        %v1915 = vunpack.c.l.b16 %v1423
        %v1916 = vunpack.c.h.b16 %v1423
        %v1917 = vunpack.c.l.b16 %v1424
        %v1918 = vunpack.c.h.b16 %v1424
        %v1919 = vunpack.c.l.b16 %v1425
        %v1920 = vunpack.c.h.b16 %v1425
        %v1921 = vunpack.c.l.b16 %v1426
        %v1922 = vunpack.c.h.b16 %v1426
        %v1923 = vunpack.c.l.b16 %v1427
        %v1924 = vunpack.c.h.b16 %v1427
        %v1925 = vunpack.c.l.b16 %v1428
        %v1926 = vunpack.c.h.b16 %v1428
        %v1927 = vunpack.c.l.b16 %v1429
        %v1928 = vunpack.c.h.b16 %v1429
        %v1929 = vpack.c.b16 %v1915, %v1913
        %v1930 = vpack.c.b16 %v1916, %v1914
        %v1931 = vpack.c.b16 %v1919, %v1917
        %v1932 = vpack.c.b16 %v1920, %v1918
        %v1933 = vpack.c.b16 %v1923, %v1921
        %v1934 = vpack.c.b16 %v1924, %v1922
        %v1935 = vpack.c.b16 %v1927, %v1925
        %v1936 = vpack.c.b16 %v1928, %v1926
        %v1946 = vsel %vm1430, %v1904, 0
        %1948 = vmatpush.bf16.msra.mxu0 0
        %1949 = vmatpush.bf16.msra.mxu0 0
        %1950 = vmatpush.bf16.msra.mxu0 0
        %1951 = vmatpush.bf16.msra.mxu0 0
        %1952 = vmatpush.bf16.msra.mxu0 %v1935
        %1953 = vmatpush.bf16.msra.mxu0 %v1933
        %1954 = vmatpush.bf16.msra.mxu0 %v1931
        %1955 = vmatpush.bf16.msra.mxu0 %v1929
        %1956 = vmatmul.bf16.gmra.mxu0 %v1946
        %v1957 = vpop.f32.mrf.mxu0
        %v1958 = vadd.f32 0.0, %v1957
        %v1959 = vpop.f32.mrf.mxu0
        %1960 = vdwg.mxu0
        %1961 = vmatpush.bf16.msra.mxu0 0
        %1962 = vmatpush.bf16.msra.mxu0 0
        %1963 = vmatpush.bf16.msra.mxu0 0
        %1964 = vmatpush.bf16.msra.mxu0 0
        %1965 = vmatpush.bf16.msra.mxu0 %v1936
        %1966 = vmatpush.bf16.msra.mxu0 %v1934
        %1967 = vmatpush.bf16.msra.mxu0 %v1932
        %1968 = vmatpush.bf16.msra.mxu0 %v1930
        %1969 = vmatmul.bf16.gmra.mxu0 %v1946
        %v1970 = vpop.f32.mrf.mxu0
        %v1971 = vadd.f32 0.0, %v1970
        %v1972 = vpop.f32.mrf.mxu0
        %1973 = vdwg.mxu0
        %v1974 = vadd.f32 %v1834, %v1958
        %v1975 = vadd.f32 %v1835, %v1971
        %v1976 = vadd.f32 %v609, %v1974
        %v1977 = vadd.f32 %v610, %v1975
        %v1978 = vld [vmem:[%s7] sm:$0x3]
        %v1980 = vperm.slane %v1978, 0
        %v1981 = vperm.slane %v1978, 1
        %v1984 = vadd.f32 %v1976, %v1980
        %v1985 = vadd.f32 %v1977, %v1981
        %v1986 = vld [vmem:[%s8] sm:$0x3]
        %v1987 = vld [vmem:[%s9] sm:$0x3]
        %v1988 = vadd.f32 %v1984, %v1985
        %1989 = vadd.xlane.f32.xlu0 %v1988
        %v1990 = vpop.xlane.xlu0 %1989
        %v1991 = vmul.f32 %v1990, %v622
        %v1992 = vsub.f32 %v1984, %v1991
        %v1993 = vsub.f32 %v1985, %v1991
        %v1994 = vmul.f32 %v1992, %v1992
        %v1995 = vmul.f32 %v1993, %v1993
        %v1996 = vadd.f32 %v1994, %v1995
        %1997 = vadd.xlane.f32.xlu0 %v1996
        %v1998 = vpop.xlane.xlu0 %1997
        %v1999 = vmul.f32 %v1998, %v622
        %v2000 = vadd.f32 %v1999, 1e-05
        %v2001 = vrsqrt.pop %v2000
        %v2002 = vmul.f32 %v2001, %v2000
        %v2003 = vmul.f32 %v2002, %v2001
        %v2004 = vmul.f32 0.5, %v2003
        %v2005 = vsub.f32 1.5, %v2004
        %v2006 = vmul.f32 %v2001, %v2005
        %vm2007 = vweird.f32 %v2000
        %vm2008 = vweird.f32 %v2001
        %vm2009 = vmor %vm2007, %vm2008
        %v2010 = vsel %vm2009, %v2001, %v2006
        %v2011 = vmul.f32 %v1992, %v2010
        %v2012 = vmul.f32 %v1993, %v2010
        %v2014 = vperm.slane %v1986, 0
        %v2015 = vperm.slane %v1986, 1
        %v2018 = vmul.f32 %v2011, %v2014
        %v2019 = vmul.f32 %v2012, %v2015
        %v2021 = vperm.slane %v1987, 0
        %v2022 = vperm.slane %v1987, 1
        %v2025 = vadd.f32 %v2018, %v2021
        %v2026 = vadd.f32 %v2019, %v2022
        %v2027 = vpack.c.bf16 %v2025, %v2025
        %v2028 = vpack.c.bf16 %v2026, %v2026
        %v2029 = vld [vmem:[#allocation6] sm:$0xff]
        %v2030 = vld [vmem:[#allocation6 + $0x8] sm:$0xff]
        %v2031 = vld [vmem:[#allocation6 + $0x10] sm:$0xff]
        %v2032 = vld [vmem:[#allocation6 + $0x18] sm:$0xff]
        %v2033 = vld [vmem:[#allocation6 + $0x20] sm:$0xff]
        %v2034 = vld [vmem:[#allocation6 + $0x28] sm:$0xff]
        %v2035 = vld [vmem:[#allocation6 + $0x30] sm:$0xff]
        %v2036 = vld [vmem:[#allocation6 + $0x38] sm:$0xff]
        %v2037 = vld [vmem:[#allocation6 + $0x40] sm:$0xff]
        %v2038 = vld [vmem:[#allocation6 + $0x48] sm:$0xff]
        %v2039 = vld [vmem:[#allocation6 + $0x50] sm:$0xff]
        %v2040 = vld [vmem:[#allocation6 + $0x58] sm:$0xff]
        %v2041 = vld [vmem:[#allocation6 + $0x60] sm:$0xff]
        %v2042 = vld [vmem:[#allocation6 + $0x68] sm:$0xff]
        %v2043 = vld [vmem:[#allocation6 + $0x70] sm:$0xff]
        %v2044 = vld [vmem:[#allocation6 + $0x78] sm:$0xff]
        %v2045 = vld [vmem:[#allocation6 + $0x80] sm:$0xff]
        %v2046 = vld [vmem:[#allocation6 + $0x88] sm:$0xff]
        %v2047 = vld [vmem:[#allocation6 + $0x90] sm:$0xff]
        %v2048 = vld [vmem:[#allocation6 + $0x98] sm:$0xff]
        %v2049 = vld [vmem:[#allocation6 + $0xa0] sm:$0xff]
        %v2050 = vld [vmem:[#allocation6 + $0xa8] sm:$0xff]
        %v2051 = vld [vmem:[#allocation6 + $0xb0] sm:$0xff]
        %v2052 = vld [vmem:[#allocation6 + $0xb8] sm:$0xff]
        %v2053 = vld [vmem:[#allocation6 + $0xc0] sm:$0xff]
        %v2054 = vld [vmem:[#allocation6 + $0xc8] sm:$0xff]
        %v2055 = vld [vmem:[#allocation6 + $0xd0] sm:$0xff]
        %v2056 = vld [vmem:[#allocation6 + $0xd8] sm:$0xff]
        %v2057 = vld [vmem:[#allocation6 + $0xe0] sm:$0xff]
        %v2058 = vld [vmem:[#allocation6 + $0xe8] sm:$0xff]
        %v2059 = vld [vmem:[#allocation6 + $0xf0] sm:$0xff]
        %v2060 = vld [vmem:[#allocation6 + $0xf8] sm:$0xff]
        %v2061 = vld [vmem:[#allocation6 + $0x100] sm:$0xff]
        %v2062 = vld [vmem:[#allocation6 + $0x108] sm:$0xff]
        %v2063 = vld [vmem:[#allocation6 + $0x110] sm:$0xff]
        %v2064 = vld [vmem:[#allocation6 + $0x118] sm:$0xff]
        %v2065 = vld [vmem:[#allocation6 + $0x120] sm:$0xff]
        %v2066 = vld [vmem:[#allocation6 + $0x128] sm:$0xff]
        %v2067 = vld [vmem:[#allocation6 + $0x130] sm:$0xff]
        %v2068 = vld [vmem:[#allocation6 + $0x138] sm:$0xff]
        %v2069 = vld [vmem:[#allocation6 + $0x140] sm:$0xff]
        %v2070 = vld [vmem:[#allocation6 + $0x148] sm:$0xff]
        %v2071 = vld [vmem:[#allocation6 + $0x150] sm:$0xff]
        %v2072 = vld [vmem:[#allocation6 + $0x158] sm:$0xff]
        %v2073 = vld [vmem:[#allocation6 + $0x160] sm:$0xff]
        %v2074 = vld [vmem:[#allocation6 + $0x168] sm:$0xff]
        %v2075 = vld [vmem:[#allocation6 + $0x170] sm:$0xff]
        %v2076 = vld [vmem:[#allocation6 + $0x178] sm:$0xff]
        %v2077 = vld [vmem:[#allocation6 + $0x180] sm:$0xff]
        %v2078 = vld [vmem:[#allocation6 + $0x188] sm:$0xff]
        %v2079 = vld [vmem:[#allocation6 + $0x190] sm:$0xff]
        %v2080 = vld [vmem:[#allocation6 + $0x198] sm:$0xff]
        %v2081 = vld [vmem:[#allocation6 + $0x1a0] sm:$0xff]
        %v2082 = vld [vmem:[#allocation6 + $0x1a8] sm:$0xff]
        %v2083 = vld [vmem:[#allocation6 + $0x1b0] sm:$0xff]
        %v2084 = vld [vmem:[#allocation6 + $0x1b8] sm:$0xff]
        %v2085 = vld [vmem:[#allocation6 + $0x1c0] sm:$0xff]
        %v2086 = vld [vmem:[#allocation6 + $0x1c8] sm:$0xff]
        %v2087 = vld [vmem:[#allocation6 + $0x1d0] sm:$0xff]
        %v2088 = vld [vmem:[#allocation6 + $0x1d8] sm:$0xff]
        %v2089 = vld [vmem:[#allocation6 + $0x1e0] sm:$0xff]
        %v2090 = vld [vmem:[#allocation6 + $0x1e8] sm:$0xff]
        %v2091 = vld [vmem:[#allocation6 + $0x1f0] sm:$0xff]
        %v2092 = vld [vmem:[#allocation6 + $0x1f8] sm:$0xff]
        %v2093 = vld [vmem:[#allocation6 + $0x200] sm:$0xff]
        %v2094 = vld [vmem:[#allocation6 + $0x208] sm:$0xff]
        %v2095 = vld [vmem:[#allocation6 + $0x210] sm:$0xff]
        %v2096 = vld [vmem:[#allocation6 + $0x218] sm:$0xff]
        %v2097 = vld [vmem:[#allocation6 + $0x220] sm:$0xff]
        %v2098 = vld [vmem:[#allocation6 + $0x228] sm:$0xff]
        %v2099 = vld [vmem:[#allocation6 + $0x230] sm:$0xff]
        %v2100 = vld [vmem:[#allocation6 + $0x238] sm:$0xff]
        %v2101 = vld [vmem:[#allocation6 + $0x240] sm:$0xff]
        %v2102 = vld [vmem:[#allocation6 + $0x248] sm:$0xff]
        %v2103 = vld [vmem:[#allocation6 + $0x250] sm:$0xff]
        %v2104 = vld [vmem:[#allocation6 + $0x258] sm:$0xff]
        %v2105 = vld [vmem:[#allocation6 + $0x260] sm:$0xff]
        %v2106 = vld [vmem:[#allocation6 + $0x268] sm:$0xff]
        %v2107 = vld [vmem:[#allocation6 + $0x270] sm:$0xff]
        %v2108 = vld [vmem:[#allocation6 + $0x278] sm:$0xff]
        %v2109 = vld [vmem:[#allocation6 + $0x280] sm:$0xff]
        %v2110 = vld [vmem:[#allocation6 + $0x288] sm:$0xff]
        %v2111 = vld [vmem:[#allocation6 + $0x290] sm:$0xff]
        %v2112 = vld [vmem:[#allocation6 + $0x298] sm:$0xff]
        %v2113 = vld [vmem:[#allocation6 + $0x2a0] sm:$0xff]
        %v2114 = vld [vmem:[#allocation6 + $0x2a8] sm:$0xff]
        %v2115 = vld [vmem:[#allocation6 + $0x2b0] sm:$0xff]
        %v2116 = vld [vmem:[#allocation6 + $0x2b8] sm:$0xff]
        %v2117 = vld [vmem:[#allocation6 + $0x2c0] sm:$0xff]
        %v2118 = vld [vmem:[#allocation6 + $0x2c8] sm:$0xff]
        %v2119 = vld [vmem:[#allocation6 + $0x2d0] sm:$0xff]
        %v2120 = vld [vmem:[#allocation6 + $0x2d8] sm:$0xff]
        %v2121 = vld [vmem:[#allocation6 + $0x2e0] sm:$0xff]
        %v2122 = vld [vmem:[#allocation6 + $0x2e8] sm:$0xff]
        %v2123 = vld [vmem:[#allocation6 + $0x2f0] sm:$0xff]
        %v2124 = vld [vmem:[#allocation6 + $0x2f8] sm:$0xff]
        %v2125 = vld [vmem:[#allocation6 + $0x300] sm:$0xff]
        %v2126 = vld [vmem:[#allocation6 + $0x308] sm:$0xff]
        %v2127 = vld [vmem:[#allocation6 + $0x310] sm:$0xff]
        %v2128 = vld [vmem:[#allocation6 + $0x318] sm:$0xff]
        %v2129 = vld [vmem:[#allocation6 + $0x320] sm:$0xff]
        %v2130 = vld [vmem:[#allocation6 + $0x328] sm:$0xff]
        %v2131 = vld [vmem:[#allocation6 + $0x330] sm:$0xff]
        %v2132 = vld [vmem:[#allocation6 + $0x338] sm:$0xff]
        %v2133 = vld [vmem:[#allocation6 + $0x340] sm:$0xff]
        %v2134 = vld [vmem:[#allocation6 + $0x348] sm:$0xff]
        %v2135 = vld [vmem:[#allocation6 + $0x350] sm:$0xff]
        %v2136 = vld [vmem:[#allocation6 + $0x358] sm:$0xff]
        %v2137 = vld [vmem:[#allocation6 + $0x360] sm:$0xff]
        %v2138 = vld [vmem:[#allocation6 + $0x368] sm:$0xff]
        %v2139 = vld [vmem:[#allocation6 + $0x370] sm:$0xff]
        %v2140 = vld [vmem:[#allocation6 + $0x378] sm:$0xff]
        %v2141 = vld [vmem:[#allocation6 + $0x380] sm:$0xff]
        %v2142 = vld [vmem:[#allocation6 + $0x388] sm:$0xff]
        %v2143 = vld [vmem:[#allocation6 + $0x390] sm:$0xff]
        %v2144 = vld [vmem:[#allocation6 + $0x398] sm:$0xff]
        %v2145 = vld [vmem:[#allocation6 + $0x3a0] sm:$0xff]
        %v2146 = vld [vmem:[#allocation6 + $0x3a8] sm:$0xff]
        %v2147 = vld [vmem:[#allocation6 + $0x3b0] sm:$0xff]
        %v2148 = vld [vmem:[#allocation6 + $0x3b8] sm:$0xff]
        %v2149 = vld [vmem:[#allocation6 + $0x3c0] sm:$0xff]
        %v2150 = vld [vmem:[#allocation6 + $0x3c8] sm:$0xff]
        %v2151 = vld [vmem:[#allocation6 + $0x3d0] sm:$0xff]
        %v2152 = vld [vmem:[#allocation6 + $0x3d8] sm:$0xff]
        %v2153 = vld [vmem:[#allocation6 + $0x3e0] sm:$0xff]
        %v2154 = vld [vmem:[#allocation6 + $0x3e8] sm:$0xff]
        %v2155 = vld [vmem:[#allocation6 + $0x3f0] sm:$0xff]
        %v2156 = vld [vmem:[#allocation6 + $0x3f8] sm:$0xff]
        %v2157 = vld [vmem:[%s11] sm:$0xff]
        %v2159 = vperm.slane %v2157, 0
        %v2160 = vperm.slane %v2157, 1
        %v2161 = vperm.slane %v2157, 2
        %v2162 = vperm.slane %v2157, 3
        %v2163 = vperm.slane %v2157, 4
        %v2164 = vperm.slane %v2157, 5
        %v2165 = vperm.slane %v2157, 6
        %v2166 = vperm.slane %v2157, 7
        %v2303 = vunpack.c.l.b16 %v2029
        %v2304 = vunpack.c.h.b16 %v2029
        %v2305 = vunpack.c.l.b16 %v2030
        %v2306 = vunpack.c.h.b16 %v2030
        %v2307 = vunpack.c.l.b16 %v2031
        %v2308 = vunpack.c.h.b16 %v2031
        %v2309 = vunpack.c.l.b16 %v2032
        %v2310 = vunpack.c.h.b16 %v2032
        %v2311 = vunpack.c.l.b16 %v2033
        %v2312 = vunpack.c.h.b16 %v2033
        %v2313 = vunpack.c.l.b16 %v2034
        %v2314 = vunpack.c.h.b16 %v2034
        %v2315 = vunpack.c.l.b16 %v2035
        %v2316 = vunpack.c.h.b16 %v2035
        %v2317 = vunpack.c.l.b16 %v2036
        %v2318 = vunpack.c.h.b16 %v2036
        %v2319 = vunpack.c.l.b16 %v2037
        %v2320 = vunpack.c.h.b16 %v2037
        %v2321 = vunpack.c.l.b16 %v2038
        %v2322 = vunpack.c.h.b16 %v2038
        %v2323 = vunpack.c.l.b16 %v2039
        %v2324 = vunpack.c.h.b16 %v2039
        %v2325 = vunpack.c.l.b16 %v2040
        %v2326 = vunpack.c.h.b16 %v2040
        %v2327 = vunpack.c.l.b16 %v2041
        %v2328 = vunpack.c.h.b16 %v2041
        %v2329 = vunpack.c.l.b16 %v2042
        %v2330 = vunpack.c.h.b16 %v2042
        %v2331 = vunpack.c.l.b16 %v2043
        %v2332 = vunpack.c.h.b16 %v2043
        %v2333 = vunpack.c.l.b16 %v2044
        %v2334 = vunpack.c.h.b16 %v2044
        %v2335 = vunpack.c.l.b16 %v2045
        %v2336 = vunpack.c.h.b16 %v2045
        %v2337 = vunpack.c.l.b16 %v2046
        %v2338 = vunpack.c.h.b16 %v2046
        %v2339 = vunpack.c.l.b16 %v2047
        %v2340 = vunpack.c.h.b16 %v2047
        %v2341 = vunpack.c.l.b16 %v2048
        %v2342 = vunpack.c.h.b16 %v2048
        %v2343 = vunpack.c.l.b16 %v2049
        %v2344 = vunpack.c.h.b16 %v2049
        %v2345 = vunpack.c.l.b16 %v2050
        %v2346 = vunpack.c.h.b16 %v2050
        %v2347 = vunpack.c.l.b16 %v2051
        %v2348 = vunpack.c.h.b16 %v2051
        %v2349 = vunpack.c.l.b16 %v2052
        %v2350 = vunpack.c.h.b16 %v2052
        %v2351 = vunpack.c.l.b16 %v2053
        %v2352 = vunpack.c.h.b16 %v2053
        %v2353 = vunpack.c.l.b16 %v2054
        %v2354 = vunpack.c.h.b16 %v2054
        %v2355 = vunpack.c.l.b16 %v2055
        %v2356 = vunpack.c.h.b16 %v2055
        %v2357 = vunpack.c.l.b16 %v2056
        %v2358 = vunpack.c.h.b16 %v2056
        %v2359 = vunpack.c.l.b16 %v2057
        %v2360 = vunpack.c.h.b16 %v2057
        %v2361 = vunpack.c.l.b16 %v2058
        %v2362 = vunpack.c.h.b16 %v2058
        %v2363 = vunpack.c.l.b16 %v2059
        %v2364 = vunpack.c.h.b16 %v2059
        %v2365 = vunpack.c.l.b16 %v2060
        %v2366 = vunpack.c.h.b16 %v2060
        %v2367 = vunpack.c.l.b16 %v2061
        %v2368 = vunpack.c.h.b16 %v2061
        %v2369 = vunpack.c.l.b16 %v2062
        %v2370 = vunpack.c.h.b16 %v2062
        %v2371 = vunpack.c.l.b16 %v2063
        %v2372 = vunpack.c.h.b16 %v2063
        %v2373 = vunpack.c.l.b16 %v2064
        %v2374 = vunpack.c.h.b16 %v2064
        %v2375 = vunpack.c.l.b16 %v2065
        %v2376 = vunpack.c.h.b16 %v2065
        %v2377 = vunpack.c.l.b16 %v2066
        %v2378 = vunpack.c.h.b16 %v2066
        %v2379 = vunpack.c.l.b16 %v2067
        %v2380 = vunpack.c.h.b16 %v2067
        %v2381 = vunpack.c.l.b16 %v2068
        %v2382 = vunpack.c.h.b16 %v2068
        %v2383 = vunpack.c.l.b16 %v2069
        %v2384 = vunpack.c.h.b16 %v2069
        %v2385 = vunpack.c.l.b16 %v2070
        %v2386 = vunpack.c.h.b16 %v2070
        %v2387 = vunpack.c.l.b16 %v2071
        %v2388 = vunpack.c.h.b16 %v2071
        %v2389 = vunpack.c.l.b16 %v2072
        %v2390 = vunpack.c.h.b16 %v2072
        %v2391 = vunpack.c.l.b16 %v2073
        %v2392 = vunpack.c.h.b16 %v2073
        %v2393 = vunpack.c.l.b16 %v2074
        %v2394 = vunpack.c.h.b16 %v2074
        %v2395 = vunpack.c.l.b16 %v2075
        %v2396 = vunpack.c.h.b16 %v2075
        %v2397 = vunpack.c.l.b16 %v2076
        %v2398 = vunpack.c.h.b16 %v2076
        %v2399 = vunpack.c.l.b16 %v2077
        %v2400 = vunpack.c.h.b16 %v2077
        %v2401 = vunpack.c.l.b16 %v2078
        %v2402 = vunpack.c.h.b16 %v2078
        %v2403 = vunpack.c.l.b16 %v2079
        %v2404 = vunpack.c.h.b16 %v2079
        %v2405 = vunpack.c.l.b16 %v2080
        %v2406 = vunpack.c.h.b16 %v2080
        %v2407 = vunpack.c.l.b16 %v2081
        %v2408 = vunpack.c.h.b16 %v2081
        %v2409 = vunpack.c.l.b16 %v2082
        %v2410 = vunpack.c.h.b16 %v2082
        %v2411 = vunpack.c.l.b16 %v2083
        %v2412 = vunpack.c.h.b16 %v2083
        %v2413 = vunpack.c.l.b16 %v2084
        %v2414 = vunpack.c.h.b16 %v2084
        %v2415 = vunpack.c.l.b16 %v2085
        %v2416 = vunpack.c.h.b16 %v2085
        %v2417 = vunpack.c.l.b16 %v2086
        %v2418 = vunpack.c.h.b16 %v2086
        %v2419 = vunpack.c.l.b16 %v2087
        %v2420 = vunpack.c.h.b16 %v2087
        %v2421 = vunpack.c.l.b16 %v2088
        %v2422 = vunpack.c.h.b16 %v2088
        %v2423 = vunpack.c.l.b16 %v2089
        %v2424 = vunpack.c.h.b16 %v2089
        %v2425 = vunpack.c.l.b16 %v2090
        %v2426 = vunpack.c.h.b16 %v2090
        %v2427 = vunpack.c.l.b16 %v2091
        %v2428 = vunpack.c.h.b16 %v2091
        %v2429 = vunpack.c.l.b16 %v2092
        %v2430 = vunpack.c.h.b16 %v2092
        %v2431 = vunpack.c.l.b16 %v2093
        %v2432 = vunpack.c.h.b16 %v2093
        %v2433 = vunpack.c.l.b16 %v2094
        %v2434 = vunpack.c.h.b16 %v2094
        %v2435 = vunpack.c.l.b16 %v2095
        %v2436 = vunpack.c.h.b16 %v2095
        %v2437 = vunpack.c.l.b16 %v2096
        %v2438 = vunpack.c.h.b16 %v2096
        %v2439 = vunpack.c.l.b16 %v2097
        %v2440 = vunpack.c.h.b16 %v2097
        %v2441 = vunpack.c.l.b16 %v2098
        %v2442 = vunpack.c.h.b16 %v2098
        %v2443 = vunpack.c.l.b16 %v2099
        %v2444 = vunpack.c.h.b16 %v2099
        %v2445 = vunpack.c.l.b16 %v2100
        %v2446 = vunpack.c.h.b16 %v2100
        %v2447 = vunpack.c.l.b16 %v2101
        %v2448 = vunpack.c.h.b16 %v2101
        %v2449 = vunpack.c.l.b16 %v2102
        %v2450 = vunpack.c.h.b16 %v2102
        %v2451 = vunpack.c.l.b16 %v2103
        %v2452 = vunpack.c.h.b16 %v2103
        %v2453 = vunpack.c.l.b16 %v2104
        %v2454 = vunpack.c.h.b16 %v2104
        %v2455 = vunpack.c.l.b16 %v2105
        %v2456 = vunpack.c.h.b16 %v2105
        %v2457 = vunpack.c.l.b16 %v2106
        %v2458 = vunpack.c.h.b16 %v2106
        %v2459 = vunpack.c.l.b16 %v2107
        %v2460 = vunpack.c.h.b16 %v2107
        %v2461 = vunpack.c.l.b16 %v2108
        %v2462 = vunpack.c.h.b16 %v2108
        %v2463 = vunpack.c.l.b16 %v2109
        %v2464 = vunpack.c.h.b16 %v2109
        %v2465 = vunpack.c.l.b16 %v2110
        %v2466 = vunpack.c.h.b16 %v2110
        %v2467 = vunpack.c.l.b16 %v2111
        %v2468 = vunpack.c.h.b16 %v2111
        %v2469 = vunpack.c.l.b16 %v2112
        %v2470 = vunpack.c.h.b16 %v2112
        %v2471 = vunpack.c.l.b16 %v2113
        %v2472 = vunpack.c.h.b16 %v2113
        %v2473 = vunpack.c.l.b16 %v2114
        %v2474 = vunpack.c.h.b16 %v2114
        %v2475 = vunpack.c.l.b16 %v2115
        %v2476 = vunpack.c.h.b16 %v2115
        %v2477 = vunpack.c.l.b16 %v2116
        %v2478 = vunpack.c.h.b16 %v2116
        %v2479 = vunpack.c.l.b16 %v2117
        %v2480 = vunpack.c.h.b16 %v2117
        %v2481 = vunpack.c.l.b16 %v2118
        %v2482 = vunpack.c.h.b16 %v2118
        %v2483 = vunpack.c.l.b16 %v2119
        %v2484 = vunpack.c.h.b16 %v2119
        %v2485 = vunpack.c.l.b16 %v2120
        %v2486 = vunpack.c.h.b16 %v2120
        %v2487 = vunpack.c.l.b16 %v2121
        %v2488 = vunpack.c.h.b16 %v2121
        %v2489 = vunpack.c.l.b16 %v2122
        %v2490 = vunpack.c.h.b16 %v2122
        %v2491 = vunpack.c.l.b16 %v2123
        %v2492 = vunpack.c.h.b16 %v2123
        %v2493 = vunpack.c.l.b16 %v2124
        %v2494 = vunpack.c.h.b16 %v2124
        %v2495 = vunpack.c.l.b16 %v2125
        %v2496 = vunpack.c.h.b16 %v2125
        %v2497 = vunpack.c.l.b16 %v2126
        %v2498 = vunpack.c.h.b16 %v2126
        %v2499 = vunpack.c.l.b16 %v2127
        %v2500 = vunpack.c.h.b16 %v2127
        %v2501 = vunpack.c.l.b16 %v2128
        %v2502 = vunpack.c.h.b16 %v2128
        %v2503 = vunpack.c.l.b16 %v2129
        %v2504 = vunpack.c.h.b16 %v2129
        %v2505 = vunpack.c.l.b16 %v2130
        %v2506 = vunpack.c.h.b16 %v2130
        %v2507 = vunpack.c.l.b16 %v2131
        %v2508 = vunpack.c.h.b16 %v2131
        %v2509 = vunpack.c.l.b16 %v2132
        %v2510 = vunpack.c.h.b16 %v2132
        %v2511 = vunpack.c.l.b16 %v2133
        %v2512 = vunpack.c.h.b16 %v2133
        %v2513 = vunpack.c.l.b16 %v2134
        %v2514 = vunpack.c.h.b16 %v2134
        %v2515 = vunpack.c.l.b16 %v2135
        %v2516 = vunpack.c.h.b16 %v2135
        %v2517 = vunpack.c.l.b16 %v2136
        %v2518 = vunpack.c.h.b16 %v2136
        %v2519 = vunpack.c.l.b16 %v2137
        %v2520 = vunpack.c.h.b16 %v2137
        %v2521 = vunpack.c.l.b16 %v2138
        %v2522 = vunpack.c.h.b16 %v2138
        %v2523 = vunpack.c.l.b16 %v2139
        %v2524 = vunpack.c.h.b16 %v2139
        %v2525 = vunpack.c.l.b16 %v2140
        %v2526 = vunpack.c.h.b16 %v2140
        %v2527 = vunpack.c.l.b16 %v2141
        %v2528 = vunpack.c.h.b16 %v2141
        %v2529 = vunpack.c.l.b16 %v2142
        %v2530 = vunpack.c.h.b16 %v2142
        %v2531 = vunpack.c.l.b16 %v2143
        %v2532 = vunpack.c.h.b16 %v2143
        %v2533 = vunpack.c.l.b16 %v2144
        %v2534 = vunpack.c.h.b16 %v2144
        %v2535 = vunpack.c.l.b16 %v2145
        %v2536 = vunpack.c.h.b16 %v2145
        %v2537 = vunpack.c.l.b16 %v2146
        %v2538 = vunpack.c.h.b16 %v2146
        %v2539 = vunpack.c.l.b16 %v2147
        %v2540 = vunpack.c.h.b16 %v2147
        %v2541 = vunpack.c.l.b16 %v2148
        %v2542 = vunpack.c.h.b16 %v2148
        %v2543 = vunpack.c.l.b16 %v2149
        %v2544 = vunpack.c.h.b16 %v2149
        %v2545 = vunpack.c.l.b16 %v2150
        %v2546 = vunpack.c.h.b16 %v2150
        %v2547 = vunpack.c.l.b16 %v2151
        %v2548 = vunpack.c.h.b16 %v2151
        %v2549 = vunpack.c.l.b16 %v2152
        %v2550 = vunpack.c.h.b16 %v2152
        %v2551 = vunpack.c.l.b16 %v2153
        %v2552 = vunpack.c.h.b16 %v2153
        %v2553 = vunpack.c.l.b16 %v2154
        %v2554 = vunpack.c.h.b16 %v2154
        %v2555 = vunpack.c.l.b16 %v2155
        %v2556 = vunpack.c.h.b16 %v2155
        %v2557 = vunpack.c.l.b16 %v2156
        %v2558 = vunpack.c.h.b16 %v2156
        %v2559 = vpack.c.b16 %v2311, %v2303
        %v2560 = vpack.c.b16 %v2312, %v2304
        %v2561 = vpack.c.b16 %v2313, %v2305
        %v2562 = vpack.c.b16 %v2314, %v2306
        %v2563 = vpack.c.b16 %v2315, %v2307
        %v2564 = vpack.c.b16 %v2316, %v2308
        %v2565 = vpack.c.b16 %v2317, %v2309
        %v2566 = vpack.c.b16 %v2318, %v2310
        %v2567 = vpack.c.b16 %v2327, %v2319
        %v2568 = vpack.c.b16 %v2328, %v2320
        %v2569 = vpack.c.b16 %v2329, %v2321
        %v2570 = vpack.c.b16 %v2330, %v2322
        %v2571 = vpack.c.b16 %v2331, %v2323
        %v2572 = vpack.c.b16 %v2332, %v2324
        %v2573 = vpack.c.b16 %v2333, %v2325
        %v2574 = vpack.c.b16 %v2334, %v2326
        %v2575 = vpack.c.b16 %v2343, %v2335
        %v2576 = vpack.c.b16 %v2344, %v2336
        %v2577 = vpack.c.b16 %v2345, %v2337
        %v2578 = vpack.c.b16 %v2346, %v2338
        %v2579 = vpack.c.b16 %v2347, %v2339
        %v2580 = vpack.c.b16 %v2348, %v2340
        %v2581 = vpack.c.b16 %v2349, %v2341
        %v2582 = vpack.c.b16 %v2350, %v2342
        %v2583 = vpack.c.b16 %v2359, %v2351
        %v2584 = vpack.c.b16 %v2360, %v2352
        %v2585 = vpack.c.b16 %v2361, %v2353
        %v2586 = vpack.c.b16 %v2362, %v2354
        %v2587 = vpack.c.b16 %v2363, %v2355
        %v2588 = vpack.c.b16 %v2364, %v2356
        %v2589 = vpack.c.b16 %v2365, %v2357
        %v2590 = vpack.c.b16 %v2366, %v2358
        %v2591 = vpack.c.b16 %v2375, %v2367
        %v2592 = vpack.c.b16 %v2376, %v2368
        %v2593 = vpack.c.b16 %v2377, %v2369
        %v2594 = vpack.c.b16 %v2378, %v2370
        %v2595 = vpack.c.b16 %v2379, %v2371
        %v2596 = vpack.c.b16 %v2380, %v2372
        %v2597 = vpack.c.b16 %v2381, %v2373
        %v2598 = vpack.c.b16 %v2382, %v2374
        %v2599 = vpack.c.b16 %v2391, %v2383
        %v2600 = vpack.c.b16 %v2392, %v2384
        %v2601 = vpack.c.b16 %v2393, %v2385
        %v2602 = vpack.c.b16 %v2394, %v2386
        %v2603 = vpack.c.b16 %v2395, %v2387
        %v2604 = vpack.c.b16 %v2396, %v2388
        %v2605 = vpack.c.b16 %v2397, %v2389
        %v2606 = vpack.c.b16 %v2398, %v2390
        %v2607 = vpack.c.b16 %v2407, %v2399
        %v2608 = vpack.c.b16 %v2408, %v2400
        %v2609 = vpack.c.b16 %v2409, %v2401
        %v2610 = vpack.c.b16 %v2410, %v2402
        %v2611 = vpack.c.b16 %v2411, %v2403
        %v2612 = vpack.c.b16 %v2412, %v2404
        %v2613 = vpack.c.b16 %v2413, %v2405
        %v2614 = vpack.c.b16 %v2414, %v2406
        %v2615 = vpack.c.b16 %v2423, %v2415
        %v2616 = vpack.c.b16 %v2424, %v2416
        %v2617 = vpack.c.b16 %v2425, %v2417
        %v2618 = vpack.c.b16 %v2426, %v2418
        %v2619 = vpack.c.b16 %v2427, %v2419
        %v2620 = vpack.c.b16 %v2428, %v2420
        %v2621 = vpack.c.b16 %v2429, %v2421
        %v2622 = vpack.c.b16 %v2430, %v2422
        %v2623 = vpack.c.b16 %v2439, %v2431
        %v2624 = vpack.c.b16 %v2440, %v2432
        %v2625 = vpack.c.b16 %v2441, %v2433
        %v2626 = vpack.c.b16 %v2442, %v2434
        %v2627 = vpack.c.b16 %v2443, %v2435
        %v2628 = vpack.c.b16 %v2444, %v2436
        %v2629 = vpack.c.b16 %v2445, %v2437
        %v2630 = vpack.c.b16 %v2446, %v2438
        %v2631 = vpack.c.b16 %v2455, %v2447
        %v2632 = vpack.c.b16 %v2456, %v2448
        %v2633 = vpack.c.b16 %v2457, %v2449
        %v2634 = vpack.c.b16 %v2458, %v2450
        %v2635 = vpack.c.b16 %v2459, %v2451
        %v2636 = vpack.c.b16 %v2460, %v2452
        %v2637 = vpack.c.b16 %v2461, %v2453
        %v2638 = vpack.c.b16 %v2462, %v2454
        %v2639 = vpack.c.b16 %v2471, %v2463
        %v2640 = vpack.c.b16 %v2472, %v2464
        %v2641 = vpack.c.b16 %v2473, %v2465
        %v2642 = vpack.c.b16 %v2474, %v2466
        %v2643 = vpack.c.b16 %v2475, %v2467
        %v2644 = vpack.c.b16 %v2476, %v2468
        %v2645 = vpack.c.b16 %v2477, %v2469
        %v2646 = vpack.c.b16 %v2478, %v2470
        %v2647 = vpack.c.b16 %v2487, %v2479
        %v2648 = vpack.c.b16 %v2488, %v2480
        %v2649 = vpack.c.b16 %v2489, %v2481
        %v2650 = vpack.c.b16 %v2490, %v2482
        %v2651 = vpack.c.b16 %v2491, %v2483
        %v2652 = vpack.c.b16 %v2492, %v2484
        %v2653 = vpack.c.b16 %v2493, %v2485
        %v2654 = vpack.c.b16 %v2494, %v2486
        %v2655 = vpack.c.b16 %v2503, %v2495
        %v2656 = vpack.c.b16 %v2504, %v2496
        %v2657 = vpack.c.b16 %v2505, %v2497
        %v2658 = vpack.c.b16 %v2506, %v2498
        %v2659 = vpack.c.b16 %v2507, %v2499
        %v2660 = vpack.c.b16 %v2508, %v2500
        %v2661 = vpack.c.b16 %v2509, %v2501
        %v2662 = vpack.c.b16 %v2510, %v2502
        %v2663 = vpack.c.b16 %v2519, %v2511
        %v2664 = vpack.c.b16 %v2520, %v2512
        %v2665 = vpack.c.b16 %v2521, %v2513
        %v2666 = vpack.c.b16 %v2522, %v2514
        %v2667 = vpack.c.b16 %v2523, %v2515
        %v2668 = vpack.c.b16 %v2524, %v2516
        %v2669 = vpack.c.b16 %v2525, %v2517
        %v2670 = vpack.c.b16 %v2526, %v2518
        %v2671 = vpack.c.b16 %v2535, %v2527
        %v2672 = vpack.c.b16 %v2536, %v2528
        %v2673 = vpack.c.b16 %v2537, %v2529
        %v2674 = vpack.c.b16 %v2538, %v2530
        %v2675 = vpack.c.b16 %v2539, %v2531
        %v2676 = vpack.c.b16 %v2540, %v2532
        %v2677 = vpack.c.b16 %v2541, %v2533
        %v2678 = vpack.c.b16 %v2542, %v2534
        %v2679 = vpack.c.b16 %v2551, %v2543
        %v2680 = vpack.c.b16 %v2552, %v2544
        %v2681 = vpack.c.b16 %v2553, %v2545
        %v2682 = vpack.c.b16 %v2554, %v2546
        %v2683 = vpack.c.b16 %v2555, %v2547
        %v2684 = vpack.c.b16 %v2556, %v2548
        %v2685 = vpack.c.b16 %v2557, %v2549
        %v2686 = vpack.c.b16 %v2558, %v2550
        %2815 = vmatpush.bf16.msra.mxu0 %v2615
        %2816 = vmatpush.bf16.msra.mxu0 %v2607
        %2817 = vmatpush.bf16.msra.mxu0 %v2599
        %2818 = vmatpush.bf16.msra.mxu0 %v2591
        %2819 = vmatpush.bf16.msra.mxu0 %v2583
        %2820 = vmatpush.bf16.msra.mxu0 %v2575
        %2821 = vmatpush.bf16.msra.mxu0 %v2567
        %2822 = vmatpush.bf16.msra.mxu0 %v2559
        %2823 = vmatmul.bf16.gmra.mxu0 %v2027
        %v2824 = vpop.f32.mrf.mxu0
        %v2825 = vadd.f32 %v2159, %v2824
        %v2826 = vpop.f32.mrf.mxu0
        %2827 = vdwg.mxu0
        %2828 = vmatpush.bf16.msra.mxu0 %v2679
        %2829 = vmatpush.bf16.msra.mxu0 %v2671
        %2830 = vmatpush.bf16.msra.mxu0 %v2663
        %2831 = vmatpush.bf16.msra.mxu0 %v2655
        %2832 = vmatpush.bf16.msra.mxu0 %v2647
        %2833 = vmatpush.bf16.msra.mxu0 %v2639
        %2834 = vmatpush.bf16.msra.mxu0 %v2631
        %2835 = vmatpush.bf16.msra.mxu0 %v2623
        %2836 = vmatmul.bf16.gmra.mxu0 %v2028
        %v2837 = vpop.f32.mrf.mxu0
        %v2838 = vadd.f32 %v2825, %v2837
        %v2839 = vpop.f32.mrf.mxu0
        %2840 = vdwg.mxu0
        %2841 = vmatpush.bf16.msra.mxu0 %v2616
        %2842 = vmatpush.bf16.msra.mxu0 %v2608
        %2843 = vmatpush.bf16.msra.mxu0 %v2600
        %2844 = vmatpush.bf16.msra.mxu0 %v2592
        %2845 = vmatpush.bf16.msra.mxu0 %v2584
        %2846 = vmatpush.bf16.msra.mxu0 %v2576
        %2847 = vmatpush.bf16.msra.mxu0 %v2568
        %2848 = vmatpush.bf16.msra.mxu0 %v2560
        %2849 = vmatmul.bf16.gmra.mxu0 %v2027
        %v2850 = vpop.f32.mrf.mxu0
        %v2851 = vadd.f32 %v2160, %v2850
        %v2852 = vpop.f32.mrf.mxu0
        %2853 = vdwg.mxu0
        %2854 = vmatpush.bf16.msra.mxu0 %v2680
        %2855 = vmatpush.bf16.msra.mxu0 %v2672
        %2856 = vmatpush.bf16.msra.mxu0 %v2664
        %2857 = vmatpush.bf16.msra.mxu0 %v2656
        %2858 = vmatpush.bf16.msra.mxu0 %v2648
        %2859 = vmatpush.bf16.msra.mxu0 %v2640
        %2860 = vmatpush.bf16.msra.mxu0 %v2632
        %2861 = vmatpush.bf16.msra.mxu0 %v2624
        %2862 = vmatmul.bf16.gmra.mxu0 %v2028
        %v2863 = vpop.f32.mrf.mxu0
        %v2864 = vadd.f32 %v2851, %v2863
        %v2865 = vpop.f32.mrf.mxu0
        %2866 = vdwg.mxu0
        %2867 = vmatpush.bf16.msra.mxu0 %v2617
        %2868 = vmatpush.bf16.msra.mxu0 %v2609
        %2869 = vmatpush.bf16.msra.mxu0 %v2601
        %2870 = vmatpush.bf16.msra.mxu0 %v2593
        %2871 = vmatpush.bf16.msra.mxu0 %v2585
        %2872 = vmatpush.bf16.msra.mxu0 %v2577
        %2873 = vmatpush.bf16.msra.mxu0 %v2569
        %2874 = vmatpush.bf16.msra.mxu0 %v2561
        %2875 = vmatmul.bf16.gmra.mxu0 %v2027
        %v2876 = vpop.f32.mrf.mxu0
        %v2877 = vadd.f32 %v2161, %v2876
        %v2878 = vpop.f32.mrf.mxu0
        %2879 = vdwg.mxu0
        %2880 = vmatpush.bf16.msra.mxu0 %v2681
        %2881 = vmatpush.bf16.msra.mxu0 %v2673
        %2882 = vmatpush.bf16.msra.mxu0 %v2665
        %2883 = vmatpush.bf16.msra.mxu0 %v2657
        %2884 = vmatpush.bf16.msra.mxu0 %v2649
        %2885 = vmatpush.bf16.msra.mxu0 %v2641
        %2886 = vmatpush.bf16.msra.mxu0 %v2633
        %2887 = vmatpush.bf16.msra.mxu0 %v2625
        %2888 = vmatmul.bf16.gmra.mxu0 %v2028
        %v2889 = vpop.f32.mrf.mxu0
        %v2890 = vadd.f32 %v2877, %v2889
        %v2891 = vpop.f32.mrf.mxu0
        %2892 = vdwg.mxu0
        %2893 = vmatpush.bf16.msra.mxu0 %v2618
        %2894 = vmatpush.bf16.msra.mxu0 %v2610
        %2895 = vmatpush.bf16.msra.mxu0 %v2602
        %2896 = vmatpush.bf16.msra.mxu0 %v2594
        %2897 = vmatpush.bf16.msra.mxu0 %v2586
        %2898 = vmatpush.bf16.msra.mxu0 %v2578
        %2899 = vmatpush.bf16.msra.mxu0 %v2570
        %2900 = vmatpush.bf16.msra.mxu0 %v2562
        %2901 = vmatmul.bf16.gmra.mxu0 %v2027
        %v2902 = vpop.f32.mrf.mxu0
        %v2903 = vadd.f32 %v2162, %v2902
        %v2904 = vpop.f32.mrf.mxu0
        %2905 = vdwg.mxu0
        %2906 = vmatpush.bf16.msra.mxu0 %v2682
        %2907 = vmatpush.bf16.msra.mxu0 %v2674
        %2908 = vmatpush.bf16.msra.mxu0 %v2666
        %2909 = vmatpush.bf16.msra.mxu0 %v2658
        %2910 = vmatpush.bf16.msra.mxu0 %v2650
        %2911 = vmatpush.bf16.msra.mxu0 %v2642
        %2912 = vmatpush.bf16.msra.mxu0 %v2634
        %2913 = vmatpush.bf16.msra.mxu0 %v2626
        %2914 = vmatmul.bf16.gmra.mxu0 %v2028
        %v2915 = vpop.f32.mrf.mxu0
        %v2916 = vadd.f32 %v2903, %v2915
        %v2917 = vpop.f32.mrf.mxu0
        %2918 = vdwg.mxu0
        %2919 = vmatpush.bf16.msra.mxu0 %v2619
        %2920 = vmatpush.bf16.msra.mxu0 %v2611
        %2921 = vmatpush.bf16.msra.mxu0 %v2603
        %2922 = vmatpush.bf16.msra.mxu0 %v2595
        %2923 = vmatpush.bf16.msra.mxu0 %v2587
        %2924 = vmatpush.bf16.msra.mxu0 %v2579
        %2925 = vmatpush.bf16.msra.mxu0 %v2571
        %2926 = vmatpush.bf16.msra.mxu0 %v2563
        %2927 = vmatmul.bf16.gmra.mxu0 %v2027
        %v2928 = vpop.f32.mrf.mxu0
        %v2929 = vadd.f32 %v2163, %v2928
        %v2930 = vpop.f32.mrf.mxu0
        %2931 = vdwg.mxu0
        %2932 = vmatpush.bf16.msra.mxu0 %v2683
        %2933 = vmatpush.bf16.msra.mxu0 %v2675
        %2934 = vmatpush.bf16.msra.mxu0 %v2667
        %2935 = vmatpush.bf16.msra.mxu0 %v2659
        %2936 = vmatpush.bf16.msra.mxu0 %v2651
        %2937 = vmatpush.bf16.msra.mxu0 %v2643
        %2938 = vmatpush.bf16.msra.mxu0 %v2635
        %2939 = vmatpush.bf16.msra.mxu0 %v2627
        %2940 = vmatmul.bf16.gmra.mxu0 %v2028
        %v2941 = vpop.f32.mrf.mxu0
        %v2942 = vadd.f32 %v2929, %v2941
        %v2943 = vpop.f32.mrf.mxu0
        %2944 = vdwg.mxu0
        %2945 = vmatpush.bf16.msra.mxu0 %v2620
        %2946 = vmatpush.bf16.msra.mxu0 %v2612
        %2947 = vmatpush.bf16.msra.mxu0 %v2604
        %2948 = vmatpush.bf16.msra.mxu0 %v2596
        %2949 = vmatpush.bf16.msra.mxu0 %v2588
        %2950 = vmatpush.bf16.msra.mxu0 %v2580
        %2951 = vmatpush.bf16.msra.mxu0 %v2572
        %2952 = vmatpush.bf16.msra.mxu0 %v2564
        %2953 = vmatmul.bf16.gmra.mxu0 %v2027
        %v2954 = vpop.f32.mrf.mxu0
        %v2955 = vadd.f32 %v2164, %v2954
        %v2956 = vpop.f32.mrf.mxu0
        %2957 = vdwg.mxu0
        %2958 = vmatpush.bf16.msra.mxu0 %v2684
        %2959 = vmatpush.bf16.msra.mxu0 %v2676
        %2960 = vmatpush.bf16.msra.mxu0 %v2668
        %2961 = vmatpush.bf16.msra.mxu0 %v2660
        %2962 = vmatpush.bf16.msra.mxu0 %v2652
        %2963 = vmatpush.bf16.msra.mxu0 %v2644
        %2964 = vmatpush.bf16.msra.mxu0 %v2636
        %2965 = vmatpush.bf16.msra.mxu0 %v2628
        %2966 = vmatmul.bf16.gmra.mxu0 %v2028
        %v2967 = vpop.f32.mrf.mxu0
        %v2968 = vadd.f32 %v2955, %v2967
        %v2969 = vpop.f32.mrf.mxu0
        %2970 = vdwg.mxu0
        %2971 = vmatpush.bf16.msra.mxu0 %v2621
        %2972 = vmatpush.bf16.msra.mxu0 %v2613
        %2973 = vmatpush.bf16.msra.mxu0 %v2605
        %2974 = vmatpush.bf16.msra.mxu0 %v2597
        %2975 = vmatpush.bf16.msra.mxu0 %v2589
        %2976 = vmatpush.bf16.msra.mxu0 %v2581
        %2977 = vmatpush.bf16.msra.mxu0 %v2573
        %2978 = vmatpush.bf16.msra.mxu0 %v2565
        %2979 = vmatmul.bf16.gmra.mxu0 %v2027
        %v2980 = vpop.f32.mrf.mxu0
        %v2981 = vadd.f32 %v2165, %v2980
        %v2982 = vpop.f32.mrf.mxu0
        %2983 = vdwg.mxu0
        %2984 = vmatpush.bf16.msra.mxu0 %v2685
        %2985 = vmatpush.bf16.msra.mxu0 %v2677
        %2986 = vmatpush.bf16.msra.mxu0 %v2669
        %2987 = vmatpush.bf16.msra.mxu0 %v2661
        %2988 = vmatpush.bf16.msra.mxu0 %v2653
        %2989 = vmatpush.bf16.msra.mxu0 %v2645
        %2990 = vmatpush.bf16.msra.mxu0 %v2637
        %2991 = vmatpush.bf16.msra.mxu0 %v2629
        %2992 = vmatmul.bf16.gmra.mxu0 %v2028
        %v2993 = vpop.f32.mrf.mxu0
        %v2994 = vadd.f32 %v2981, %v2993
        %v2995 = vpop.f32.mrf.mxu0
        %2996 = vdwg.mxu0
        %2997 = vmatpush.bf16.msra.mxu0 %v2622
        %2998 = vmatpush.bf16.msra.mxu0 %v2614
        %2999 = vmatpush.bf16.msra.mxu0 %v2606
        %3000 = vmatpush.bf16.msra.mxu0 %v2598
        %3001 = vmatpush.bf16.msra.mxu0 %v2590
        %3002 = vmatpush.bf16.msra.mxu0 %v2582
        %3003 = vmatpush.bf16.msra.mxu0 %v2574
        %3004 = vmatpush.bf16.msra.mxu0 %v2566
        %3005 = vmatmul.bf16.gmra.mxu0 %v2027
        %v3006 = vpop.f32.mrf.mxu0
        %v3007 = vadd.f32 %v2166, %v3006
        %v3008 = vpop.f32.mrf.mxu0
        %3009 = vdwg.mxu0
        %3010 = vmatpush.bf16.msra.mxu0 %v2686
        %3011 = vmatpush.bf16.msra.mxu0 %v2678
        %3012 = vmatpush.bf16.msra.mxu0 %v2670
        %3013 = vmatpush.bf16.msra.mxu0 %v2662
        %3014 = vmatpush.bf16.msra.mxu0 %v2654
        %3015 = vmatpush.bf16.msra.mxu0 %v2646
        %3016 = vmatpush.bf16.msra.mxu0 %v2638
        %3017 = vmatpush.bf16.msra.mxu0 %v2630
        %3018 = vmatmul.bf16.gmra.mxu0 %v2028
        %v3019 = vpop.f32.mrf.mxu0
        %v3020 = vadd.f32 %v3007, %v3019
        %v3021 = vpop.f32.mrf.mxu0
        %3022 = vdwg.mxu0
        %v3023 = vmax.f32 %v2838, 0.0
        %v3024 = vmax.f32 %v2864, 0.0
        %v3025 = vmax.f32 %v2890, 0.0
        %v3026 = vmax.f32 %v2916, 0.0
        %v3027 = vmax.f32 %v2942, 0.0
        %v3028 = vmax.f32 %v2968, 0.0
        %v3029 = vmax.f32 %v2994, 0.0
        %v3030 = vmax.f32 %v3020, 0.0
        %v3031 = vpack.c.bf16 %v3023, %v3023
        %v3032 = vpack.c.bf16 %v3024, %v3024
        %v3033 = vpack.c.bf16 %v3025, %v3025
        %v3034 = vpack.c.bf16 %v3026, %v3026
        %v3035 = vpack.c.bf16 %v3027, %v3027
        %v3036 = vpack.c.bf16 %v3028, %v3028
        %v3037 = vpack.c.bf16 %v3029, %v3029
        %v3038 = vpack.c.bf16 %v3030, %v3030
        %v3039 = vld [vmem:[#allocation7] sm:$0xff]
        %v3040 = vld [vmem:[#allocation7 + $0x8] sm:$0xff]
        %v3041 = vld [vmem:[#allocation7 + $0x10] sm:$0xff]
        %v3042 = vld [vmem:[#allocation7 + $0x18] sm:$0xff]
        %v3043 = vld [vmem:[#allocation7 + $0x20] sm:$0xff]
        %v3044 = vld [vmem:[#allocation7 + $0x28] sm:$0xff]
        %v3045 = vld [vmem:[#allocation7 + $0x30] sm:$0xff]
        %v3046 = vld [vmem:[#allocation7 + $0x38] sm:$0xff]
        %v3047 = vld [vmem:[#allocation7 + $0x40] sm:$0xff]
        %v3048 = vld [vmem:[#allocation7 + $0x48] sm:$0xff]
        %v3049 = vld [vmem:[#allocation7 + $0x50] sm:$0xff]
        %v3050 = vld [vmem:[#allocation7 + $0x58] sm:$0xff]
        %v3051 = vld [vmem:[#allocation7 + $0x60] sm:$0xff]
        %v3052 = vld [vmem:[#allocation7 + $0x68] sm:$0xff]
        %v3053 = vld [vmem:[#allocation7 + $0x70] sm:$0xff]
        %v3054 = vld [vmem:[#allocation7 + $0x78] sm:$0xff]
        %v3055 = vld [vmem:[#allocation7 + $0x80] sm:$0xff]
        %v3056 = vld [vmem:[#allocation7 + $0x88] sm:$0xff]
        %v3057 = vld [vmem:[#allocation7 + $0x90] sm:$0xff]
        %v3058 = vld [vmem:[#allocation7 + $0x98] sm:$0xff]
        %v3059 = vld [vmem:[#allocation7 + $0xa0] sm:$0xff]
        %v3060 = vld [vmem:[#allocation7 + $0xa8] sm:$0xff]
        %v3061 = vld [vmem:[#allocation7 + $0xb0] sm:$0xff]
        %v3062 = vld [vmem:[#allocation7 + $0xb8] sm:$0xff]
        %v3063 = vld [vmem:[#allocation7 + $0xc0] sm:$0xff]
        %v3064 = vld [vmem:[#allocation7 + $0xc8] sm:$0xff]
        %v3065 = vld [vmem:[#allocation7 + $0xd0] sm:$0xff]
        %v3066 = vld [vmem:[#allocation7 + $0xd8] sm:$0xff]
        %v3067 = vld [vmem:[#allocation7 + $0xe0] sm:$0xff]
        %v3068 = vld [vmem:[#allocation7 + $0xe8] sm:$0xff]
        %v3069 = vld [vmem:[#allocation7 + $0xf0] sm:$0xff]
        %v3070 = vld [vmem:[#allocation7 + $0xf8] sm:$0xff]
        %v3071 = vld [vmem:[#allocation7 + $0x100] sm:$0xff]
        %v3072 = vld [vmem:[#allocation7 + $0x108] sm:$0xff]
        %v3073 = vld [vmem:[#allocation7 + $0x110] sm:$0xff]
        %v3074 = vld [vmem:[#allocation7 + $0x118] sm:$0xff]
        %v3075 = vld [vmem:[#allocation7 + $0x120] sm:$0xff]
        %v3076 = vld [vmem:[#allocation7 + $0x128] sm:$0xff]
        %v3077 = vld [vmem:[#allocation7 + $0x130] sm:$0xff]
        %v3078 = vld [vmem:[#allocation7 + $0x138] sm:$0xff]
        %v3079 = vld [vmem:[#allocation7 + $0x140] sm:$0xff]
        %v3080 = vld [vmem:[#allocation7 + $0x148] sm:$0xff]
        %v3081 = vld [vmem:[#allocation7 + $0x150] sm:$0xff]
        %v3082 = vld [vmem:[#allocation7 + $0x158] sm:$0xff]
        %v3083 = vld [vmem:[#allocation7 + $0x160] sm:$0xff]
        %v3084 = vld [vmem:[#allocation7 + $0x168] sm:$0xff]
        %v3085 = vld [vmem:[#allocation7 + $0x170] sm:$0xff]
        %v3086 = vld [vmem:[#allocation7 + $0x178] sm:$0xff]
        %v3087 = vld [vmem:[#allocation7 + $0x180] sm:$0xff]
        %v3088 = vld [vmem:[#allocation7 + $0x188] sm:$0xff]
        %v3089 = vld [vmem:[#allocation7 + $0x190] sm:$0xff]
        %v3090 = vld [vmem:[#allocation7 + $0x198] sm:$0xff]
        %v3091 = vld [vmem:[#allocation7 + $0x1a0] sm:$0xff]
        %v3092 = vld [vmem:[#allocation7 + $0x1a8] sm:$0xff]
        %v3093 = vld [vmem:[#allocation7 + $0x1b0] sm:$0xff]
        %v3094 = vld [vmem:[#allocation7 + $0x1b8] sm:$0xff]
        %v3095 = vld [vmem:[#allocation7 + $0x1c0] sm:$0xff]
        %v3096 = vld [vmem:[#allocation7 + $0x1c8] sm:$0xff]
        %v3097 = vld [vmem:[#allocation7 + $0x1d0] sm:$0xff]
        %v3098 = vld [vmem:[#allocation7 + $0x1d8] sm:$0xff]
        %v3099 = vld [vmem:[#allocation7 + $0x1e0] sm:$0xff]
        %v3100 = vld [vmem:[#allocation7 + $0x1e8] sm:$0xff]
        %v3101 = vld [vmem:[#allocation7 + $0x1f0] sm:$0xff]
        %v3102 = vld [vmem:[#allocation7 + $0x1f8] sm:$0xff]
        %v3103 = vld [vmem:[#allocation7 + $0x200] sm:$0xff]
        %v3104 = vld [vmem:[#allocation7 + $0x208] sm:$0xff]
        %v3105 = vld [vmem:[#allocation7 + $0x210] sm:$0xff]
        %v3106 = vld [vmem:[#allocation7 + $0x218] sm:$0xff]
        %v3107 = vld [vmem:[#allocation7 + $0x220] sm:$0xff]
        %v3108 = vld [vmem:[#allocation7 + $0x228] sm:$0xff]
        %v3109 = vld [vmem:[#allocation7 + $0x230] sm:$0xff]
        %v3110 = vld [vmem:[#allocation7 + $0x238] sm:$0xff]
        %v3111 = vld [vmem:[#allocation7 + $0x240] sm:$0xff]
        %v3112 = vld [vmem:[#allocation7 + $0x248] sm:$0xff]
        %v3113 = vld [vmem:[#allocation7 + $0x250] sm:$0xff]
        %v3114 = vld [vmem:[#allocation7 + $0x258] sm:$0xff]
        %v3115 = vld [vmem:[#allocation7 + $0x260] sm:$0xff]
        %v3116 = vld [vmem:[#allocation7 + $0x268] sm:$0xff]
        %v3117 = vld [vmem:[#allocation7 + $0x270] sm:$0xff]
        %v3118 = vld [vmem:[#allocation7 + $0x278] sm:$0xff]
        %v3119 = vld [vmem:[#allocation7 + $0x280] sm:$0xff]
        %v3120 = vld [vmem:[#allocation7 + $0x288] sm:$0xff]
        %v3121 = vld [vmem:[#allocation7 + $0x290] sm:$0xff]
        %v3122 = vld [vmem:[#allocation7 + $0x298] sm:$0xff]
        %v3123 = vld [vmem:[#allocation7 + $0x2a0] sm:$0xff]
        %v3124 = vld [vmem:[#allocation7 + $0x2a8] sm:$0xff]
        %v3125 = vld [vmem:[#allocation7 + $0x2b0] sm:$0xff]
        %v3126 = vld [vmem:[#allocation7 + $0x2b8] sm:$0xff]
        %v3127 = vld [vmem:[#allocation7 + $0x2c0] sm:$0xff]
        %v3128 = vld [vmem:[#allocation7 + $0x2c8] sm:$0xff]
        %v3129 = vld [vmem:[#allocation7 + $0x2d0] sm:$0xff]
        %v3130 = vld [vmem:[#allocation7 + $0x2d8] sm:$0xff]
        %v3131 = vld [vmem:[#allocation7 + $0x2e0] sm:$0xff]
        %v3132 = vld [vmem:[#allocation7 + $0x2e8] sm:$0xff]
        %v3133 = vld [vmem:[#allocation7 + $0x2f0] sm:$0xff]
        %v3134 = vld [vmem:[#allocation7 + $0x2f8] sm:$0xff]
        %v3135 = vld [vmem:[#allocation7 + $0x300] sm:$0xff]
        %v3136 = vld [vmem:[#allocation7 + $0x308] sm:$0xff]
        %v3137 = vld [vmem:[#allocation7 + $0x310] sm:$0xff]
        %v3138 = vld [vmem:[#allocation7 + $0x318] sm:$0xff]
        %v3139 = vld [vmem:[#allocation7 + $0x320] sm:$0xff]
        %v3140 = vld [vmem:[#allocation7 + $0x328] sm:$0xff]
        %v3141 = vld [vmem:[#allocation7 + $0x330] sm:$0xff]
        %v3142 = vld [vmem:[#allocation7 + $0x338] sm:$0xff]
        %v3143 = vld [vmem:[#allocation7 + $0x340] sm:$0xff]
        %v3144 = vld [vmem:[#allocation7 + $0x348] sm:$0xff]
        %v3145 = vld [vmem:[#allocation7 + $0x350] sm:$0xff]
        %v3146 = vld [vmem:[#allocation7 + $0x358] sm:$0xff]
        %v3147 = vld [vmem:[#allocation7 + $0x360] sm:$0xff]
        %v3148 = vld [vmem:[#allocation7 + $0x368] sm:$0xff]
        %v3149 = vld [vmem:[#allocation7 + $0x370] sm:$0xff]
        %v3150 = vld [vmem:[#allocation7 + $0x378] sm:$0xff]
        %v3151 = vld [vmem:[#allocation7 + $0x380] sm:$0xff]
        %v3152 = vld [vmem:[#allocation7 + $0x388] sm:$0xff]
        %v3153 = vld [vmem:[#allocation7 + $0x390] sm:$0xff]
        %v3154 = vld [vmem:[#allocation7 + $0x398] sm:$0xff]
        %v3155 = vld [vmem:[#allocation7 + $0x3a0] sm:$0xff]
        %v3156 = vld [vmem:[#allocation7 + $0x3a8] sm:$0xff]
        %v3157 = vld [vmem:[#allocation7 + $0x3b0] sm:$0xff]
        %v3158 = vld [vmem:[#allocation7 + $0x3b8] sm:$0xff]
        %v3159 = vld [vmem:[#allocation7 + $0x3c0] sm:$0xff]
        %v3160 = vld [vmem:[#allocation7 + $0x3c8] sm:$0xff]
        %v3161 = vld [vmem:[#allocation7 + $0x3d0] sm:$0xff]
        %v3162 = vld [vmem:[#allocation7 + $0x3d8] sm:$0xff]
        %v3163 = vld [vmem:[#allocation7 + $0x3e0] sm:$0xff]
        %v3164 = vld [vmem:[#allocation7 + $0x3e8] sm:$0xff]
        %v3165 = vld [vmem:[#allocation7 + $0x3f0] sm:$0xff]
        %v3166 = vld [vmem:[#allocation7 + $0x3f8] sm:$0xff]
        %v3167 = vld [vmem:[#allocation9] sm:$0x3]
        %v3169 = vperm.slane %v3167, 0
        %v3170 = vperm.slane %v3167, 1
        %v3301 = vunpack.c.l.b16 %v3039
        %v3302 = vunpack.c.h.b16 %v3039
        %v3303 = vunpack.c.l.b16 %v3040
        %v3304 = vunpack.c.h.b16 %v3040
        %v3305 = vunpack.c.l.b16 %v3041
        %v3306 = vunpack.c.h.b16 %v3041
        %v3307 = vunpack.c.l.b16 %v3042
        %v3308 = vunpack.c.h.b16 %v3042
        %v3309 = vunpack.c.l.b16 %v3043
        %v3310 = vunpack.c.h.b16 %v3043
        %v3311 = vunpack.c.l.b16 %v3044
        %v3312 = vunpack.c.h.b16 %v3044
        %v3313 = vunpack.c.l.b16 %v3045
        %v3314 = vunpack.c.h.b16 %v3045
        %v3315 = vunpack.c.l.b16 %v3046
        %v3316 = vunpack.c.h.b16 %v3046
        %v3317 = vunpack.c.l.b16 %v3047
        %v3318 = vunpack.c.h.b16 %v3047
        %v3319 = vunpack.c.l.b16 %v3048
        %v3320 = vunpack.c.h.b16 %v3048
        %v3321 = vunpack.c.l.b16 %v3049
        %v3322 = vunpack.c.h.b16 %v3049
        %v3323 = vunpack.c.l.b16 %v3050
        %v3324 = vunpack.c.h.b16 %v3050
        %v3325 = vunpack.c.l.b16 %v3051
        %v3326 = vunpack.c.h.b16 %v3051
        %v3327 = vunpack.c.l.b16 %v3052
        %v3328 = vunpack.c.h.b16 %v3052
        %v3329 = vunpack.c.l.b16 %v3053
        %v3330 = vunpack.c.h.b16 %v3053
        %v3331 = vunpack.c.l.b16 %v3054
        %v3332 = vunpack.c.h.b16 %v3054
        %v3333 = vunpack.c.l.b16 %v3055
        %v3334 = vunpack.c.h.b16 %v3055
        %v3335 = vunpack.c.l.b16 %v3056
        %v3336 = vunpack.c.h.b16 %v3056
        %v3337 = vunpack.c.l.b16 %v3057
        %v3338 = vunpack.c.h.b16 %v3057
        %v3339 = vunpack.c.l.b16 %v3058
        %v3340 = vunpack.c.h.b16 %v3058
        %v3341 = vunpack.c.l.b16 %v3059
        %v3342 = vunpack.c.h.b16 %v3059
        %v3343 = vunpack.c.l.b16 %v3060
        %v3344 = vunpack.c.h.b16 %v3060
        %v3345 = vunpack.c.l.b16 %v3061
        %v3346 = vunpack.c.h.b16 %v3061
        %v3347 = vunpack.c.l.b16 %v3062
        %v3348 = vunpack.c.h.b16 %v3062
        %v3349 = vunpack.c.l.b16 %v3063
        %v3350 = vunpack.c.h.b16 %v3063
        %v3351 = vunpack.c.l.b16 %v3064
        %v3352 = vunpack.c.h.b16 %v3064
        %v3353 = vunpack.c.l.b16 %v3065
        %v3354 = vunpack.c.h.b16 %v3065
        %v3355 = vunpack.c.l.b16 %v3066
        %v3356 = vunpack.c.h.b16 %v3066
        %v3357 = vunpack.c.l.b16 %v3067
        %v3358 = vunpack.c.h.b16 %v3067
        %v3359 = vunpack.c.l.b16 %v3068
        %v3360 = vunpack.c.h.b16 %v3068
        %v3361 = vunpack.c.l.b16 %v3069
        %v3362 = vunpack.c.h.b16 %v3069
        %v3363 = vunpack.c.l.b16 %v3070
        %v3364 = vunpack.c.h.b16 %v3070
        %v3365 = vunpack.c.l.b16 %v3071
        %v3366 = vunpack.c.h.b16 %v3071
        %v3367 = vunpack.c.l.b16 %v3072
        %v3368 = vunpack.c.h.b16 %v3072
        %v3369 = vunpack.c.l.b16 %v3073
        %v3370 = vunpack.c.h.b16 %v3073
        %v3371 = vunpack.c.l.b16 %v3074
        %v3372 = vunpack.c.h.b16 %v3074
        %v3373 = vunpack.c.l.b16 %v3075
        %v3374 = vunpack.c.h.b16 %v3075
        %v3375 = vunpack.c.l.b16 %v3076
        %v3376 = vunpack.c.h.b16 %v3076
        %v3377 = vunpack.c.l.b16 %v3077
        %v3378 = vunpack.c.h.b16 %v3077
        %v3379 = vunpack.c.l.b16 %v3078
        %v3380 = vunpack.c.h.b16 %v3078
        %v3381 = vunpack.c.l.b16 %v3079
        %v3382 = vunpack.c.h.b16 %v3079
        %v3383 = vunpack.c.l.b16 %v3080
        %v3384 = vunpack.c.h.b16 %v3080
        %v3385 = vunpack.c.l.b16 %v3081
        %v3386 = vunpack.c.h.b16 %v3081
        %v3387 = vunpack.c.l.b16 %v3082
        %v3388 = vunpack.c.h.b16 %v3082
        %v3389 = vunpack.c.l.b16 %v3083
        %v3390 = vunpack.c.h.b16 %v3083
        %v3391 = vunpack.c.l.b16 %v3084
        %v3392 = vunpack.c.h.b16 %v3084
        %v3393 = vunpack.c.l.b16 %v3085
        %v3394 = vunpack.c.h.b16 %v3085
        %v3395 = vunpack.c.l.b16 %v3086
        %v3396 = vunpack.c.h.b16 %v3086
        %v3397 = vunpack.c.l.b16 %v3087
        %v3398 = vunpack.c.h.b16 %v3087
        %v3399 = vunpack.c.l.b16 %v3088
        %v3400 = vunpack.c.h.b16 %v3088
        %v3401 = vunpack.c.l.b16 %v3089
        %v3402 = vunpack.c.h.b16 %v3089
        %v3403 = vunpack.c.l.b16 %v3090
        %v3404 = vunpack.c.h.b16 %v3090
        %v3405 = vunpack.c.l.b16 %v3091
        %v3406 = vunpack.c.h.b16 %v3091
        %v3407 = vunpack.c.l.b16 %v3092
        %v3408 = vunpack.c.h.b16 %v3092
        %v3409 = vunpack.c.l.b16 %v3093
        %v3410 = vunpack.c.h.b16 %v3093
        %v3411 = vunpack.c.l.b16 %v3094
        %v3412 = vunpack.c.h.b16 %v3094
        %v3413 = vunpack.c.l.b16 %v3095
        %v3414 = vunpack.c.h.b16 %v3095
        %v3415 = vunpack.c.l.b16 %v3096
        %v3416 = vunpack.c.h.b16 %v3096
        %v3417 = vunpack.c.l.b16 %v3097
        %v3418 = vunpack.c.h.b16 %v3097
        %v3419 = vunpack.c.l.b16 %v3098
        %v3420 = vunpack.c.h.b16 %v3098
        %v3421 = vunpack.c.l.b16 %v3099
        %v3422 = vunpack.c.h.b16 %v3099
        %v3423 = vunpack.c.l.b16 %v3100
        %v3424 = vunpack.c.h.b16 %v3100
        %v3425 = vunpack.c.l.b16 %v3101
        %v3426 = vunpack.c.h.b16 %v3101
        %v3427 = vunpack.c.l.b16 %v3102
        %v3428 = vunpack.c.h.b16 %v3102
        %v3429 = vunpack.c.l.b16 %v3103
        %v3430 = vunpack.c.h.b16 %v3103
        %v3431 = vunpack.c.l.b16 %v3104
        %v3432 = vunpack.c.h.b16 %v3104
        %v3433 = vunpack.c.l.b16 %v3105
        %v3434 = vunpack.c.h.b16 %v3105
        %v3435 = vunpack.c.l.b16 %v3106
        %v3436 = vunpack.c.h.b16 %v3106
        %v3437 = vunpack.c.l.b16 %v3107
        %v3438 = vunpack.c.h.b16 %v3107
        %v3439 = vunpack.c.l.b16 %v3108
        %v3440 = vunpack.c.h.b16 %v3108
        %v3441 = vunpack.c.l.b16 %v3109
        %v3442 = vunpack.c.h.b16 %v3109
        %v3443 = vunpack.c.l.b16 %v3110
        %v3444 = vunpack.c.h.b16 %v3110
        %v3445 = vunpack.c.l.b16 %v3111
        %v3446 = vunpack.c.h.b16 %v3111
        %v3447 = vunpack.c.l.b16 %v3112
        %v3448 = vunpack.c.h.b16 %v3112
        %v3449 = vunpack.c.l.b16 %v3113
        %v3450 = vunpack.c.h.b16 %v3113
        %v3451 = vunpack.c.l.b16 %v3114
        %v3452 = vunpack.c.h.b16 %v3114
        %v3453 = vunpack.c.l.b16 %v3115
        %v3454 = vunpack.c.h.b16 %v3115
        %v3455 = vunpack.c.l.b16 %v3116
        %v3456 = vunpack.c.h.b16 %v3116
        %v3457 = vunpack.c.l.b16 %v3117
        %v3458 = vunpack.c.h.b16 %v3117
        %v3459 = vunpack.c.l.b16 %v3118
        %v3460 = vunpack.c.h.b16 %v3118
        %v3461 = vunpack.c.l.b16 %v3119
        %v3462 = vunpack.c.h.b16 %v3119
        %v3463 = vunpack.c.l.b16 %v3120
        %v3464 = vunpack.c.h.b16 %v3120
        %v3465 = vunpack.c.l.b16 %v3121
        %v3466 = vunpack.c.h.b16 %v3121
        %v3467 = vunpack.c.l.b16 %v3122
        %v3468 = vunpack.c.h.b16 %v3122
        %v3469 = vunpack.c.l.b16 %v3123
        %v3470 = vunpack.c.h.b16 %v3123
        %v3471 = vunpack.c.l.b16 %v3124
        %v3472 = vunpack.c.h.b16 %v3124
        %v3473 = vunpack.c.l.b16 %v3125
        %v3474 = vunpack.c.h.b16 %v3125
        %v3475 = vunpack.c.l.b16 %v3126
        %v3476 = vunpack.c.h.b16 %v3126
        %v3477 = vunpack.c.l.b16 %v3127
        %v3478 = vunpack.c.h.b16 %v3127
        %v3479 = vunpack.c.l.b16 %v3128
        %v3480 = vunpack.c.h.b16 %v3128
        %v3481 = vunpack.c.l.b16 %v3129
        %v3482 = vunpack.c.h.b16 %v3129
        %v3483 = vunpack.c.l.b16 %v3130
        %v3484 = vunpack.c.h.b16 %v3130
        %v3485 = vunpack.c.l.b16 %v3131
        %v3486 = vunpack.c.h.b16 %v3131
        %v3487 = vunpack.c.l.b16 %v3132
        %v3488 = vunpack.c.h.b16 %v3132
        %v3489 = vunpack.c.l.b16 %v3133
        %v3490 = vunpack.c.h.b16 %v3133
        %v3491 = vunpack.c.l.b16 %v3134
        %v3492 = vunpack.c.h.b16 %v3134
        %v3493 = vunpack.c.l.b16 %v3135
        %v3494 = vunpack.c.h.b16 %v3135
        %v3495 = vunpack.c.l.b16 %v3136
        %v3496 = vunpack.c.h.b16 %v3136
        %v3497 = vunpack.c.l.b16 %v3137
        %v3498 = vunpack.c.h.b16 %v3137
        %v3499 = vunpack.c.l.b16 %v3138
        %v3500 = vunpack.c.h.b16 %v3138
        %v3501 = vunpack.c.l.b16 %v3139
        %v3502 = vunpack.c.h.b16 %v3139
        %v3503 = vunpack.c.l.b16 %v3140
        %v3504 = vunpack.c.h.b16 %v3140
        %v3505 = vunpack.c.l.b16 %v3141
        %v3506 = vunpack.c.h.b16 %v3141
        %v3507 = vunpack.c.l.b16 %v3142
        %v3508 = vunpack.c.h.b16 %v3142
        %v3509 = vunpack.c.l.b16 %v3143
        %v3510 = vunpack.c.h.b16 %v3143
        %v3511 = vunpack.c.l.b16 %v3144
        %v3512 = vunpack.c.h.b16 %v3144
        %v3513 = vunpack.c.l.b16 %v3145
        %v3514 = vunpack.c.h.b16 %v3145
        %v3515 = vunpack.c.l.b16 %v3146
        %v3516 = vunpack.c.h.b16 %v3146
        %v3517 = vunpack.c.l.b16 %v3147
        %v3518 = vunpack.c.h.b16 %v3147
        %v3519 = vunpack.c.l.b16 %v3148
        %v3520 = vunpack.c.h.b16 %v3148
        %v3521 = vunpack.c.l.b16 %v3149
        %v3522 = vunpack.c.h.b16 %v3149
        %v3523 = vunpack.c.l.b16 %v3150
        %v3524 = vunpack.c.h.b16 %v3150
        %v3525 = vunpack.c.l.b16 %v3151
        %v3526 = vunpack.c.h.b16 %v3151
        %v3527 = vunpack.c.l.b16 %v3152
        %v3528 = vunpack.c.h.b16 %v3152
        %v3529 = vunpack.c.l.b16 %v3153
        %v3530 = vunpack.c.h.b16 %v3153
        %v3531 = vunpack.c.l.b16 %v3154
        %v3532 = vunpack.c.h.b16 %v3154
        %v3533 = vunpack.c.l.b16 %v3155
        %v3534 = vunpack.c.h.b16 %v3155
        %v3535 = vunpack.c.l.b16 %v3156
        %v3536 = vunpack.c.h.b16 %v3156
        %v3537 = vunpack.c.l.b16 %v3157
        %v3538 = vunpack.c.h.b16 %v3157
        %v3539 = vunpack.c.l.b16 %v3158
        %v3540 = vunpack.c.h.b16 %v3158
        %v3541 = vunpack.c.l.b16 %v3159
        %v3542 = vunpack.c.h.b16 %v3159
        %v3543 = vunpack.c.l.b16 %v3160
        %v3544 = vunpack.c.h.b16 %v3160
        %v3545 = vunpack.c.l.b16 %v3161
        %v3546 = vunpack.c.h.b16 %v3161
        %v3547 = vunpack.c.l.b16 %v3162
        %v3548 = vunpack.c.h.b16 %v3162
        %v3549 = vunpack.c.l.b16 %v3163
        %v3550 = vunpack.c.h.b16 %v3163
        %v3551 = vunpack.c.l.b16 %v3164
        %v3552 = vunpack.c.h.b16 %v3164
        %v3553 = vunpack.c.l.b16 %v3165
        %v3554 = vunpack.c.h.b16 %v3165
        %v3555 = vunpack.c.l.b16 %v3166
        %v3556 = vunpack.c.h.b16 %v3166
        %v3557 = vpack.c.b16 %v3303, %v3301
        %v3558 = vpack.c.b16 %v3304, %v3302
        %v3559 = vpack.c.b16 %v3307, %v3305
        %v3560 = vpack.c.b16 %v3308, %v3306
        %v3561 = vpack.c.b16 %v3311, %v3309
        %v3562 = vpack.c.b16 %v3312, %v3310
        %v3563 = vpack.c.b16 %v3315, %v3313
        %v3564 = vpack.c.b16 %v3316, %v3314
        %v3565 = vpack.c.b16 %v3319, %v3317
        %v3566 = vpack.c.b16 %v3320, %v3318
        %v3567 = vpack.c.b16 %v3323, %v3321
        %v3568 = vpack.c.b16 %v3324, %v3322
        %v3569 = vpack.c.b16 %v3327, %v3325
        %v3570 = vpack.c.b16 %v3328, %v3326
        %v3571 = vpack.c.b16 %v3331, %v3329
        %v3572 = vpack.c.b16 %v3332, %v3330
        %v3573 = vpack.c.b16 %v3335, %v3333
        %v3574 = vpack.c.b16 %v3336, %v3334
        %v3575 = vpack.c.b16 %v3339, %v3337
        %v3576 = vpack.c.b16 %v3340, %v3338
        %v3577 = vpack.c.b16 %v3343, %v3341
        %v3578 = vpack.c.b16 %v3344, %v3342
        %v3579 = vpack.c.b16 %v3347, %v3345
        %v3580 = vpack.c.b16 %v3348, %v3346
        %v3581 = vpack.c.b16 %v3351, %v3349
        %v3582 = vpack.c.b16 %v3352, %v3350
        %v3583 = vpack.c.b16 %v3355, %v3353
        %v3584 = vpack.c.b16 %v3356, %v3354
        %v3585 = vpack.c.b16 %v3359, %v3357
        %v3586 = vpack.c.b16 %v3360, %v3358
        %v3587 = vpack.c.b16 %v3363, %v3361
        %v3588 = vpack.c.b16 %v3364, %v3362
        %v3589 = vpack.c.b16 %v3367, %v3365
        %v3590 = vpack.c.b16 %v3368, %v3366
        %v3591 = vpack.c.b16 %v3371, %v3369
        %v3592 = vpack.c.b16 %v3372, %v3370
        %v3593 = vpack.c.b16 %v3375, %v3373
        %v3594 = vpack.c.b16 %v3376, %v3374
        %v3595 = vpack.c.b16 %v3379, %v3377
        %v3596 = vpack.c.b16 %v3380, %v3378
        %v3597 = vpack.c.b16 %v3383, %v3381
        %v3598 = vpack.c.b16 %v3384, %v3382
        %v3599 = vpack.c.b16 %v3387, %v3385
        %v3600 = vpack.c.b16 %v3388, %v3386
        %v3601 = vpack.c.b16 %v3391, %v3389
        %v3602 = vpack.c.b16 %v3392, %v3390
        %v3603 = vpack.c.b16 %v3395, %v3393
        %v3604 = vpack.c.b16 %v3396, %v3394
        %v3605 = vpack.c.b16 %v3399, %v3397
        %v3606 = vpack.c.b16 %v3400, %v3398
        %v3607 = vpack.c.b16 %v3403, %v3401
        %v3608 = vpack.c.b16 %v3404, %v3402
        %v3609 = vpack.c.b16 %v3407, %v3405
        %v3610 = vpack.c.b16 %v3408, %v3406
        %v3611 = vpack.c.b16 %v3411, %v3409
        %v3612 = vpack.c.b16 %v3412, %v3410
        %v3613 = vpack.c.b16 %v3415, %v3413
        %v3614 = vpack.c.b16 %v3416, %v3414
        %v3615 = vpack.c.b16 %v3419, %v3417
        %v3616 = vpack.c.b16 %v3420, %v3418
        %v3617 = vpack.c.b16 %v3423, %v3421
        %v3618 = vpack.c.b16 %v3424, %v3422
        %v3619 = vpack.c.b16 %v3427, %v3425
        %v3620 = vpack.c.b16 %v3428, %v3426
        %v3621 = vpack.c.b16 %v3431, %v3429
        %v3622 = vpack.c.b16 %v3432, %v3430
        %v3623 = vpack.c.b16 %v3435, %v3433
        %v3624 = vpack.c.b16 %v3436, %v3434
        %v3625 = vpack.c.b16 %v3439, %v3437
        %v3626 = vpack.c.b16 %v3440, %v3438
        %v3627 = vpack.c.b16 %v3443, %v3441
        %v3628 = vpack.c.b16 %v3444, %v3442
        %v3629 = vpack.c.b16 %v3447, %v3445
        %v3630 = vpack.c.b16 %v3448, %v3446
        %v3631 = vpack.c.b16 %v3451, %v3449
        %v3632 = vpack.c.b16 %v3452, %v3450
        %v3633 = vpack.c.b16 %v3455, %v3453
        %v3634 = vpack.c.b16 %v3456, %v3454
        %v3635 = vpack.c.b16 %v3459, %v3457
        %v3636 = vpack.c.b16 %v3460, %v3458
        %v3637 = vpack.c.b16 %v3463, %v3461
        %v3638 = vpack.c.b16 %v3464, %v3462
        %v3639 = vpack.c.b16 %v3467, %v3465
        %v3640 = vpack.c.b16 %v3468, %v3466
        %v3641 = vpack.c.b16 %v3471, %v3469
        %v3642 = vpack.c.b16 %v3472, %v3470
        %v3643 = vpack.c.b16 %v3475, %v3473
        %v3644 = vpack.c.b16 %v3476, %v3474
        %v3645 = vpack.c.b16 %v3479, %v3477
        %v3646 = vpack.c.b16 %v3480, %v3478
        %v3647 = vpack.c.b16 %v3483, %v3481
        %v3648 = vpack.c.b16 %v3484, %v3482
        %v3649 = vpack.c.b16 %v3487, %v3485
        %v3650 = vpack.c.b16 %v3488, %v3486
        %v3651 = vpack.c.b16 %v3491, %v3489
        %v3652 = vpack.c.b16 %v3492, %v3490
        %v3653 = vpack.c.b16 %v3495, %v3493
        %v3654 = vpack.c.b16 %v3496, %v3494
        %v3655 = vpack.c.b16 %v3499, %v3497
        %v3656 = vpack.c.b16 %v3500, %v3498
        %v3657 = vpack.c.b16 %v3503, %v3501
        %v3658 = vpack.c.b16 %v3504, %v3502
        %v3659 = vpack.c.b16 %v3507, %v3505
        %v3660 = vpack.c.b16 %v3508, %v3506
        %v3661 = vpack.c.b16 %v3511, %v3509
        %v3662 = vpack.c.b16 %v3512, %v3510
        %v3663 = vpack.c.b16 %v3515, %v3513
        %v3664 = vpack.c.b16 %v3516, %v3514
        %v3665 = vpack.c.b16 %v3519, %v3517
        %v3666 = vpack.c.b16 %v3520, %v3518
        %v3667 = vpack.c.b16 %v3523, %v3521
        %v3668 = vpack.c.b16 %v3524, %v3522
        %v3669 = vpack.c.b16 %v3527, %v3525
        %v3670 = vpack.c.b16 %v3528, %v3526
        %v3671 = vpack.c.b16 %v3531, %v3529
        %v3672 = vpack.c.b16 %v3532, %v3530
        %v3673 = vpack.c.b16 %v3535, %v3533
        %v3674 = vpack.c.b16 %v3536, %v3534
        %v3675 = vpack.c.b16 %v3539, %v3537
        %v3676 = vpack.c.b16 %v3540, %v3538
        %v3677 = vpack.c.b16 %v3543, %v3541
        %v3678 = vpack.c.b16 %v3544, %v3542
        %v3679 = vpack.c.b16 %v3547, %v3545
        %v3680 = vpack.c.b16 %v3548, %v3546
        %v3681 = vpack.c.b16 %v3551, %v3549
        %v3682 = vpack.c.b16 %v3552, %v3550
        %v3683 = vpack.c.b16 %v3555, %v3553
        %v3684 = vpack.c.b16 %v3556, %v3554
        %3813 = vmatpush.bf16.msra.mxu0 %v3571
        %3814 = vmatpush.bf16.msra.mxu0 %v3569
        %3815 = vmatpush.bf16.msra.mxu0 %v3567
        %3816 = vmatpush.bf16.msra.mxu0 %v3565
        %3817 = vmatpush.bf16.msra.mxu0 %v3563
        %3818 = vmatpush.bf16.msra.mxu0 %v3561
        %3819 = vmatpush.bf16.msra.mxu0 %v3559
        %3820 = vmatpush.bf16.msra.mxu0 %v3557
        %3821 = vmatmul.bf16.gmra.mxu0 %v3031
        %v3822 = vpop.f32.mrf.mxu0
        %v3823 = vadd.f32 %v3169, %v3822
        %v3824 = vpop.f32.mrf.mxu0
        %3825 = vdwg.mxu0
        %3826 = vmatpush.bf16.msra.mxu0 %v3587
        %3827 = vmatpush.bf16.msra.mxu0 %v3585
        %3828 = vmatpush.bf16.msra.mxu0 %v3583
        %3829 = vmatpush.bf16.msra.mxu0 %v3581
        %3830 = vmatpush.bf16.msra.mxu0 %v3579
        %3831 = vmatpush.bf16.msra.mxu0 %v3577
        %3832 = vmatpush.bf16.msra.mxu0 %v3575
        %3833 = vmatpush.bf16.msra.mxu0 %v3573
        %3834 = vmatmul.bf16.gmra.mxu0 %v3032
        %v3835 = vpop.f32.mrf.mxu0
        %v3836 = vadd.f32 %v3823, %v3835
        %v3837 = vpop.f32.mrf.mxu0
        %3838 = vdwg.mxu0
        %3839 = vmatpush.bf16.msra.mxu0 %v3603
        %3840 = vmatpush.bf16.msra.mxu0 %v3601
        %3841 = vmatpush.bf16.msra.mxu0 %v3599
        %3842 = vmatpush.bf16.msra.mxu0 %v3597
        %3843 = vmatpush.bf16.msra.mxu0 %v3595
        %3844 = vmatpush.bf16.msra.mxu0 %v3593
        %3845 = vmatpush.bf16.msra.mxu0 %v3591
        %3846 = vmatpush.bf16.msra.mxu0 %v3589
        %3847 = vmatmul.bf16.gmra.mxu0 %v3033
        %v3848 = vpop.f32.mrf.mxu0
        %v3849 = vadd.f32 %v3836, %v3848
        %v3850 = vpop.f32.mrf.mxu0
        %3851 = vdwg.mxu0
        %3852 = vmatpush.bf16.msra.mxu0 %v3619
        %3853 = vmatpush.bf16.msra.mxu0 %v3617
        %3854 = vmatpush.bf16.msra.mxu0 %v3615
        %3855 = vmatpush.bf16.msra.mxu0 %v3613
        %3856 = vmatpush.bf16.msra.mxu0 %v3611
        %3857 = vmatpush.bf16.msra.mxu0 %v3609
        %3858 = vmatpush.bf16.msra.mxu0 %v3607
        %3859 = vmatpush.bf16.msra.mxu0 %v3605
        %3860 = vmatmul.bf16.gmra.mxu0 %v3034
        %v3861 = vpop.f32.mrf.mxu0
        %v3862 = vadd.f32 %v3849, %v3861
        %v3863 = vpop.f32.mrf.mxu0
        %3864 = vdwg.mxu0
        %3865 = vmatpush.bf16.msra.mxu0 %v3635
        %3866 = vmatpush.bf16.msra.mxu0 %v3633
        %3867 = vmatpush.bf16.msra.mxu0 %v3631
        %3868 = vmatpush.bf16.msra.mxu0 %v3629
        %3869 = vmatpush.bf16.msra.mxu0 %v3627
        %3870 = vmatpush.bf16.msra.mxu0 %v3625
        %3871 = vmatpush.bf16.msra.mxu0 %v3623
        %3872 = vmatpush.bf16.msra.mxu0 %v3621
        %3873 = vmatmul.bf16.gmra.mxu0 %v3035
        %v3874 = vpop.f32.mrf.mxu0
        %v3875 = vadd.f32 %v3862, %v3874
        %v3876 = vpop.f32.mrf.mxu0
        %3877 = vdwg.mxu0
        %3878 = vmatpush.bf16.msra.mxu0 %v3651
        %3879 = vmatpush.bf16.msra.mxu0 %v3649
        %3880 = vmatpush.bf16.msra.mxu0 %v3647
        %3881 = vmatpush.bf16.msra.mxu0 %v3645
        %3882 = vmatpush.bf16.msra.mxu0 %v3643
        %3883 = vmatpush.bf16.msra.mxu0 %v3641
        %3884 = vmatpush.bf16.msra.mxu0 %v3639
        %3885 = vmatpush.bf16.msra.mxu0 %v3637
        %3886 = vmatmul.bf16.gmra.mxu0 %v3036
        %v3887 = vpop.f32.mrf.mxu0
        %v3888 = vadd.f32 %v3875, %v3887
        %v3889 = vpop.f32.mrf.mxu0
        %3890 = vdwg.mxu0
        %3891 = vmatpush.bf16.msra.mxu0 %v3667
        %3892 = vmatpush.bf16.msra.mxu0 %v3665
        %3893 = vmatpush.bf16.msra.mxu0 %v3663
        %3894 = vmatpush.bf16.msra.mxu0 %v3661
        %3895 = vmatpush.bf16.msra.mxu0 %v3659
        %3896 = vmatpush.bf16.msra.mxu0 %v3657
        %3897 = vmatpush.bf16.msra.mxu0 %v3655
        %3898 = vmatpush.bf16.msra.mxu0 %v3653
        %3899 = vmatmul.bf16.gmra.mxu0 %v3037
        %v3900 = vpop.f32.mrf.mxu0
        %v3901 = vadd.f32 %v3888, %v3900
        %v3902 = vpop.f32.mrf.mxu0
        %3903 = vdwg.mxu0
        %3904 = vmatpush.bf16.msra.mxu0 %v3683
        %3905 = vmatpush.bf16.msra.mxu0 %v3681
        %3906 = vmatpush.bf16.msra.mxu0 %v3679
        %3907 = vmatpush.bf16.msra.mxu0 %v3677
        %3908 = vmatpush.bf16.msra.mxu0 %v3675
        %3909 = vmatpush.bf16.msra.mxu0 %v3673
        %3910 = vmatpush.bf16.msra.mxu0 %v3671
        %3911 = vmatpush.bf16.msra.mxu0 %v3669
        %3912 = vmatmul.bf16.gmra.mxu0 %v3038
        %v3913 = vpop.f32.mrf.mxu0
        %v3914 = vadd.f32 %v3901, %v3913
        %v3915 = vpop.f32.mrf.mxu0
        %3916 = vdwg.mxu0
        %3917 = vmatpush.bf16.msra.mxu0 %v3572
        %3918 = vmatpush.bf16.msra.mxu0 %v3570
        %3919 = vmatpush.bf16.msra.mxu0 %v3568
        %3920 = vmatpush.bf16.msra.mxu0 %v3566
        %3921 = vmatpush.bf16.msra.mxu0 %v3564
        %3922 = vmatpush.bf16.msra.mxu0 %v3562
        %3923 = vmatpush.bf16.msra.mxu0 %v3560
        %3924 = vmatpush.bf16.msra.mxu0 %v3558
        %3925 = vmatmul.bf16.gmra.mxu0 %v3031
        %v3926 = vpop.f32.mrf.mxu0
        %v3927 = vadd.f32 %v3170, %v3926
        %v3928 = vpop.f32.mrf.mxu0
        %3929 = vdwg.mxu0
        %3930 = vmatpush.bf16.msra.mxu0 %v3588
        %3931 = vmatpush.bf16.msra.mxu0 %v3586
        %3932 = vmatpush.bf16.msra.mxu0 %v3584
        %3933 = vmatpush.bf16.msra.mxu0 %v3582
        %3934 = vmatpush.bf16.msra.mxu0 %v3580
        %3935 = vmatpush.bf16.msra.mxu0 %v3578
        %3936 = vmatpush.bf16.msra.mxu0 %v3576
        %3937 = vmatpush.bf16.msra.mxu0 %v3574
        %3938 = vmatmul.bf16.gmra.mxu0 %v3032
        %v3939 = vpop.f32.mrf.mxu0
        %v3940 = vadd.f32 %v3927, %v3939
        %v3941 = vpop.f32.mrf.mxu0
        %3942 = vdwg.mxu0
        %3943 = vmatpush.bf16.msra.mxu0 %v3604
        %3944 = vmatpush.bf16.msra.mxu0 %v3602
        %3945 = vmatpush.bf16.msra.mxu0 %v3600
        %3946 = vmatpush.bf16.msra.mxu0 %v3598
        %3947 = vmatpush.bf16.msra.mxu0 %v3596
        %3948 = vmatpush.bf16.msra.mxu0 %v3594
        %3949 = vmatpush.bf16.msra.mxu0 %v3592
        %3950 = vmatpush.bf16.msra.mxu0 %v3590
        %3951 = vmatmul.bf16.gmra.mxu0 %v3033
        %v3952 = vpop.f32.mrf.mxu0
        %v3953 = vadd.f32 %v3940, %v3952
        %v3954 = vpop.f32.mrf.mxu0
        %3955 = vdwg.mxu0
        %3956 = vmatpush.bf16.msra.mxu0 %v3620
        %3957 = vmatpush.bf16.msra.mxu0 %v3618
        %3958 = vmatpush.bf16.msra.mxu0 %v3616
        %3959 = vmatpush.bf16.msra.mxu0 %v3614
        %3960 = vmatpush.bf16.msra.mxu0 %v3612
        %3961 = vmatpush.bf16.msra.mxu0 %v3610
        %3962 = vmatpush.bf16.msra.mxu0 %v3608
        %3963 = vmatpush.bf16.msra.mxu0 %v3606
        %3964 = vmatmul.bf16.gmra.mxu0 %v3034
        %v3965 = vpop.f32.mrf.mxu0
        %v3966 = vadd.f32 %v3953, %v3965
        %v3967 = vpop.f32.mrf.mxu0
        %3968 = vdwg.mxu0
        %3969 = vmatpush.bf16.msra.mxu0 %v3636
        %3970 = vmatpush.bf16.msra.mxu0 %v3634
        %3971 = vmatpush.bf16.msra.mxu0 %v3632
        %3972 = vmatpush.bf16.msra.mxu0 %v3630
        %3973 = vmatpush.bf16.msra.mxu0 %v3628
        %3974 = vmatpush.bf16.msra.mxu0 %v3626
        %3975 = vmatpush.bf16.msra.mxu0 %v3624
        %3976 = vmatpush.bf16.msra.mxu0 %v3622
        %3977 = vmatmul.bf16.gmra.mxu0 %v3035
        %v3978 = vpop.f32.mrf.mxu0
        %v3979 = vadd.f32 %v3966, %v3978
        %v3980 = vpop.f32.mrf.mxu0
        %3981 = vdwg.mxu0
        %3982 = vmatpush.bf16.msra.mxu0 %v3652
        %3983 = vmatpush.bf16.msra.mxu0 %v3650
        %3984 = vmatpush.bf16.msra.mxu0 %v3648
        %3985 = vmatpush.bf16.msra.mxu0 %v3646
        %3986 = vmatpush.bf16.msra.mxu0 %v3644
        %3987 = vmatpush.bf16.msra.mxu0 %v3642
        %3988 = vmatpush.bf16.msra.mxu0 %v3640
        %3989 = vmatpush.bf16.msra.mxu0 %v3638
        %3990 = vmatmul.bf16.gmra.mxu0 %v3036
        %v3991 = vpop.f32.mrf.mxu0
        %v3992 = vadd.f32 %v3979, %v3991
        %v3993 = vpop.f32.mrf.mxu0
        %3994 = vdwg.mxu0
        %3995 = vmatpush.bf16.msra.mxu0 %v3668
        %3996 = vmatpush.bf16.msra.mxu0 %v3666
        %3997 = vmatpush.bf16.msra.mxu0 %v3664
        %3998 = vmatpush.bf16.msra.mxu0 %v3662
        %3999 = vmatpush.bf16.msra.mxu0 %v3660
        %4000 = vmatpush.bf16.msra.mxu0 %v3658
        %4001 = vmatpush.bf16.msra.mxu0 %v3656
        %4002 = vmatpush.bf16.msra.mxu0 %v3654
        %4003 = vmatmul.bf16.gmra.mxu0 %v3037
        %v4004 = vpop.f32.mrf.mxu0
        %v4005 = vadd.f32 %v3992, %v4004
        %v4006 = vpop.f32.mrf.mxu0
        %4007 = vdwg.mxu0
        %4008 = vmatpush.bf16.msra.mxu0 %v3684
        %4009 = vmatpush.bf16.msra.mxu0 %v3682
        %4010 = vmatpush.bf16.msra.mxu0 %v3680
        %4011 = vmatpush.bf16.msra.mxu0 %v3678
        %4012 = vmatpush.bf16.msra.mxu0 %v3676
        %4013 = vmatpush.bf16.msra.mxu0 %v3674
        %4014 = vmatpush.bf16.msra.mxu0 %v3672
        %4015 = vmatpush.bf16.msra.mxu0 %v3670
        %4016 = vmatmul.bf16.gmra.mxu0 %v3038
        %v4017 = vpop.f32.mrf.mxu0
        %v4018 = vadd.f32 %v4005, %v4017
        %v4019 = vpop.f32.mrf.mxu0
        %4020 = vdwg.mxu0
        %v4021 = vadd.f32 %v1984, %v3914
        %v4022 = vadd.f32 %v1985, %v4018
        %4023 = vst [vmem:[%s545] sm:$0xff] %v4021
        %4024 = vst [vmem:[%s545 + $0x8] sm:$0xff] %v4022
        %p4025 = scmp.lt.s32.totalorder %s28, 1
        %s4026 = scalar_select %p4025, %s28, 1
        %s4027 = smul.addr %s4026, 2
        %s4028 = smul.addr %s4027, 8
        %s4029 = scalar_lea.vmem %s14, %s4028
        // Predicated region
        $region97: #{nanogpt_forward.4} parent=75 // pred_check
          %p4030 = pneg %p345
        $region98: #{nanogpt_forward.4} parent=75 // pred_check_branch
          %4032 = sbr.rel (%p4030) target = $region100
        $region99: #{nanogpt_forward.4} parent=75 // pred_region
          _
        $region100: #{nanogpt_forward.4} parent=75 // pred_fallthru
          _
      $region76: #{nanogpt_forward.4} parent=5 // pred_fallthru
        _
      %p4033 = scmp.le.s32.totalorder 2, %s23
      // Predicated region
      $region101: #{nanogpt_forward.4} parent=5 // pred_check
        %p4034 = pneg %p4033
      $region102: #{nanogpt_forward.4} parent=5 // pred_check_branch
        %4036 = sbr.rel (%p4034) target = $region104
      $region103: #{nanogpt_forward.4} parent=5 // pred_region
        %s4037 = ssub.s32 %s23, 2
        // Predicated region
        $region105: #{nanogpt_forward.4} parent=103 // pred_check
          %p4038 = pneg %p351
        $region106: #{nanogpt_forward.4} parent=103 // pred_check_branch
          %4040 = sbr.rel (%p4038) target = $region108
        $region107: #{nanogpt_forward.4} parent=103 // pred_region
          %p4041 = scmp.lt.s32.totalorder %s29, 1
          %s4042 = scalar_select %p4041, %s29, 1
          %s4043 = smul.addr %s4042, 2
          %s4044 = smul.addr %s4043, 8
          %s4045 = scalar_lea.vmem %s14, %s4044
        $region108: #{nanogpt_forward.4} parent=103 // pred_fallthru
          _
      $region104: #{nanogpt_forward.4} parent=5 // pred_fallthru
        _
    $region6: #{nanogpt_forward.4} parent=1 // loop_footer
      %s27 = sadd.s32 1, %s23
    $region7: #{nanogpt_forward.4} parent=1 // loop_footer_branch
      %22 = sbr.rel target = $region3
    $region8: #{nanogpt_forward.4} parent=1 // loop_exit
      _
    %4046 = vsyncpa [#allocation3], 1
    %s4047 = scalar_lea.sflag [#allocation3], 1
    %4048 = vsyncpa %s4047, 1
    %4049 = vsyncpa [#allocation5], 1
    %4050 = vsyncpa [#allocation8], 1

</llo_original>
